<compile_context>
chip_gen: v6e
topology: v6e:2x2x1
jax: 0.10.0
libtpu: 0.0.40
codegen_flags: <defaults>
</compile_context>

<pallas_src>
import numpy as np
import jax
import jax.numpy as jnp
from jax.experimental import pallas as pl
from jax.experimental.pallas import tpu as pltpu

ROWS, COLS = 6, 7          # Connect-Four board geometry (Env.rows, Env.columns)
BN_EPS = 1e-5


def _round_up(x, m):
    return (x + m - 1) // m * m


# ------------------------------------------------------------------ kernel

def resblock_kernel(x_ref, k1_ref, b1_ref, k2_ref, b2_ref, o_ref):
    """Fused ResBlock on a (TB, C*H*W) batch tile (NCHW-flat layout).

    o = relu(x + bn2(conv2(relu(bn1(conv1(x))))))
    Convs + BN scale are dense NCHW-flat operators (bf16 operands on the MXU,
    f32 accumulate); only folded biases, the residual add and the two ReLUs
    remain on the VPU in f32.
    """
    x = x_ref[...]                                            # (TB, CHW) f32
    h = jnp.dot(x.astype(jnp.bfloat16), k1_ref[...],
                preferred_element_type=jnp.float32)
    h = jnp.maximum(h + b1_ref[...], 0.0)                     # bn1 bias + relu1
    y = jnp.dot(h.astype(jnp.bfloat16), k2_ref[...],
                preferred_element_type=jnp.float32)
    o_ref[...] = jnp.maximum(x + y + b2_ref[...], 0.0)        # bn2 bias + residual + relu2


# ------------------------------------------------------------------ wrapper

def resblock_forward(params, x_nchw, *, block_batch=256):
    """x_nchw: (B, filters, ROWS, COLS) f32 -> same shape (PyTorch layout)."""
    B, C, H, W = x_nchw.shape
    CHW = C * H * W

    # Native NCHW-flat layout: a true no-copy reshape, no transposes.
    x = x_nchw.reshape(B, CHW).astype(jnp.float32)

    TB = min(block_batch, _round_up(B, 8))
    steps = -(-B // TB)
    if steps > 1 and steps % 2 == 1:
        steps += 1                      # even step count balances v7x's 2 TensorCores
    Bp = steps * TB
    if Bp != B:
        x = jnp.pad(x, ((0, Bp - B), (0, 0)))

    out = pl.pallas_call(
        resblock_kernel,
        out_shape=jax.ShapeDtypeStruct((Bp, CHW), jnp.float32),
        grid_spec=pltpu.PrefetchScalarGridSpec(
            num_scalar_prefetch=0,
            grid=(steps,),
            in_specs=[
                pl.BlockSpec((TB, CHW), lambda i: (i, 0)),     # x tile
                pl.BlockSpec((CHW, CHW), lambda i: (0, 0)),    # K1*s1 (VMEM-resident)
                pl.BlockSpec((1, CHW), lambda i: (0, 0)),      # folded bias1
                pl.BlockSpec((CHW, CHW), lambda i: (0, 0)),    # K2*s2 (VMEM-resident)
                pl.BlockSpec((1, CHW), lambda i: (0, 0)),      # folded bias2
            ],
            out_specs=pl.BlockSpec((TB, CHW), lambda i: (i, 0)),
        ),
        compiler_params=pltpu.CompilerParams(
            dimension_semantics=("parallel",),
            vmem_limit_bytes=48 * 1024 * 1024,
        ),
    )(x, params["k1"], params["b1"], params["k2"], params["b2"])

    return out[:B].reshape(B, C, H, W)                         # no-copy reshape back


# ------------------------------------------------------------------ parameter prep

def conv3x3_same_as_dense_nchw(w_oihw, rows, cols):
    """(F, C, 3, 3) 'same' conv weight -> dense (C*H*W, F*H*W) operator in the
    native NCHW-flat ordering:
        y_flat[b, f*H*W + p*cols + q] = conv2d_same(x)[b, f, p, q]
        x_flat[b, c*H*W + i*cols + j] = x[b, c, i, j]          (no conv bias)."""
    w = np.asarray(w_oihw, np.float32)
    F, C = w.shape[:2]
    hw = rows * cols
    K4 = np.zeros((C, hw, F, hw), np.float32)
    for p in range(rows):
        for q in range(cols):
            for u in range(3):
                for v in range(3):
                    i, j = p + u - 1, q + v - 1
                    if 0 <= i < rows and 0 <= j < cols:
                        K4[:, i * cols + j, :, p * cols + q] = w[:, :, u, v].T
    return K4.reshape(C * hw, F * hw)


def pack_resblock_params(raw1, raw2, rows=ROWS, cols=COLS):
    """Densify the convs (NCHW-flat) and fold eval-mode BN + conv bias into them:
    the per-channel BN scale multiplies the operator columns; only a per-column
    bias vector remains."""
    hw = rows * cols

    def pack(raw):
        K = conv3x3_same_as_dense_nchw(raw["w"], rows, cols)
        gamma = np.asarray(raw["gamma"], np.float32)
        var = np.asarray(raw["var"], np.float32)
        mean = np.asarray(raw["mean"], np.float32)
        beta = np.asarray(raw["beta"], np.float32)
        b = np.asarray(raw["b"], np.float32)
        scale = gamma / np.sqrt(var + BN_EPS)                  # (F,)
        bias = (b - mean) * scale + beta                       # (F,)
        Ks = K * np.repeat(scale, hw)[None, :]                 # fold scale into columns
        return (jnp.asarray(Ks, jnp.bfloat16),
                jnp.asarray(np.repeat(bias, hw).reshape(1, -1), jnp.float32))

    k1, b1 = pack(raw1)
    k2, b2 = pack(raw2)
    return {"k1": k1, "b1": b1, "k2": k2, "b2": b2}


def _conv_bn_raw(key, filters):
    kw, kb, kg, kbe, km, kv = jax.random.split(key, 6)
    return {
        "w": 0.1 * jax.random.normal(kw, (filters, filters, 3, 3), jnp.float32),
        "b": 0.1 * jax.random.normal(kb, (filters,), jnp.float32),
        "gamma": 1.0 + 0.1 * jax.random.normal(kg, (filters,), jnp.float32),
        "beta": 0.1 * jax.random.normal(kbe, (filters,), jnp.float32),
        "mean": 0.1 * jax.random.normal(km, (filters,), jnp.float32),
        "var": 0.5 + jax.random.uniform(kv, (filters,), jnp.float32),
    }


# ------------------------------------------------------------------ pure-JAX reference

def _bn_eval(x, raw):
    inv = raw["gamma"] / jnp.sqrt(raw["var"] + BN_EPS)
    return (x - raw["mean"][None, :, None, None]) * inv[None, :, None, None] \
        + raw["beta"][None, :, None, None]


def resblock_ref(raw1, raw2, x_nchw):
    def conv(x, raw):
        y = jax.lax.conv_general_dilated(
            x, raw["w"], window_strides=(1, 1), padding="SAME",
            dimension_numbers=("NCHW", "OIHW", "NCHW"))
        return y + raw["b"][None, :, None, None]

    h = jax.nn.relu(_bn_eval(conv(x_nchw, raw1), raw1))
    y = _bn_eval(conv(h, raw2), raw2)
    return jax.nn.relu(x_nchw + y)


def _allclose(a, b, atol=0.15, rtol=0.02):
    return bool(jnp.all(jnp.abs(a - b) <= atol + rtol * jnp.abs(b)))


# ------------------------------------------------------------------ main

if __name__ == "__main__":
    filters = 32
    batch = 2

    root = jax.random.PRNGKey(0)
    k_in, k_c1, k_c2 = jax.random.split(root, 3)
    raw1 = _conv_bn_raw(k_c1, filters)
    raw2 = _conv_bn_raw(k_c2, filters)
    params = pack_resblock_params(raw1, raw2)

    x = jax.random.normal(k_in, (batch, filters, ROWS, COLS), jnp.float32)

    fwd = jax.jit(resblock_forward)
    out = jax.block_until_ready(fwd(params, x))
    assert out.shape == (batch, filters, ROWS, COLS)

    ref = jax.block_until_ready(resblock_ref(raw1, raw2, x))
    assert _allclose(out, ref), \
        f"max abs error {float(jnp.max(jnp.abs(out - ref)))}"   # bf16 matmul tolerance

    # Larger batch exercises the tiled grid path (TB=256, 'parallel' axis, padding).
    xb = jax.random.normal(jax.random.PRNGKey(1), (300, filters, ROWS, COLS), jnp.float32)
    outb = jax.block_until_ready(fwd(params, xb))
    refb = resblock_ref(raw1, raw2, xb)
    assert outb.shape == (300, filters, ROWS, COLS)
    assert _allclose(outb, refb), \
        f"max abs error {float(jnp.max(jnp.abs(outb - refb)))}"

    print("KERNEL_OK")
</pallas_src>

<mosaic_0001>
module attributes {stable_mosaic.version = 11 : i64} {
  func.func @resblock_kernel(%arg0: i32, %arg1: memref<8x1344xf32, #tpu.memory_space<vmem>>, %arg2: memref<1344x1344xbf16, #tpu.memory_space<vmem>>, %arg3: memref<1x1344xf32, #tpu.memory_space<vmem>>, %arg4: memref<1344x1344xbf16, #tpu.memory_space<vmem>>, %arg5: memref<1x1344xf32, #tpu.memory_space<vmem>>, %arg6: memref<8x1344xf32, #tpu.memory_space<vmem>>) attributes {dimension_semantics = [#tpu.dimension_semantics<parallel>], iteration_bounds = array<i64: 1>, scalar_prefetch = 0 : i64, scratch_operands = 0 : i64, tpu.core_type = #tpu.core_type<tc>, window_params = [{transform_indices = @transform_0, window_bounds = array<i64: 8, 1344>}, {pipeline_mode = #tpu.pipeline_mode<synchronous>, transform_indices = @transform_1, window_bounds = array<i64: 1344, 1344>}, {pipeline_mode = #tpu.pipeline_mode<synchronous>, transform_indices = @transform_2, window_bounds = array<i64: 1, 1344>}, {pipeline_mode = #tpu.pipeline_mode<synchronous>, transform_indices = @transform_3, window_bounds = array<i64: 1344, 1344>}, {pipeline_mode = #tpu.pipeline_mode<synchronous>, transform_indices = @transform_4, window_bounds = array<i64: 1, 1344>}, {transform_indices = @transform_5, window_bounds = array<i64: 8, 1344>}]} {
    %c0 = arith.constant 0 : index
    %c0_0 = arith.constant 0 : index
    %0 = vector.load %arg1[%c0, %c0_0] : memref<8x1344xf32, #tpu.memory_space<vmem>>, vector<8x1344xf32>
    %1 = arith.truncf %0 : vector<8x1344xf32> to vector<8x1344xbf16>
    %c0_1 = arith.constant 0 : index
    %c0_2 = arith.constant 0 : index
    %2 = vector.load %arg2[%c0_1, %c0_2] : memref<1344x1344xbf16, #tpu.memory_space<vmem>>, vector<1344x1344xbf16>
    %cst = arith.constant dense<0.000000e+00> : vector<8x1344xf32>
    %3 = tpu.matmul %1, %2, %cst {dimension_numbers = #tpu.dot_dimension_numbers<[1], [0], [0], [1], [0, 0, 1, 1], [], []>} : vector<8x1344xbf16>, vector<1344x1344xbf16>, vector<8x1344xf32> -> vector<8x1344xf32>
    %c0_3 = arith.constant 0 : index
    %c0_4 = arith.constant 0 : index
    %4 = vector.load %arg3[%c0_3, %c0_4] : memref<1x1344xf32, #tpu.memory_space<vmem>>, vector<1x1344xf32>
    %5 = vector.broadcast %4 : vector<1x1344xf32> to vector<8x1344xf32>
    %6 = arith.addf %3, %5 : vector<8x1344xf32>
    %cst_5 = arith.constant 0.000000e+00 : f32
    %7 = vector.broadcast %cst_5 : f32 to vector<8x1344xf32>
    %8 = arith.maximumf %6, %7 : vector<8x1344xf32>
    %9 = arith.truncf %8 : vector<8x1344xf32> to vector<8x1344xbf16>
    %c0_6 = arith.constant 0 : index
    %c0_7 = arith.constant 0 : index
    %10 = vector.load %arg4[%c0_6, %c0_7] : memref<1344x1344xbf16, #tpu.memory_space<vmem>>, vector<1344x1344xbf16>
    %cst_8 = arith.constant dense<0.000000e+00> : vector<8x1344xf32>
    %11 = tpu.matmul %9, %10, %cst_8 {dimension_numbers = #tpu.dot_dimension_numbers<[1], [0], [0], [1], [0, 0, 1, 1], [], []>} : vector<8x1344xbf16>, vector<1344x1344xbf16>, vector<8x1344xf32> -> vector<8x1344xf32>
    %12 = arith.addf %0, %11 : vector<8x1344xf32>
    %c0_9 = arith.constant 0 : index
    %c0_10 = arith.constant 0 : index
    %13 = vector.load %arg5[%c0_9, %c0_10] : memref<1x1344xf32, #tpu.memory_space<vmem>>, vector<1x1344xf32>
    %14 = vector.broadcast %13 : vector<1x1344xf32> to vector<8x1344xf32>
    %15 = arith.addf %12, %14 : vector<8x1344xf32>
    %cst_11 = arith.constant 0.000000e+00 : f32
    %16 = vector.broadcast %cst_11 : f32 to vector<8x1344xf32>
    %17 = arith.maximumf %15, %16 : vector<8x1344xf32>
    %c0_12 = arith.constant 0 : index
    %c0_13 = arith.constant 0 : index
    %18 = vector.load %arg6[%c0_12, %c0_13] : memref<8x1344xf32, #tpu.memory_space<vmem>>, vector<8x1344xf32>
    tpu.vector_store %arg6[%c0_12, %c0_13], %17 {strides = array<i32>} : memref<8x1344xf32, #tpu.memory_space<vmem>>, vector<8x1344xf32>,
    return
  }
  func.func @transform_0(%arg0: i32) -> (i32, i32) {
    %c0_i32 = arith.constant 0 : i32
    %c0_i32_0 = arith.constant 0 : i32
    return %arg0, %c0_i32 : i32, i32
  }
  func.func @transform_1(%arg0: i32) -> (i32, i32) {
    %c0_i32 = arith.constant 0 : i32
    %c0_i32_0 = arith.constant 0 : i32
    %c0_i32_1 = arith.constant 0 : i32
    return %c0_i32, %c0_i32_0 : i32, i32
  }
  func.func @transform_2(%arg0: i32) -> (i32, i32) {
    %c0_i32 = arith.constant 0 : i32
    %c0_i32_0 = arith.constant 0 : i32
    %c0_i32_1 = arith.constant 0 : i32
    return %c0_i32, %c0_i32_0 : i32, i32
  }
  func.func @transform_3(%arg0: i32) -> (i32, i32) {
    %c0_i32 = arith.constant 0 : i32
    %c0_i32_0 = arith.constant 0 : i32
    %c0_i32_1 = arith.constant 0 : i32
    return %c0_i32, %c0_i32_0 : i32, i32
  }
  func.func @transform_4(%arg0: i32) -> (i32, i32) {
    %c0_i32 = arith.constant 0 : i32
    %c0_i32_0 = arith.constant 0 : i32
    %c0_i32_1 = arith.constant 0 : i32
    return %c0_i32, %c0_i32_0 : i32, i32
  }
  func.func @transform_5(%arg0: i32) -> (i32, i32) {
    %c0_i32 = arith.constant 0 : i32
    %c0_i32_0 = arith.constant 0 : i32
    return %arg0, %c0_i32 : i32, i32
  }
}

</mosaic_0001>

<llo_original>
// kernel: resblock_forward.1
$region0: #{resblock_forward.1}
  #allocation0 [shape = 'u32[]', space=smem, size = 0x4, offset = 0x4, fixed_abs, tag = 'smem constant byte address 0x4 - core index']
  #allocation1 [shape = 'u32[144,128]{1,0:T(1,128)}', space=vmem, size = 0x12000, scoped, tag = 'internal scratch']
  %s0 = inlined_call_operand.vmem [shape: f32[8,1344], index: 0, kind: input, shape index: {}]
  %s1 = inlined_call_operand.hbm [shape: bf16[1344,1344], index: 1, kind: input, shape index: {}]
  %s2 = inlined_call_operand.hbm [shape: f32[1,1344], index: 2, kind: input, shape index: {}]
  %s3 = inlined_call_operand.hbm [shape: bf16[1344,1344], index: 3, kind: input, shape index: {}]
  %s4 = inlined_call_operand.hbm [shape: f32[1,1344], index: 4, kind: input, shape index: {}]
  %s5 = inlined_call_operand.vmem [shape: f32[8,1344], index: 5, kind: output, shape index: {}]
  %s6 = sld [smem:[#allocation0]]
  $region46: #{resblock_forward.1} parent=0
    _
  %s8 = ssub.s32 1, %s6
  %s9 = scalar_select 0, %s8, %s6
  $region1: #{resblock_forward.1} parent=0
    #allocation2 [shape = 'u8[3784704]{0}', space=vmem, size = 0x39c000, scoped, tag = 'input window, operand 1, single buffered']
    #allocation3 [shape = 's32[1]{0}', space=sflag, size = 0x4, scoped, tag = 'scoped memory for resblock_forward.1']
    #allocation4 [shape = 'u8[5632]{0}', space=vmem, size = 0x1800, scoped, tag = 'input window, operand 2, single buffered']
    #allocation5 [shape = 's32[1]{0}', space=sflag, size = 0x4, scoped, tag = 'scoped memory for resblock_forward.1']
    #allocation6 [shape = 'u8[3784704]{0}', space=vmem, size = 0x39c000, scoped, tag = 'input window, operand 3, single buffered']
    #allocation7 [shape = 'u8[5632]{0}', space=vmem, size = 0x1800, scoped, tag = 'input window, operand 4, single buffered']
    #allocation8 [shape = 's32[1]{0}', space=sflag, size = 0x4, scoped, tag = 'scoped memory for resblock_forward.1']
    %10 = vsyncpa [#allocation3], 0
    %11 = vsyncpa [#allocation5], 0
    %12 = vsyncpa [#allocation8], 0
    // Predicated region
    $region2: #{resblock_forward.1} parent=1 // pred_check
      _
    $region3: #{resblock_forward.1} parent=1 // pred_check_branch
      %14 = sbr.rel (0) target = $region5
    $region4: #{resblock_forward.1} parent=1 // pred_region
      _
    $region5: #{resblock_forward.1} parent=1 // pred_fallthru
      _
    // Predicated region
    $region6: #{resblock_forward.1} parent=1 // pred_check
      _
    $region7: #{resblock_forward.1} parent=1 // pred_check_branch
      %16 = sbr.rel (0) target = $region9
    $region8: #{resblock_forward.1} parent=1 // pred_region
      %s18 = ssub.s32 118272, 118272
      %19 = vsyncadd [#allocation3], %s18
      %s20 = sshll.u32 [#allocation2], 4
      %s21 = int_to_ptr.vmem [resolvable:$true] %s20
      %26 = dma.hbm_to_vmem [thread:$0]  %s1, 118272, %s21, [#allocation3], 704, 704, 44
    $region9: #{resblock_forward.1} parent=1 // pred_fallthru
      _
    // Predicated region
    $region10: #{resblock_forward.1} parent=1 // pred_check
      _
    $region11: #{resblock_forward.1} parent=1 // pred_check_branch
      %28 = sbr.rel (0) target = $region13
    $region12: #{resblock_forward.1} parent=1 // pred_region
      %s30 = ssub.s32 176, 176
      %31 = vsyncadd [#allocation5], %s30
      %s33 = sshll.u32 [#allocation4], 4
      %s34 = int_to_ptr.vmem [resolvable:$true] %s33
      %36 = dma.hbm_to_vmem [thread:$0]  %s2, 176, %s34, [#allocation5]
    $region13: #{resblock_forward.1} parent=1 // pred_fallthru
      _
    // Predicated region
    $region14: #{resblock_forward.1} parent=1 // pred_check
      _
    $region15: #{resblock_forward.1} parent=1 // pred_check_branch
      %38 = sbr.rel (0) target = $region17
    $region16: #{resblock_forward.1} parent=1 // pred_region
      %s40 = ssub.s32 118272, 118272
      %41 = vsyncadd [#allocation5], %s40
      %s42 = sshll.u32 [#allocation6], 4
      %s43 = int_to_ptr.vmem [resolvable:$true] %s42
      %48 = dma.hbm_to_vmem [thread:$0]  %s3, 118272, %s43, [#allocation5], 704, 704, 44
    $region17: #{resblock_forward.1} parent=1 // pred_fallthru
      _
    // Predicated region
    $region18: #{resblock_forward.1} parent=1 // pred_check
      _
    $region19: #{resblock_forward.1} parent=1 // pred_check_branch
      %50 = sbr.rel (0) target = $region21
    $region20: #{resblock_forward.1} parent=1 // pred_region
      %s52 = ssub.s32 176, 176
      %53 = vsyncadd [#allocation8], %s52
      %s55 = sshll.u32 [#allocation7], 4
      %s56 = int_to_ptr.vmem [resolvable:$true] %s55
      %58 = dma.hbm_to_vmem [thread:$0]  %s4, 176, %s56, [#allocation8]
    $region21: #{resblock_forward.1} parent=1 // pred_fallthru
      _
    // Predicated region
    $region22: #{resblock_forward.1} parent=1 // pred_check
      _
    $region23: #{resblock_forward.1} parent=1 // pred_check_branch
      %60 = sbr.rel (0) target = $region25
    $region24: #{resblock_forward.1} parent=1 // pred_region
      %61 = dma.done [#allocation3], 118272
    $region25: #{resblock_forward.1} parent=1 // pred_fallthru
      _
    // Predicated region
    $region26: #{resblock_forward.1} parent=1 // pred_check
      _
    $region27: #{resblock_forward.1} parent=1 // pred_check_branch
      %63 = sbr.rel (0) target = $region29
    $region28: #{resblock_forward.1} parent=1 // pred_region
      %64 = dma.done [#allocation5], 176
    $region29: #{resblock_forward.1} parent=1 // pred_fallthru
      _
    // Predicated region
    $region30: #{resblock_forward.1} parent=1 // pred_check
      _
    $region31: #{resblock_forward.1} parent=1 // pred_check_branch
      %66 = sbr.rel (0) target = $region33
    $region32: #{resblock_forward.1} parent=1 // pred_region
      %67 = dma.done [#allocation5], 118272
    $region33: #{resblock_forward.1} parent=1 // pred_fallthru
      _
    // Predicated region
    $region34: #{resblock_forward.1} parent=1 // pred_check
      _
    $region35: #{resblock_forward.1} parent=1 // pred_check_branch
      %69 = sbr.rel (0) target = $region37
    $region36: #{resblock_forward.1} parent=1 // pred_region
      %70 = dma.done [#allocation8], 176
    $region37: #{resblock_forward.1} parent=1 // pred_fallthru
      _
    %v72 = vld [vmem:[%s0] sm:$0xff]
    %v73 = vld [vmem:[%s0 + $0x8] sm:$0xff]
    %v74 = vld [vmem:[%s0 + $0x10] sm:$0xff]
    %v75 = vld [vmem:[%s0 + $0x18] sm:$0xff]
    %v76 = vld [vmem:[%s0 + $0x20] sm:$0xff]
    %v77 = vld [vmem:[%s0 + $0x28] sm:$0xff]
    %v78 = vld [vmem:[%s0 + $0x30] sm:$0xff]
    %v79 = vld [vmem:[%s0 + $0x38] sm:$0xff]
    %v80 = vld [vmem:[%s0 + $0x40] sm:$0xff]
    %v81 = vld [vmem:[%s0 + $0x48] sm:$0xff]
    %v82 = vld [vmem:[%s0 + $0x50] sm:$0xff]
    %v83 = vpack.c.bf16 %v72, %v72
    %v84 = vpack.c.bf16 %v73, %v73
    %v85 = vpack.c.bf16 %v74, %v74
    %v86 = vpack.c.bf16 %v75, %v75
    %v87 = vpack.c.bf16 %v76, %v76
    %v88 = vpack.c.bf16 %v77, %v77
    %v89 = vpack.c.bf16 %v78, %v78
    %v90 = vpack.c.bf16 %v79, %v79
    %v91 = vpack.c.bf16 %v80, %v80
    %v92 = vpack.c.bf16 %v81, %v81
    %v93 = vpack.c.bf16 %v82, %v82
    %v94 = vld [vmem:[#allocation2] sm:$0xff]
    %v95 = vld [vmem:[#allocation2 + $0x8] sm:$0xff]
    %v96 = vld [vmem:[#allocation2 + $0x10] sm:$0xff]
    %v97 = vld [vmem:[#allocation2 + $0x18] sm:$0xff]
    %v98 = vld [vmem:[#allocation2 + $0x20] sm:$0xff]
    %v99 = vld [vmem:[#allocation2 + $0x28] sm:$0xf]
    %v100 = vld [vmem:[#allocation2 + $0x2c] sm:$0xff]
    %v101 = vld [vmem:[#allocation2 + $0x34] sm:$0xff]
    %v102 = vld [vmem:[#allocation2 + $0x3c] sm:$0xff]
    %v103 = vld [vmem:[#allocation2 + $0x44] sm:$0xff]
    %v104 = vld [vmem:[#allocation2 + $0x4c] sm:$0xff]
    %v105 = vld [vmem:[#allocation2 + $0x54] sm:$0xf]
    %v106 = vld [vmem:[#allocation2 + $0x58] sm:$0xff]
    %v107 = vld [vmem:[#allocation2 + $0x60] sm:$0xff]
    %v108 = vld [vmem:[#allocation2 + $0x68] sm:$0xff]
    %v109 = vld [vmem:[#allocation2 + $0x70] sm:$0xff]
    %v110 = vld [vmem:[#allocation2 + $0x78] sm:$0xff]
    %v111 = vld [vmem:[#allocation2 + $0x80] sm:$0xf]
    %v112 = vld [vmem:[#allocation2 + $0x84] sm:$0xff]
    %v113 = vld [vmem:[#allocation2 + $0x8c] sm:$0xff]
    %v114 = vld [vmem:[#allocation2 + $0x94] sm:$0xff]
    %v115 = vld [vmem:[#allocation2 + $0x9c] sm:$0xff]
    %v116 = vld [vmem:[#allocation2 + $0xa4] sm:$0xff]
    %v117 = vld [vmem:[#allocation2 + $0xac] sm:$0xf]
    %v118 = vld [vmem:[#allocation2 + $0xb0] sm:$0xff]
    %v119 = vld [vmem:[#allocation2 + $0xb8] sm:$0xff]
    %v120 = vld [vmem:[#allocation2 + $0xc0] sm:$0xff]
    %v121 = vld [vmem:[#allocation2 + $0xc8] sm:$0xff]
    %v122 = vld [vmem:[#allocation2 + $0xd0] sm:$0xff]
    %v123 = vld [vmem:[#allocation2 + $0xd8] sm:$0xf]
    %v124 = vld [vmem:[#allocation2 + $0xdc] sm:$0xff]
    %v125 = vld [vmem:[#allocation2 + $0xe4] sm:$0xff]
    %v126 = vld [vmem:[#allocation2 + $0xec] sm:$0xff]
    %v127 = vld [vmem:[#allocation2 + $0xf4] sm:$0xff]
    %v128 = vld [vmem:[#allocation2 + $0xfc] sm:$0xff]
    %v129 = vld [vmem:[#allocation2 + $0x104] sm:$0xf]
    %v130 = vld [vmem:[#allocation2 + $0x108] sm:$0xff]
    %v131 = vld [vmem:[#allocation2 + $0x110] sm:$0xff]
    %v132 = vld [vmem:[#allocation2 + $0x118] sm:$0xff]
    %v133 = vld [vmem:[#allocation2 + $0x120] sm:$0xff]
    %v134 = vld [vmem:[#allocation2 + $0x128] sm:$0xff]
    %v135 = vld [vmem:[#allocation2 + $0x130] sm:$0xf]
    %v136 = vld [vmem:[#allocation2 + $0x134] sm:$0xff]
    %v137 = vld [vmem:[#allocation2 + $0x13c] sm:$0xff]
    %v138 = vld [vmem:[#allocation2 + $0x144] sm:$0xff]
    %v139 = vld [vmem:[#allocation2 + $0x14c] sm:$0xff]
    %v140 = vld [vmem:[#allocation2 + $0x154] sm:$0xff]
    %v141 = vld [vmem:[#allocation2 + $0x15c] sm:$0xf]
    %v142 = vld [vmem:[#allocation2 + $0x160] sm:$0xff]
    %v143 = vld [vmem:[#allocation2 + $0x168] sm:$0xff]
    %v144 = vld [vmem:[#allocation2 + $0x170] sm:$0xff]
    %v145 = vld [vmem:[#allocation2 + $0x178] sm:$0xff]
    %v146 = vld [vmem:[#allocation2 + $0x180] sm:$0xff]
    %v147 = vld [vmem:[#allocation2 + $0x188] sm:$0xf]
    %v148 = vld [vmem:[#allocation2 + $0x18c] sm:$0xff]
    %v149 = vld [vmem:[#allocation2 + $0x194] sm:$0xff]
    %v150 = vld [vmem:[#allocation2 + $0x19c] sm:$0xff]
    %v151 = vld [vmem:[#allocation2 + $0x1a4] sm:$0xff]
    %v152 = vld [vmem:[#allocation2 + $0x1ac] sm:$0xff]
    %v153 = vld [vmem:[#allocation2 + $0x1b4] sm:$0xf]
    %v154 = vld [vmem:[#allocation2 + $0x1b8] sm:$0xff]
    %v155 = vld [vmem:[#allocation2 + $0x1c0] sm:$0xff]
    %v156 = vld [vmem:[#allocation2 + $0x1c8] sm:$0xff]
    %v157 = vld [vmem:[#allocation2 + $0x1d0] sm:$0xff]
    %v158 = vld [vmem:[#allocation2 + $0x1d8] sm:$0xff]
    %v159 = vld [vmem:[#allocation2 + $0x1e0] sm:$0xf]
    %v160 = vld [vmem:[#allocation2 + $0x1e4] sm:$0xff]
    %v161 = vld [vmem:[#allocation2 + $0x1ec] sm:$0xff]
    %v162 = vld [vmem:[#allocation2 + $0x1f4] sm:$0xff]
    %v163 = vld [vmem:[#allocation2 + $0x1fc] sm:$0xff]
    %v164 = vld [vmem:[#allocation2 + $0x204] sm:$0xff]
    %v165 = vld [vmem:[#allocation2 + $0x20c] sm:$0xf]
    %v166 = vld [vmem:[#allocation2 + $0x210] sm:$0xff]
    %v167 = vld [vmem:[#allocation2 + $0x218] sm:$0xff]
    %v168 = vld [vmem:[#allocation2 + $0x220] sm:$0xff]
    %v169 = vld [vmem:[#allocation2 + $0x228] sm:$0xff]
    %v170 = vld [vmem:[#allocation2 + $0x230] sm:$0xff]
    %v171 = vld [vmem:[#allocation2 + $0x238] sm:$0xf]
    %v172 = vld [vmem:[#allocation2 + $0x23c] sm:$0xff]
    %v173 = vld [vmem:[#allocation2 + $0x244] sm:$0xff]
    %v174 = vld [vmem:[#allocation2 + $0x24c] sm:$0xff]
    %v175 = vld [vmem:[#allocation2 + $0x254] sm:$0xff]
    %v176 = vld [vmem:[#allocation2 + $0x25c] sm:$0xff]
    %v177 = vld [vmem:[#allocation2 + $0x264] sm:$0xf]
    %v178 = vld [vmem:[#allocation2 + $0x268] sm:$0xff]
    %v179 = vld [vmem:[#allocation2 + $0x270] sm:$0xff]
    %v180 = vld [vmem:[#allocation2 + $0x278] sm:$0xff]
    %v181 = vld [vmem:[#allocation2 + $0x280] sm:$0xff]
    %v182 = vld [vmem:[#allocation2 + $0x288] sm:$0xff]
    %v183 = vld [vmem:[#allocation2 + $0x290] sm:$0xf]
    %v184 = vld [vmem:[#allocation2 + $0x294] sm:$0xff]
    %v185 = vld [vmem:[#allocation2 + $0x29c] sm:$0xff]
    %v186 = vld [vmem:[#allocation2 + $0x2a4] sm:$0xff]
    %v187 = vld [vmem:[#allocation2 + $0x2ac] sm:$0xff]
    %v188 = vld [vmem:[#allocation2 + $0x2b4] sm:$0xff]
    %v189 = vld [vmem:[#allocation2 + $0x2bc] sm:$0xf]
    %v190 = vld [vmem:[#allocation2 + $0x2c0] sm:$0xff]
    %v191 = vld [vmem:[#allocation2 + $0x2c8] sm:$0xff]
    %v192 = vld [vmem:[#allocation2 + $0x2d0] sm:$0xff]
    %v193 = vld [vmem:[#allocation2 + $0x2d8] sm:$0xff]
    %v194 = vld [vmem:[#allocation2 + $0x2e0] sm:$0xff]
    %v195 = vld [vmem:[#allocation2 + $0x2e8] sm:$0xf]
    %v196 = vld [vmem:[#allocation2 + $0x2ec] sm:$0xff]
    %v197 = vld [vmem:[#allocation2 + $0x2f4] sm:$0xff]
    %v198 = vld [vmem:[#allocation2 + $0x2fc] sm:$0xff]
    %v199 = vld [vmem:[#allocation2 + $0x304] sm:$0xff]
    %v200 = vld [vmem:[#allocation2 + $0x30c] sm:$0xff]
    %v201 = vld [vmem:[#allocation2 + $0x314] sm:$0xf]
    %v202 = vld [vmem:[#allocation2 + $0x318] sm:$0xff]
    %v203 = vld [vmem:[#allocation2 + $0x320] sm:$0xff]
    %v204 = vld [vmem:[#allocation2 + $0x328] sm:$0xff]
    %v205 = vld [vmem:[#allocation2 + $0x330] sm:$0xff]
    %v206 = vld [vmem:[#allocation2 + $0x338] sm:$0xff]
    %v207 = vld [vmem:[#allocation2 + $0x340] sm:$0xf]
    %v208 = vld [vmem:[#allocation2 + $0x344] sm:$0xff]
    %v209 = vld [vmem:[#allocation2 + $0x34c] sm:$0xff]
    %v210 = vld [vmem:[#allocation2 + $0x354] sm:$0xff]
    %v211 = vld [vmem:[#allocation2 + $0x35c] sm:$0xff]
    %v212 = vld [vmem:[#allocation2 + $0x364] sm:$0xff]
    %v213 = vld [vmem:[#allocation2 + $0x36c] sm:$0xf]
    %v214 = vld [vmem:[#allocation2 + $0x370] sm:$0xff]
    %v215 = vld [vmem:[#allocation2 + $0x378] sm:$0xff]
    %v216 = vld [vmem:[#allocation2 + $0x380] sm:$0xff]
    %v217 = vld [vmem:[#allocation2 + $0x388] sm:$0xff]
    %v218 = vld [vmem:[#allocation2 + $0x390] sm:$0xff]
    %v219 = vld [vmem:[#allocation2 + $0x398] sm:$0xf]
    %v220 = vld [vmem:[#allocation2 + $0x39c] sm:$0xff]
    %v221 = vld [vmem:[#allocation2 + $0x3a4] sm:$0xff]
    %v222 = vld [vmem:[#allocation2 + $0x3ac] sm:$0xff]
    %v223 = vld [vmem:[#allocation2 + $0x3b4] sm:$0xff]
    %v224 = vld [vmem:[#allocation2 + $0x3bc] sm:$0xff]
    %v225 = vld [vmem:[#allocation2 + $0x3c4] sm:$0xf]
    %v226 = vld [vmem:[#allocation2 + $0x3c8] sm:$0xff]
    %v227 = vld [vmem:[#allocation2 + $0x3d0] sm:$0xff]
    %v228 = vld [vmem:[#allocation2 + $0x3d8] sm:$0xff]
    %v229 = vld [vmem:[#allocation2 + $0x3e0] sm:$0xff]
    %v230 = vld [vmem:[#allocation2 + $0x3e8] sm:$0xff]
    %v231 = vld [vmem:[#allocation2 + $0x3f0] sm:$0xf]
    %v232 = vld [vmem:[#allocation2 + $0x3f4] sm:$0xff]
    %v233 = vld [vmem:[#allocation2 + $0x3fc] sm:$0xff]
    %v234 = vld [vmem:[#allocation2 + $0x404] sm:$0xff]
    %v235 = vld [vmem:[#allocation2 + $0x40c] sm:$0xff]
    %v236 = vld [vmem:[#allocation2 + $0x414] sm:$0xff]
    %v237 = vld [vmem:[#allocation2 + $0x41c] sm:$0xf]
    %v238 = vld [vmem:[#allocation2 + $0x420] sm:$0xff]
    %v239 = vld [vmem:[#allocation2 + $0x428] sm:$0xff]
    %v240 = vld [vmem:[#allocation2 + $0x430] sm:$0xff]
    %v241 = vld [vmem:[#allocation2 + $0x438] sm:$0xff]
    %v242 = vld [vmem:[#allocation2 + $0x440] sm:$0xff]
    %v243 = vld [vmem:[#allocation2 + $0x448] sm:$0xf]
    %v244 = vld [vmem:[#allocation2 + $0x44c] sm:$0xff]
    %v245 = vld [vmem:[#allocation2 + $0x454] sm:$0xff]
    %v246 = vld [vmem:[#allocation2 + $0x45c] sm:$0xff]
    %v247 = vld [vmem:[#allocation2 + $0x464] sm:$0xff]
    %v248 = vld [vmem:[#allocation2 + $0x46c] sm:$0xff]
    %v249 = vld [vmem:[#allocation2 + $0x474] sm:$0xf]
    %v250 = vld [vmem:[#allocation2 + $0x478] sm:$0xff]
    %v251 = vld [vmem:[#allocation2 + $0x480] sm:$0xff]
    %v252 = vld [vmem:[#allocation2 + $0x488] sm:$0xff]
    %v253 = vld [vmem:[#allocation2 + $0x490] sm:$0xff]
    %v254 = vld [vmem:[#allocation2 + $0x498] sm:$0xff]
    %v255 = vld [vmem:[#allocation2 + $0x4a0] sm:$0xf]
    %v256 = vld [vmem:[#allocation2 + $0x4a4] sm:$0xff]
    %v257 = vld [vmem:[#allocation2 + $0x4ac] sm:$0xff]
    %v258 = vld [vmem:[#allocation2 + $0x4b4] sm:$0xff]
    %v259 = vld [vmem:[#allocation2 + $0x4bc] sm:$0xff]
    %v260 = vld [vmem:[#allocation2 + $0x4c4] sm:$0xff]
    %v261 = vld [vmem:[#allocation2 + $0x4cc] sm:$0xf]
    %v262 = vld [vmem:[#allocation2 + $0x4d0] sm:$0xff]
    %v263 = vld [vmem:[#allocation2 + $0x4d8] sm:$0xff]
    %v264 = vld [vmem:[#allocation2 + $0x4e0] sm:$0xff]
    %v265 = vld [vmem:[#allocation2 + $0x4e8] sm:$0xff]
    %v266 = vld [vmem:[#allocation2 + $0x4f0] sm:$0xff]
    %v267 = vld [vmem:[#allocation2 + $0x4f8] sm:$0xf]
    %v268 = vld [vmem:[#allocation2 + $0x4fc] sm:$0xff]
    %v269 = vld [vmem:[#allocation2 + $0x504] sm:$0xff]
    %v270 = vld [vmem:[#allocation2 + $0x50c] sm:$0xff]
    %v271 = vld [vmem:[#allocation2 + $0x514] sm:$0xff]
    %v272 = vld [vmem:[#allocation2 + $0x51c] sm:$0xff]
    %v273 = vld [vmem:[#allocation2 + $0x524] sm:$0xf]
    %v274 = vld [vmem:[#allocation2 + $0x528] sm:$0xff]
    %v275 = vld [vmem:[#allocation2 + $0x530] sm:$0xff]
    %v276 = vld [vmem:[#allocation2 + $0x538] sm:$0xff]
    %v277 = vld [vmem:[#allocation2 + $0x540] sm:$0xff]
    %v278 = vld [vmem:[#allocation2 + $0x548] sm:$0xff]
    %v279 = vld [vmem:[#allocation2 + $0x550] sm:$0xf]
    %v280 = vld [vmem:[#allocation2 + $0x554] sm:$0xff]
    %v281 = vld [vmem:[#allocation2 + $0x55c] sm:$0xff]
    %v282 = vld [vmem:[#allocation2 + $0x564] sm:$0xff]
    %v283 = vld [vmem:[#allocation2 + $0x56c] sm:$0xff]
    %v284 = vld [vmem:[#allocation2 + $0x574] sm:$0xff]
    %v285 = vld [vmem:[#allocation2 + $0x57c] sm:$0xf]
    %v286 = vld [vmem:[#allocation2 + $0x580] sm:$0xff]
    %v287 = vld [vmem:[#allocation2 + $0x588] sm:$0xff]
    %v288 = vld [vmem:[#allocation2 + $0x590] sm:$0xff]
    %v289 = vld [vmem:[#allocation2 + $0x598] sm:$0xff]
    %v290 = vld [vmem:[#allocation2 + $0x5a0] sm:$0xff]
    %v291 = vld [vmem:[#allocation2 + $0x5a8] sm:$0xf]
    %v292 = vld [vmem:[#allocation2 + $0x5ac] sm:$0xff]
    %v293 = vld [vmem:[#allocation2 + $0x5b4] sm:$0xff]
    %v294 = vld [vmem:[#allocation2 + $0x5bc] sm:$0xff]
    %v295 = vld [vmem:[#allocation2 + $0x5c4] sm:$0xff]
    %v296 = vld [vmem:[#allocation2 + $0x5cc] sm:$0xff]
    %v297 = vld [vmem:[#allocation2 + $0x5d4] sm:$0xf]
    %v298 = vld [vmem:[#allocation2 + $0x5d8] sm:$0xff]
    %v299 = vld [vmem:[#allocation2 + $0x5e0] sm:$0xff]
    %v300 = vld [vmem:[#allocation2 + $0x5e8] sm:$0xff]
    %v301 = vld [vmem:[#allocation2 + $0x5f0] sm:$0xff]
    %v302 = vld [vmem:[#allocation2 + $0x5f8] sm:$0xff]
    %v303 = vld [vmem:[#allocation2 + $0x600] sm:$0xf]
    %v304 = vld [vmem:[#allocation2 + $0x604] sm:$0xff]
    %v305 = vld [vmem:[#allocation2 + $0x60c] sm:$0xff]
    %v306 = vld [vmem:[#allocation2 + $0x614] sm:$0xff]
    %v307 = vld [vmem:[#allocation2 + $0x61c] sm:$0xff]
    %v308 = vld [vmem:[#allocation2 + $0x624] sm:$0xff]
    %v309 = vld [vmem:[#allocation2 + $0x62c] sm:$0xf]
    %v310 = vld [vmem:[#allocation2 + $0x630] sm:$0xff]
    %v311 = vld [vmem:[#allocation2 + $0x638] sm:$0xff]
    %v312 = vld [vmem:[#allocation2 + $0x640] sm:$0xff]
    %v313 = vld [vmem:[#allocation2 + $0x648] sm:$0xff]
    %v314 = vld [vmem:[#allocation2 + $0x650] sm:$0xff]
    %v315 = vld [vmem:[#allocation2 + $0x658] sm:$0xf]
    %v316 = vld [vmem:[#allocation2 + $0x65c] sm:$0xff]
    %v317 = vld [vmem:[#allocation2 + $0x664] sm:$0xff]
    %v318 = vld [vmem:[#allocation2 + $0x66c] sm:$0xff]
    %v319 = vld [vmem:[#allocation2 + $0x674] sm:$0xff]
    %v320 = vld [vmem:[#allocation2 + $0x67c] sm:$0xff]
    %v321 = vld [vmem:[#allocation2 + $0x684] sm:$0xf]
    %v322 = vld [vmem:[#allocation2 + $0x688] sm:$0xff]
    %v323 = vld [vmem:[#allocation2 + $0x690] sm:$0xff]
    %v324 = vld [vmem:[#allocation2 + $0x698] sm:$0xff]
    %v325 = vld [vmem:[#allocation2 + $0x6a0] sm:$0xff]
    %v326 = vld [vmem:[#allocation2 + $0x6a8] sm:$0xff]
    %v327 = vld [vmem:[#allocation2 + $0x6b0] sm:$0xf]
    %v328 = vld [vmem:[#allocation2 + $0x6b4] sm:$0xff]
    %v329 = vld [vmem:[#allocation2 + $0x6bc] sm:$0xff]
    %v330 = vld [vmem:[#allocation2 + $0x6c4] sm:$0xff]
    %v331 = vld [vmem:[#allocation2 + $0x6cc] sm:$0xff]
    %v332 = vld [vmem:[#allocation2 + $0x6d4] sm:$0xff]
    %v333 = vld [vmem:[#allocation2 + $0x6dc] sm:$0xf]
    %v334 = vld [vmem:[#allocation2 + $0x6e0] sm:$0xff]
    %v335 = vld [vmem:[#allocation2 + $0x6e8] sm:$0xff]
    %v336 = vld [vmem:[#allocation2 + $0x6f0] sm:$0xff]
    %v337 = vld [vmem:[#allocation2 + $0x6f8] sm:$0xff]
    %v338 = vld [vmem:[#allocation2 + $0x700] sm:$0xff]
    %v339 = vld [vmem:[#allocation2 + $0x708] sm:$0xf]
    %v340 = vld [vmem:[#allocation2 + $0x70c] sm:$0xff]
    %v341 = vld [vmem:[#allocation2 + $0x714] sm:$0xff]
    %v342 = vld [vmem:[#allocation2 + $0x71c] sm:$0xff]
    %v343 = vld [vmem:[#allocation2 + $0x724] sm:$0xff]
    %v344 = vld [vmem:[#allocation2 + $0x72c] sm:$0xff]
    %v345 = vld [vmem:[#allocation2 + $0x734] sm:$0xf]
    %v346 = vld [vmem:[#allocation2 + $0x738] sm:$0xff]
    %v347 = vld [vmem:[#allocation2 + $0x740] sm:$0xff]
    %v348 = vld [vmem:[#allocation2 + $0x748] sm:$0xff]
    %v349 = vld [vmem:[#allocation2 + $0x750] sm:$0xff]
    %v350 = vld [vmem:[#allocation2 + $0x758] sm:$0xff]
    %v351 = vld [vmem:[#allocation2 + $0x760] sm:$0xf]
    %v352 = vld [vmem:[#allocation2 + $0x764] sm:$0xff]
    %v353 = vld [vmem:[#allocation2 + $0x76c] sm:$0xff]
    %v354 = vld [vmem:[#allocation2 + $0x774] sm:$0xff]
    %v355 = vld [vmem:[#allocation2 + $0x77c] sm:$0xff]
    %v356 = vld [vmem:[#allocation2 + $0x784] sm:$0xff]
    %v357 = vld [vmem:[#allocation2 + $0x78c] sm:$0xf]
    %v358 = vld [vmem:[#allocation2 + $0x790] sm:$0xff]
    %v359 = vld [vmem:[#allocation2 + $0x798] sm:$0xff]
    %v360 = vld [vmem:[#allocation2 + $0x7a0] sm:$0xff]
    %v361 = vld [vmem:[#allocation2 + $0x7a8] sm:$0xff]
    %v362 = vld [vmem:[#allocation2 + $0x7b0] sm:$0xff]
    %v363 = vld [vmem:[#allocation2 + $0x7b8] sm:$0xf]
    %v364 = vld [vmem:[#allocation2 + $0x7bc] sm:$0xff]
    %v365 = vld [vmem:[#allocation2 + $0x7c4] sm:$0xff]
    %v366 = vld [vmem:[#allocation2 + $0x7cc] sm:$0xff]
    %v367 = vld [vmem:[#allocation2 + $0x7d4] sm:$0xff]
    %v368 = vld [vmem:[#allocation2 + $0x7dc] sm:$0xff]
    %v369 = vld [vmem:[#allocation2 + $0x7e4] sm:$0xf]
    %v370 = vld [vmem:[#allocation2 + $0x7e8] sm:$0xff]
    %v371 = vld [vmem:[#allocation2 + $0x7f0] sm:$0xff]
    %v372 = vld [vmem:[#allocation2 + $0x7f8] sm:$0xff]
    %v373 = vld [vmem:[#allocation2 + $0x800] sm:$0xff]
    %v374 = vld [vmem:[#allocation2 + $0x808] sm:$0xff]
    %v375 = vld [vmem:[#allocation2 + $0x810] sm:$0xf]
    %v376 = vld [vmem:[#allocation2 + $0x814] sm:$0xff]
    %v377 = vld [vmem:[#allocation2 + $0x81c] sm:$0xff]
    %v378 = vld [vmem:[#allocation2 + $0x824] sm:$0xff]
    %v379 = vld [vmem:[#allocation2 + $0x82c] sm:$0xff]
    %v380 = vld [vmem:[#allocation2 + $0x834] sm:$0xff]
    %v381 = vld [vmem:[#allocation2 + $0x83c] sm:$0xf]
    %v382 = vld [vmem:[#allocation2 + $0x840] sm:$0xff]
    %v383 = vld [vmem:[#allocation2 + $0x848] sm:$0xff]
    %v384 = vld [vmem:[#allocation2 + $0x850] sm:$0xff]
    %v385 = vld [vmem:[#allocation2 + $0x858] sm:$0xff]
    %v386 = vld [vmem:[#allocation2 + $0x860] sm:$0xff]
    %v387 = vld [vmem:[#allocation2 + $0x868] sm:$0xf]
    %v388 = vld [vmem:[#allocation2 + $0x86c] sm:$0xff]
    %v389 = vld [vmem:[#allocation2 + $0x874] sm:$0xff]
    %v390 = vld [vmem:[#allocation2 + $0x87c] sm:$0xff]
    %v391 = vld [vmem:[#allocation2 + $0x884] sm:$0xff]
    %v392 = vld [vmem:[#allocation2 + $0x88c] sm:$0xff]
    %v393 = vld [vmem:[#allocation2 + $0x894] sm:$0xf]
    %v394 = vld [vmem:[#allocation2 + $0x898] sm:$0xff]
    %v395 = vld [vmem:[#allocation2 + $0x8a0] sm:$0xff]
    %v396 = vld [vmem:[#allocation2 + $0x8a8] sm:$0xff]
    %v397 = vld [vmem:[#allocation2 + $0x8b0] sm:$0xff]
    %v398 = vld [vmem:[#allocation2 + $0x8b8] sm:$0xff]
    %v399 = vld [vmem:[#allocation2 + $0x8c0] sm:$0xf]
    %v400 = vld [vmem:[#allocation2 + $0x8c4] sm:$0xff]
    %v401 = vld [vmem:[#allocation2 + $0x8cc] sm:$0xff]
    %v402 = vld [vmem:[#allocation2 + $0x8d4] sm:$0xff]
    %v403 = vld [vmem:[#allocation2 + $0x8dc] sm:$0xff]
    %v404 = vld [vmem:[#allocation2 + $0x8e4] sm:$0xff]
    %v405 = vld [vmem:[#allocation2 + $0x8ec] sm:$0xf]
    %v406 = vld [vmem:[#allocation2 + $0x8f0] sm:$0xff]
    %v407 = vld [vmem:[#allocation2 + $0x8f8] sm:$0xff]
    %v408 = vld [vmem:[#allocation2 + $0x900] sm:$0xff]
    %v409 = vld [vmem:[#allocation2 + $0x908] sm:$0xff]
    %v410 = vld [vmem:[#allocation2 + $0x910] sm:$0xff]
    %v411 = vld [vmem:[#allocation2 + $0x918] sm:$0xf]
    %v412 = vld [vmem:[#allocation2 + $0x91c] sm:$0xff]
    %v413 = vld [vmem:[#allocation2 + $0x924] sm:$0xff]
    %v414 = vld [vmem:[#allocation2 + $0x92c] sm:$0xff]
    %v415 = vld [vmem:[#allocation2 + $0x934] sm:$0xff]
    %v416 = vld [vmem:[#allocation2 + $0x93c] sm:$0xff]
    %v417 = vld [vmem:[#allocation2 + $0x944] sm:$0xf]
    %v418 = vld [vmem:[#allocation2 + $0x948] sm:$0xff]
    %v419 = vld [vmem:[#allocation2 + $0x950] sm:$0xff]
    %v420 = vld [vmem:[#allocation2 + $0x958] sm:$0xff]
    %v421 = vld [vmem:[#allocation2 + $0x960] sm:$0xff]
    %v422 = vld [vmem:[#allocation2 + $0x968] sm:$0xff]
    %v423 = vld [vmem:[#allocation2 + $0x970] sm:$0xf]
    %v424 = vld [vmem:[#allocation2 + $0x974] sm:$0xff]
    %v425 = vld [vmem:[#allocation2 + $0x97c] sm:$0xff]
    %v426 = vld [vmem:[#allocation2 + $0x984] sm:$0xff]
    %v427 = vld [vmem:[#allocation2 + $0x98c] sm:$0xff]
    %v428 = vld [vmem:[#allocation2 + $0x994] sm:$0xff]
    %v429 = vld [vmem:[#allocation2 + $0x99c] sm:$0xf]
    %v430 = vld [vmem:[#allocation2 + $0x9a0] sm:$0xff]
    %v431 = vld [vmem:[#allocation2 + $0x9a8] sm:$0xff]
    %v432 = vld [vmem:[#allocation2 + $0x9b0] sm:$0xff]
    %v433 = vld [vmem:[#allocation2 + $0x9b8] sm:$0xff]
    %v434 = vld [vmem:[#allocation2 + $0x9c0] sm:$0xff]
    %v435 = vld [vmem:[#allocation2 + $0x9c8] sm:$0xf]
    %v436 = vld [vmem:[#allocation2 + $0x9cc] sm:$0xff]
    %v437 = vld [vmem:[#allocation2 + $0x9d4] sm:$0xff]
    %v438 = vld [vmem:[#allocation2 + $0x9dc] sm:$0xff]
    %v439 = vld [vmem:[#allocation2 + $0x9e4] sm:$0xff]
    %v440 = vld [vmem:[#allocation2 + $0x9ec] sm:$0xff]
    %v441 = vld [vmem:[#allocation2 + $0x9f4] sm:$0xf]
    %v442 = vld [vmem:[#allocation2 + $0x9f8] sm:$0xff]
    %v443 = vld [vmem:[#allocation2 + $0xa00] sm:$0xff]
    %v444 = vld [vmem:[#allocation2 + $0xa08] sm:$0xff]
    %v445 = vld [vmem:[#allocation2 + $0xa10] sm:$0xff]
    %v446 = vld [vmem:[#allocation2 + $0xa18] sm:$0xff]
    %v447 = vld [vmem:[#allocation2 + $0xa20] sm:$0xf]
    %v448 = vld [vmem:[#allocation2 + $0xa24] sm:$0xff]
    %v449 = vld [vmem:[#allocation2 + $0xa2c] sm:$0xff]
    %v450 = vld [vmem:[#allocation2 + $0xa34] sm:$0xff]
    %v451 = vld [vmem:[#allocation2 + $0xa3c] sm:$0xff]
    %v452 = vld [vmem:[#allocation2 + $0xa44] sm:$0xff]
    %v453 = vld [vmem:[#allocation2 + $0xa4c] sm:$0xf]
    %v454 = vld [vmem:[#allocation2 + $0xa50] sm:$0xff]
    %v455 = vld [vmem:[#allocation2 + $0xa58] sm:$0xff]
    %v456 = vld [vmem:[#allocation2 + $0xa60] sm:$0xff]
    %v457 = vld [vmem:[#allocation2 + $0xa68] sm:$0xff]
    %v458 = vld [vmem:[#allocation2 + $0xa70] sm:$0xff]
    %v459 = vld [vmem:[#allocation2 + $0xa78] sm:$0xf]
    %v460 = vld [vmem:[#allocation2 + $0xa7c] sm:$0xff]
    %v461 = vld [vmem:[#allocation2 + $0xa84] sm:$0xff]
    %v462 = vld [vmem:[#allocation2 + $0xa8c] sm:$0xff]
    %v463 = vld [vmem:[#allocation2 + $0xa94] sm:$0xff]
    %v464 = vld [vmem:[#allocation2 + $0xa9c] sm:$0xff]
    %v465 = vld [vmem:[#allocation2 + $0xaa4] sm:$0xf]
    %v466 = vld [vmem:[#allocation2 + $0xaa8] sm:$0xff]
    %v467 = vld [vmem:[#allocation2 + $0xab0] sm:$0xff]
    %v468 = vld [vmem:[#allocation2 + $0xab8] sm:$0xff]
    %v469 = vld [vmem:[#allocation2 + $0xac0] sm:$0xff]
    %v470 = vld [vmem:[#allocation2 + $0xac8] sm:$0xff]
    %v471 = vld [vmem:[#allocation2 + $0xad0] sm:$0xf]
    %v472 = vld [vmem:[#allocation2 + $0xad4] sm:$0xff]
    %v473 = vld [vmem:[#allocation2 + $0xadc] sm:$0xff]
    %v474 = vld [vmem:[#allocation2 + $0xae4] sm:$0xff]
    %v475 = vld [vmem:[#allocation2 + $0xaec] sm:$0xff]
    %v476 = vld [vmem:[#allocation2 + $0xaf4] sm:$0xff]
    %v477 = vld [vmem:[#allocation2 + $0xafc] sm:$0xf]
    %v478 = vld [vmem:[#allocation2 + $0xb00] sm:$0xff]
    %v479 = vld [vmem:[#allocation2 + $0xb08] sm:$0xff]
    %v480 = vld [vmem:[#allocation2 + $0xb10] sm:$0xff]
    %v481 = vld [vmem:[#allocation2 + $0xb18] sm:$0xff]
    %v482 = vld [vmem:[#allocation2 + $0xb20] sm:$0xff]
    %v483 = vld [vmem:[#allocation2 + $0xb28] sm:$0xf]
    %v484 = vld [vmem:[#allocation2 + $0xb2c] sm:$0xff]
    %v485 = vld [vmem:[#allocation2 + $0xb34] sm:$0xff]
    %v486 = vld [vmem:[#allocation2 + $0xb3c] sm:$0xff]
    %v487 = vld [vmem:[#allocation2 + $0xb44] sm:$0xff]
    %v488 = vld [vmem:[#allocation2 + $0xb4c] sm:$0xff]
    %v489 = vld [vmem:[#allocation2 + $0xb54] sm:$0xf]
    %v490 = vld [vmem:[#allocation2 + $0xb58] sm:$0xff]
    %v491 = vld [vmem:[#allocation2 + $0xb60] sm:$0xff]
    %v492 = vld [vmem:[#allocation2 + $0xb68] sm:$0xff]
    %v493 = vld [vmem:[#allocation2 + $0xb70] sm:$0xff]
    %v494 = vld [vmem:[#allocation2 + $0xb78] sm:$0xff]
    %v495 = vld [vmem:[#allocation2 + $0xb80] sm:$0xf]
    %v496 = vld [vmem:[#allocation2 + $0xb84] sm:$0xff]
    %v497 = vld [vmem:[#allocation2 + $0xb8c] sm:$0xff]
    %v498 = vld [vmem:[#allocation2 + $0xb94] sm:$0xff]
    %v499 = vld [vmem:[#allocation2 + $0xb9c] sm:$0xff]
    %v500 = vld [vmem:[#allocation2 + $0xba4] sm:$0xff]
    %v501 = vld [vmem:[#allocation2 + $0xbac] sm:$0xf]
    %v502 = vld [vmem:[#allocation2 + $0xbb0] sm:$0xff]
    %v503 = vld [vmem:[#allocation2 + $0xbb8] sm:$0xff]
    %v504 = vld [vmem:[#allocation2 + $0xbc0] sm:$0xff]
    %v505 = vld [vmem:[#allocation2 + $0xbc8] sm:$0xff]
    %v506 = vld [vmem:[#allocation2 + $0xbd0] sm:$0xff]
    %v507 = vld [vmem:[#allocation2 + $0xbd8] sm:$0xf]
    %v508 = vld [vmem:[#allocation2 + $0xbdc] sm:$0xff]
    %v509 = vld [vmem:[#allocation2 + $0xbe4] sm:$0xff]
    %v510 = vld [vmem:[#allocation2 + $0xbec] sm:$0xff]
    %v511 = vld [vmem:[#allocation2 + $0xbf4] sm:$0xff]
    %v512 = vld [vmem:[#allocation2 + $0xbfc] sm:$0xff]
    %v513 = vld [vmem:[#allocation2 + $0xc04] sm:$0xf]
    %v514 = vld [vmem:[#allocation2 + $0xc08] sm:$0xff]
    %v515 = vld [vmem:[#allocation2 + $0xc10] sm:$0xff]
    %v516 = vld [vmem:[#allocation2 + $0xc18] sm:$0xff]
    %v517 = vld [vmem:[#allocation2 + $0xc20] sm:$0xff]
    %v518 = vld [vmem:[#allocation2 + $0xc28] sm:$0xff]
    %v519 = vld [vmem:[#allocation2 + $0xc30] sm:$0xf]
    %v520 = vld [vmem:[#allocation2 + $0xc34] sm:$0xff]
    %v521 = vld [vmem:[#allocation2 + $0xc3c] sm:$0xff]
    %v522 = vld [vmem:[#allocation2 + $0xc44] sm:$0xff]
    %v523 = vld [vmem:[#allocation2 + $0xc4c] sm:$0xff]
    %v524 = vld [vmem:[#allocation2 + $0xc54] sm:$0xff]
    %v525 = vld [vmem:[#allocation2 + $0xc5c] sm:$0xf]
    %v526 = vld [vmem:[#allocation2 + $0xc60] sm:$0xff]
    %v527 = vld [vmem:[#allocation2 + $0xc68] sm:$0xff]
    %v528 = vld [vmem:[#allocation2 + $0xc70] sm:$0xff]
    %v529 = vld [vmem:[#allocation2 + $0xc78] sm:$0xff]
    %v530 = vld [vmem:[#allocation2 + $0xc80] sm:$0xff]
    %v531 = vld [vmem:[#allocation2 + $0xc88] sm:$0xf]
    %v532 = vld [vmem:[#allocation2 + $0xc8c] sm:$0xff]
    %v533 = vld [vmem:[#allocation2 + $0xc94] sm:$0xff]
    %v534 = vld [vmem:[#allocation2 + $0xc9c] sm:$0xff]
    %v535 = vld [vmem:[#allocation2 + $0xca4] sm:$0xff]
    %v536 = vld [vmem:[#allocation2 + $0xcac] sm:$0xff]
    %v537 = vld [vmem:[#allocation2 + $0xcb4] sm:$0xf]
    %v538 = vld [vmem:[#allocation2 + $0xcb8] sm:$0xff]
    %v539 = vld [vmem:[#allocation2 + $0xcc0] sm:$0xff]
    %v540 = vld [vmem:[#allocation2 + $0xcc8] sm:$0xff]
    %v541 = vld [vmem:[#allocation2 + $0xcd0] sm:$0xff]
    %v542 = vld [vmem:[#allocation2 + $0xcd8] sm:$0xff]
    %v543 = vld [vmem:[#allocation2 + $0xce0] sm:$0xf]
    %v544 = vld [vmem:[#allocation2 + $0xce4] sm:$0xff]
    %v545 = vld [vmem:[#allocation2 + $0xcec] sm:$0xff]
    %v546 = vld [vmem:[#allocation2 + $0xcf4] sm:$0xff]
    %v547 = vld [vmem:[#allocation2 + $0xcfc] sm:$0xff]
    %v548 = vld [vmem:[#allocation2 + $0xd04] sm:$0xff]
    %v549 = vld [vmem:[#allocation2 + $0xd0c] sm:$0xf]
    %v550 = vld [vmem:[#allocation2 + $0xd10] sm:$0xff]
    %v551 = vld [vmem:[#allocation2 + $0xd18] sm:$0xff]
    %v552 = vld [vmem:[#allocation2 + $0xd20] sm:$0xff]
    %v553 = vld [vmem:[#allocation2 + $0xd28] sm:$0xff]
    %v554 = vld [vmem:[#allocation2 + $0xd30] sm:$0xff]
    %v555 = vld [vmem:[#allocation2 + $0xd38] sm:$0xf]
    %v556 = vld [vmem:[#allocation2 + $0xd3c] sm:$0xff]
    %v557 = vld [vmem:[#allocation2 + $0xd44] sm:$0xff]
    %v558 = vld [vmem:[#allocation2 + $0xd4c] sm:$0xff]
    %v559 = vld [vmem:[#allocation2 + $0xd54] sm:$0xff]
    %v560 = vld [vmem:[#allocation2 + $0xd5c] sm:$0xff]
    %v561 = vld [vmem:[#allocation2 + $0xd64] sm:$0xf]
    %v562 = vld [vmem:[#allocation2 + $0xd68] sm:$0xff]
    %v563 = vld [vmem:[#allocation2 + $0xd70] sm:$0xff]
    %v564 = vld [vmem:[#allocation2 + $0xd78] sm:$0xff]
    %v565 = vld [vmem:[#allocation2 + $0xd80] sm:$0xff]
    %v566 = vld [vmem:[#allocation2 + $0xd88] sm:$0xff]
    %v567 = vld [vmem:[#allocation2 + $0xd90] sm:$0xf]
    %v568 = vld [vmem:[#allocation2 + $0xd94] sm:$0xff]
    %v569 = vld [vmem:[#allocation2 + $0xd9c] sm:$0xff]
    %v570 = vld [vmem:[#allocation2 + $0xda4] sm:$0xff]
    %v571 = vld [vmem:[#allocation2 + $0xdac] sm:$0xff]
    %v572 = vld [vmem:[#allocation2 + $0xdb4] sm:$0xff]
    %v573 = vld [vmem:[#allocation2 + $0xdbc] sm:$0xf]
    %v574 = vld [vmem:[#allocation2 + $0xdc0] sm:$0xff]
    %v575 = vld [vmem:[#allocation2 + $0xdc8] sm:$0xff]
    %v576 = vld [vmem:[#allocation2 + $0xdd0] sm:$0xff]
    %v577 = vld [vmem:[#allocation2 + $0xdd8] sm:$0xff]
    %v578 = vld [vmem:[#allocation2 + $0xde0] sm:$0xff]
    %v579 = vld [vmem:[#allocation2 + $0xde8] sm:$0xf]
    %v580 = vld [vmem:[#allocation2 + $0xdec] sm:$0xff]
    %v581 = vld [vmem:[#allocation2 + $0xdf4] sm:$0xff]
    %v582 = vld [vmem:[#allocation2 + $0xdfc] sm:$0xff]
    %v583 = vld [vmem:[#allocation2 + $0xe04] sm:$0xff]
    %v584 = vld [vmem:[#allocation2 + $0xe0c] sm:$0xff]
    %v585 = vld [vmem:[#allocation2 + $0xe14] sm:$0xf]
    %v586 = vld [vmem:[#allocation2 + $0xe18] sm:$0xff]
    %v587 = vld [vmem:[#allocation2 + $0xe20] sm:$0xff]
    %v588 = vld [vmem:[#allocation2 + $0xe28] sm:$0xff]
    %v589 = vld [vmem:[#allocation2 + $0xe30] sm:$0xff]
    %v590 = vld [vmem:[#allocation2 + $0xe38] sm:$0xff]
    %v591 = vld [vmem:[#allocation2 + $0xe40] sm:$0xf]
    %v592 = vld [vmem:[#allocation2 + $0xe44] sm:$0xff]
    %v593 = vld [vmem:[#allocation2 + $0xe4c] sm:$0xff]
    %v594 = vld [vmem:[#allocation2 + $0xe54] sm:$0xff]
    %v595 = vld [vmem:[#allocation2 + $0xe5c] sm:$0xff]
    %v596 = vld [vmem:[#allocation2 + $0xe64] sm:$0xff]
    %v597 = vld [vmem:[#allocation2 + $0xe6c] sm:$0xf]
    %v598 = vld [vmem:[#allocation2 + $0xe70] sm:$0xff]
    %v599 = vld [vmem:[#allocation2 + $0xe78] sm:$0xff]
    %v600 = vld [vmem:[#allocation2 + $0xe80] sm:$0xff]
    %v601 = vld [vmem:[#allocation2 + $0xe88] sm:$0xff]
    %v602 = vld [vmem:[#allocation2 + $0xe90] sm:$0xff]
    %v603 = vld [vmem:[#allocation2 + $0xe98] sm:$0xf]
    %v604 = vld [vmem:[#allocation2 + $0xe9c] sm:$0xff]
    %v605 = vld [vmem:[#allocation2 + $0xea4] sm:$0xff]
    %v606 = vld [vmem:[#allocation2 + $0xeac] sm:$0xff]
    %v607 = vld [vmem:[#allocation2 + $0xeb4] sm:$0xff]
    %v608 = vld [vmem:[#allocation2 + $0xebc] sm:$0xff]
    %v609 = vld [vmem:[#allocation2 + $0xec4] sm:$0xf]
    %v610 = vld [vmem:[#allocation2 + $0xec8] sm:$0xff]
    %v611 = vld [vmem:[#allocation2 + $0xed0] sm:$0xff]
    %v612 = vld [vmem:[#allocation2 + $0xed8] sm:$0xff]
    %v613 = vld [vmem:[#allocation2 + $0xee0] sm:$0xff]
    %v614 = vld [vmem:[#allocation2 + $0xee8] sm:$0xff]
    %v615 = vld [vmem:[#allocation2 + $0xef0] sm:$0xf]
    %v616 = vld [vmem:[#allocation2 + $0xef4] sm:$0xff]
    %v617 = vld [vmem:[#allocation2 + $0xefc] sm:$0xff]
    %v618 = vld [vmem:[#allocation2 + $0xf04] sm:$0xff]
    %v619 = vld [vmem:[#allocation2 + $0xf0c] sm:$0xff]
    %v620 = vld [vmem:[#allocation2 + $0xf14] sm:$0xff]
    %v621 = vld [vmem:[#allocation2 + $0xf1c] sm:$0xf]
    %v622 = vld [vmem:[#allocation2 + $0xf20] sm:$0xff]
    %v623 = vld [vmem:[#allocation2 + $0xf28] sm:$0xff]
    %v624 = vld [vmem:[#allocation2 + $0xf30] sm:$0xff]
    %v625 = vld [vmem:[#allocation2 + $0xf38] sm:$0xff]
    %v626 = vld [vmem:[#allocation2 + $0xf40] sm:$0xff]
    %v627 = vld [vmem:[#allocation2 + $0xf48] sm:$0xf]
    %v628 = vld [vmem:[#allocation2 + $0xf4c] sm:$0xff]
    %v629 = vld [vmem:[#allocation2 + $0xf54] sm:$0xff]
    %v630 = vld [vmem:[#allocation2 + $0xf5c] sm:$0xff]
    %v631 = vld [vmem:[#allocation2 + $0xf64] sm:$0xff]
    %v632 = vld [vmem:[#allocation2 + $0xf6c] sm:$0xff]
    %v633 = vld [vmem:[#allocation2 + $0xf74] sm:$0xf]
    %v634 = vld [vmem:[#allocation2 + $0xf78] sm:$0xff]
    %v635 = vld [vmem:[#allocation2 + $0xf80] sm:$0xff]
    %v636 = vld [vmem:[#allocation2 + $0xf88] sm:$0xff]
    %v637 = vld [vmem:[#allocation2 + $0xf90] sm:$0xff]
    %v638 = vld [vmem:[#allocation2 + $0xf98] sm:$0xff]
    %v639 = vld [vmem:[#allocation2 + $0xfa0] sm:$0xf]
    %v640 = vld [vmem:[#allocation2 + $0xfa4] sm:$0xff]
    %v641 = vld [vmem:[#allocation2 + $0xfac] sm:$0xff]
    %v642 = vld [vmem:[#allocation2 + $0xfb4] sm:$0xff]
    %v643 = vld [vmem:[#allocation2 + $0xfbc] sm:$0xff]
    %v644 = vld [vmem:[#allocation2 + $0xfc4] sm:$0xff]
    %v645 = vld [vmem:[#allocation2 + $0xfcc] sm:$0xf]
    %v646 = vld [vmem:[#allocation2 + $0xfd0] sm:$0xff]
    %v647 = vld [vmem:[#allocation2 + $0xfd8] sm:$0xff]
    %v648 = vld [vmem:[#allocation2 + $0xfe0] sm:$0xff]
    %v649 = vld [vmem:[#allocation2 + $0xfe8] sm:$0xff]
    %v650 = vld [vmem:[#allocation2 + $0xff0] sm:$0xff]
    %v651 = vld [vmem:[#allocation2 + $0xff8] sm:$0xf]
    %v652 = vld [vmem:[#allocation2 + $0xffc] sm:$0xff]
    %v653 = vld [vmem:[#allocation2 + $0x1004] sm:$0xff]
    %v654 = vld [vmem:[#allocation2 + $0x100c] sm:$0xff]
    %v655 = vld [vmem:[#allocation2 + $0x1014] sm:$0xff]
    %v656 = vld [vmem:[#allocation2 + $0x101c] sm:$0xff]
    %v657 = vld [vmem:[#allocation2 + $0x1024] sm:$0xf]
    %v658 = vld [vmem:[#allocation2 + $0x1028] sm:$0xff]
    %v659 = vld [vmem:[#allocation2 + $0x1030] sm:$0xff]
    %v660 = vld [vmem:[#allocation2 + $0x1038] sm:$0xff]
    %v661 = vld [vmem:[#allocation2 + $0x1040] sm:$0xff]
    %v662 = vld [vmem:[#allocation2 + $0x1048] sm:$0xff]
    %v663 = vld [vmem:[#allocation2 + $0x1050] sm:$0xf]
    %v664 = vld [vmem:[#allocation2 + $0x1054] sm:$0xff]
    %v665 = vld [vmem:[#allocation2 + $0x105c] sm:$0xff]
    %v666 = vld [vmem:[#allocation2 + $0x1064] sm:$0xff]
    %v667 = vld [vmem:[#allocation2 + $0x106c] sm:$0xff]
    %v668 = vld [vmem:[#allocation2 + $0x1074] sm:$0xff]
    %v669 = vld [vmem:[#allocation2 + $0x107c] sm:$0xf]
    %v670 = vld [vmem:[#allocation2 + $0x1080] sm:$0xff]
    %v671 = vld [vmem:[#allocation2 + $0x1088] sm:$0xff]
    %v672 = vld [vmem:[#allocation2 + $0x1090] sm:$0xff]
    %v673 = vld [vmem:[#allocation2 + $0x1098] sm:$0xff]
    %v674 = vld [vmem:[#allocation2 + $0x10a0] sm:$0xff]
    %v675 = vld [vmem:[#allocation2 + $0x10a8] sm:$0xf]
    %v676 = vld [vmem:[#allocation2 + $0x10ac] sm:$0xff]
    %v677 = vld [vmem:[#allocation2 + $0x10b4] sm:$0xff]
    %v678 = vld [vmem:[#allocation2 + $0x10bc] sm:$0xff]
    %v679 = vld [vmem:[#allocation2 + $0x10c4] sm:$0xff]
    %v680 = vld [vmem:[#allocation2 + $0x10cc] sm:$0xff]
    %v681 = vld [vmem:[#allocation2 + $0x10d4] sm:$0xf]
    %v682 = vld [vmem:[#allocation2 + $0x10d8] sm:$0xff]
    %v683 = vld [vmem:[#allocation2 + $0x10e0] sm:$0xff]
    %v684 = vld [vmem:[#allocation2 + $0x10e8] sm:$0xff]
    %v685 = vld [vmem:[#allocation2 + $0x10f0] sm:$0xff]
    %v686 = vld [vmem:[#allocation2 + $0x10f8] sm:$0xff]
    %v687 = vld [vmem:[#allocation2 + $0x1100] sm:$0xf]
    %v688 = vld [vmem:[#allocation2 + $0x1104] sm:$0xff]
    %v689 = vld [vmem:[#allocation2 + $0x110c] sm:$0xff]
    %v690 = vld [vmem:[#allocation2 + $0x1114] sm:$0xff]
    %v691 = vld [vmem:[#allocation2 + $0x111c] sm:$0xff]
    %v692 = vld [vmem:[#allocation2 + $0x1124] sm:$0xff]
    %v693 = vld [vmem:[#allocation2 + $0x112c] sm:$0xf]
    %v694 = vld [vmem:[#allocation2 + $0x1130] sm:$0xff]
    %v695 = vld [vmem:[#allocation2 + $0x1138] sm:$0xff]
    %v696 = vld [vmem:[#allocation2 + $0x1140] sm:$0xff]
    %v697 = vld [vmem:[#allocation2 + $0x1148] sm:$0xff]
    %v698 = vld [vmem:[#allocation2 + $0x1150] sm:$0xff]
    %v699 = vld [vmem:[#allocation2 + $0x1158] sm:$0xf]
    %v700 = vld [vmem:[#allocation2 + $0x115c] sm:$0xff]
    %v701 = vld [vmem:[#allocation2 + $0x1164] sm:$0xff]
    %v702 = vld [vmem:[#allocation2 + $0x116c] sm:$0xff]
    %v703 = vld [vmem:[#allocation2 + $0x1174] sm:$0xff]
    %v704 = vld [vmem:[#allocation2 + $0x117c] sm:$0xff]
    %v705 = vld [vmem:[#allocation2 + $0x1184] sm:$0xf]
    %v706 = vld [vmem:[#allocation2 + $0x1188] sm:$0xff]
    %v707 = vld [vmem:[#allocation2 + $0x1190] sm:$0xff]
    %v708 = vld [vmem:[#allocation2 + $0x1198] sm:$0xff]
    %v709 = vld [vmem:[#allocation2 + $0x11a0] sm:$0xff]
    %v710 = vld [vmem:[#allocation2 + $0x11a8] sm:$0xff]
    %v711 = vld [vmem:[#allocation2 + $0x11b0] sm:$0xf]
    %v712 = vld [vmem:[#allocation2 + $0x11b4] sm:$0xff]
    %v713 = vld [vmem:[#allocation2 + $0x11bc] sm:$0xff]
    %v714 = vld [vmem:[#allocation2 + $0x11c4] sm:$0xff]
    %v715 = vld [vmem:[#allocation2 + $0x11cc] sm:$0xff]
    %v716 = vld [vmem:[#allocation2 + $0x11d4] sm:$0xff]
    %v717 = vld [vmem:[#allocation2 + $0x11dc] sm:$0xf]
    %v718 = vld [vmem:[#allocation2 + $0x11e0] sm:$0xff]
    %v719 = vld [vmem:[#allocation2 + $0x11e8] sm:$0xff]
    %v720 = vld [vmem:[#allocation2 + $0x11f0] sm:$0xff]
    %v721 = vld [vmem:[#allocation2 + $0x11f8] sm:$0xff]
    %v722 = vld [vmem:[#allocation2 + $0x1200] sm:$0xff]
    %v723 = vld [vmem:[#allocation2 + $0x1208] sm:$0xf]
    %v724 = vld [vmem:[#allocation2 + $0x120c] sm:$0xff]
    %v725 = vld [vmem:[#allocation2 + $0x1214] sm:$0xff]
    %v726 = vld [vmem:[#allocation2 + $0x121c] sm:$0xff]
    %v727 = vld [vmem:[#allocation2 + $0x1224] sm:$0xff]
    %v728 = vld [vmem:[#allocation2 + $0x122c] sm:$0xff]
    %v729 = vld [vmem:[#allocation2 + $0x1234] sm:$0xf]
    %v730 = vld [vmem:[#allocation2 + $0x1238] sm:$0xff]
    %v731 = vld [vmem:[#allocation2 + $0x1240] sm:$0xff]
    %v732 = vld [vmem:[#allocation2 + $0x1248] sm:$0xff]
    %v733 = vld [vmem:[#allocation2 + $0x1250] sm:$0xff]
    %v734 = vld [vmem:[#allocation2 + $0x1258] sm:$0xff]
    %v735 = vld [vmem:[#allocation2 + $0x1260] sm:$0xf]
    %v736 = vld [vmem:[#allocation2 + $0x1264] sm:$0xff]
    %v737 = vld [vmem:[#allocation2 + $0x126c] sm:$0xff]
    %v738 = vld [vmem:[#allocation2 + $0x1274] sm:$0xff]
    %v739 = vld [vmem:[#allocation2 + $0x127c] sm:$0xff]
    %v740 = vld [vmem:[#allocation2 + $0x1284] sm:$0xff]
    %v741 = vld [vmem:[#allocation2 + $0x128c] sm:$0xf]
    %v742 = vld [vmem:[#allocation2 + $0x1290] sm:$0xff]
    %v743 = vld [vmem:[#allocation2 + $0x1298] sm:$0xff]
    %v744 = vld [vmem:[#allocation2 + $0x12a0] sm:$0xff]
    %v745 = vld [vmem:[#allocation2 + $0x12a8] sm:$0xff]
    %v746 = vld [vmem:[#allocation2 + $0x12b0] sm:$0xff]
    %v747 = vld [vmem:[#allocation2 + $0x12b8] sm:$0xf]
    %v748 = vld [vmem:[#allocation2 + $0x12bc] sm:$0xff]
    %v749 = vld [vmem:[#allocation2 + $0x12c4] sm:$0xff]
    %v750 = vld [vmem:[#allocation2 + $0x12cc] sm:$0xff]
    %v751 = vld [vmem:[#allocation2 + $0x12d4] sm:$0xff]
    %v752 = vld [vmem:[#allocation2 + $0x12dc] sm:$0xff]
    %v753 = vld [vmem:[#allocation2 + $0x12e4] sm:$0xf]
    %v754 = vld [vmem:[#allocation2 + $0x12e8] sm:$0xff]
    %v755 = vld [vmem:[#allocation2 + $0x12f0] sm:$0xff]
    %v756 = vld [vmem:[#allocation2 + $0x12f8] sm:$0xff]
    %v757 = vld [vmem:[#allocation2 + $0x1300] sm:$0xff]
    %v758 = vld [vmem:[#allocation2 + $0x1308] sm:$0xff]
    %v759 = vld [vmem:[#allocation2 + $0x1310] sm:$0xf]
    %v760 = vld [vmem:[#allocation2 + $0x1314] sm:$0xff]
    %v761 = vld [vmem:[#allocation2 + $0x131c] sm:$0xff]
    %v762 = vld [vmem:[#allocation2 + $0x1324] sm:$0xff]
    %v763 = vld [vmem:[#allocation2 + $0x132c] sm:$0xff]
    %v764 = vld [vmem:[#allocation2 + $0x1334] sm:$0xff]
    %v765 = vld [vmem:[#allocation2 + $0x133c] sm:$0xf]
    %v766 = vld [vmem:[#allocation2 + $0x1340] sm:$0xff]
    %v767 = vld [vmem:[#allocation2 + $0x1348] sm:$0xff]
    %v768 = vld [vmem:[#allocation2 + $0x1350] sm:$0xff]
    %v769 = vld [vmem:[#allocation2 + $0x1358] sm:$0xff]
    %v770 = vld [vmem:[#allocation2 + $0x1360] sm:$0xff]
    %v771 = vld [vmem:[#allocation2 + $0x1368] sm:$0xf]
    %v772 = vld [vmem:[#allocation2 + $0x136c] sm:$0xff]
    %v773 = vld [vmem:[#allocation2 + $0x1374] sm:$0xff]
    %v774 = vld [vmem:[#allocation2 + $0x137c] sm:$0xff]
    %v775 = vld [vmem:[#allocation2 + $0x1384] sm:$0xff]
    %v776 = vld [vmem:[#allocation2 + $0x138c] sm:$0xff]
    %v777 = vld [vmem:[#allocation2 + $0x1394] sm:$0xf]
    %v778 = vld [vmem:[#allocation2 + $0x1398] sm:$0xff]
    %v779 = vld [vmem:[#allocation2 + $0x13a0] sm:$0xff]
    %v780 = vld [vmem:[#allocation2 + $0x13a8] sm:$0xff]
    %v781 = vld [vmem:[#allocation2 + $0x13b0] sm:$0xff]
    %v782 = vld [vmem:[#allocation2 + $0x13b8] sm:$0xff]
    %v783 = vld [vmem:[#allocation2 + $0x13c0] sm:$0xf]
    %v784 = vld [vmem:[#allocation2 + $0x13c4] sm:$0xff]
    %v785 = vld [vmem:[#allocation2 + $0x13cc] sm:$0xff]
    %v786 = vld [vmem:[#allocation2 + $0x13d4] sm:$0xff]
    %v787 = vld [vmem:[#allocation2 + $0x13dc] sm:$0xff]
    %v788 = vld [vmem:[#allocation2 + $0x13e4] sm:$0xff]
    %v789 = vld [vmem:[#allocation2 + $0x13ec] sm:$0xf]
    %v790 = vld [vmem:[#allocation2 + $0x13f0] sm:$0xff]
    %v791 = vld [vmem:[#allocation2 + $0x13f8] sm:$0xff]
    %v792 = vld [vmem:[#allocation2 + $0x1400] sm:$0xff]
    %v793 = vld [vmem:[#allocation2 + $0x1408] sm:$0xff]
    %v794 = vld [vmem:[#allocation2 + $0x1410] sm:$0xff]
    %v795 = vld [vmem:[#allocation2 + $0x1418] sm:$0xf]
    %v796 = vld [vmem:[#allocation2 + $0x141c] sm:$0xff]
    %v797 = vld [vmem:[#allocation2 + $0x1424] sm:$0xff]
    %v798 = vld [vmem:[#allocation2 + $0x142c] sm:$0xff]
    %v799 = vld [vmem:[#allocation2 + $0x1434] sm:$0xff]
    %v800 = vld [vmem:[#allocation2 + $0x143c] sm:$0xff]
    %v801 = vld [vmem:[#allocation2 + $0x1444] sm:$0xf]
    %v802 = vld [vmem:[#allocation2 + $0x1448] sm:$0xff]
    %v803 = vld [vmem:[#allocation2 + $0x1450] sm:$0xff]
    %v804 = vld [vmem:[#allocation2 + $0x1458] sm:$0xff]
    %v805 = vld [vmem:[#allocation2 + $0x1460] sm:$0xff]
    %v806 = vld [vmem:[#allocation2 + $0x1468] sm:$0xff]
    %v807 = vld [vmem:[#allocation2 + $0x1470] sm:$0xf]
    %v808 = vld [vmem:[#allocation2 + $0x1474] sm:$0xff]
    %v809 = vld [vmem:[#allocation2 + $0x147c] sm:$0xff]
    %v810 = vld [vmem:[#allocation2 + $0x1484] sm:$0xff]
    %v811 = vld [vmem:[#allocation2 + $0x148c] sm:$0xff]
    %v812 = vld [vmem:[#allocation2 + $0x1494] sm:$0xff]
    %v813 = vld [vmem:[#allocation2 + $0x149c] sm:$0xf]
    %v814 = vld [vmem:[#allocation2 + $0x14a0] sm:$0xff]
    %v815 = vld [vmem:[#allocation2 + $0x14a8] sm:$0xff]
    %v816 = vld [vmem:[#allocation2 + $0x14b0] sm:$0xff]
    %v817 = vld [vmem:[#allocation2 + $0x14b8] sm:$0xff]
    %v818 = vld [vmem:[#allocation2 + $0x14c0] sm:$0xff]
    %v819 = vld [vmem:[#allocation2 + $0x14c8] sm:$0xf]
    %v820 = vld [vmem:[#allocation2 + $0x14cc] sm:$0xff]
    %v821 = vld [vmem:[#allocation2 + $0x14d4] sm:$0xff]
    %v822 = vld [vmem:[#allocation2 + $0x14dc] sm:$0xff]
    %v823 = vld [vmem:[#allocation2 + $0x14e4] sm:$0xff]
    %v824 = vld [vmem:[#allocation2 + $0x14ec] sm:$0xff]
    %v825 = vld [vmem:[#allocation2 + $0x14f4] sm:$0xf]
    %v826 = vld [vmem:[#allocation2 + $0x14f8] sm:$0xff]
    %v827 = vld [vmem:[#allocation2 + $0x1500] sm:$0xff]
    %v828 = vld [vmem:[#allocation2 + $0x1508] sm:$0xff]
    %v829 = vld [vmem:[#allocation2 + $0x1510] sm:$0xff]
    %v830 = vld [vmem:[#allocation2 + $0x1518] sm:$0xff]
    %v831 = vld [vmem:[#allocation2 + $0x1520] sm:$0xf]
    %v832 = vld [vmem:[#allocation2 + $0x1524] sm:$0xff]
    %v833 = vld [vmem:[#allocation2 + $0x152c] sm:$0xff]
    %v834 = vld [vmem:[#allocation2 + $0x1534] sm:$0xff]
    %v835 = vld [vmem:[#allocation2 + $0x153c] sm:$0xff]
    %v836 = vld [vmem:[#allocation2 + $0x1544] sm:$0xff]
    %v837 = vld [vmem:[#allocation2 + $0x154c] sm:$0xf]
    %v838 = vld [vmem:[#allocation2 + $0x1550] sm:$0xff]
    %v839 = vld [vmem:[#allocation2 + $0x1558] sm:$0xff]
    %v840 = vld [vmem:[#allocation2 + $0x1560] sm:$0xff]
    %v841 = vld [vmem:[#allocation2 + $0x1568] sm:$0xff]
    %v842 = vld [vmem:[#allocation2 + $0x1570] sm:$0xff]
    %v843 = vld [vmem:[#allocation2 + $0x1578] sm:$0xf]
    %v844 = vld [vmem:[#allocation2 + $0x157c] sm:$0xff]
    %v845 = vld [vmem:[#allocation2 + $0x1584] sm:$0xff]
    %v846 = vld [vmem:[#allocation2 + $0x158c] sm:$0xff]
    %v847 = vld [vmem:[#allocation2 + $0x1594] sm:$0xff]
    %v848 = vld [vmem:[#allocation2 + $0x159c] sm:$0xff]
    %v849 = vld [vmem:[#allocation2 + $0x15a4] sm:$0xf]
    %v850 = vld [vmem:[#allocation2 + $0x15a8] sm:$0xff]
    %v851 = vld [vmem:[#allocation2 + $0x15b0] sm:$0xff]
    %v852 = vld [vmem:[#allocation2 + $0x15b8] sm:$0xff]
    %v853 = vld [vmem:[#allocation2 + $0x15c0] sm:$0xff]
    %v854 = vld [vmem:[#allocation2 + $0x15c8] sm:$0xff]
    %v855 = vld [vmem:[#allocation2 + $0x15d0] sm:$0xf]
    %v856 = vld [vmem:[#allocation2 + $0x15d4] sm:$0xff]
    %v857 = vld [vmem:[#allocation2 + $0x15dc] sm:$0xff]
    %v858 = vld [vmem:[#allocation2 + $0x15e4] sm:$0xff]
    %v859 = vld [vmem:[#allocation2 + $0x15ec] sm:$0xff]
    %v860 = vld [vmem:[#allocation2 + $0x15f4] sm:$0xff]
    %v861 = vld [vmem:[#allocation2 + $0x15fc] sm:$0xf]
    %v862 = vld [vmem:[#allocation2 + $0x1600] sm:$0xff]
    %v863 = vld [vmem:[#allocation2 + $0x1608] sm:$0xff]
    %v864 = vld [vmem:[#allocation2 + $0x1610] sm:$0xff]
    %v865 = vld [vmem:[#allocation2 + $0x1618] sm:$0xff]
    %v866 = vld [vmem:[#allocation2 + $0x1620] sm:$0xff]
    %v867 = vld [vmem:[#allocation2 + $0x1628] sm:$0xf]
    %v868 = vld [vmem:[#allocation2 + $0x162c] sm:$0xff]
    %v869 = vld [vmem:[#allocation2 + $0x1634] sm:$0xff]
    %v870 = vld [vmem:[#allocation2 + $0x163c] sm:$0xff]
    %v871 = vld [vmem:[#allocation2 + $0x1644] sm:$0xff]
    %v872 = vld [vmem:[#allocation2 + $0x164c] sm:$0xff]
    %v873 = vld [vmem:[#allocation2 + $0x1654] sm:$0xf]
    %v874 = vld [vmem:[#allocation2 + $0x1658] sm:$0xff]
    %v875 = vld [vmem:[#allocation2 + $0x1660] sm:$0xff]
    %v876 = vld [vmem:[#allocation2 + $0x1668] sm:$0xff]
    %v877 = vld [vmem:[#allocation2 + $0x1670] sm:$0xff]
    %v878 = vld [vmem:[#allocation2 + $0x1678] sm:$0xff]
    %v879 = vld [vmem:[#allocation2 + $0x1680] sm:$0xf]
    %v880 = vld [vmem:[#allocation2 + $0x1684] sm:$0xff]
    %v881 = vld [vmem:[#allocation2 + $0x168c] sm:$0xff]
    %v882 = vld [vmem:[#allocation2 + $0x1694] sm:$0xff]
    %v883 = vld [vmem:[#allocation2 + $0x169c] sm:$0xff]
    %v884 = vld [vmem:[#allocation2 + $0x16a4] sm:$0xff]
    %v885 = vld [vmem:[#allocation2 + $0x16ac] sm:$0xf]
    %v886 = vld [vmem:[#allocation2 + $0x16b0] sm:$0xff]
    %v887 = vld [vmem:[#allocation2 + $0x16b8] sm:$0xff]
    %v888 = vld [vmem:[#allocation2 + $0x16c0] sm:$0xff]
    %v889 = vld [vmem:[#allocation2 + $0x16c8] sm:$0xff]
    %v890 = vld [vmem:[#allocation2 + $0x16d0] sm:$0xff]
    %v891 = vld [vmem:[#allocation2 + $0x16d8] sm:$0xf]
    %v892 = vld [vmem:[#allocation2 + $0x16dc] sm:$0xff]
    %v893 = vld [vmem:[#allocation2 + $0x16e4] sm:$0xff]
    %v894 = vld [vmem:[#allocation2 + $0x16ec] sm:$0xff]
    %v895 = vld [vmem:[#allocation2 + $0x16f4] sm:$0xff]
    %v896 = vld [vmem:[#allocation2 + $0x16fc] sm:$0xff]
    %v897 = vld [vmem:[#allocation2 + $0x1704] sm:$0xf]
    %v898 = vld [vmem:[#allocation2 + $0x1708] sm:$0xff]
    %v899 = vld [vmem:[#allocation2 + $0x1710] sm:$0xff]
    %v900 = vld [vmem:[#allocation2 + $0x1718] sm:$0xff]
    %v901 = vld [vmem:[#allocation2 + $0x1720] sm:$0xff]
    %v902 = vld [vmem:[#allocation2 + $0x1728] sm:$0xff]
    %v903 = vld [vmem:[#allocation2 + $0x1730] sm:$0xf]
    %v904 = vld [vmem:[#allocation2 + $0x1734] sm:$0xff]
    %v905 = vld [vmem:[#allocation2 + $0x173c] sm:$0xff]
    %v906 = vld [vmem:[#allocation2 + $0x1744] sm:$0xff]
    %v907 = vld [vmem:[#allocation2 + $0x174c] sm:$0xff]
    %v908 = vld [vmem:[#allocation2 + $0x1754] sm:$0xff]
    %v909 = vld [vmem:[#allocation2 + $0x175c] sm:$0xf]
    %v910 = vld [vmem:[#allocation2 + $0x1760] sm:$0xff]
    %v911 = vld [vmem:[#allocation2 + $0x1768] sm:$0xff]
    %v912 = vld [vmem:[#allocation2 + $0x1770] sm:$0xff]
    %v913 = vld [vmem:[#allocation2 + $0x1778] sm:$0xff]
    %v914 = vld [vmem:[#allocation2 + $0x1780] sm:$0xff]
    %v915 = vld [vmem:[#allocation2 + $0x1788] sm:$0xf]
    %v916 = vld [vmem:[#allocation2 + $0x178c] sm:$0xff]
    %v917 = vld [vmem:[#allocation2 + $0x1794] sm:$0xff]
    %v918 = vld [vmem:[#allocation2 + $0x179c] sm:$0xff]
    %v919 = vld [vmem:[#allocation2 + $0x17a4] sm:$0xff]
    %v920 = vld [vmem:[#allocation2 + $0x17ac] sm:$0xff]
    %v921 = vld [vmem:[#allocation2 + $0x17b4] sm:$0xf]
    %v922 = vld [vmem:[#allocation2 + $0x17b8] sm:$0xff]
    %v923 = vld [vmem:[#allocation2 + $0x17c0] sm:$0xff]
    %v924 = vld [vmem:[#allocation2 + $0x17c8] sm:$0xff]
    %v925 = vld [vmem:[#allocation2 + $0x17d0] sm:$0xff]
    %v926 = vld [vmem:[#allocation2 + $0x17d8] sm:$0xff]
    %v927 = vld [vmem:[#allocation2 + $0x17e0] sm:$0xf]
    %v928 = vld [vmem:[#allocation2 + $0x17e4] sm:$0xff]
    %v929 = vld [vmem:[#allocation2 + $0x17ec] sm:$0xff]
    %v930 = vld [vmem:[#allocation2 + $0x17f4] sm:$0xff]
    %v931 = vld [vmem:[#allocation2 + $0x17fc] sm:$0xff]
    %v932 = vld [vmem:[#allocation2 + $0x1804] sm:$0xff]
    %v933 = vld [vmem:[#allocation2 + $0x180c] sm:$0xf]
    %v934 = vld [vmem:[#allocation2 + $0x1810] sm:$0xff]
    %v935 = vld [vmem:[#allocation2 + $0x1818] sm:$0xff]
    %v936 = vld [vmem:[#allocation2 + $0x1820] sm:$0xff]
    %v937 = vld [vmem:[#allocation2 + $0x1828] sm:$0xff]
    %v938 = vld [vmem:[#allocation2 + $0x1830] sm:$0xff]
    %v939 = vld [vmem:[#allocation2 + $0x1838] sm:$0xf]
    %v940 = vld [vmem:[#allocation2 + $0x183c] sm:$0xff]
    %v941 = vld [vmem:[#allocation2 + $0x1844] sm:$0xff]
    %v942 = vld [vmem:[#allocation2 + $0x184c] sm:$0xff]
    %v943 = vld [vmem:[#allocation2 + $0x1854] sm:$0xff]
    %v944 = vld [vmem:[#allocation2 + $0x185c] sm:$0xff]
    %v945 = vld [vmem:[#allocation2 + $0x1864] sm:$0xf]
    %v946 = vld [vmem:[#allocation2 + $0x1868] sm:$0xff]
    %v947 = vld [vmem:[#allocation2 + $0x1870] sm:$0xff]
    %v948 = vld [vmem:[#allocation2 + $0x1878] sm:$0xff]
    %v949 = vld [vmem:[#allocation2 + $0x1880] sm:$0xff]
    %v950 = vld [vmem:[#allocation2 + $0x1888] sm:$0xff]
    %v951 = vld [vmem:[#allocation2 + $0x1890] sm:$0xf]
    %v952 = vld [vmem:[#allocation2 + $0x1894] sm:$0xff]
    %v953 = vld [vmem:[#allocation2 + $0x189c] sm:$0xff]
    %v954 = vld [vmem:[#allocation2 + $0x18a4] sm:$0xff]
    %v955 = vld [vmem:[#allocation2 + $0x18ac] sm:$0xff]
    %v956 = vld [vmem:[#allocation2 + $0x18b4] sm:$0xff]
    %v957 = vld [vmem:[#allocation2 + $0x18bc] sm:$0xf]
    %v958 = vld [vmem:[#allocation2 + $0x18c0] sm:$0xff]
    %v959 = vld [vmem:[#allocation2 + $0x18c8] sm:$0xff]
    %v960 = vld [vmem:[#allocation2 + $0x18d0] sm:$0xff]
    %v961 = vld [vmem:[#allocation2 + $0x18d8] sm:$0xff]
    %v962 = vld [vmem:[#allocation2 + $0x18e0] sm:$0xff]
    %v963 = vld [vmem:[#allocation2 + $0x18e8] sm:$0xf]
    %v964 = vld [vmem:[#allocation2 + $0x18ec] sm:$0xff]
    %v965 = vld [vmem:[#allocation2 + $0x18f4] sm:$0xff]
    %v966 = vld [vmem:[#allocation2 + $0x18fc] sm:$0xff]
    %v967 = vld [vmem:[#allocation2 + $0x1904] sm:$0xff]
    %v968 = vld [vmem:[#allocation2 + $0x190c] sm:$0xff]
    %v969 = vld [vmem:[#allocation2 + $0x1914] sm:$0xf]
    %v970 = vld [vmem:[#allocation2 + $0x1918] sm:$0xff]
    %v971 = vld [vmem:[#allocation2 + $0x1920] sm:$0xff]
    %v972 = vld [vmem:[#allocation2 + $0x1928] sm:$0xff]
    %v973 = vld [vmem:[#allocation2 + $0x1930] sm:$0xff]
    %v974 = vld [vmem:[#allocation2 + $0x1938] sm:$0xff]
    %v975 = vld [vmem:[#allocation2 + $0x1940] sm:$0xf]
    %v976 = vld [vmem:[#allocation2 + $0x1944] sm:$0xff]
    %v977 = vld [vmem:[#allocation2 + $0x194c] sm:$0xff]
    %v978 = vld [vmem:[#allocation2 + $0x1954] sm:$0xff]
    %v979 = vld [vmem:[#allocation2 + $0x195c] sm:$0xff]
    %v980 = vld [vmem:[#allocation2 + $0x1964] sm:$0xff]
    %v981 = vld [vmem:[#allocation2 + $0x196c] sm:$0xf]
    %v982 = vld [vmem:[#allocation2 + $0x1970] sm:$0xff]
    %v983 = vld [vmem:[#allocation2 + $0x1978] sm:$0xff]
    %v984 = vld [vmem:[#allocation2 + $0x1980] sm:$0xff]
    %v985 = vld [vmem:[#allocation2 + $0x1988] sm:$0xff]
    %v986 = vld [vmem:[#allocation2 + $0x1990] sm:$0xff]
    %v987 = vld [vmem:[#allocation2 + $0x1998] sm:$0xf]
    %v988 = vld [vmem:[#allocation2 + $0x199c] sm:$0xff]
    %v989 = vld [vmem:[#allocation2 + $0x19a4] sm:$0xff]
    %v990 = vld [vmem:[#allocation2 + $0x19ac] sm:$0xff]
    %v991 = vld [vmem:[#allocation2 + $0x19b4] sm:$0xff]
    %v992 = vld [vmem:[#allocation2 + $0x19bc] sm:$0xff]
    %v993 = vld [vmem:[#allocation2 + $0x19c4] sm:$0xf]
    %v994 = vld [vmem:[#allocation2 + $0x19c8] sm:$0xff]
    %v995 = vld [vmem:[#allocation2 + $0x19d0] sm:$0xff]
    %v996 = vld [vmem:[#allocation2 + $0x19d8] sm:$0xff]
    %v997 = vld [vmem:[#allocation2 + $0x19e0] sm:$0xff]
    %v998 = vld [vmem:[#allocation2 + $0x19e8] sm:$0xff]
    %v999 = vld [vmem:[#allocation2 + $0x19f0] sm:$0xf]
    %v1000 = vld [vmem:[#allocation2 + $0x19f4] sm:$0xff]
    %v1001 = vld [vmem:[#allocation2 + $0x19fc] sm:$0xff]
    %v1002 = vld [vmem:[#allocation2 + $0x1a04] sm:$0xff]
    %v1003 = vld [vmem:[#allocation2 + $0x1a0c] sm:$0xff]
    %v1004 = vld [vmem:[#allocation2 + $0x1a14] sm:$0xff]
    %v1005 = vld [vmem:[#allocation2 + $0x1a1c] sm:$0xf]
    %v1006 = vld [vmem:[#allocation2 + $0x1a20] sm:$0xff]
    %v1007 = vld [vmem:[#allocation2 + $0x1a28] sm:$0xff]
    %v1008 = vld [vmem:[#allocation2 + $0x1a30] sm:$0xff]
    %v1009 = vld [vmem:[#allocation2 + $0x1a38] sm:$0xff]
    %v1010 = vld [vmem:[#allocation2 + $0x1a40] sm:$0xff]
    %v1011 = vld [vmem:[#allocation2 + $0x1a48] sm:$0xf]
    %v1012 = vld [vmem:[#allocation2 + $0x1a4c] sm:$0xff]
    %v1013 = vld [vmem:[#allocation2 + $0x1a54] sm:$0xff]
    %v1014 = vld [vmem:[#allocation2 + $0x1a5c] sm:$0xff]
    %v1015 = vld [vmem:[#allocation2 + $0x1a64] sm:$0xff]
    %v1016 = vld [vmem:[#allocation2 + $0x1a6c] sm:$0xff]
    %v1017 = vld [vmem:[#allocation2 + $0x1a74] sm:$0xf]
    %v1018 = vld [vmem:[#allocation2 + $0x1a78] sm:$0xff]
    %v1019 = vld [vmem:[#allocation2 + $0x1a80] sm:$0xff]
    %v1020 = vld [vmem:[#allocation2 + $0x1a88] sm:$0xff]
    %v1021 = vld [vmem:[#allocation2 + $0x1a90] sm:$0xff]
    %v1022 = vld [vmem:[#allocation2 + $0x1a98] sm:$0xff]
    %v1023 = vld [vmem:[#allocation2 + $0x1aa0] sm:$0xf]
    %v1024 = vld [vmem:[#allocation2 + $0x1aa4] sm:$0xff]
    %v1025 = vld [vmem:[#allocation2 + $0x1aac] sm:$0xff]
    %v1026 = vld [vmem:[#allocation2 + $0x1ab4] sm:$0xff]
    %v1027 = vld [vmem:[#allocation2 + $0x1abc] sm:$0xff]
    %v1028 = vld [vmem:[#allocation2 + $0x1ac4] sm:$0xff]
    %v1029 = vld [vmem:[#allocation2 + $0x1acc] sm:$0xf]
    %v1030 = vld [vmem:[#allocation2 + $0x1ad0] sm:$0xff]
    %v1031 = vld [vmem:[#allocation2 + $0x1ad8] sm:$0xff]
    %v1032 = vld [vmem:[#allocation2 + $0x1ae0] sm:$0xff]
    %v1033 = vld [vmem:[#allocation2 + $0x1ae8] sm:$0xff]
    %v1034 = vld [vmem:[#allocation2 + $0x1af0] sm:$0xff]
    %v1035 = vld [vmem:[#allocation2 + $0x1af8] sm:$0xf]
    %v1036 = vld [vmem:[#allocation2 + $0x1afc] sm:$0xff]
    %v1037 = vld [vmem:[#allocation2 + $0x1b04] sm:$0xff]
    %v1038 = vld [vmem:[#allocation2 + $0x1b0c] sm:$0xff]
    %v1039 = vld [vmem:[#allocation2 + $0x1b14] sm:$0xff]
    %v1040 = vld [vmem:[#allocation2 + $0x1b1c] sm:$0xff]
    %v1041 = vld [vmem:[#allocation2 + $0x1b24] sm:$0xf]
    %v1042 = vld [vmem:[#allocation2 + $0x1b28] sm:$0xff]
    %v1043 = vld [vmem:[#allocation2 + $0x1b30] sm:$0xff]
    %v1044 = vld [vmem:[#allocation2 + $0x1b38] sm:$0xff]
    %v1045 = vld [vmem:[#allocation2 + $0x1b40] sm:$0xff]
    %v1046 = vld [vmem:[#allocation2 + $0x1b48] sm:$0xff]
    %v1047 = vld [vmem:[#allocation2 + $0x1b50] sm:$0xf]
    %v1048 = vld [vmem:[#allocation2 + $0x1b54] sm:$0xff]
    %v1049 = vld [vmem:[#allocation2 + $0x1b5c] sm:$0xff]
    %v1050 = vld [vmem:[#allocation2 + $0x1b64] sm:$0xff]
    %v1051 = vld [vmem:[#allocation2 + $0x1b6c] sm:$0xff]
    %v1052 = vld [vmem:[#allocation2 + $0x1b74] sm:$0xff]
    %v1053 = vld [vmem:[#allocation2 + $0x1b7c] sm:$0xf]
    %v1054 = vld [vmem:[#allocation2 + $0x1b80] sm:$0xff]
    %v1055 = vld [vmem:[#allocation2 + $0x1b88] sm:$0xff]
    %v1056 = vld [vmem:[#allocation2 + $0x1b90] sm:$0xff]
    %v1057 = vld [vmem:[#allocation2 + $0x1b98] sm:$0xff]
    %v1058 = vld [vmem:[#allocation2 + $0x1ba0] sm:$0xff]
    %v1059 = vld [vmem:[#allocation2 + $0x1ba8] sm:$0xf]
    %v1060 = vld [vmem:[#allocation2 + $0x1bac] sm:$0xff]
    %v1061 = vld [vmem:[#allocation2 + $0x1bb4] sm:$0xff]
    %v1062 = vld [vmem:[#allocation2 + $0x1bbc] sm:$0xff]
    %v1063 = vld [vmem:[#allocation2 + $0x1bc4] sm:$0xff]
    %v1064 = vld [vmem:[#allocation2 + $0x1bcc] sm:$0xff]
    %v1065 = vld [vmem:[#allocation2 + $0x1bd4] sm:$0xf]
    %v1066 = vld [vmem:[#allocation2 + $0x1bd8] sm:$0xff]
    %v1067 = vld [vmem:[#allocation2 + $0x1be0] sm:$0xff]
    %v1068 = vld [vmem:[#allocation2 + $0x1be8] sm:$0xff]
    %v1069 = vld [vmem:[#allocation2 + $0x1bf0] sm:$0xff]
    %v1070 = vld [vmem:[#allocation2 + $0x1bf8] sm:$0xff]
    %v1071 = vld [vmem:[#allocation2 + $0x1c00] sm:$0xf]
    %v1072 = vld [vmem:[#allocation2 + $0x1c04] sm:$0xff]
    %v1073 = vld [vmem:[#allocation2 + $0x1c0c] sm:$0xff]
    %v1074 = vld [vmem:[#allocation2 + $0x1c14] sm:$0xff]
    %v1075 = vld [vmem:[#allocation2 + $0x1c1c] sm:$0xff]
    %v1076 = vld [vmem:[#allocation2 + $0x1c24] sm:$0xff]
    %v1077 = vld [vmem:[#allocation2 + $0x1c2c] sm:$0xf]
    %v1078 = vld [vmem:[#allocation2 + $0x1c30] sm:$0xff]
    %v1079 = vld [vmem:[#allocation2 + $0x1c38] sm:$0xff]
    %v1080 = vld [vmem:[#allocation2 + $0x1c40] sm:$0xff]
    %v1081 = vld [vmem:[#allocation2 + $0x1c48] sm:$0xff]
    %v1082 = vld [vmem:[#allocation2 + $0x1c50] sm:$0xff]
    %v1083 = vld [vmem:[#allocation2 + $0x1c58] sm:$0xf]
    %v1084 = vld [vmem:[#allocation2 + $0x1c5c] sm:$0xff]
    %v1085 = vld [vmem:[#allocation2 + $0x1c64] sm:$0xff]
    %v1086 = vld [vmem:[#allocation2 + $0x1c6c] sm:$0xff]
    %v1087 = vld [vmem:[#allocation2 + $0x1c74] sm:$0xff]
    %v1088 = vld [vmem:[#allocation2 + $0x1c7c] sm:$0xff]
    %v1089 = vld [vmem:[#allocation2 + $0x1c84] sm:$0xf]
    %v1090 = vld [vmem:[#allocation2 + $0x1c88] sm:$0xff]
    %v1091 = vld [vmem:[#allocation2 + $0x1c90] sm:$0xff]
    %v1092 = vld [vmem:[#allocation2 + $0x1c98] sm:$0xff]
    %v1093 = vld [vmem:[#allocation2 + $0x1ca0] sm:$0xff]
    %v1094 = vld [vmem:[#allocation2 + $0x1ca8] sm:$0xff]
    %v1095 = vld [vmem:[#allocation2 + $0x1cb0] sm:$0xf]
    %v1096 = vld [vmem:[#allocation2 + $0x1cb4] sm:$0xff]
    %v1097 = vld [vmem:[#allocation2 + $0x1cbc] sm:$0xff]
    %v1098 = vld [vmem:[#allocation2 + $0x1cc4] sm:$0xff]
    %v1099 = vld [vmem:[#allocation2 + $0x1ccc] sm:$0xff]
    %v1100 = vld [vmem:[#allocation2 + $0x1cd4] sm:$0xff]
    %v1101 = vld [vmem:[#allocation2 + $0x1cdc] sm:$0xf]
    %v1102 = vld [vmem:[#allocation4] sm:$0xff]
    %v1103 = vld [vmem:[#allocation4 + $0x8] sm:$0x7]
    %v1106 = vlaneseq
    %v1107 = vshrl.u32 %v1106, 7
    %v1108 = vsub.s32 0, %v1107
    %v1109 = vrot.slane %v1102, %v1108
    %v1110 = vlaneseq
    %v1111 = vshrl.u32 %v1110, 7
    %v1112 = vsub.s32 1, %v1111
    %v1113 = vrot.slane %v1102, %v1112
    %v1114 = vlaneseq
    %v1115 = vshrl.u32 %v1114, 7
    %v1116 = vsub.s32 2, %v1115
    %v1117 = vrot.slane %v1102, %v1116
    %v1118 = vlaneseq
    %v1119 = vshrl.u32 %v1118, 7
    %v1120 = vsub.s32 3, %v1119
    %v1121 = vrot.slane %v1102, %v1120
    %v1122 = vlaneseq
    %v1123 = vshrl.u32 %v1122, 7
    %v1124 = vsub.s32 4, %v1123
    %v1125 = vrot.slane %v1102, %v1124
    %v1126 = vlaneseq
    %v1127 = vshrl.u32 %v1126, 7
    %v1128 = vsub.s32 5, %v1127
    %v1129 = vrot.slane %v1102, %v1128
    %v1130 = vlaneseq
    %v1131 = vshrl.u32 %v1130, 7
    %v1132 = vsub.s32 6, %v1131
    %v1133 = vrot.slane %v1102, %v1132
    %v1134 = vlaneseq
    %v1135 = vshrl.u32 %v1134, 7
    %v1136 = vsub.s32 7, %v1135
    %v1137 = vrot.slane %v1102, %v1136
    %v1138 = vlaneseq
    %v1139 = vshrl.u32 %v1138, 7
    %v1140 = vsub.s32 0, %v1139
    %v1141 = vrot.slane %v1103, %v1140
    %v1142 = vlaneseq
    %v1143 = vshrl.u32 %v1142, 7
    %v1144 = vsub.s32 1, %v1143
    %v1145 = vrot.slane %v1103, %v1144
    %v1146 = vlaneseq
    %v1147 = vshrl.u32 %v1146, 7
    %v1148 = vsub.s32 2, %v1147
    %v1149 = vrot.slane %v1103, %v1148
    %v2169 = vunpack.c.l.b16 %v94
    %v2170 = vunpack.c.h.b16 %v94
    %v2171 = vunpack.c.l.b16 %v95
    %v2172 = vunpack.c.h.b16 %v95
    %v2173 = vunpack.c.l.b16 %v96
    %v2174 = vunpack.c.h.b16 %v96
    %v2175 = vunpack.c.l.b16 %v97
    %v2176 = vunpack.c.h.b16 %v97
    %v2177 = vunpack.c.l.b16 %v98
    %v2178 = vunpack.c.h.b16 %v98
    %v2179 = vunpack.c.l.b16 %v99
    %v2180 = vunpack.c.l.b16 %v100
    %v2181 = vunpack.c.h.b16 %v100
    %v2182 = vunpack.c.l.b16 %v101
    %v2183 = vunpack.c.h.b16 %v101
    %v2184 = vunpack.c.l.b16 %v102
    %v2185 = vunpack.c.h.b16 %v102
    %v2186 = vunpack.c.l.b16 %v103
    %v2187 = vunpack.c.h.b16 %v103
    %v2188 = vunpack.c.l.b16 %v104
    %v2189 = vunpack.c.h.b16 %v104
    %v2190 = vunpack.c.l.b16 %v105
    %v2191 = vunpack.c.l.b16 %v106
    %v2192 = vunpack.c.h.b16 %v106
    %v2193 = vunpack.c.l.b16 %v107
    %v2194 = vunpack.c.h.b16 %v107
    %v2195 = vunpack.c.l.b16 %v108
    %v2196 = vunpack.c.h.b16 %v108
    %v2197 = vunpack.c.l.b16 %v109
    %v2198 = vunpack.c.h.b16 %v109
    %v2199 = vunpack.c.l.b16 %v110
    %v2200 = vunpack.c.h.b16 %v110
    %v2201 = vunpack.c.l.b16 %v111
    %v2202 = vunpack.c.l.b16 %v112
    %v2203 = vunpack.c.h.b16 %v112
    %v2204 = vunpack.c.l.b16 %v113
    %v2205 = vunpack.c.h.b16 %v113
    %v2206 = vunpack.c.l.b16 %v114
    %v2207 = vunpack.c.h.b16 %v114
    %v2208 = vunpack.c.l.b16 %v115
    %v2209 = vunpack.c.h.b16 %v115
    %v2210 = vunpack.c.l.b16 %v116
    %v2211 = vunpack.c.h.b16 %v116
    %v2212 = vunpack.c.l.b16 %v117
    %v2213 = vunpack.c.l.b16 %v118
    %v2214 = vunpack.c.h.b16 %v118
    %v2215 = vunpack.c.l.b16 %v119
    %v2216 = vunpack.c.h.b16 %v119
    %v2217 = vunpack.c.l.b16 %v120
    %v2218 = vunpack.c.h.b16 %v120
    %v2219 = vunpack.c.l.b16 %v121
    %v2220 = vunpack.c.h.b16 %v121
    %v2221 = vunpack.c.l.b16 %v122
    %v2222 = vunpack.c.h.b16 %v122
    %v2223 = vunpack.c.l.b16 %v123
    %v2224 = vunpack.c.l.b16 %v124
    %v2225 = vunpack.c.h.b16 %v124
    %v2226 = vunpack.c.l.b16 %v125
    %v2227 = vunpack.c.h.b16 %v125
    %v2228 = vunpack.c.l.b16 %v126
    %v2229 = vunpack.c.h.b16 %v126
    %v2230 = vunpack.c.l.b16 %v127
    %v2231 = vunpack.c.h.b16 %v127
    %v2232 = vunpack.c.l.b16 %v128
    %v2233 = vunpack.c.h.b16 %v128
    %v2234 = vunpack.c.l.b16 %v129
    %v2235 = vunpack.c.l.b16 %v130
    %v2236 = vunpack.c.h.b16 %v130
    %v2237 = vunpack.c.l.b16 %v131
    %v2238 = vunpack.c.h.b16 %v131
    %v2239 = vunpack.c.l.b16 %v132
    %v2240 = vunpack.c.h.b16 %v132
    %v2241 = vunpack.c.l.b16 %v133
    %v2242 = vunpack.c.h.b16 %v133
    %v2243 = vunpack.c.l.b16 %v134
    %v2244 = vunpack.c.h.b16 %v134
    %v2245 = vunpack.c.l.b16 %v135
    %v2246 = vunpack.c.l.b16 %v136
    %v2247 = vunpack.c.h.b16 %v136
    %v2248 = vunpack.c.l.b16 %v137
    %v2249 = vunpack.c.h.b16 %v137
    %v2250 = vunpack.c.l.b16 %v138
    %v2251 = vunpack.c.h.b16 %v138
    %v2252 = vunpack.c.l.b16 %v139
    %v2253 = vunpack.c.h.b16 %v139
    %v2254 = vunpack.c.l.b16 %v140
    %v2255 = vunpack.c.h.b16 %v140
    %v2256 = vunpack.c.l.b16 %v141
    %v2257 = vunpack.c.l.b16 %v142
    %v2258 = vunpack.c.h.b16 %v142
    %v2259 = vunpack.c.l.b16 %v143
    %v2260 = vunpack.c.h.b16 %v143
    %v2261 = vunpack.c.l.b16 %v144
    %v2262 = vunpack.c.h.b16 %v144
    %v2263 = vunpack.c.l.b16 %v145
    %v2264 = vunpack.c.h.b16 %v145
    %v2265 = vunpack.c.l.b16 %v146
    %v2266 = vunpack.c.h.b16 %v146
    %v2267 = vunpack.c.l.b16 %v147
    %v2268 = vunpack.c.l.b16 %v148
    %v2269 = vunpack.c.h.b16 %v148
    %v2270 = vunpack.c.l.b16 %v149
    %v2271 = vunpack.c.h.b16 %v149
    %v2272 = vunpack.c.l.b16 %v150
    %v2273 = vunpack.c.h.b16 %v150
    %v2274 = vunpack.c.l.b16 %v151
    %v2275 = vunpack.c.h.b16 %v151
    %v2276 = vunpack.c.l.b16 %v152
    %v2277 = vunpack.c.h.b16 %v152
    %v2278 = vunpack.c.l.b16 %v153
    %v2279 = vunpack.c.l.b16 %v154
    %v2280 = vunpack.c.h.b16 %v154
    %v2281 = vunpack.c.l.b16 %v155
    %v2282 = vunpack.c.h.b16 %v155
    %v2283 = vunpack.c.l.b16 %v156
    %v2284 = vunpack.c.h.b16 %v156
    %v2285 = vunpack.c.l.b16 %v157
    %v2286 = vunpack.c.h.b16 %v157
    %v2287 = vunpack.c.l.b16 %v158
    %v2288 = vunpack.c.h.b16 %v158
    %v2289 = vunpack.c.l.b16 %v159
    %v2290 = vunpack.c.l.b16 %v160
    %v2291 = vunpack.c.h.b16 %v160
    %v2292 = vunpack.c.l.b16 %v161
    %v2293 = vunpack.c.h.b16 %v161
    %v2294 = vunpack.c.l.b16 %v162
    %v2295 = vunpack.c.h.b16 %v162
    %v2296 = vunpack.c.l.b16 %v163
    %v2297 = vunpack.c.h.b16 %v163
    %v2298 = vunpack.c.l.b16 %v164
    %v2299 = vunpack.c.h.b16 %v164
    %v2300 = vunpack.c.l.b16 %v165
    %v2301 = vunpack.c.l.b16 %v166
    %v2302 = vunpack.c.h.b16 %v166
    %v2303 = vunpack.c.l.b16 %v167
    %v2304 = vunpack.c.h.b16 %v167
    %v2305 = vunpack.c.l.b16 %v168
    %v2306 = vunpack.c.h.b16 %v168
    %v2307 = vunpack.c.l.b16 %v169
    %v2308 = vunpack.c.h.b16 %v169
    %v2309 = vunpack.c.l.b16 %v170
    %v2310 = vunpack.c.h.b16 %v170
    %v2311 = vunpack.c.l.b16 %v171
    %v2312 = vunpack.c.l.b16 %v172
    %v2313 = vunpack.c.h.b16 %v172
    %v2314 = vunpack.c.l.b16 %v173
    %v2315 = vunpack.c.h.b16 %v173
    %v2316 = vunpack.c.l.b16 %v174
    %v2317 = vunpack.c.h.b16 %v174
    %v2318 = vunpack.c.l.b16 %v175
    %v2319 = vunpack.c.h.b16 %v175
    %v2320 = vunpack.c.l.b16 %v176
    %v2321 = vunpack.c.h.b16 %v176
    %v2322 = vunpack.c.l.b16 %v177
    %v2323 = vunpack.c.l.b16 %v178
    %v2324 = vunpack.c.h.b16 %v178
    %v2325 = vunpack.c.l.b16 %v179
    %v2326 = vunpack.c.h.b16 %v179
    %v2327 = vunpack.c.l.b16 %v180
    %v2328 = vunpack.c.h.b16 %v180
    %v2329 = vunpack.c.l.b16 %v181
    %v2330 = vunpack.c.h.b16 %v181
    %v2331 = vunpack.c.l.b16 %v182
    %v2332 = vunpack.c.h.b16 %v182
    %v2333 = vunpack.c.l.b16 %v183
    %v2334 = vunpack.c.l.b16 %v184
    %v2335 = vunpack.c.h.b16 %v184
    %v2336 = vunpack.c.l.b16 %v185
    %v2337 = vunpack.c.h.b16 %v185
    %v2338 = vunpack.c.l.b16 %v186
    %v2339 = vunpack.c.h.b16 %v186
    %v2340 = vunpack.c.l.b16 %v187
    %v2341 = vunpack.c.h.b16 %v187
    %v2342 = vunpack.c.l.b16 %v188
    %v2343 = vunpack.c.h.b16 %v188
    %v2344 = vunpack.c.l.b16 %v189
    %v2345 = vunpack.c.l.b16 %v190
    %v2346 = vunpack.c.h.b16 %v190
    %v2347 = vunpack.c.l.b16 %v191
    %v2348 = vunpack.c.h.b16 %v191
    %v2349 = vunpack.c.l.b16 %v192
    %v2350 = vunpack.c.h.b16 %v192
    %v2351 = vunpack.c.l.b16 %v193
    %v2352 = vunpack.c.h.b16 %v193
    %v2353 = vunpack.c.l.b16 %v194
    %v2354 = vunpack.c.h.b16 %v194
    %v2355 = vunpack.c.l.b16 %v195
    %v2356 = vunpack.c.l.b16 %v196
    %v2357 = vunpack.c.h.b16 %v196
    %v2358 = vunpack.c.l.b16 %v197
    %v2359 = vunpack.c.h.b16 %v197
    %v2360 = vunpack.c.l.b16 %v198
    %v2361 = vunpack.c.h.b16 %v198
    %v2362 = vunpack.c.l.b16 %v199
    %v2363 = vunpack.c.h.b16 %v199
    %v2364 = vunpack.c.l.b16 %v200
    %v2365 = vunpack.c.h.b16 %v200
    %v2366 = vunpack.c.l.b16 %v201
    %v2367 = vunpack.c.l.b16 %v202
    %v2368 = vunpack.c.h.b16 %v202
    %v2369 = vunpack.c.l.b16 %v203
    %v2370 = vunpack.c.h.b16 %v203
    %v2371 = vunpack.c.l.b16 %v204
    %v2372 = vunpack.c.h.b16 %v204
    %v2373 = vunpack.c.l.b16 %v205
    %v2374 = vunpack.c.h.b16 %v205
    %v2375 = vunpack.c.l.b16 %v206
    %v2376 = vunpack.c.h.b16 %v206
    %v2377 = vunpack.c.l.b16 %v207
    %v2378 = vunpack.c.l.b16 %v208
    %v2379 = vunpack.c.h.b16 %v208
    %v2380 = vunpack.c.l.b16 %v209
    %v2381 = vunpack.c.h.b16 %v209
    %v2382 = vunpack.c.l.b16 %v210
    %v2383 = vunpack.c.h.b16 %v210
    %v2384 = vunpack.c.l.b16 %v211
    %v2385 = vunpack.c.h.b16 %v211
    %v2386 = vunpack.c.l.b16 %v212
    %v2387 = vunpack.c.h.b16 %v212
    %v2388 = vunpack.c.l.b16 %v213
    %v2389 = vunpack.c.l.b16 %v214
    %v2390 = vunpack.c.h.b16 %v214
    %v2391 = vunpack.c.l.b16 %v215
    %v2392 = vunpack.c.h.b16 %v215
    %v2393 = vunpack.c.l.b16 %v216
    %v2394 = vunpack.c.h.b16 %v216
    %v2395 = vunpack.c.l.b16 %v217
    %v2396 = vunpack.c.h.b16 %v217
    %v2397 = vunpack.c.l.b16 %v218
    %v2398 = vunpack.c.h.b16 %v218
    %v2399 = vunpack.c.l.b16 %v219
    %v2400 = vunpack.c.l.b16 %v220
    %v2401 = vunpack.c.h.b16 %v220
    %v2402 = vunpack.c.l.b16 %v221
    %v2403 = vunpack.c.h.b16 %v221
    %v2404 = vunpack.c.l.b16 %v222
    %v2405 = vunpack.c.h.b16 %v222
    %v2406 = vunpack.c.l.b16 %v223
    %v2407 = vunpack.c.h.b16 %v223
    %v2408 = vunpack.c.l.b16 %v224
    %v2409 = vunpack.c.h.b16 %v224
    %v2410 = vunpack.c.l.b16 %v225
    %v2411 = vunpack.c.l.b16 %v226
    %v2412 = vunpack.c.h.b16 %v226
    %v2413 = vunpack.c.l.b16 %v227
    %v2414 = vunpack.c.h.b16 %v227
    %v2415 = vunpack.c.l.b16 %v228
    %v2416 = vunpack.c.h.b16 %v228
    %v2417 = vunpack.c.l.b16 %v229
    %v2418 = vunpack.c.h.b16 %v229
    %v2419 = vunpack.c.l.b16 %v230
    %v2420 = vunpack.c.h.b16 %v230
    %v2421 = vunpack.c.l.b16 %v231
    %v2422 = vunpack.c.l.b16 %v232
    %v2423 = vunpack.c.h.b16 %v232
    %v2424 = vunpack.c.l.b16 %v233
    %v2425 = vunpack.c.h.b16 %v233
    %v2426 = vunpack.c.l.b16 %v234
    %v2427 = vunpack.c.h.b16 %v234
    %v2428 = vunpack.c.l.b16 %v235
    %v2429 = vunpack.c.h.b16 %v235
    %v2430 = vunpack.c.l.b16 %v236
    %v2431 = vunpack.c.h.b16 %v236
    %v2432 = vunpack.c.l.b16 %v237
    %v2433 = vunpack.c.l.b16 %v238
    %v2434 = vunpack.c.h.b16 %v238
    %v2435 = vunpack.c.l.b16 %v239
    %v2436 = vunpack.c.h.b16 %v239
    %v2437 = vunpack.c.l.b16 %v240
    %v2438 = vunpack.c.h.b16 %v240
    %v2439 = vunpack.c.l.b16 %v241
    %v2440 = vunpack.c.h.b16 %v241
    %v2441 = vunpack.c.l.b16 %v242
    %v2442 = vunpack.c.h.b16 %v242
    %v2443 = vunpack.c.l.b16 %v243
    %v2444 = vunpack.c.l.b16 %v244
    %v2445 = vunpack.c.h.b16 %v244
    %v2446 = vunpack.c.l.b16 %v245
    %v2447 = vunpack.c.h.b16 %v245
    %v2448 = vunpack.c.l.b16 %v246
    %v2449 = vunpack.c.h.b16 %v246
    %v2450 = vunpack.c.l.b16 %v247
    %v2451 = vunpack.c.h.b16 %v247
    %v2452 = vunpack.c.l.b16 %v248
    %v2453 = vunpack.c.h.b16 %v248
    %v2454 = vunpack.c.l.b16 %v249
    %v2455 = vunpack.c.l.b16 %v250
    %v2456 = vunpack.c.h.b16 %v250
    %v2457 = vunpack.c.l.b16 %v251
    %v2458 = vunpack.c.h.b16 %v251
    %v2459 = vunpack.c.l.b16 %v252
    %v2460 = vunpack.c.h.b16 %v252
    %v2461 = vunpack.c.l.b16 %v253
    %v2462 = vunpack.c.h.b16 %v253
    %v2463 = vunpack.c.l.b16 %v254
    %v2464 = vunpack.c.h.b16 %v254
    %v2465 = vunpack.c.l.b16 %v255
    %v2466 = vunpack.c.l.b16 %v256
    %v2467 = vunpack.c.h.b16 %v256
    %v2468 = vunpack.c.l.b16 %v257
    %v2469 = vunpack.c.h.b16 %v257
    %v2470 = vunpack.c.l.b16 %v258
    %v2471 = vunpack.c.h.b16 %v258
    %v2472 = vunpack.c.l.b16 %v259
    %v2473 = vunpack.c.h.b16 %v259
    %v2474 = vunpack.c.l.b16 %v260
    %v2475 = vunpack.c.h.b16 %v260
    %v2476 = vunpack.c.l.b16 %v261
    %v2477 = vunpack.c.l.b16 %v262
    %v2478 = vunpack.c.h.b16 %v262
    %v2479 = vunpack.c.l.b16 %v263
    %v2480 = vunpack.c.h.b16 %v263
    %v2481 = vunpack.c.l.b16 %v264
    %v2482 = vunpack.c.h.b16 %v264
    %v2483 = vunpack.c.l.b16 %v265
    %v2484 = vunpack.c.h.b16 %v265
    %v2485 = vunpack.c.l.b16 %v266
    %v2486 = vunpack.c.h.b16 %v266
    %v2487 = vunpack.c.l.b16 %v267
    %v2488 = vunpack.c.l.b16 %v268
    %v2489 = vunpack.c.h.b16 %v268
    %v2490 = vunpack.c.l.b16 %v269
    %v2491 = vunpack.c.h.b16 %v269
    %v2492 = vunpack.c.l.b16 %v270
    %v2493 = vunpack.c.h.b16 %v270
    %v2494 = vunpack.c.l.b16 %v271
    %v2495 = vunpack.c.h.b16 %v271
    %v2496 = vunpack.c.l.b16 %v272
    %v2497 = vunpack.c.h.b16 %v272
    %v2498 = vunpack.c.l.b16 %v273
    %v2499 = vunpack.c.l.b16 %v274
    %v2500 = vunpack.c.h.b16 %v274
    %v2501 = vunpack.c.l.b16 %v275
    %v2502 = vunpack.c.h.b16 %v275
    %v2503 = vunpack.c.l.b16 %v276
    %v2504 = vunpack.c.h.b16 %v276
    %v2505 = vunpack.c.l.b16 %v277
    %v2506 = vunpack.c.h.b16 %v277
    %v2507 = vunpack.c.l.b16 %v278
    %v2508 = vunpack.c.h.b16 %v278
    %v2509 = vunpack.c.l.b16 %v279
    %v2510 = vunpack.c.l.b16 %v280
    %v2511 = vunpack.c.h.b16 %v280
    %v2512 = vunpack.c.l.b16 %v281
    %v2513 = vunpack.c.h.b16 %v281
    %v2514 = vunpack.c.l.b16 %v282
    %v2515 = vunpack.c.h.b16 %v282
    %v2516 = vunpack.c.l.b16 %v283
    %v2517 = vunpack.c.h.b16 %v283
    %v2518 = vunpack.c.l.b16 %v284
    %v2519 = vunpack.c.h.b16 %v284
    %v2520 = vunpack.c.l.b16 %v285
    %v2521 = vunpack.c.l.b16 %v286
    %v2522 = vunpack.c.h.b16 %v286
    %v2523 = vunpack.c.l.b16 %v287
    %v2524 = vunpack.c.h.b16 %v287
    %v2525 = vunpack.c.l.b16 %v288
    %v2526 = vunpack.c.h.b16 %v288
    %v2527 = vunpack.c.l.b16 %v289
    %v2528 = vunpack.c.h.b16 %v289
    %v2529 = vunpack.c.l.b16 %v290
    %v2530 = vunpack.c.h.b16 %v290
    %v2531 = vunpack.c.l.b16 %v291
    %v2532 = vunpack.c.l.b16 %v292
    %v2533 = vunpack.c.h.b16 %v292
    %v2534 = vunpack.c.l.b16 %v293
    %v2535 = vunpack.c.h.b16 %v293
    %v2536 = vunpack.c.l.b16 %v294
    %v2537 = vunpack.c.h.b16 %v294
    %v2538 = vunpack.c.l.b16 %v295
    %v2539 = vunpack.c.h.b16 %v295
    %v2540 = vunpack.c.l.b16 %v296
    %v2541 = vunpack.c.h.b16 %v296
    %v2542 = vunpack.c.l.b16 %v297
    %v2543 = vunpack.c.l.b16 %v298
    %v2544 = vunpack.c.h.b16 %v298
    %v2545 = vunpack.c.l.b16 %v299
    %v2546 = vunpack.c.h.b16 %v299
    %v2547 = vunpack.c.l.b16 %v300
    %v2548 = vunpack.c.h.b16 %v300
    %v2549 = vunpack.c.l.b16 %v301
    %v2550 = vunpack.c.h.b16 %v301
    %v2551 = vunpack.c.l.b16 %v302
    %v2552 = vunpack.c.h.b16 %v302
    %v2553 = vunpack.c.l.b16 %v303
    %v2554 = vunpack.c.l.b16 %v304
    %v2555 = vunpack.c.h.b16 %v304
    %v2556 = vunpack.c.l.b16 %v305
    %v2557 = vunpack.c.h.b16 %v305
    %v2558 = vunpack.c.l.b16 %v306
    %v2559 = vunpack.c.h.b16 %v306
    %v2560 = vunpack.c.l.b16 %v307
    %v2561 = vunpack.c.h.b16 %v307
    %v2562 = vunpack.c.l.b16 %v308
    %v2563 = vunpack.c.h.b16 %v308
    %v2564 = vunpack.c.l.b16 %v309
    %v2565 = vunpack.c.l.b16 %v310
    %v2566 = vunpack.c.h.b16 %v310
    %v2567 = vunpack.c.l.b16 %v311
    %v2568 = vunpack.c.h.b16 %v311
    %v2569 = vunpack.c.l.b16 %v312
    %v2570 = vunpack.c.h.b16 %v312
    %v2571 = vunpack.c.l.b16 %v313
    %v2572 = vunpack.c.h.b16 %v313
    %v2573 = vunpack.c.l.b16 %v314
    %v2574 = vunpack.c.h.b16 %v314
    %v2575 = vunpack.c.l.b16 %v315
    %v2576 = vunpack.c.l.b16 %v316
    %v2577 = vunpack.c.h.b16 %v316
    %v2578 = vunpack.c.l.b16 %v317
    %v2579 = vunpack.c.h.b16 %v317
    %v2580 = vunpack.c.l.b16 %v318
    %v2581 = vunpack.c.h.b16 %v318
    %v2582 = vunpack.c.l.b16 %v319
    %v2583 = vunpack.c.h.b16 %v319
    %v2584 = vunpack.c.l.b16 %v320
    %v2585 = vunpack.c.h.b16 %v320
    %v2586 = vunpack.c.l.b16 %v321
    %v2587 = vunpack.c.l.b16 %v322
    %v2588 = vunpack.c.h.b16 %v322
    %v2589 = vunpack.c.l.b16 %v323
    %v2590 = vunpack.c.h.b16 %v323
    %v2591 = vunpack.c.l.b16 %v324
    %v2592 = vunpack.c.h.b16 %v324
    %v2593 = vunpack.c.l.b16 %v325
    %v2594 = vunpack.c.h.b16 %v325
    %v2595 = vunpack.c.l.b16 %v326
    %v2596 = vunpack.c.h.b16 %v326
    %v2597 = vunpack.c.l.b16 %v327
    %v2598 = vunpack.c.l.b16 %v328
    %v2599 = vunpack.c.h.b16 %v328
    %v2600 = vunpack.c.l.b16 %v329
    %v2601 = vunpack.c.h.b16 %v329
    %v2602 = vunpack.c.l.b16 %v330
    %v2603 = vunpack.c.h.b16 %v330
    %v2604 = vunpack.c.l.b16 %v331
    %v2605 = vunpack.c.h.b16 %v331
    %v2606 = vunpack.c.l.b16 %v332
    %v2607 = vunpack.c.h.b16 %v332
    %v2608 = vunpack.c.l.b16 %v333
    %v2609 = vunpack.c.l.b16 %v334
    %v2610 = vunpack.c.h.b16 %v334
    %v2611 = vunpack.c.l.b16 %v335
    %v2612 = vunpack.c.h.b16 %v335
    %v2613 = vunpack.c.l.b16 %v336
    %v2614 = vunpack.c.h.b16 %v336
    %v2615 = vunpack.c.l.b16 %v337
    %v2616 = vunpack.c.h.b16 %v337
    %v2617 = vunpack.c.l.b16 %v338
    %v2618 = vunpack.c.h.b16 %v338
    %v2619 = vunpack.c.l.b16 %v339
    %v2620 = vunpack.c.l.b16 %v340
    %v2621 = vunpack.c.h.b16 %v340
    %v2622 = vunpack.c.l.b16 %v341
    %v2623 = vunpack.c.h.b16 %v341
    %v2624 = vunpack.c.l.b16 %v342
    %v2625 = vunpack.c.h.b16 %v342
    %v2626 = vunpack.c.l.b16 %v343
    %v2627 = vunpack.c.h.b16 %v343
    %v2628 = vunpack.c.l.b16 %v344
    %v2629 = vunpack.c.h.b16 %v344
    %v2630 = vunpack.c.l.b16 %v345
    %v2631 = vunpack.c.l.b16 %v346
    %v2632 = vunpack.c.h.b16 %v346
    %v2633 = vunpack.c.l.b16 %v347
    %v2634 = vunpack.c.h.b16 %v347
    %v2635 = vunpack.c.l.b16 %v348
    %v2636 = vunpack.c.h.b16 %v348
    %v2637 = vunpack.c.l.b16 %v349
    %v2638 = vunpack.c.h.b16 %v349
    %v2639 = vunpack.c.l.b16 %v350
    %v2640 = vunpack.c.h.b16 %v350
    %v2641 = vunpack.c.l.b16 %v351
    %v2642 = vunpack.c.l.b16 %v352
    %v2643 = vunpack.c.h.b16 %v352
    %v2644 = vunpack.c.l.b16 %v353
    %v2645 = vunpack.c.h.b16 %v353
    %v2646 = vunpack.c.l.b16 %v354
    %v2647 = vunpack.c.h.b16 %v354
    %v2648 = vunpack.c.l.b16 %v355
    %v2649 = vunpack.c.h.b16 %v355
    %v2650 = vunpack.c.l.b16 %v356
    %v2651 = vunpack.c.h.b16 %v356
    %v2652 = vunpack.c.l.b16 %v357
    %v2653 = vunpack.c.l.b16 %v358
    %v2654 = vunpack.c.h.b16 %v358
    %v2655 = vunpack.c.l.b16 %v359
    %v2656 = vunpack.c.h.b16 %v359
    %v2657 = vunpack.c.l.b16 %v360
    %v2658 = vunpack.c.h.b16 %v360
    %v2659 = vunpack.c.l.b16 %v361
    %v2660 = vunpack.c.h.b16 %v361
    %v2661 = vunpack.c.l.b16 %v362
    %v2662 = vunpack.c.h.b16 %v362
    %v2663 = vunpack.c.l.b16 %v363
    %v2664 = vunpack.c.l.b16 %v364
    %v2665 = vunpack.c.h.b16 %v364
    %v2666 = vunpack.c.l.b16 %v365
    %v2667 = vunpack.c.h.b16 %v365
    %v2668 = vunpack.c.l.b16 %v366
    %v2669 = vunpack.c.h.b16 %v366
    %v2670 = vunpack.c.l.b16 %v367
    %v2671 = vunpack.c.h.b16 %v367
    %v2672 = vunpack.c.l.b16 %v368
    %v2673 = vunpack.c.h.b16 %v368
    %v2674 = vunpack.c.l.b16 %v369
    %v2675 = vunpack.c.l.b16 %v370
    %v2676 = vunpack.c.h.b16 %v370
    %v2677 = vunpack.c.l.b16 %v371
    %v2678 = vunpack.c.h.b16 %v371
    %v2679 = vunpack.c.l.b16 %v372
    %v2680 = vunpack.c.h.b16 %v372
    %v2681 = vunpack.c.l.b16 %v373
    %v2682 = vunpack.c.h.b16 %v373
    %v2683 = vunpack.c.l.b16 %v374
    %v2684 = vunpack.c.h.b16 %v374
    %v2685 = vunpack.c.l.b16 %v375
    %v2686 = vunpack.c.l.b16 %v376
    %v2687 = vunpack.c.h.b16 %v376
    %v2688 = vunpack.c.l.b16 %v377
    %v2689 = vunpack.c.h.b16 %v377
    %v2690 = vunpack.c.l.b16 %v378
    %v2691 = vunpack.c.h.b16 %v378
    %v2692 = vunpack.c.l.b16 %v379
    %v2693 = vunpack.c.h.b16 %v379
    %v2694 = vunpack.c.l.b16 %v380
    %v2695 = vunpack.c.h.b16 %v380
    %v2696 = vunpack.c.l.b16 %v381
    %v2697 = vunpack.c.l.b16 %v382
    %v2698 = vunpack.c.h.b16 %v382
    %v2699 = vunpack.c.l.b16 %v383
    %v2700 = vunpack.c.h.b16 %v383
    %v2701 = vunpack.c.l.b16 %v384
    %v2702 = vunpack.c.h.b16 %v384
    %v2703 = vunpack.c.l.b16 %v385
    %v2704 = vunpack.c.h.b16 %v385
    %v2705 = vunpack.c.l.b16 %v386
    %v2706 = vunpack.c.h.b16 %v386
    %v2707 = vunpack.c.l.b16 %v387
    %v2708 = vunpack.c.l.b16 %v388
    %v2709 = vunpack.c.h.b16 %v388
    %v2710 = vunpack.c.l.b16 %v389
    %v2711 = vunpack.c.h.b16 %v389
    %v2712 = vunpack.c.l.b16 %v390
    %v2713 = vunpack.c.h.b16 %v390
    %v2714 = vunpack.c.l.b16 %v391
    %v2715 = vunpack.c.h.b16 %v391
    %v2716 = vunpack.c.l.b16 %v392
    %v2717 = vunpack.c.h.b16 %v392
    %v2718 = vunpack.c.l.b16 %v393
    %v2719 = vunpack.c.l.b16 %v394
    %v2720 = vunpack.c.h.b16 %v394
    %v2721 = vunpack.c.l.b16 %v395
    %v2722 = vunpack.c.h.b16 %v395
    %v2723 = vunpack.c.l.b16 %v396
    %v2724 = vunpack.c.h.b16 %v396
    %v2725 = vunpack.c.l.b16 %v397
    %v2726 = vunpack.c.h.b16 %v397
    %v2727 = vunpack.c.l.b16 %v398
    %v2728 = vunpack.c.h.b16 %v398
    %v2729 = vunpack.c.l.b16 %v399
    %v2730 = vunpack.c.l.b16 %v400
    %v2731 = vunpack.c.h.b16 %v400
    %v2732 = vunpack.c.l.b16 %v401
    %v2733 = vunpack.c.h.b16 %v401
    %v2734 = vunpack.c.l.b16 %v402
    %v2735 = vunpack.c.h.b16 %v402
    %v2736 = vunpack.c.l.b16 %v403
    %v2737 = vunpack.c.h.b16 %v403
    %v2738 = vunpack.c.l.b16 %v404
    %v2739 = vunpack.c.h.b16 %v404
    %v2740 = vunpack.c.l.b16 %v405
    %v2741 = vunpack.c.l.b16 %v406
    %v2742 = vunpack.c.h.b16 %v406
    %v2743 = vunpack.c.l.b16 %v407
    %v2744 = vunpack.c.h.b16 %v407
    %v2745 = vunpack.c.l.b16 %v408
    %v2746 = vunpack.c.h.b16 %v408
    %v2747 = vunpack.c.l.b16 %v409
    %v2748 = vunpack.c.h.b16 %v409
    %v2749 = vunpack.c.l.b16 %v410
    %v2750 = vunpack.c.h.b16 %v410
    %v2751 = vunpack.c.l.b16 %v411
    %v2752 = vunpack.c.l.b16 %v412
    %v2753 = vunpack.c.h.b16 %v412
    %v2754 = vunpack.c.l.b16 %v413
    %v2755 = vunpack.c.h.b16 %v413
    %v2756 = vunpack.c.l.b16 %v414
    %v2757 = vunpack.c.h.b16 %v414
    %v2758 = vunpack.c.l.b16 %v415
    %v2759 = vunpack.c.h.b16 %v415
    %v2760 = vunpack.c.l.b16 %v416
    %v2761 = vunpack.c.h.b16 %v416
    %v2762 = vunpack.c.l.b16 %v417
    %v2763 = vunpack.c.l.b16 %v418
    %v2764 = vunpack.c.h.b16 %v418
    %v2765 = vunpack.c.l.b16 %v419
    %v2766 = vunpack.c.h.b16 %v419
    %v2767 = vunpack.c.l.b16 %v420
    %v2768 = vunpack.c.h.b16 %v420
    %v2769 = vunpack.c.l.b16 %v421
    %v2770 = vunpack.c.h.b16 %v421
    %v2771 = vunpack.c.l.b16 %v422
    %v2772 = vunpack.c.h.b16 %v422
    %v2773 = vunpack.c.l.b16 %v423
    %v2774 = vunpack.c.l.b16 %v424
    %v2775 = vunpack.c.h.b16 %v424
    %v2776 = vunpack.c.l.b16 %v425
    %v2777 = vunpack.c.h.b16 %v425
    %v2778 = vunpack.c.l.b16 %v426
    %v2779 = vunpack.c.h.b16 %v426
    %v2780 = vunpack.c.l.b16 %v427
    %v2781 = vunpack.c.h.b16 %v427
    %v2782 = vunpack.c.l.b16 %v428
    %v2783 = vunpack.c.h.b16 %v428
    %v2784 = vunpack.c.l.b16 %v429
    %v2785 = vunpack.c.l.b16 %v430
    %v2786 = vunpack.c.h.b16 %v430
    %v2787 = vunpack.c.l.b16 %v431
    %v2788 = vunpack.c.h.b16 %v431
    %v2789 = vunpack.c.l.b16 %v432
    %v2790 = vunpack.c.h.b16 %v432
    %v2791 = vunpack.c.l.b16 %v433
    %v2792 = vunpack.c.h.b16 %v433
    %v2793 = vunpack.c.l.b16 %v434
    %v2794 = vunpack.c.h.b16 %v434
    %v2795 = vunpack.c.l.b16 %v435
    %v2796 = vunpack.c.l.b16 %v436
    %v2797 = vunpack.c.h.b16 %v436
    %v2798 = vunpack.c.l.b16 %v437
    %v2799 = vunpack.c.h.b16 %v437
    %v2800 = vunpack.c.l.b16 %v438
    %v2801 = vunpack.c.h.b16 %v438
    %v2802 = vunpack.c.l.b16 %v439
    %v2803 = vunpack.c.h.b16 %v439
    %v2804 = vunpack.c.l.b16 %v440
    %v2805 = vunpack.c.h.b16 %v440
    %v2806 = vunpack.c.l.b16 %v441
    %v2807 = vunpack.c.l.b16 %v442
    %v2808 = vunpack.c.h.b16 %v442
    %v2809 = vunpack.c.l.b16 %v443
    %v2810 = vunpack.c.h.b16 %v443
    %v2811 = vunpack.c.l.b16 %v444
    %v2812 = vunpack.c.h.b16 %v444
    %v2813 = vunpack.c.l.b16 %v445
    %v2814 = vunpack.c.h.b16 %v445
    %v2815 = vunpack.c.l.b16 %v446
    %v2816 = vunpack.c.h.b16 %v446
    %v2817 = vunpack.c.l.b16 %v447
    %v2818 = vunpack.c.l.b16 %v448
    %v2819 = vunpack.c.h.b16 %v448
    %v2820 = vunpack.c.l.b16 %v449
    %v2821 = vunpack.c.h.b16 %v449
    %v2822 = vunpack.c.l.b16 %v450
    %v2823 = vunpack.c.h.b16 %v450
    %v2824 = vunpack.c.l.b16 %v451
    %v2825 = vunpack.c.h.b16 %v451
    %v2826 = vunpack.c.l.b16 %v452
    %v2827 = vunpack.c.h.b16 %v452
    %v2828 = vunpack.c.l.b16 %v453
    %v2829 = vunpack.c.l.b16 %v454
    %v2830 = vunpack.c.h.b16 %v454
    %v2831 = vunpack.c.l.b16 %v455
    %v2832 = vunpack.c.h.b16 %v455
    %v2833 = vunpack.c.l.b16 %v456
    %v2834 = vunpack.c.h.b16 %v456
    %v2835 = vunpack.c.l.b16 %v457
    %v2836 = vunpack.c.h.b16 %v457
    %v2837 = vunpack.c.l.b16 %v458
    %v2838 = vunpack.c.h.b16 %v458
    %v2839 = vunpack.c.l.b16 %v459
    %v2840 = vunpack.c.l.b16 %v460
    %v2841 = vunpack.c.h.b16 %v460
    %v2842 = vunpack.c.l.b16 %v461
    %v2843 = vunpack.c.h.b16 %v461
    %v2844 = vunpack.c.l.b16 %v462
    %v2845 = vunpack.c.h.b16 %v462
    %v2846 = vunpack.c.l.b16 %v463
    %v2847 = vunpack.c.h.b16 %v463
    %v2848 = vunpack.c.l.b16 %v464
    %v2849 = vunpack.c.h.b16 %v464
    %v2850 = vunpack.c.l.b16 %v465
    %v2851 = vunpack.c.l.b16 %v466
    %v2852 = vunpack.c.h.b16 %v466
    %v2853 = vunpack.c.l.b16 %v467
    %v2854 = vunpack.c.h.b16 %v467
    %v2855 = vunpack.c.l.b16 %v468
    %v2856 = vunpack.c.h.b16 %v468
    %v2857 = vunpack.c.l.b16 %v469
    %v2858 = vunpack.c.h.b16 %v469
    %v2859 = vunpack.c.l.b16 %v470
    %v2860 = vunpack.c.h.b16 %v470
    %v2861 = vunpack.c.l.b16 %v471
    %v2862 = vunpack.c.l.b16 %v472
    %v2863 = vunpack.c.h.b16 %v472
    %v2864 = vunpack.c.l.b16 %v473
    %v2865 = vunpack.c.h.b16 %v473
    %v2866 = vunpack.c.l.b16 %v474
    %v2867 = vunpack.c.h.b16 %v474
    %v2868 = vunpack.c.l.b16 %v475
    %v2869 = vunpack.c.h.b16 %v475
    %v2870 = vunpack.c.l.b16 %v476
    %v2871 = vunpack.c.h.b16 %v476
    %v2872 = vunpack.c.l.b16 %v477
    %v2873 = vunpack.c.l.b16 %v478
    %v2874 = vunpack.c.h.b16 %v478
    %v2875 = vunpack.c.l.b16 %v479
    %v2876 = vunpack.c.h.b16 %v479
    %v2877 = vunpack.c.l.b16 %v480
    %v2878 = vunpack.c.h.b16 %v480
    %v2879 = vunpack.c.l.b16 %v481
    %v2880 = vunpack.c.h.b16 %v481
    %v2881 = vunpack.c.l.b16 %v482
    %v2882 = vunpack.c.h.b16 %v482
    %v2883 = vunpack.c.l.b16 %v483
    %v2884 = vunpack.c.l.b16 %v484
    %v2885 = vunpack.c.h.b16 %v484
    %v2886 = vunpack.c.l.b16 %v485
    %v2887 = vunpack.c.h.b16 %v485
    %v2888 = vunpack.c.l.b16 %v486
    %v2889 = vunpack.c.h.b16 %v486
    %v2890 = vunpack.c.l.b16 %v487
    %v2891 = vunpack.c.h.b16 %v487
    %v2892 = vunpack.c.l.b16 %v488
    %v2893 = vunpack.c.h.b16 %v488
    %v2894 = vunpack.c.l.b16 %v489
    %v2895 = vunpack.c.l.b16 %v490
    %v2896 = vunpack.c.h.b16 %v490
    %v2897 = vunpack.c.l.b16 %v491
    %v2898 = vunpack.c.h.b16 %v491
    %v2899 = vunpack.c.l.b16 %v492
    %v2900 = vunpack.c.h.b16 %v492
    %v2901 = vunpack.c.l.b16 %v493
    %v2902 = vunpack.c.h.b16 %v493
    %v2903 = vunpack.c.l.b16 %v494
    %v2904 = vunpack.c.h.b16 %v494
    %v2905 = vunpack.c.l.b16 %v495
    %v2906 = vunpack.c.l.b16 %v496
    %v2907 = vunpack.c.h.b16 %v496
    %v2908 = vunpack.c.l.b16 %v497
    %v2909 = vunpack.c.h.b16 %v497
    %v2910 = vunpack.c.l.b16 %v498
    %v2911 = vunpack.c.h.b16 %v498
    %v2912 = vunpack.c.l.b16 %v499
    %v2913 = vunpack.c.h.b16 %v499
    %v2914 = vunpack.c.l.b16 %v500
    %v2915 = vunpack.c.h.b16 %v500
    %v2916 = vunpack.c.l.b16 %v501
    %v2917 = vunpack.c.l.b16 %v502
    %v2918 = vunpack.c.h.b16 %v502
    %v2919 = vunpack.c.l.b16 %v503
    %v2920 = vunpack.c.h.b16 %v503
    %v2921 = vunpack.c.l.b16 %v504
    %v2922 = vunpack.c.h.b16 %v504
    %v2923 = vunpack.c.l.b16 %v505
    %v2924 = vunpack.c.h.b16 %v505
    %v2925 = vunpack.c.l.b16 %v506
    %v2926 = vunpack.c.h.b16 %v506
    %v2927 = vunpack.c.l.b16 %v507
    %v2928 = vunpack.c.l.b16 %v508
    %v2929 = vunpack.c.h.b16 %v508
    %v2930 = vunpack.c.l.b16 %v509
    %v2931 = vunpack.c.h.b16 %v509
    %v2932 = vunpack.c.l.b16 %v510
    %v2933 = vunpack.c.h.b16 %v510
    %v2934 = vunpack.c.l.b16 %v511
    %v2935 = vunpack.c.h.b16 %v511
    %v2936 = vunpack.c.l.b16 %v512
    %v2937 = vunpack.c.h.b16 %v512
    %v2938 = vunpack.c.l.b16 %v513
    %v2939 = vunpack.c.l.b16 %v514
    %v2940 = vunpack.c.h.b16 %v514
    %v2941 = vunpack.c.l.b16 %v515
    %v2942 = vunpack.c.h.b16 %v515
    %v2943 = vunpack.c.l.b16 %v516
    %v2944 = vunpack.c.h.b16 %v516
    %v2945 = vunpack.c.l.b16 %v517
    %v2946 = vunpack.c.h.b16 %v517
    %v2947 = vunpack.c.l.b16 %v518
    %v2948 = vunpack.c.h.b16 %v518
    %v2949 = vunpack.c.l.b16 %v519
    %v2950 = vunpack.c.l.b16 %v520
    %v2951 = vunpack.c.h.b16 %v520
    %v2952 = vunpack.c.l.b16 %v521
    %v2953 = vunpack.c.h.b16 %v521
    %v2954 = vunpack.c.l.b16 %v522
    %v2955 = vunpack.c.h.b16 %v522
    %v2956 = vunpack.c.l.b16 %v523
    %v2957 = vunpack.c.h.b16 %v523
    %v2958 = vunpack.c.l.b16 %v524
    %v2959 = vunpack.c.h.b16 %v524
    %v2960 = vunpack.c.l.b16 %v525
    %v2961 = vunpack.c.l.b16 %v526
    %v2962 = vunpack.c.h.b16 %v526
    %v2963 = vunpack.c.l.b16 %v527
    %v2964 = vunpack.c.h.b16 %v527
    %v2965 = vunpack.c.l.b16 %v528
    %v2966 = vunpack.c.h.b16 %v528
    %v2967 = vunpack.c.l.b16 %v529
    %v2968 = vunpack.c.h.b16 %v529
    %v2969 = vunpack.c.l.b16 %v530
    %v2970 = vunpack.c.h.b16 %v530
    %v2971 = vunpack.c.l.b16 %v531
    %v2972 = vunpack.c.l.b16 %v532
    %v2973 = vunpack.c.h.b16 %v532
    %v2974 = vunpack.c.l.b16 %v533
    %v2975 = vunpack.c.h.b16 %v533
    %v2976 = vunpack.c.l.b16 %v534
    %v2977 = vunpack.c.h.b16 %v534
    %v2978 = vunpack.c.l.b16 %v535
    %v2979 = vunpack.c.h.b16 %v535
    %v2980 = vunpack.c.l.b16 %v536
    %v2981 = vunpack.c.h.b16 %v536
    %v2982 = vunpack.c.l.b16 %v537
    %v2983 = vunpack.c.l.b16 %v538
    %v2984 = vunpack.c.h.b16 %v538
    %v2985 = vunpack.c.l.b16 %v539
    %v2986 = vunpack.c.h.b16 %v539
    %v2987 = vunpack.c.l.b16 %v540
    %v2988 = vunpack.c.h.b16 %v540
    %v2989 = vunpack.c.l.b16 %v541
    %v2990 = vunpack.c.h.b16 %v541
    %v2991 = vunpack.c.l.b16 %v542
    %v2992 = vunpack.c.h.b16 %v542
    %v2993 = vunpack.c.l.b16 %v543
    %v2994 = vunpack.c.l.b16 %v544
    %v2995 = vunpack.c.h.b16 %v544
    %v2996 = vunpack.c.l.b16 %v545
    %v2997 = vunpack.c.h.b16 %v545
    %v2998 = vunpack.c.l.b16 %v546
    %v2999 = vunpack.c.h.b16 %v546
    %v3000 = vunpack.c.l.b16 %v547
    %v3001 = vunpack.c.h.b16 %v547
    %v3002 = vunpack.c.l.b16 %v548
    %v3003 = vunpack.c.h.b16 %v548
    %v3004 = vunpack.c.l.b16 %v549
    %v3005 = vunpack.c.l.b16 %v550
    %v3006 = vunpack.c.h.b16 %v550
    %v3007 = vunpack.c.l.b16 %v551
    %v3008 = vunpack.c.h.b16 %v551
    %v3009 = vunpack.c.l.b16 %v552
    %v3010 = vunpack.c.h.b16 %v552
    %v3011 = vunpack.c.l.b16 %v553
    %v3012 = vunpack.c.h.b16 %v553
    %v3013 = vunpack.c.l.b16 %v554
    %v3014 = vunpack.c.h.b16 %v554
    %v3015 = vunpack.c.l.b16 %v555
    %v3016 = vunpack.c.l.b16 %v556
    %v3017 = vunpack.c.h.b16 %v556
    %v3018 = vunpack.c.l.b16 %v557
    %v3019 = vunpack.c.h.b16 %v557
    %v3020 = vunpack.c.l.b16 %v558
    %v3021 = vunpack.c.h.b16 %v558
    %v3022 = vunpack.c.l.b16 %v559
    %v3023 = vunpack.c.h.b16 %v559
    %v3024 = vunpack.c.l.b16 %v560
    %v3025 = vunpack.c.h.b16 %v560
    %v3026 = vunpack.c.l.b16 %v561
    %v3027 = vunpack.c.l.b16 %v562
    %v3028 = vunpack.c.h.b16 %v562
    %v3029 = vunpack.c.l.b16 %v563
    %v3030 = vunpack.c.h.b16 %v563
    %v3031 = vunpack.c.l.b16 %v564
    %v3032 = vunpack.c.h.b16 %v564
    %v3033 = vunpack.c.l.b16 %v565
    %v3034 = vunpack.c.h.b16 %v565
    %v3035 = vunpack.c.l.b16 %v566
    %v3036 = vunpack.c.h.b16 %v566
    %v3037 = vunpack.c.l.b16 %v567
    %v3038 = vunpack.c.l.b16 %v568
    %v3039 = vunpack.c.h.b16 %v568
    %v3040 = vunpack.c.l.b16 %v569
    %v3041 = vunpack.c.h.b16 %v569
    %v3042 = vunpack.c.l.b16 %v570
    %v3043 = vunpack.c.h.b16 %v570
    %v3044 = vunpack.c.l.b16 %v571
    %v3045 = vunpack.c.h.b16 %v571
    %v3046 = vunpack.c.l.b16 %v572
    %v3047 = vunpack.c.h.b16 %v572
    %v3048 = vunpack.c.l.b16 %v573
    %v3049 = vunpack.c.l.b16 %v574
    %v3050 = vunpack.c.h.b16 %v574
    %v3051 = vunpack.c.l.b16 %v575
    %v3052 = vunpack.c.h.b16 %v575
    %v3053 = vunpack.c.l.b16 %v576
    %v3054 = vunpack.c.h.b16 %v576
    %v3055 = vunpack.c.l.b16 %v577
    %v3056 = vunpack.c.h.b16 %v577
    %v3057 = vunpack.c.l.b16 %v578
    %v3058 = vunpack.c.h.b16 %v578
    %v3059 = vunpack.c.l.b16 %v579
    %v3060 = vunpack.c.l.b16 %v580
    %v3061 = vunpack.c.h.b16 %v580
    %v3062 = vunpack.c.l.b16 %v581
    %v3063 = vunpack.c.h.b16 %v581
    %v3064 = vunpack.c.l.b16 %v582
    %v3065 = vunpack.c.h.b16 %v582
    %v3066 = vunpack.c.l.b16 %v583
    %v3067 = vunpack.c.h.b16 %v583
    %v3068 = vunpack.c.l.b16 %v584
    %v3069 = vunpack.c.h.b16 %v584
    %v3070 = vunpack.c.l.b16 %v585
    %v3071 = vunpack.c.l.b16 %v586
    %v3072 = vunpack.c.h.b16 %v586
    %v3073 = vunpack.c.l.b16 %v587
    %v3074 = vunpack.c.h.b16 %v587
    %v3075 = vunpack.c.l.b16 %v588
    %v3076 = vunpack.c.h.b16 %v588
    %v3077 = vunpack.c.l.b16 %v589
    %v3078 = vunpack.c.h.b16 %v589
    %v3079 = vunpack.c.l.b16 %v590
    %v3080 = vunpack.c.h.b16 %v590
    %v3081 = vunpack.c.l.b16 %v591
    %v3082 = vunpack.c.l.b16 %v592
    %v3083 = vunpack.c.h.b16 %v592
    %v3084 = vunpack.c.l.b16 %v593
    %v3085 = vunpack.c.h.b16 %v593
    %v3086 = vunpack.c.l.b16 %v594
    %v3087 = vunpack.c.h.b16 %v594
    %v3088 = vunpack.c.l.b16 %v595
    %v3089 = vunpack.c.h.b16 %v595
    %v3090 = vunpack.c.l.b16 %v596
    %v3091 = vunpack.c.h.b16 %v596
    %v3092 = vunpack.c.l.b16 %v597
    %v3093 = vunpack.c.l.b16 %v598
    %v3094 = vunpack.c.h.b16 %v598
    %v3095 = vunpack.c.l.b16 %v599
    %v3096 = vunpack.c.h.b16 %v599
    %v3097 = vunpack.c.l.b16 %v600
    %v3098 = vunpack.c.h.b16 %v600
    %v3099 = vunpack.c.l.b16 %v601
    %v3100 = vunpack.c.h.b16 %v601
    %v3101 = vunpack.c.l.b16 %v602
    %v3102 = vunpack.c.h.b16 %v602
    %v3103 = vunpack.c.l.b16 %v603
    %v3104 = vunpack.c.l.b16 %v604
    %v3105 = vunpack.c.h.b16 %v604
    %v3106 = vunpack.c.l.b16 %v605
    %v3107 = vunpack.c.h.b16 %v605
    %v3108 = vunpack.c.l.b16 %v606
    %v3109 = vunpack.c.h.b16 %v606
    %v3110 = vunpack.c.l.b16 %v607
    %v3111 = vunpack.c.h.b16 %v607
    %v3112 = vunpack.c.l.b16 %v608
    %v3113 = vunpack.c.h.b16 %v608
    %v3114 = vunpack.c.l.b16 %v609
    %v3115 = vunpack.c.l.b16 %v610
    %v3116 = vunpack.c.h.b16 %v610
    %v3117 = vunpack.c.l.b16 %v611
    %v3118 = vunpack.c.h.b16 %v611
    %v3119 = vunpack.c.l.b16 %v612
    %v3120 = vunpack.c.h.b16 %v612
    %v3121 = vunpack.c.l.b16 %v613
    %v3122 = vunpack.c.h.b16 %v613
    %v3123 = vunpack.c.l.b16 %v614
    %v3124 = vunpack.c.h.b16 %v614
    %v3125 = vunpack.c.l.b16 %v615
    %v3126 = vunpack.c.l.b16 %v616
    %v3127 = vunpack.c.h.b16 %v616
    %v3128 = vunpack.c.l.b16 %v617
    %v3129 = vunpack.c.h.b16 %v617
    %v3130 = vunpack.c.l.b16 %v618
    %v3131 = vunpack.c.h.b16 %v618
    %v3132 = vunpack.c.l.b16 %v619
    %v3133 = vunpack.c.h.b16 %v619
    %v3134 = vunpack.c.l.b16 %v620
    %v3135 = vunpack.c.h.b16 %v620
    %v3136 = vunpack.c.l.b16 %v621
    %v3137 = vunpack.c.l.b16 %v622
    %v3138 = vunpack.c.h.b16 %v622
    %v3139 = vunpack.c.l.b16 %v623
    %v3140 = vunpack.c.h.b16 %v623
    %v3141 = vunpack.c.l.b16 %v624
    %v3142 = vunpack.c.h.b16 %v624
    %v3143 = vunpack.c.l.b16 %v625
    %v3144 = vunpack.c.h.b16 %v625
    %v3145 = vunpack.c.l.b16 %v626
    %v3146 = vunpack.c.h.b16 %v626
    %v3147 = vunpack.c.l.b16 %v627
    %v3148 = vunpack.c.l.b16 %v628
    %v3149 = vunpack.c.h.b16 %v628
    %v3150 = vunpack.c.l.b16 %v629
    %v3151 = vunpack.c.h.b16 %v629
    %v3152 = vunpack.c.l.b16 %v630
    %v3153 = vunpack.c.h.b16 %v630
    %v3154 = vunpack.c.l.b16 %v631
    %v3155 = vunpack.c.h.b16 %v631
    %v3156 = vunpack.c.l.b16 %v632
    %v3157 = vunpack.c.h.b16 %v632
    %v3158 = vunpack.c.l.b16 %v633
    %v3159 = vunpack.c.l.b16 %v634
    %v3160 = vunpack.c.h.b16 %v634
    %v3161 = vunpack.c.l.b16 %v635
    %v3162 = vunpack.c.h.b16 %v635
    %v3163 = vunpack.c.l.b16 %v636
    %v3164 = vunpack.c.h.b16 %v636
    %v3165 = vunpack.c.l.b16 %v637
    %v3166 = vunpack.c.h.b16 %v637
    %v3167 = vunpack.c.l.b16 %v638
    %v3168 = vunpack.c.h.b16 %v638
    %v3169 = vunpack.c.l.b16 %v639
    %v3170 = vunpack.c.l.b16 %v640
    %v3171 = vunpack.c.h.b16 %v640
    %v3172 = vunpack.c.l.b16 %v641
    %v3173 = vunpack.c.h.b16 %v641
    %v3174 = vunpack.c.l.b16 %v642
    %v3175 = vunpack.c.h.b16 %v642
    %v3176 = vunpack.c.l.b16 %v643
    %v3177 = vunpack.c.h.b16 %v643
    %v3178 = vunpack.c.l.b16 %v644
    %v3179 = vunpack.c.h.b16 %v644
    %v3180 = vunpack.c.l.b16 %v645
    %v3181 = vunpack.c.l.b16 %v646
    %v3182 = vunpack.c.h.b16 %v646
    %v3183 = vunpack.c.l.b16 %v647
    %v3184 = vunpack.c.h.b16 %v647
    %v3185 = vunpack.c.l.b16 %v648
    %v3186 = vunpack.c.h.b16 %v648
    %v3187 = vunpack.c.l.b16 %v649
    %v3188 = vunpack.c.h.b16 %v649
    %v3189 = vunpack.c.l.b16 %v650
    %v3190 = vunpack.c.h.b16 %v650
    %v3191 = vunpack.c.l.b16 %v651
    %v3192 = vunpack.c.l.b16 %v652
    %v3193 = vunpack.c.h.b16 %v652
    %v3194 = vunpack.c.l.b16 %v653
    %v3195 = vunpack.c.h.b16 %v653
    %v3196 = vunpack.c.l.b16 %v654
    %v3197 = vunpack.c.h.b16 %v654
    %v3198 = vunpack.c.l.b16 %v655
    %v3199 = vunpack.c.h.b16 %v655
    %v3200 = vunpack.c.l.b16 %v656
    %v3201 = vunpack.c.h.b16 %v656
    %v3202 = vunpack.c.l.b16 %v657
    %v3203 = vunpack.c.l.b16 %v658
    %v3204 = vunpack.c.h.b16 %v658
    %v3205 = vunpack.c.l.b16 %v659
    %v3206 = vunpack.c.h.b16 %v659
    %v3207 = vunpack.c.l.b16 %v660
    %v3208 = vunpack.c.h.b16 %v660
    %v3209 = vunpack.c.l.b16 %v661
    %v3210 = vunpack.c.h.b16 %v661
    %v3211 = vunpack.c.l.b16 %v662
    %v3212 = vunpack.c.h.b16 %v662
    %v3213 = vunpack.c.l.b16 %v663
    %v3214 = vunpack.c.l.b16 %v664
    %v3215 = vunpack.c.h.b16 %v664
    %v3216 = vunpack.c.l.b16 %v665
    %v3217 = vunpack.c.h.b16 %v665
    %v3218 = vunpack.c.l.b16 %v666
    %v3219 = vunpack.c.h.b16 %v666
    %v3220 = vunpack.c.l.b16 %v667
    %v3221 = vunpack.c.h.b16 %v667
    %v3222 = vunpack.c.l.b16 %v668
    %v3223 = vunpack.c.h.b16 %v668
    %v3224 = vunpack.c.l.b16 %v669
    %v3225 = vunpack.c.l.b16 %v670
    %v3226 = vunpack.c.h.b16 %v670
    %v3227 = vunpack.c.l.b16 %v671
    %v3228 = vunpack.c.h.b16 %v671
    %v3229 = vunpack.c.l.b16 %v672
    %v3230 = vunpack.c.h.b16 %v672
    %v3231 = vunpack.c.l.b16 %v673
    %v3232 = vunpack.c.h.b16 %v673
    %v3233 = vunpack.c.l.b16 %v674
    %v3234 = vunpack.c.h.b16 %v674
    %v3235 = vunpack.c.l.b16 %v675
    %v3236 = vunpack.c.l.b16 %v676
    %v3237 = vunpack.c.h.b16 %v676
    %v3238 = vunpack.c.l.b16 %v677
    %v3239 = vunpack.c.h.b16 %v677
    %v3240 = vunpack.c.l.b16 %v678
    %v3241 = vunpack.c.h.b16 %v678
    %v3242 = vunpack.c.l.b16 %v679
    %v3243 = vunpack.c.h.b16 %v679
    %v3244 = vunpack.c.l.b16 %v680
    %v3245 = vunpack.c.h.b16 %v680
    %v3246 = vunpack.c.l.b16 %v681
    %v3247 = vunpack.c.l.b16 %v682
    %v3248 = vunpack.c.h.b16 %v682
    %v3249 = vunpack.c.l.b16 %v683
    %v3250 = vunpack.c.h.b16 %v683
    %v3251 = vunpack.c.l.b16 %v684
    %v3252 = vunpack.c.h.b16 %v684
    %v3253 = vunpack.c.l.b16 %v685
    %v3254 = vunpack.c.h.b16 %v685
    %v3255 = vunpack.c.l.b16 %v686
    %v3256 = vunpack.c.h.b16 %v686
    %v3257 = vunpack.c.l.b16 %v687
    %v3258 = vunpack.c.l.b16 %v688
    %v3259 = vunpack.c.h.b16 %v688
    %v3260 = vunpack.c.l.b16 %v689
    %v3261 = vunpack.c.h.b16 %v689
    %v3262 = vunpack.c.l.b16 %v690
    %v3263 = vunpack.c.h.b16 %v690
    %v3264 = vunpack.c.l.b16 %v691
    %v3265 = vunpack.c.h.b16 %v691
    %v3266 = vunpack.c.l.b16 %v692
    %v3267 = vunpack.c.h.b16 %v692
    %v3268 = vunpack.c.l.b16 %v693
    %v3269 = vunpack.c.l.b16 %v694
    %v3270 = vunpack.c.h.b16 %v694
    %v3271 = vunpack.c.l.b16 %v695
    %v3272 = vunpack.c.h.b16 %v695
    %v3273 = vunpack.c.l.b16 %v696
    %v3274 = vunpack.c.h.b16 %v696
    %v3275 = vunpack.c.l.b16 %v697
    %v3276 = vunpack.c.h.b16 %v697
    %v3277 = vunpack.c.l.b16 %v698
    %v3278 = vunpack.c.h.b16 %v698
    %v3279 = vunpack.c.l.b16 %v699
    %v3280 = vunpack.c.l.b16 %v700
    %v3281 = vunpack.c.h.b16 %v700
    %v3282 = vunpack.c.l.b16 %v701
    %v3283 = vunpack.c.h.b16 %v701
    %v3284 = vunpack.c.l.b16 %v702
    %v3285 = vunpack.c.h.b16 %v702
    %v3286 = vunpack.c.l.b16 %v703
    %v3287 = vunpack.c.h.b16 %v703
    %v3288 = vunpack.c.l.b16 %v704
    %v3289 = vunpack.c.h.b16 %v704
    %v3290 = vunpack.c.l.b16 %v705
    %v3291 = vunpack.c.l.b16 %v706
    %v3292 = vunpack.c.h.b16 %v706
    %v3293 = vunpack.c.l.b16 %v707
    %v3294 = vunpack.c.h.b16 %v707
    %v3295 = vunpack.c.l.b16 %v708
    %v3296 = vunpack.c.h.b16 %v708
    %v3297 = vunpack.c.l.b16 %v709
    %v3298 = vunpack.c.h.b16 %v709
    %v3299 = vunpack.c.l.b16 %v710
    %v3300 = vunpack.c.h.b16 %v710
    %v3301 = vunpack.c.l.b16 %v711
    %v3302 = vunpack.c.l.b16 %v712
    %v3303 = vunpack.c.h.b16 %v712
    %v3304 = vunpack.c.l.b16 %v713
    %v3305 = vunpack.c.h.b16 %v713
    %v3306 = vunpack.c.l.b16 %v714
    %v3307 = vunpack.c.h.b16 %v714
    %v3308 = vunpack.c.l.b16 %v715
    %v3309 = vunpack.c.h.b16 %v715
    %v3310 = vunpack.c.l.b16 %v716
    %v3311 = vunpack.c.h.b16 %v716
    %v3312 = vunpack.c.l.b16 %v717
    %v3313 = vunpack.c.l.b16 %v718
    %v3314 = vunpack.c.h.b16 %v718
    %v3315 = vunpack.c.l.b16 %v719
    %v3316 = vunpack.c.h.b16 %v719
    %v3317 = vunpack.c.l.b16 %v720
    %v3318 = vunpack.c.h.b16 %v720
    %v3319 = vunpack.c.l.b16 %v721
    %v3320 = vunpack.c.h.b16 %v721
    %v3321 = vunpack.c.l.b16 %v722
    %v3322 = vunpack.c.h.b16 %v722
    %v3323 = vunpack.c.l.b16 %v723
    %v3324 = vunpack.c.l.b16 %v724
    %v3325 = vunpack.c.h.b16 %v724
    %v3326 = vunpack.c.l.b16 %v725
    %v3327 = vunpack.c.h.b16 %v725
    %v3328 = vunpack.c.l.b16 %v726
    %v3329 = vunpack.c.h.b16 %v726
    %v3330 = vunpack.c.l.b16 %v727
    %v3331 = vunpack.c.h.b16 %v727
    %v3332 = vunpack.c.l.b16 %v728
    %v3333 = vunpack.c.h.b16 %v728
    %v3334 = vunpack.c.l.b16 %v729
    %v3335 = vunpack.c.l.b16 %v730
    %v3336 = vunpack.c.h.b16 %v730
    %v3337 = vunpack.c.l.b16 %v731
    %v3338 = vunpack.c.h.b16 %v731
    %v3339 = vunpack.c.l.b16 %v732
    %v3340 = vunpack.c.h.b16 %v732
    %v3341 = vunpack.c.l.b16 %v733
    %v3342 = vunpack.c.h.b16 %v733
    %v3343 = vunpack.c.l.b16 %v734
    %v3344 = vunpack.c.h.b16 %v734
    %v3345 = vunpack.c.l.b16 %v735
    %v3346 = vunpack.c.l.b16 %v736
    %v3347 = vunpack.c.h.b16 %v736
    %v3348 = vunpack.c.l.b16 %v737
    %v3349 = vunpack.c.h.b16 %v737
    %v3350 = vunpack.c.l.b16 %v738
    %v3351 = vunpack.c.h.b16 %v738
    %v3352 = vunpack.c.l.b16 %v739
    %v3353 = vunpack.c.h.b16 %v739
    %v3354 = vunpack.c.l.b16 %v740
    %v3355 = vunpack.c.h.b16 %v740
    %v3356 = vunpack.c.l.b16 %v741
    %v3357 = vunpack.c.l.b16 %v742
    %v3358 = vunpack.c.h.b16 %v742
    %v3359 = vunpack.c.l.b16 %v743
    %v3360 = vunpack.c.h.b16 %v743
    %v3361 = vunpack.c.l.b16 %v744
    %v3362 = vunpack.c.h.b16 %v744
    %v3363 = vunpack.c.l.b16 %v745
    %v3364 = vunpack.c.h.b16 %v745
    %v3365 = vunpack.c.l.b16 %v746
    %v3366 = vunpack.c.h.b16 %v746
    %v3367 = vunpack.c.l.b16 %v747
    %v3368 = vunpack.c.l.b16 %v748
    %v3369 = vunpack.c.h.b16 %v748
    %v3370 = vunpack.c.l.b16 %v749
    %v3371 = vunpack.c.h.b16 %v749
    %v3372 = vunpack.c.l.b16 %v750
    %v3373 = vunpack.c.h.b16 %v750
    %v3374 = vunpack.c.l.b16 %v751
    %v3375 = vunpack.c.h.b16 %v751
    %v3376 = vunpack.c.l.b16 %v752
    %v3377 = vunpack.c.h.b16 %v752
    %v3378 = vunpack.c.l.b16 %v753
    %v3379 = vunpack.c.l.b16 %v754
    %v3380 = vunpack.c.h.b16 %v754
    %v3381 = vunpack.c.l.b16 %v755
    %v3382 = vunpack.c.h.b16 %v755
    %v3383 = vunpack.c.l.b16 %v756
    %v3384 = vunpack.c.h.b16 %v756
    %v3385 = vunpack.c.l.b16 %v757
    %v3386 = vunpack.c.h.b16 %v757
    %v3387 = vunpack.c.l.b16 %v758
    %v3388 = vunpack.c.h.b16 %v758
    %v3389 = vunpack.c.l.b16 %v759
    %v3390 = vunpack.c.l.b16 %v760
    %v3391 = vunpack.c.h.b16 %v760
    %v3392 = vunpack.c.l.b16 %v761
    %v3393 = vunpack.c.h.b16 %v761
    %v3394 = vunpack.c.l.b16 %v762
    %v3395 = vunpack.c.h.b16 %v762
    %v3396 = vunpack.c.l.b16 %v763
    %v3397 = vunpack.c.h.b16 %v763
    %v3398 = vunpack.c.l.b16 %v764
    %v3399 = vunpack.c.h.b16 %v764
    %v3400 = vunpack.c.l.b16 %v765
    %v3401 = vunpack.c.l.b16 %v766
    %v3402 = vunpack.c.h.b16 %v766
    %v3403 = vunpack.c.l.b16 %v767
    %v3404 = vunpack.c.h.b16 %v767
    %v3405 = vunpack.c.l.b16 %v768
    %v3406 = vunpack.c.h.b16 %v768
    %v3407 = vunpack.c.l.b16 %v769
    %v3408 = vunpack.c.h.b16 %v769
    %v3409 = vunpack.c.l.b16 %v770
    %v3410 = vunpack.c.h.b16 %v770
    %v3411 = vunpack.c.l.b16 %v771
    %v3412 = vunpack.c.l.b16 %v772
    %v3413 = vunpack.c.h.b16 %v772
    %v3414 = vunpack.c.l.b16 %v773
    %v3415 = vunpack.c.h.b16 %v773
    %v3416 = vunpack.c.l.b16 %v774
    %v3417 = vunpack.c.h.b16 %v774
    %v3418 = vunpack.c.l.b16 %v775
    %v3419 = vunpack.c.h.b16 %v775
    %v3420 = vunpack.c.l.b16 %v776
    %v3421 = vunpack.c.h.b16 %v776
    %v3422 = vunpack.c.l.b16 %v777
    %v3423 = vunpack.c.l.b16 %v778
    %v3424 = vunpack.c.h.b16 %v778
    %v3425 = vunpack.c.l.b16 %v779
    %v3426 = vunpack.c.h.b16 %v779
    %v3427 = vunpack.c.l.b16 %v780
    %v3428 = vunpack.c.h.b16 %v780
    %v3429 = vunpack.c.l.b16 %v781
    %v3430 = vunpack.c.h.b16 %v781
    %v3431 = vunpack.c.l.b16 %v782
    %v3432 = vunpack.c.h.b16 %v782
    %v3433 = vunpack.c.l.b16 %v783
    %v3434 = vunpack.c.l.b16 %v784
    %v3435 = vunpack.c.h.b16 %v784
    %v3436 = vunpack.c.l.b16 %v785
    %v3437 = vunpack.c.h.b16 %v785
    %v3438 = vunpack.c.l.b16 %v786
    %v3439 = vunpack.c.h.b16 %v786
    %v3440 = vunpack.c.l.b16 %v787
    %v3441 = vunpack.c.h.b16 %v787
    %v3442 = vunpack.c.l.b16 %v788
    %v3443 = vunpack.c.h.b16 %v788
    %v3444 = vunpack.c.l.b16 %v789
    %v3445 = vunpack.c.l.b16 %v790
    %v3446 = vunpack.c.h.b16 %v790
    %v3447 = vunpack.c.l.b16 %v791
    %v3448 = vunpack.c.h.b16 %v791
    %v3449 = vunpack.c.l.b16 %v792
    %v3450 = vunpack.c.h.b16 %v792
    %v3451 = vunpack.c.l.b16 %v793
    %v3452 = vunpack.c.h.b16 %v793
    %v3453 = vunpack.c.l.b16 %v794
    %v3454 = vunpack.c.h.b16 %v794
    %v3455 = vunpack.c.l.b16 %v795
    %v3456 = vunpack.c.l.b16 %v796
    %v3457 = vunpack.c.h.b16 %v796
    %v3458 = vunpack.c.l.b16 %v797
    %v3459 = vunpack.c.h.b16 %v797
    %v3460 = vunpack.c.l.b16 %v798
    %v3461 = vunpack.c.h.b16 %v798
    %v3462 = vunpack.c.l.b16 %v799
    %v3463 = vunpack.c.h.b16 %v799
    %v3464 = vunpack.c.l.b16 %v800
    %v3465 = vunpack.c.h.b16 %v800
    %v3466 = vunpack.c.l.b16 %v801
    %v3467 = vunpack.c.l.b16 %v802
    %v3468 = vunpack.c.h.b16 %v802
    %v3469 = vunpack.c.l.b16 %v803
    %v3470 = vunpack.c.h.b16 %v803
    %v3471 = vunpack.c.l.b16 %v804
    %v3472 = vunpack.c.h.b16 %v804
    %v3473 = vunpack.c.l.b16 %v805
    %v3474 = vunpack.c.h.b16 %v805
    %v3475 = vunpack.c.l.b16 %v806
    %v3476 = vunpack.c.h.b16 %v806
    %v3477 = vunpack.c.l.b16 %v807
    %v3478 = vunpack.c.l.b16 %v808
    %v3479 = vunpack.c.h.b16 %v808
    %v3480 = vunpack.c.l.b16 %v809
    %v3481 = vunpack.c.h.b16 %v809
    %v3482 = vunpack.c.l.b16 %v810
    %v3483 = vunpack.c.h.b16 %v810
    %v3484 = vunpack.c.l.b16 %v811
    %v3485 = vunpack.c.h.b16 %v811
    %v3486 = vunpack.c.l.b16 %v812
    %v3487 = vunpack.c.h.b16 %v812
    %v3488 = vunpack.c.l.b16 %v813
    %v3489 = vunpack.c.l.b16 %v814
    %v3490 = vunpack.c.h.b16 %v814
    %v3491 = vunpack.c.l.b16 %v815
    %v3492 = vunpack.c.h.b16 %v815
    %v3493 = vunpack.c.l.b16 %v816
    %v3494 = vunpack.c.h.b16 %v816
    %v3495 = vunpack.c.l.b16 %v817
    %v3496 = vunpack.c.h.b16 %v817
    %v3497 = vunpack.c.l.b16 %v818
    %v3498 = vunpack.c.h.b16 %v818
    %v3499 = vunpack.c.l.b16 %v819
    %v3500 = vunpack.c.l.b16 %v820
    %v3501 = vunpack.c.h.b16 %v820
    %v3502 = vunpack.c.l.b16 %v821
    %v3503 = vunpack.c.h.b16 %v821
    %v3504 = vunpack.c.l.b16 %v822
    %v3505 = vunpack.c.h.b16 %v822
    %v3506 = vunpack.c.l.b16 %v823
    %v3507 = vunpack.c.h.b16 %v823
    %v3508 = vunpack.c.l.b16 %v824
    %v3509 = vunpack.c.h.b16 %v824
    %v3510 = vunpack.c.l.b16 %v825
    %v3511 = vunpack.c.l.b16 %v826
    %v3512 = vunpack.c.h.b16 %v826
    %v3513 = vunpack.c.l.b16 %v827
    %v3514 = vunpack.c.h.b16 %v827
    %v3515 = vunpack.c.l.b16 %v828
    %v3516 = vunpack.c.h.b16 %v828
    %v3517 = vunpack.c.l.b16 %v829
    %v3518 = vunpack.c.h.b16 %v829
    %v3519 = vunpack.c.l.b16 %v830
    %v3520 = vunpack.c.h.b16 %v830
    %v3521 = vunpack.c.l.b16 %v831
    %v3522 = vunpack.c.l.b16 %v832
    %v3523 = vunpack.c.h.b16 %v832
    %v3524 = vunpack.c.l.b16 %v833
    %v3525 = vunpack.c.h.b16 %v833
    %v3526 = vunpack.c.l.b16 %v834
    %v3527 = vunpack.c.h.b16 %v834
    %v3528 = vunpack.c.l.b16 %v835
    %v3529 = vunpack.c.h.b16 %v835
    %v3530 = vunpack.c.l.b16 %v836
    %v3531 = vunpack.c.h.b16 %v836
    %v3532 = vunpack.c.l.b16 %v837
    %v3533 = vunpack.c.l.b16 %v838
    %v3534 = vunpack.c.h.b16 %v838
    %v3535 = vunpack.c.l.b16 %v839
    %v3536 = vunpack.c.h.b16 %v839
    %v3537 = vunpack.c.l.b16 %v840
    %v3538 = vunpack.c.h.b16 %v840
    %v3539 = vunpack.c.l.b16 %v841
    %v3540 = vunpack.c.h.b16 %v841
    %v3541 = vunpack.c.l.b16 %v842
    %v3542 = vunpack.c.h.b16 %v842
    %v3543 = vunpack.c.l.b16 %v843
    %v3544 = vunpack.c.l.b16 %v844
    %v3545 = vunpack.c.h.b16 %v844
    %v3546 = vunpack.c.l.b16 %v845
    %v3547 = vunpack.c.h.b16 %v845
    %v3548 = vunpack.c.l.b16 %v846
    %v3549 = vunpack.c.h.b16 %v846
    %v3550 = vunpack.c.l.b16 %v847
    %v3551 = vunpack.c.h.b16 %v847
    %v3552 = vunpack.c.l.b16 %v848
    %v3553 = vunpack.c.h.b16 %v848
    %v3554 = vunpack.c.l.b16 %v849
    %v3555 = vunpack.c.l.b16 %v850
    %v3556 = vunpack.c.h.b16 %v850
    %v3557 = vunpack.c.l.b16 %v851
    %v3558 = vunpack.c.h.b16 %v851
    %v3559 = vunpack.c.l.b16 %v852
    %v3560 = vunpack.c.h.b16 %v852
    %v3561 = vunpack.c.l.b16 %v853
    %v3562 = vunpack.c.h.b16 %v853
    %v3563 = vunpack.c.l.b16 %v854
    %v3564 = vunpack.c.h.b16 %v854
    %v3565 = vunpack.c.l.b16 %v855
    %v3566 = vunpack.c.l.b16 %v856
    %v3567 = vunpack.c.h.b16 %v856
    %v3568 = vunpack.c.l.b16 %v857
    %v3569 = vunpack.c.h.b16 %v857
    %v3570 = vunpack.c.l.b16 %v858
    %v3571 = vunpack.c.h.b16 %v858
    %v3572 = vunpack.c.l.b16 %v859
    %v3573 = vunpack.c.h.b16 %v859
    %v3574 = vunpack.c.l.b16 %v860
    %v3575 = vunpack.c.h.b16 %v860
    %v3576 = vunpack.c.l.b16 %v861
    %v3577 = vunpack.c.l.b16 %v862
    %v3578 = vunpack.c.h.b16 %v862
    %v3579 = vunpack.c.l.b16 %v863
    %v3580 = vunpack.c.h.b16 %v863
    %v3581 = vunpack.c.l.b16 %v864
    %v3582 = vunpack.c.h.b16 %v864
    %v3583 = vunpack.c.l.b16 %v865
    %v3584 = vunpack.c.h.b16 %v865
    %v3585 = vunpack.c.l.b16 %v866
    %v3586 = vunpack.c.h.b16 %v866
    %v3587 = vunpack.c.l.b16 %v867
    %v3588 = vunpack.c.l.b16 %v868
    %v3589 = vunpack.c.h.b16 %v868
    %v3590 = vunpack.c.l.b16 %v869
    %v3591 = vunpack.c.h.b16 %v869
    %v3592 = vunpack.c.l.b16 %v870
    %v3593 = vunpack.c.h.b16 %v870
    %v3594 = vunpack.c.l.b16 %v871
    %v3595 = vunpack.c.h.b16 %v871
    %v3596 = vunpack.c.l.b16 %v872
    %v3597 = vunpack.c.h.b16 %v872
    %v3598 = vunpack.c.l.b16 %v873
    %v3599 = vunpack.c.l.b16 %v874
    %v3600 = vunpack.c.h.b16 %v874
    %v3601 = vunpack.c.l.b16 %v875
    %v3602 = vunpack.c.h.b16 %v875
    %v3603 = vunpack.c.l.b16 %v876
    %v3604 = vunpack.c.h.b16 %v876
    %v3605 = vunpack.c.l.b16 %v877
    %v3606 = vunpack.c.h.b16 %v877
    %v3607 = vunpack.c.l.b16 %v878
    %v3608 = vunpack.c.h.b16 %v878
    %v3609 = vunpack.c.l.b16 %v879
    %v3610 = vunpack.c.l.b16 %v880
    %v3611 = vunpack.c.h.b16 %v880
    %v3612 = vunpack.c.l.b16 %v881
    %v3613 = vunpack.c.h.b16 %v881
    %v3614 = vunpack.c.l.b16 %v882
    %v3615 = vunpack.c.h.b16 %v882
    %v3616 = vunpack.c.l.b16 %v883
    %v3617 = vunpack.c.h.b16 %v883
    %v3618 = vunpack.c.l.b16 %v884
    %v3619 = vunpack.c.h.b16 %v884
    %v3620 = vunpack.c.l.b16 %v885
    %v3621 = vunpack.c.l.b16 %v886
    %v3622 = vunpack.c.h.b16 %v886
    %v3623 = vunpack.c.l.b16 %v887
    %v3624 = vunpack.c.h.b16 %v887
    %v3625 = vunpack.c.l.b16 %v888
    %v3626 = vunpack.c.h.b16 %v888
    %v3627 = vunpack.c.l.b16 %v889
    %v3628 = vunpack.c.h.b16 %v889
    %v3629 = vunpack.c.l.b16 %v890
    %v3630 = vunpack.c.h.b16 %v890
    %v3631 = vunpack.c.l.b16 %v891
    %v3632 = vunpack.c.l.b16 %v892
    %v3633 = vunpack.c.h.b16 %v892
    %v3634 = vunpack.c.l.b16 %v893
    %v3635 = vunpack.c.h.b16 %v893
    %v3636 = vunpack.c.l.b16 %v894
    %v3637 = vunpack.c.h.b16 %v894
    %v3638 = vunpack.c.l.b16 %v895
    %v3639 = vunpack.c.h.b16 %v895
    %v3640 = vunpack.c.l.b16 %v896
    %v3641 = vunpack.c.h.b16 %v896
    %v3642 = vunpack.c.l.b16 %v897
    %v3643 = vunpack.c.l.b16 %v898
    %v3644 = vunpack.c.h.b16 %v898
    %v3645 = vunpack.c.l.b16 %v899
    %v3646 = vunpack.c.h.b16 %v899
    %v3647 = vunpack.c.l.b16 %v900
    %v3648 = vunpack.c.h.b16 %v900
    %v3649 = vunpack.c.l.b16 %v901
    %v3650 = vunpack.c.h.b16 %v901
    %v3651 = vunpack.c.l.b16 %v902
    %v3652 = vunpack.c.h.b16 %v902
    %v3653 = vunpack.c.l.b16 %v903
    %v3654 = vunpack.c.l.b16 %v904
    %v3655 = vunpack.c.h.b16 %v904
    %v3656 = vunpack.c.l.b16 %v905
    %v3657 = vunpack.c.h.b16 %v905
    %v3658 = vunpack.c.l.b16 %v906
    %v3659 = vunpack.c.h.b16 %v906
    %v3660 = vunpack.c.l.b16 %v907
    %v3661 = vunpack.c.h.b16 %v907
    %v3662 = vunpack.c.l.b16 %v908
    %v3663 = vunpack.c.h.b16 %v908
    %v3664 = vunpack.c.l.b16 %v909
    %v3665 = vunpack.c.l.b16 %v910
    %v3666 = vunpack.c.h.b16 %v910
    %v3667 = vunpack.c.l.b16 %v911
    %v3668 = vunpack.c.h.b16 %v911
    %v3669 = vunpack.c.l.b16 %v912
    %v3670 = vunpack.c.h.b16 %v912
    %v3671 = vunpack.c.l.b16 %v913
    %v3672 = vunpack.c.h.b16 %v913
    %v3673 = vunpack.c.l.b16 %v914
    %v3674 = vunpack.c.h.b16 %v914
    %v3675 = vunpack.c.l.b16 %v915
    %v3676 = vunpack.c.l.b16 %v916
    %v3677 = vunpack.c.h.b16 %v916
    %v3678 = vunpack.c.l.b16 %v917
    %v3679 = vunpack.c.h.b16 %v917
    %v3680 = vunpack.c.l.b16 %v918
    %v3681 = vunpack.c.h.b16 %v918
    %v3682 = vunpack.c.l.b16 %v919
    %v3683 = vunpack.c.h.b16 %v919
    %v3684 = vunpack.c.l.b16 %v920
    %v3685 = vunpack.c.h.b16 %v920
    %v3686 = vunpack.c.l.b16 %v921
    %v3687 = vunpack.c.l.b16 %v922
    %v3688 = vunpack.c.h.b16 %v922
    %v3689 = vunpack.c.l.b16 %v923
    %v3690 = vunpack.c.h.b16 %v923
    %v3691 = vunpack.c.l.b16 %v924
    %v3692 = vunpack.c.h.b16 %v924
    %v3693 = vunpack.c.l.b16 %v925
    %v3694 = vunpack.c.h.b16 %v925
    %v3695 = vunpack.c.l.b16 %v926
    %v3696 = vunpack.c.h.b16 %v926
    %v3697 = vunpack.c.l.b16 %v927
    %v3698 = vunpack.c.l.b16 %v928
    %v3699 = vunpack.c.h.b16 %v928
    %v3700 = vunpack.c.l.b16 %v929
    %v3701 = vunpack.c.h.b16 %v929
    %v3702 = vunpack.c.l.b16 %v930
    %v3703 = vunpack.c.h.b16 %v930
    %v3704 = vunpack.c.l.b16 %v931
    %v3705 = vunpack.c.h.b16 %v931
    %v3706 = vunpack.c.l.b16 %v932
    %v3707 = vunpack.c.h.b16 %v932
    %v3708 = vunpack.c.l.b16 %v933
    %v3709 = vunpack.c.l.b16 %v934
    %v3710 = vunpack.c.h.b16 %v934
    %v3711 = vunpack.c.l.b16 %v935
    %v3712 = vunpack.c.h.b16 %v935
    %v3713 = vunpack.c.l.b16 %v936
    %v3714 = vunpack.c.h.b16 %v936
    %v3715 = vunpack.c.l.b16 %v937
    %v3716 = vunpack.c.h.b16 %v937
    %v3717 = vunpack.c.l.b16 %v938
    %v3718 = vunpack.c.h.b16 %v938
    %v3719 = vunpack.c.l.b16 %v939
    %v3720 = vunpack.c.l.b16 %v940
    %v3721 = vunpack.c.h.b16 %v940
    %v3722 = vunpack.c.l.b16 %v941
    %v3723 = vunpack.c.h.b16 %v941
    %v3724 = vunpack.c.l.b16 %v942
    %v3725 = vunpack.c.h.b16 %v942
    %v3726 = vunpack.c.l.b16 %v943
    %v3727 = vunpack.c.h.b16 %v943
    %v3728 = vunpack.c.l.b16 %v944
    %v3729 = vunpack.c.h.b16 %v944
    %v3730 = vunpack.c.l.b16 %v945
    %v3731 = vunpack.c.l.b16 %v946
    %v3732 = vunpack.c.h.b16 %v946
    %v3733 = vunpack.c.l.b16 %v947
    %v3734 = vunpack.c.h.b16 %v947
    %v3735 = vunpack.c.l.b16 %v948
    %v3736 = vunpack.c.h.b16 %v948
    %v3737 = vunpack.c.l.b16 %v949
    %v3738 = vunpack.c.h.b16 %v949
    %v3739 = vunpack.c.l.b16 %v950
    %v3740 = vunpack.c.h.b16 %v950
    %v3741 = vunpack.c.l.b16 %v951
    %v3742 = vunpack.c.l.b16 %v952
    %v3743 = vunpack.c.h.b16 %v952
    %v3744 = vunpack.c.l.b16 %v953
    %v3745 = vunpack.c.h.b16 %v953
    %v3746 = vunpack.c.l.b16 %v954
    %v3747 = vunpack.c.h.b16 %v954
    %v3748 = vunpack.c.l.b16 %v955
    %v3749 = vunpack.c.h.b16 %v955
    %v3750 = vunpack.c.l.b16 %v956
    %v3751 = vunpack.c.h.b16 %v956
    %v3752 = vunpack.c.l.b16 %v957
    %v3753 = vunpack.c.l.b16 %v958
    %v3754 = vunpack.c.h.b16 %v958
    %v3755 = vunpack.c.l.b16 %v959
    %v3756 = vunpack.c.h.b16 %v959
    %v3757 = vunpack.c.l.b16 %v960
    %v3758 = vunpack.c.h.b16 %v960
    %v3759 = vunpack.c.l.b16 %v961
    %v3760 = vunpack.c.h.b16 %v961
    %v3761 = vunpack.c.l.b16 %v962
    %v3762 = vunpack.c.h.b16 %v962
    %v3763 = vunpack.c.l.b16 %v963
    %v3764 = vunpack.c.l.b16 %v964
    %v3765 = vunpack.c.h.b16 %v964
    %v3766 = vunpack.c.l.b16 %v965
    %v3767 = vunpack.c.h.b16 %v965
    %v3768 = vunpack.c.l.b16 %v966
    %v3769 = vunpack.c.h.b16 %v966
    %v3770 = vunpack.c.l.b16 %v967
    %v3771 = vunpack.c.h.b16 %v967
    %v3772 = vunpack.c.l.b16 %v968
    %v3773 = vunpack.c.h.b16 %v968
    %v3774 = vunpack.c.l.b16 %v969
    %v3775 = vunpack.c.l.b16 %v970
    %v3776 = vunpack.c.h.b16 %v970
    %v3777 = vunpack.c.l.b16 %v971
    %v3778 = vunpack.c.h.b16 %v971
    %v3779 = vunpack.c.l.b16 %v972
    %v3780 = vunpack.c.h.b16 %v972
    %v3781 = vunpack.c.l.b16 %v973
    %v3782 = vunpack.c.h.b16 %v973
    %v3783 = vunpack.c.l.b16 %v974
    %v3784 = vunpack.c.h.b16 %v974
    %v3785 = vunpack.c.l.b16 %v975
    %v3786 = vunpack.c.l.b16 %v976
    %v3787 = vunpack.c.h.b16 %v976
    %v3788 = vunpack.c.l.b16 %v977
    %v3789 = vunpack.c.h.b16 %v977
    %v3790 = vunpack.c.l.b16 %v978
    %v3791 = vunpack.c.h.b16 %v978
    %v3792 = vunpack.c.l.b16 %v979
    %v3793 = vunpack.c.h.b16 %v979
    %v3794 = vunpack.c.l.b16 %v980
    %v3795 = vunpack.c.h.b16 %v980
    %v3796 = vunpack.c.l.b16 %v981
    %v3797 = vunpack.c.l.b16 %v982
    %v3798 = vunpack.c.h.b16 %v982
    %v3799 = vunpack.c.l.b16 %v983
    %v3800 = vunpack.c.h.b16 %v983
    %v3801 = vunpack.c.l.b16 %v984
    %v3802 = vunpack.c.h.b16 %v984
    %v3803 = vunpack.c.l.b16 %v985
    %v3804 = vunpack.c.h.b16 %v985
    %v3805 = vunpack.c.l.b16 %v986
    %v3806 = vunpack.c.h.b16 %v986
    %v3807 = vunpack.c.l.b16 %v987
    %v3808 = vunpack.c.l.b16 %v988
    %v3809 = vunpack.c.h.b16 %v988
    %v3810 = vunpack.c.l.b16 %v989
    %v3811 = vunpack.c.h.b16 %v989
    %v3812 = vunpack.c.l.b16 %v990
    %v3813 = vunpack.c.h.b16 %v990
    %v3814 = vunpack.c.l.b16 %v991
    %v3815 = vunpack.c.h.b16 %v991
    %v3816 = vunpack.c.l.b16 %v992
    %v3817 = vunpack.c.h.b16 %v992
    %v3818 = vunpack.c.l.b16 %v993
    %v3819 = vunpack.c.l.b16 %v994
    %v3820 = vunpack.c.h.b16 %v994
    %v3821 = vunpack.c.l.b16 %v995
    %v3822 = vunpack.c.h.b16 %v995
    %v3823 = vunpack.c.l.b16 %v996
    %v3824 = vunpack.c.h.b16 %v996
    %v3825 = vunpack.c.l.b16 %v997
    %v3826 = vunpack.c.h.b16 %v997
    %v3827 = vunpack.c.l.b16 %v998
    %v3828 = vunpack.c.h.b16 %v998
    %v3829 = vunpack.c.l.b16 %v999
    %v3830 = vunpack.c.l.b16 %v1000
    %v3831 = vunpack.c.h.b16 %v1000
    %v3832 = vunpack.c.l.b16 %v1001
    %v3833 = vunpack.c.h.b16 %v1001
    %v3834 = vunpack.c.l.b16 %v1002
    %v3835 = vunpack.c.h.b16 %v1002
    %v3836 = vunpack.c.l.b16 %v1003
    %v3837 = vunpack.c.h.b16 %v1003
    %v3838 = vunpack.c.l.b16 %v1004
    %v3839 = vunpack.c.h.b16 %v1004
    %v3840 = vunpack.c.l.b16 %v1005
    %v3841 = vunpack.c.l.b16 %v1006
    %v3842 = vunpack.c.h.b16 %v1006
    %v3843 = vunpack.c.l.b16 %v1007
    %v3844 = vunpack.c.h.b16 %v1007
    %v3845 = vunpack.c.l.b16 %v1008
    %v3846 = vunpack.c.h.b16 %v1008
    %v3847 = vunpack.c.l.b16 %v1009
    %v3848 = vunpack.c.h.b16 %v1009
    %v3849 = vunpack.c.l.b16 %v1010
    %v3850 = vunpack.c.h.b16 %v1010
    %v3851 = vunpack.c.l.b16 %v1011
    %v3852 = vunpack.c.l.b16 %v1012
    %v3853 = vunpack.c.h.b16 %v1012
    %v3854 = vunpack.c.l.b16 %v1013
    %v3855 = vunpack.c.h.b16 %v1013
    %v3856 = vunpack.c.l.b16 %v1014
    %v3857 = vunpack.c.h.b16 %v1014
    %v3858 = vunpack.c.l.b16 %v1015
    %v3859 = vunpack.c.h.b16 %v1015
    %v3860 = vunpack.c.l.b16 %v1016
    %v3861 = vunpack.c.h.b16 %v1016
    %v3862 = vunpack.c.l.b16 %v1017
    %v3863 = vunpack.c.l.b16 %v1018
    %v3864 = vunpack.c.h.b16 %v1018
    %v3865 = vunpack.c.l.b16 %v1019
    %v3866 = vunpack.c.h.b16 %v1019
    %v3867 = vunpack.c.l.b16 %v1020
    %v3868 = vunpack.c.h.b16 %v1020
    %v3869 = vunpack.c.l.b16 %v1021
    %v3870 = vunpack.c.h.b16 %v1021
    %v3871 = vunpack.c.l.b16 %v1022
    %v3872 = vunpack.c.h.b16 %v1022
    %v3873 = vunpack.c.l.b16 %v1023
    %v3874 = vunpack.c.l.b16 %v1024
    %v3875 = vunpack.c.h.b16 %v1024
    %v3876 = vunpack.c.l.b16 %v1025
    %v3877 = vunpack.c.h.b16 %v1025
    %v3878 = vunpack.c.l.b16 %v1026
    %v3879 = vunpack.c.h.b16 %v1026
    %v3880 = vunpack.c.l.b16 %v1027
    %v3881 = vunpack.c.h.b16 %v1027
    %v3882 = vunpack.c.l.b16 %v1028
    %v3883 = vunpack.c.h.b16 %v1028
    %v3884 = vunpack.c.l.b16 %v1029
    %v3885 = vunpack.c.l.b16 %v1030
    %v3886 = vunpack.c.h.b16 %v1030
    %v3887 = vunpack.c.l.b16 %v1031
    %v3888 = vunpack.c.h.b16 %v1031
    %v3889 = vunpack.c.l.b16 %v1032
    %v3890 = vunpack.c.h.b16 %v1032
    %v3891 = vunpack.c.l.b16 %v1033
    %v3892 = vunpack.c.h.b16 %v1033
    %v3893 = vunpack.c.l.b16 %v1034
    %v3894 = vunpack.c.h.b16 %v1034
    %v3895 = vunpack.c.l.b16 %v1035
    %v3896 = vunpack.c.l.b16 %v1036
    %v3897 = vunpack.c.h.b16 %v1036
    %v3898 = vunpack.c.l.b16 %v1037
    %v3899 = vunpack.c.h.b16 %v1037
    %v3900 = vunpack.c.l.b16 %v1038
    %v3901 = vunpack.c.h.b16 %v1038
    %v3902 = vunpack.c.l.b16 %v1039
    %v3903 = vunpack.c.h.b16 %v1039
    %v3904 = vunpack.c.l.b16 %v1040
    %v3905 = vunpack.c.h.b16 %v1040
    %v3906 = vunpack.c.l.b16 %v1041
    %v3907 = vunpack.c.l.b16 %v1042
    %v3908 = vunpack.c.h.b16 %v1042
    %v3909 = vunpack.c.l.b16 %v1043
    %v3910 = vunpack.c.h.b16 %v1043
    %v3911 = vunpack.c.l.b16 %v1044
    %v3912 = vunpack.c.h.b16 %v1044
    %v3913 = vunpack.c.l.b16 %v1045
    %v3914 = vunpack.c.h.b16 %v1045
    %v3915 = vunpack.c.l.b16 %v1046
    %v3916 = vunpack.c.h.b16 %v1046
    %v3917 = vunpack.c.l.b16 %v1047
    %v3918 = vunpack.c.l.b16 %v1048
    %v3919 = vunpack.c.h.b16 %v1048
    %v3920 = vunpack.c.l.b16 %v1049
    %v3921 = vunpack.c.h.b16 %v1049
    %v3922 = vunpack.c.l.b16 %v1050
    %v3923 = vunpack.c.h.b16 %v1050
    %v3924 = vunpack.c.l.b16 %v1051
    %v3925 = vunpack.c.h.b16 %v1051
    %v3926 = vunpack.c.l.b16 %v1052
    %v3927 = vunpack.c.h.b16 %v1052
    %v3928 = vunpack.c.l.b16 %v1053
    %v3929 = vunpack.c.l.b16 %v1054
    %v3930 = vunpack.c.h.b16 %v1054
    %v3931 = vunpack.c.l.b16 %v1055
    %v3932 = vunpack.c.h.b16 %v1055
    %v3933 = vunpack.c.l.b16 %v1056
    %v3934 = vunpack.c.h.b16 %v1056
    %v3935 = vunpack.c.l.b16 %v1057
    %v3936 = vunpack.c.h.b16 %v1057
    %v3937 = vunpack.c.l.b16 %v1058
    %v3938 = vunpack.c.h.b16 %v1058
    %v3939 = vunpack.c.l.b16 %v1059
    %v3940 = vunpack.c.l.b16 %v1060
    %v3941 = vunpack.c.h.b16 %v1060
    %v3942 = vunpack.c.l.b16 %v1061
    %v3943 = vunpack.c.h.b16 %v1061
    %v3944 = vunpack.c.l.b16 %v1062
    %v3945 = vunpack.c.h.b16 %v1062
    %v3946 = vunpack.c.l.b16 %v1063
    %v3947 = vunpack.c.h.b16 %v1063
    %v3948 = vunpack.c.l.b16 %v1064
    %v3949 = vunpack.c.h.b16 %v1064
    %v3950 = vunpack.c.l.b16 %v1065
    %v3951 = vunpack.c.l.b16 %v1066
    %v3952 = vunpack.c.h.b16 %v1066
    %v3953 = vunpack.c.l.b16 %v1067
    %v3954 = vunpack.c.h.b16 %v1067
    %v3955 = vunpack.c.l.b16 %v1068
    %v3956 = vunpack.c.h.b16 %v1068
    %v3957 = vunpack.c.l.b16 %v1069
    %v3958 = vunpack.c.h.b16 %v1069
    %v3959 = vunpack.c.l.b16 %v1070
    %v3960 = vunpack.c.h.b16 %v1070
    %v3961 = vunpack.c.l.b16 %v1071
    %v3962 = vunpack.c.l.b16 %v1072
    %v3963 = vunpack.c.h.b16 %v1072
    %v3964 = vunpack.c.l.b16 %v1073
    %v3965 = vunpack.c.h.b16 %v1073
    %v3966 = vunpack.c.l.b16 %v1074
    %v3967 = vunpack.c.h.b16 %v1074
    %v3968 = vunpack.c.l.b16 %v1075
    %v3969 = vunpack.c.h.b16 %v1075
    %v3970 = vunpack.c.l.b16 %v1076
    %v3971 = vunpack.c.h.b16 %v1076
    %v3972 = vunpack.c.l.b16 %v1077
    %v3973 = vunpack.c.l.b16 %v1078
    %v3974 = vunpack.c.h.b16 %v1078
    %v3975 = vunpack.c.l.b16 %v1079
    %v3976 = vunpack.c.h.b16 %v1079
    %v3977 = vunpack.c.l.b16 %v1080
    %v3978 = vunpack.c.h.b16 %v1080
    %v3979 = vunpack.c.l.b16 %v1081
    %v3980 = vunpack.c.h.b16 %v1081
    %v3981 = vunpack.c.l.b16 %v1082
    %v3982 = vunpack.c.h.b16 %v1082
    %v3983 = vunpack.c.l.b16 %v1083
    %v3984 = vunpack.c.l.b16 %v1084
    %v3985 = vunpack.c.h.b16 %v1084
    %v3986 = vunpack.c.l.b16 %v1085
    %v3987 = vunpack.c.h.b16 %v1085
    %v3988 = vunpack.c.l.b16 %v1086
    %v3989 = vunpack.c.h.b16 %v1086
    %v3990 = vunpack.c.l.b16 %v1087
    %v3991 = vunpack.c.h.b16 %v1087
    %v3992 = vunpack.c.l.b16 %v1088
    %v3993 = vunpack.c.h.b16 %v1088
    %v3994 = vunpack.c.l.b16 %v1089
    %v3995 = vunpack.c.l.b16 %v1090
    %v3996 = vunpack.c.h.b16 %v1090
    %v3997 = vunpack.c.l.b16 %v1091
    %v3998 = vunpack.c.h.b16 %v1091
    %v3999 = vunpack.c.l.b16 %v1092
    %v4000 = vunpack.c.h.b16 %v1092
    %v4001 = vunpack.c.l.b16 %v1093
    %v4002 = vunpack.c.h.b16 %v1093
    %v4003 = vunpack.c.l.b16 %v1094
    %v4004 = vunpack.c.h.b16 %v1094
    %v4005 = vunpack.c.l.b16 %v1095
    %v4006 = vunpack.c.l.b16 %v1096
    %v4007 = vunpack.c.h.b16 %v1096
    %v4008 = vunpack.c.l.b16 %v1097
    %v4009 = vunpack.c.h.b16 %v1097
    %v4010 = vunpack.c.l.b16 %v1098
    %v4011 = vunpack.c.h.b16 %v1098
    %v4012 = vunpack.c.l.b16 %v1099
    %v4013 = vunpack.c.h.b16 %v1099
    %v4014 = vunpack.c.l.b16 %v1100
    %v4015 = vunpack.c.h.b16 %v1100
    %v4016 = vunpack.c.l.b16 %v1101
    %v4017 = vpack.c.b16 %v2180, %v2169
    %v4018 = vpack.c.b16 %v2181, %v2170
    %v4019 = vpack.c.b16 %v2182, %v2171
    %v4020 = vpack.c.b16 %v2183, %v2172
    %v4021 = vpack.c.b16 %v2184, %v2173
    %v4022 = vpack.c.b16 %v2185, %v2174
    %v4023 = vpack.c.b16 %v2186, %v2175
    %v4024 = vpack.c.b16 %v2187, %v2176
    %v4025 = vpack.c.b16 %v2188, %v2177
    %v4026 = vpack.c.b16 %v2189, %v2178
    %v4027 = vpack.c.b16 %v2190, %v2179
    %v4028 = vpack.c.b16 %v2202, %v2191
    %v4029 = vpack.c.b16 %v2203, %v2192
    %v4030 = vpack.c.b16 %v2204, %v2193
    %v4031 = vpack.c.b16 %v2205, %v2194
    %v4032 = vpack.c.b16 %v2206, %v2195
    %v4033 = vpack.c.b16 %v2207, %v2196
    %v4034 = vpack.c.b16 %v2208, %v2197
    %v4035 = vpack.c.b16 %v2209, %v2198
    %v4036 = vpack.c.b16 %v2210, %v2199
    %v4037 = vpack.c.b16 %v2211, %v2200
    %v4038 = vpack.c.b16 %v2212, %v2201
    %v4039 = vpack.c.b16 %v2224, %v2213
    %v4040 = vpack.c.b16 %v2225, %v2214
    %v4041 = vpack.c.b16 %v2226, %v2215
    %v4042 = vpack.c.b16 %v2227, %v2216
    %v4043 = vpack.c.b16 %v2228, %v2217
    %v4044 = vpack.c.b16 %v2229, %v2218
    %v4045 = vpack.c.b16 %v2230, %v2219
    %v4046 = vpack.c.b16 %v2231, %v2220
    %v4047 = vpack.c.b16 %v2232, %v2221
    %v4048 = vpack.c.b16 %v2233, %v2222
    %v4049 = vpack.c.b16 %v2234, %v2223
    %v4050 = vpack.c.b16 %v2246, %v2235
    %v4051 = vpack.c.b16 %v2247, %v2236
    %v4052 = vpack.c.b16 %v2248, %v2237
    %v4053 = vpack.c.b16 %v2249, %v2238
    %v4054 = vpack.c.b16 %v2250, %v2239
    %v4055 = vpack.c.b16 %v2251, %v2240
    %v4056 = vpack.c.b16 %v2252, %v2241
    %v4057 = vpack.c.b16 %v2253, %v2242
    %v4058 = vpack.c.b16 %v2254, %v2243
    %v4059 = vpack.c.b16 %v2255, %v2244
    %v4060 = vpack.c.b16 %v2256, %v2245
    %v4061 = vpack.c.b16 %v2268, %v2257
    %v4062 = vpack.c.b16 %v2269, %v2258
    %v4063 = vpack.c.b16 %v2270, %v2259
    %v4064 = vpack.c.b16 %v2271, %v2260
    %v4065 = vpack.c.b16 %v2272, %v2261
    %v4066 = vpack.c.b16 %v2273, %v2262
    %v4067 = vpack.c.b16 %v2274, %v2263
    %v4068 = vpack.c.b16 %v2275, %v2264
    %v4069 = vpack.c.b16 %v2276, %v2265
    %v4070 = vpack.c.b16 %v2277, %v2266
    %v4071 = vpack.c.b16 %v2278, %v2267
    %v4072 = vpack.c.b16 %v2290, %v2279
    %v4073 = vpack.c.b16 %v2291, %v2280
    %v4074 = vpack.c.b16 %v2292, %v2281
    %v4075 = vpack.c.b16 %v2293, %v2282
    %v4076 = vpack.c.b16 %v2294, %v2283
    %v4077 = vpack.c.b16 %v2295, %v2284
    %v4078 = vpack.c.b16 %v2296, %v2285
    %v4079 = vpack.c.b16 %v2297, %v2286
    %v4080 = vpack.c.b16 %v2298, %v2287
    %v4081 = vpack.c.b16 %v2299, %v2288
    %v4082 = vpack.c.b16 %v2300, %v2289
    %v4083 = vpack.c.b16 %v2312, %v2301
    %v4084 = vpack.c.b16 %v2313, %v2302
    %v4085 = vpack.c.b16 %v2314, %v2303
    %v4086 = vpack.c.b16 %v2315, %v2304
    %v4087 = vpack.c.b16 %v2316, %v2305
    %v4088 = vpack.c.b16 %v2317, %v2306
    %v4089 = vpack.c.b16 %v2318, %v2307
    %v4090 = vpack.c.b16 %v2319, %v2308
    %v4091 = vpack.c.b16 %v2320, %v2309
    %v4092 = vpack.c.b16 %v2321, %v2310
    %v4093 = vpack.c.b16 %v2322, %v2311
    %v4094 = vpack.c.b16 %v2334, %v2323
    %v4095 = vpack.c.b16 %v2335, %v2324
    %v4096 = vpack.c.b16 %v2336, %v2325
    %v4097 = vpack.c.b16 %v2337, %v2326
    %v4098 = vpack.c.b16 %v2338, %v2327
    %v4099 = vpack.c.b16 %v2339, %v2328
    %v4100 = vpack.c.b16 %v2340, %v2329
    %v4101 = vpack.c.b16 %v2341, %v2330
    %v4102 = vpack.c.b16 %v2342, %v2331
    %v4103 = vpack.c.b16 %v2343, %v2332
    %v4104 = vpack.c.b16 %v2344, %v2333
    %v4105 = vpack.c.b16 %v2356, %v2345
    %v4106 = vpack.c.b16 %v2357, %v2346
    %v4107 = vpack.c.b16 %v2358, %v2347
    %v4108 = vpack.c.b16 %v2359, %v2348
    %v4109 = vpack.c.b16 %v2360, %v2349
    %v4110 = vpack.c.b16 %v2361, %v2350
    %v4111 = vpack.c.b16 %v2362, %v2351
    %v4112 = vpack.c.b16 %v2363, %v2352
    %v4113 = vpack.c.b16 %v2364, %v2353
    %v4114 = vpack.c.b16 %v2365, %v2354
    %v4115 = vpack.c.b16 %v2366, %v2355
    %v4116 = vpack.c.b16 %v2378, %v2367
    %v4117 = vpack.c.b16 %v2379, %v2368
    %v4118 = vpack.c.b16 %v2380, %v2369
    %v4119 = vpack.c.b16 %v2381, %v2370
    %v4120 = vpack.c.b16 %v2382, %v2371
    %v4121 = vpack.c.b16 %v2383, %v2372
    %v4122 = vpack.c.b16 %v2384, %v2373
    %v4123 = vpack.c.b16 %v2385, %v2374
    %v4124 = vpack.c.b16 %v2386, %v2375
    %v4125 = vpack.c.b16 %v2387, %v2376
    %v4126 = vpack.c.b16 %v2388, %v2377
    %v4127 = vpack.c.b16 %v2400, %v2389
    %v4128 = vpack.c.b16 %v2401, %v2390
    %v4129 = vpack.c.b16 %v2402, %v2391
    %v4130 = vpack.c.b16 %v2403, %v2392
    %v4131 = vpack.c.b16 %v2404, %v2393
    %v4132 = vpack.c.b16 %v2405, %v2394
    %v4133 = vpack.c.b16 %v2406, %v2395
    %v4134 = vpack.c.b16 %v2407, %v2396
    %v4135 = vpack.c.b16 %v2408, %v2397
    %v4136 = vpack.c.b16 %v2409, %v2398
    %v4137 = vpack.c.b16 %v2410, %v2399
    %v4138 = vpack.c.b16 %v2422, %v2411
    %v4139 = vpack.c.b16 %v2423, %v2412
    %v4140 = vpack.c.b16 %v2424, %v2413
    %v4141 = vpack.c.b16 %v2425, %v2414
    %v4142 = vpack.c.b16 %v2426, %v2415
    %v4143 = vpack.c.b16 %v2427, %v2416
    %v4144 = vpack.c.b16 %v2428, %v2417
    %v4145 = vpack.c.b16 %v2429, %v2418
    %v4146 = vpack.c.b16 %v2430, %v2419
    %v4147 = vpack.c.b16 %v2431, %v2420
    %v4148 = vpack.c.b16 %v2432, %v2421
    %v4149 = vpack.c.b16 %v2444, %v2433
    %v4150 = vpack.c.b16 %v2445, %v2434
    %v4151 = vpack.c.b16 %v2446, %v2435
    %v4152 = vpack.c.b16 %v2447, %v2436
    %v4153 = vpack.c.b16 %v2448, %v2437
    %v4154 = vpack.c.b16 %v2449, %v2438
    %v4155 = vpack.c.b16 %v2450, %v2439
    %v4156 = vpack.c.b16 %v2451, %v2440
    %v4157 = vpack.c.b16 %v2452, %v2441
    %v4158 = vpack.c.b16 %v2453, %v2442
    %v4159 = vpack.c.b16 %v2454, %v2443
    %v4160 = vpack.c.b16 %v2466, %v2455
    %v4161 = vpack.c.b16 %v2467, %v2456
    %v4162 = vpack.c.b16 %v2468, %v2457
    %v4163 = vpack.c.b16 %v2469, %v2458
    %v4164 = vpack.c.b16 %v2470, %v2459
    %v4165 = vpack.c.b16 %v2471, %v2460
    %v4166 = vpack.c.b16 %v2472, %v2461
    %v4167 = vpack.c.b16 %v2473, %v2462
    %v4168 = vpack.c.b16 %v2474, %v2463
    %v4169 = vpack.c.b16 %v2475, %v2464
    %v4170 = vpack.c.b16 %v2476, %v2465
    %v4171 = vpack.c.b16 %v2488, %v2477
    %v4172 = vpack.c.b16 %v2489, %v2478
    %v4173 = vpack.c.b16 %v2490, %v2479
    %v4174 = vpack.c.b16 %v2491, %v2480
    %v4175 = vpack.c.b16 %v2492, %v2481
    %v4176 = vpack.c.b16 %v2493, %v2482
    %v4177 = vpack.c.b16 %v2494, %v2483
    %v4178 = vpack.c.b16 %v2495, %v2484
    %v4179 = vpack.c.b16 %v2496, %v2485
    %v4180 = vpack.c.b16 %v2497, %v2486
    %v4181 = vpack.c.b16 %v2498, %v2487
    %v4182 = vpack.c.b16 %v2510, %v2499
    %v4183 = vpack.c.b16 %v2511, %v2500
    %v4184 = vpack.c.b16 %v2512, %v2501
    %v4185 = vpack.c.b16 %v2513, %v2502
    %v4186 = vpack.c.b16 %v2514, %v2503
    %v4187 = vpack.c.b16 %v2515, %v2504
    %v4188 = vpack.c.b16 %v2516, %v2505
    %v4189 = vpack.c.b16 %v2517, %v2506
    %v4190 = vpack.c.b16 %v2518, %v2507
    %v4191 = vpack.c.b16 %v2519, %v2508
    %v4192 = vpack.c.b16 %v2520, %v2509
    %v4193 = vpack.c.b16 %v2532, %v2521
    %v4194 = vpack.c.b16 %v2533, %v2522
    %v4195 = vpack.c.b16 %v2534, %v2523
    %v4196 = vpack.c.b16 %v2535, %v2524
    %v4197 = vpack.c.b16 %v2536, %v2525
    %v4198 = vpack.c.b16 %v2537, %v2526
    %v4199 = vpack.c.b16 %v2538, %v2527
    %v4200 = vpack.c.b16 %v2539, %v2528
    %v4201 = vpack.c.b16 %v2540, %v2529
    %v4202 = vpack.c.b16 %v2541, %v2530
    %v4203 = vpack.c.b16 %v2542, %v2531
    %v4204 = vpack.c.b16 %v2554, %v2543
    %v4205 = vpack.c.b16 %v2555, %v2544
    %v4206 = vpack.c.b16 %v2556, %v2545
    %v4207 = vpack.c.b16 %v2557, %v2546
    %v4208 = vpack.c.b16 %v2558, %v2547
    %v4209 = vpack.c.b16 %v2559, %v2548
    %v4210 = vpack.c.b16 %v2560, %v2549
    %v4211 = vpack.c.b16 %v2561, %v2550
    %v4212 = vpack.c.b16 %v2562, %v2551
    %v4213 = vpack.c.b16 %v2563, %v2552
    %v4214 = vpack.c.b16 %v2564, %v2553
    %v4215 = vpack.c.b16 %v2576, %v2565
    %v4216 = vpack.c.b16 %v2577, %v2566
    %v4217 = vpack.c.b16 %v2578, %v2567
    %v4218 = vpack.c.b16 %v2579, %v2568
    %v4219 = vpack.c.b16 %v2580, %v2569
    %v4220 = vpack.c.b16 %v2581, %v2570
    %v4221 = vpack.c.b16 %v2582, %v2571
    %v4222 = vpack.c.b16 %v2583, %v2572
    %v4223 = vpack.c.b16 %v2584, %v2573
    %v4224 = vpack.c.b16 %v2585, %v2574
    %v4225 = vpack.c.b16 %v2586, %v2575
    %v4226 = vpack.c.b16 %v2598, %v2587
    %v4227 = vpack.c.b16 %v2599, %v2588
    %v4228 = vpack.c.b16 %v2600, %v2589
    %v4229 = vpack.c.b16 %v2601, %v2590
    %v4230 = vpack.c.b16 %v2602, %v2591
    %v4231 = vpack.c.b16 %v2603, %v2592
    %v4232 = vpack.c.b16 %v2604, %v2593
    %v4233 = vpack.c.b16 %v2605, %v2594
    %v4234 = vpack.c.b16 %v2606, %v2595
    %v4235 = vpack.c.b16 %v2607, %v2596
    %v4236 = vpack.c.b16 %v2608, %v2597
    %v4237 = vpack.c.b16 %v2620, %v2609
    %v4238 = vpack.c.b16 %v2621, %v2610
    %v4239 = vpack.c.b16 %v2622, %v2611
    %v4240 = vpack.c.b16 %v2623, %v2612
    %v4241 = vpack.c.b16 %v2624, %v2613
    %v4242 = vpack.c.b16 %v2625, %v2614
    %v4243 = vpack.c.b16 %v2626, %v2615
    %v4244 = vpack.c.b16 %v2627, %v2616
    %v4245 = vpack.c.b16 %v2628, %v2617
    %v4246 = vpack.c.b16 %v2629, %v2618
    %v4247 = vpack.c.b16 %v2630, %v2619
    %v4248 = vpack.c.b16 %v2642, %v2631
    %v4249 = vpack.c.b16 %v2643, %v2632
    %v4250 = vpack.c.b16 %v2644, %v2633
    %v4251 = vpack.c.b16 %v2645, %v2634
    %v4252 = vpack.c.b16 %v2646, %v2635
    %v4253 = vpack.c.b16 %v2647, %v2636
    %v4254 = vpack.c.b16 %v2648, %v2637
    %v4255 = vpack.c.b16 %v2649, %v2638
    %v4256 = vpack.c.b16 %v2650, %v2639
    %v4257 = vpack.c.b16 %v2651, %v2640
    %v4258 = vpack.c.b16 %v2652, %v2641
    %v4259 = vpack.c.b16 %v2664, %v2653
    %v4260 = vpack.c.b16 %v2665, %v2654
    %v4261 = vpack.c.b16 %v2666, %v2655
    %v4262 = vpack.c.b16 %v2667, %v2656
    %v4263 = vpack.c.b16 %v2668, %v2657
    %v4264 = vpack.c.b16 %v2669, %v2658
    %v4265 = vpack.c.b16 %v2670, %v2659
    %v4266 = vpack.c.b16 %v2671, %v2660
    %v4267 = vpack.c.b16 %v2672, %v2661
    %v4268 = vpack.c.b16 %v2673, %v2662
    %v4269 = vpack.c.b16 %v2674, %v2663
    %v4270 = vpack.c.b16 %v2686, %v2675
    %v4271 = vpack.c.b16 %v2687, %v2676
    %v4272 = vpack.c.b16 %v2688, %v2677
    %v4273 = vpack.c.b16 %v2689, %v2678
    %v4274 = vpack.c.b16 %v2690, %v2679
    %v4275 = vpack.c.b16 %v2691, %v2680
    %v4276 = vpack.c.b16 %v2692, %v2681
    %v4277 = vpack.c.b16 %v2693, %v2682
    %v4278 = vpack.c.b16 %v2694, %v2683
    %v4279 = vpack.c.b16 %v2695, %v2684
    %v4280 = vpack.c.b16 %v2696, %v2685
    %v4281 = vpack.c.b16 %v2708, %v2697
    %v4282 = vpack.c.b16 %v2709, %v2698
    %v4283 = vpack.c.b16 %v2710, %v2699
    %v4284 = vpack.c.b16 %v2711, %v2700
    %v4285 = vpack.c.b16 %v2712, %v2701
    %v4286 = vpack.c.b16 %v2713, %v2702
    %v4287 = vpack.c.b16 %v2714, %v2703
    %v4288 = vpack.c.b16 %v2715, %v2704
    %v4289 = vpack.c.b16 %v2716, %v2705
    %v4290 = vpack.c.b16 %v2717, %v2706
    %v4291 = vpack.c.b16 %v2718, %v2707
    %v4292 = vpack.c.b16 %v2730, %v2719
    %v4293 = vpack.c.b16 %v2731, %v2720
    %v4294 = vpack.c.b16 %v2732, %v2721
    %v4295 = vpack.c.b16 %v2733, %v2722
    %v4296 = vpack.c.b16 %v2734, %v2723
    %v4297 = vpack.c.b16 %v2735, %v2724
    %v4298 = vpack.c.b16 %v2736, %v2725
    %v4299 = vpack.c.b16 %v2737, %v2726
    %v4300 = vpack.c.b16 %v2738, %v2727
    %v4301 = vpack.c.b16 %v2739, %v2728
    %v4302 = vpack.c.b16 %v2740, %v2729
    %v4303 = vpack.c.b16 %v2752, %v2741
    %v4304 = vpack.c.b16 %v2753, %v2742
    %v4305 = vpack.c.b16 %v2754, %v2743
    %v4306 = vpack.c.b16 %v2755, %v2744
    %v4307 = vpack.c.b16 %v2756, %v2745
    %v4308 = vpack.c.b16 %v2757, %v2746
    %v4309 = vpack.c.b16 %v2758, %v2747
    %v4310 = vpack.c.b16 %v2759, %v2748
    %v4311 = vpack.c.b16 %v2760, %v2749
    %v4312 = vpack.c.b16 %v2761, %v2750
    %v4313 = vpack.c.b16 %v2762, %v2751
    %v4314 = vpack.c.b16 %v2774, %v2763
    %v4315 = vpack.c.b16 %v2775, %v2764
    %v4316 = vpack.c.b16 %v2776, %v2765
    %v4317 = vpack.c.b16 %v2777, %v2766
    %v4318 = vpack.c.b16 %v2778, %v2767
    %v4319 = vpack.c.b16 %v2779, %v2768
    %v4320 = vpack.c.b16 %v2780, %v2769
    %v4321 = vpack.c.b16 %v2781, %v2770
    %v4322 = vpack.c.b16 %v2782, %v2771
    %v4323 = vpack.c.b16 %v2783, %v2772
    %v4324 = vpack.c.b16 %v2784, %v2773
    %v4325 = vpack.c.b16 %v2796, %v2785
    %v4326 = vpack.c.b16 %v2797, %v2786
    %v4327 = vpack.c.b16 %v2798, %v2787
    %v4328 = vpack.c.b16 %v2799, %v2788
    %v4329 = vpack.c.b16 %v2800, %v2789
    %v4330 = vpack.c.b16 %v2801, %v2790
    %v4331 = vpack.c.b16 %v2802, %v2791
    %v4332 = vpack.c.b16 %v2803, %v2792
    %v4333 = vpack.c.b16 %v2804, %v2793
    %v4334 = vpack.c.b16 %v2805, %v2794
    %v4335 = vpack.c.b16 %v2806, %v2795
    %v4336 = vpack.c.b16 %v2818, %v2807
    %v4337 = vpack.c.b16 %v2819, %v2808
    %v4338 = vpack.c.b16 %v2820, %v2809
    %v4339 = vpack.c.b16 %v2821, %v2810
    %v4340 = vpack.c.b16 %v2822, %v2811
    %v4341 = vpack.c.b16 %v2823, %v2812
    %v4342 = vpack.c.b16 %v2824, %v2813
    %v4343 = vpack.c.b16 %v2825, %v2814
    %v4344 = vpack.c.b16 %v2826, %v2815
    %v4345 = vpack.c.b16 %v2827, %v2816
    %v4346 = vpack.c.b16 %v2828, %v2817
    %v4347 = vpack.c.b16 %v2840, %v2829
    %v4348 = vpack.c.b16 %v2841, %v2830
    %v4349 = vpack.c.b16 %v2842, %v2831
    %v4350 = vpack.c.b16 %v2843, %v2832
    %v4351 = vpack.c.b16 %v2844, %v2833
    %v4352 = vpack.c.b16 %v2845, %v2834
    %v4353 = vpack.c.b16 %v2846, %v2835
    %v4354 = vpack.c.b16 %v2847, %v2836
    %v4355 = vpack.c.b16 %v2848, %v2837
    %v4356 = vpack.c.b16 %v2849, %v2838
    %v4357 = vpack.c.b16 %v2850, %v2839
    %v4358 = vpack.c.b16 %v2862, %v2851
    %v4359 = vpack.c.b16 %v2863, %v2852
    %v4360 = vpack.c.b16 %v2864, %v2853
    %v4361 = vpack.c.b16 %v2865, %v2854
    %v4362 = vpack.c.b16 %v2866, %v2855
    %v4363 = vpack.c.b16 %v2867, %v2856
    %v4364 = vpack.c.b16 %v2868, %v2857
    %v4365 = vpack.c.b16 %v2869, %v2858
    %v4366 = vpack.c.b16 %v2870, %v2859
    %v4367 = vpack.c.b16 %v2871, %v2860
    %v4368 = vpack.c.b16 %v2872, %v2861
    %v4369 = vpack.c.b16 %v2884, %v2873
    %v4370 = vpack.c.b16 %v2885, %v2874
    %v4371 = vpack.c.b16 %v2886, %v2875
    %v4372 = vpack.c.b16 %v2887, %v2876
    %v4373 = vpack.c.b16 %v2888, %v2877
    %v4374 = vpack.c.b16 %v2889, %v2878
    %v4375 = vpack.c.b16 %v2890, %v2879
    %v4376 = vpack.c.b16 %v2891, %v2880
    %v4377 = vpack.c.b16 %v2892, %v2881
    %v4378 = vpack.c.b16 %v2893, %v2882
    %v4379 = vpack.c.b16 %v2894, %v2883
    %v4380 = vpack.c.b16 %v2906, %v2895
    %v4381 = vpack.c.b16 %v2907, %v2896
    %v4382 = vpack.c.b16 %v2908, %v2897
    %v4383 = vpack.c.b16 %v2909, %v2898
    %v4384 = vpack.c.b16 %v2910, %v2899
    %v4385 = vpack.c.b16 %v2911, %v2900
    %v4386 = vpack.c.b16 %v2912, %v2901
    %v4387 = vpack.c.b16 %v2913, %v2902
    %v4388 = vpack.c.b16 %v2914, %v2903
    %v4389 = vpack.c.b16 %v2915, %v2904
    %v4390 = vpack.c.b16 %v2916, %v2905
    %v4391 = vpack.c.b16 %v2928, %v2917
    %v4392 = vpack.c.b16 %v2929, %v2918
    %v4393 = vpack.c.b16 %v2930, %v2919
    %v4394 = vpack.c.b16 %v2931, %v2920
    %v4395 = vpack.c.b16 %v2932, %v2921
    %v4396 = vpack.c.b16 %v2933, %v2922
    %v4397 = vpack.c.b16 %v2934, %v2923
    %v4398 = vpack.c.b16 %v2935, %v2924
    %v4399 = vpack.c.b16 %v2936, %v2925
    %v4400 = vpack.c.b16 %v2937, %v2926
    %v4401 = vpack.c.b16 %v2938, %v2927
    %v4402 = vpack.c.b16 %v2950, %v2939
    %v4403 = vpack.c.b16 %v2951, %v2940
    %v4404 = vpack.c.b16 %v2952, %v2941
    %v4405 = vpack.c.b16 %v2953, %v2942
    %v4406 = vpack.c.b16 %v2954, %v2943
    %v4407 = vpack.c.b16 %v2955, %v2944
    %v4408 = vpack.c.b16 %v2956, %v2945
    %v4409 = vpack.c.b16 %v2957, %v2946
    %v4410 = vpack.c.b16 %v2958, %v2947
    %v4411 = vpack.c.b16 %v2959, %v2948
    %v4412 = vpack.c.b16 %v2960, %v2949
    %v4413 = vpack.c.b16 %v2972, %v2961
    %v4414 = vpack.c.b16 %v2973, %v2962
    %v4415 = vpack.c.b16 %v2974, %v2963
    %v4416 = vpack.c.b16 %v2975, %v2964
    %v4417 = vpack.c.b16 %v2976, %v2965
    %v4418 = vpack.c.b16 %v2977, %v2966
    %v4419 = vpack.c.b16 %v2978, %v2967
    %v4420 = vpack.c.b16 %v2979, %v2968
    %v4421 = vpack.c.b16 %v2980, %v2969
    %v4422 = vpack.c.b16 %v2981, %v2970
    %v4423 = vpack.c.b16 %v2982, %v2971
    %v4424 = vpack.c.b16 %v2994, %v2983
    %v4425 = vpack.c.b16 %v2995, %v2984
    %v4426 = vpack.c.b16 %v2996, %v2985
    %v4427 = vpack.c.b16 %v2997, %v2986
    %v4428 = vpack.c.b16 %v2998, %v2987
    %v4429 = vpack.c.b16 %v2999, %v2988
    %v4430 = vpack.c.b16 %v3000, %v2989
    %v4431 = vpack.c.b16 %v3001, %v2990
    %v4432 = vpack.c.b16 %v3002, %v2991
    %v4433 = vpack.c.b16 %v3003, %v2992
    %v4434 = vpack.c.b16 %v3004, %v2993
    %v4435 = vpack.c.b16 %v3016, %v3005
    %v4436 = vpack.c.b16 %v3017, %v3006
    %v4437 = vpack.c.b16 %v3018, %v3007
    %v4438 = vpack.c.b16 %v3019, %v3008
    %v4439 = vpack.c.b16 %v3020, %v3009
    %v4440 = vpack.c.b16 %v3021, %v3010
    %v4441 = vpack.c.b16 %v3022, %v3011
    %v4442 = vpack.c.b16 %v3023, %v3012
    %v4443 = vpack.c.b16 %v3024, %v3013
    %v4444 = vpack.c.b16 %v3025, %v3014
    %v4445 = vpack.c.b16 %v3026, %v3015
    %v4446 = vpack.c.b16 %v3038, %v3027
    %v4447 = vpack.c.b16 %v3039, %v3028
    %v4448 = vpack.c.b16 %v3040, %v3029
    %v4449 = vpack.c.b16 %v3041, %v3030
    %v4450 = vpack.c.b16 %v3042, %v3031
    %v4451 = vpack.c.b16 %v3043, %v3032
    %v4452 = vpack.c.b16 %v3044, %v3033
    %v4453 = vpack.c.b16 %v3045, %v3034
    %v4454 = vpack.c.b16 %v3046, %v3035
    %v4455 = vpack.c.b16 %v3047, %v3036
    %v4456 = vpack.c.b16 %v3048, %v3037
    %v4457 = vpack.c.b16 %v3060, %v3049
    %v4458 = vpack.c.b16 %v3061, %v3050
    %v4459 = vpack.c.b16 %v3062, %v3051
    %v4460 = vpack.c.b16 %v3063, %v3052
    %v4461 = vpack.c.b16 %v3064, %v3053
    %v4462 = vpack.c.b16 %v3065, %v3054
    %v4463 = vpack.c.b16 %v3066, %v3055
    %v4464 = vpack.c.b16 %v3067, %v3056
    %v4465 = vpack.c.b16 %v3068, %v3057
    %v4466 = vpack.c.b16 %v3069, %v3058
    %v4467 = vpack.c.b16 %v3070, %v3059
    %v4468 = vpack.c.b16 %v3082, %v3071
    %v4469 = vpack.c.b16 %v3083, %v3072
    %v4470 = vpack.c.b16 %v3084, %v3073
    %v4471 = vpack.c.b16 %v3085, %v3074
    %v4472 = vpack.c.b16 %v3086, %v3075
    %v4473 = vpack.c.b16 %v3087, %v3076
    %v4474 = vpack.c.b16 %v3088, %v3077
    %v4475 = vpack.c.b16 %v3089, %v3078
    %v4476 = vpack.c.b16 %v3090, %v3079
    %v4477 = vpack.c.b16 %v3091, %v3080
    %v4478 = vpack.c.b16 %v3092, %v3081
    %v4479 = vpack.c.b16 %v3104, %v3093
    %v4480 = vpack.c.b16 %v3105, %v3094
    %v4481 = vpack.c.b16 %v3106, %v3095
    %v4482 = vpack.c.b16 %v3107, %v3096
    %v4483 = vpack.c.b16 %v3108, %v3097
    %v4484 = vpack.c.b16 %v3109, %v3098
    %v4485 = vpack.c.b16 %v3110, %v3099
    %v4486 = vpack.c.b16 %v3111, %v3100
    %v4487 = vpack.c.b16 %v3112, %v3101
    %v4488 = vpack.c.b16 %v3113, %v3102
    %v4489 = vpack.c.b16 %v3114, %v3103
    %v4490 = vpack.c.b16 %v3126, %v3115
    %v4491 = vpack.c.b16 %v3127, %v3116
    %v4492 = vpack.c.b16 %v3128, %v3117
    %v4493 = vpack.c.b16 %v3129, %v3118
    %v4494 = vpack.c.b16 %v3130, %v3119
    %v4495 = vpack.c.b16 %v3131, %v3120
    %v4496 = vpack.c.b16 %v3132, %v3121
    %v4497 = vpack.c.b16 %v3133, %v3122
    %v4498 = vpack.c.b16 %v3134, %v3123
    %v4499 = vpack.c.b16 %v3135, %v3124
    %v4500 = vpack.c.b16 %v3136, %v3125
    %v4501 = vpack.c.b16 %v3148, %v3137
    %v4502 = vpack.c.b16 %v3149, %v3138
    %v4503 = vpack.c.b16 %v3150, %v3139
    %v4504 = vpack.c.b16 %v3151, %v3140
    %v4505 = vpack.c.b16 %v3152, %v3141
    %v4506 = vpack.c.b16 %v3153, %v3142
    %v4507 = vpack.c.b16 %v3154, %v3143
    %v4508 = vpack.c.b16 %v3155, %v3144
    %v4509 = vpack.c.b16 %v3156, %v3145
    %v4510 = vpack.c.b16 %v3157, %v3146
    %v4511 = vpack.c.b16 %v3158, %v3147
    %v4512 = vpack.c.b16 %v3170, %v3159
    %v4513 = vpack.c.b16 %v3171, %v3160
    %v4514 = vpack.c.b16 %v3172, %v3161
    %v4515 = vpack.c.b16 %v3173, %v3162
    %v4516 = vpack.c.b16 %v3174, %v3163
    %v4517 = vpack.c.b16 %v3175, %v3164
    %v4518 = vpack.c.b16 %v3176, %v3165
    %v4519 = vpack.c.b16 %v3177, %v3166
    %v4520 = vpack.c.b16 %v3178, %v3167
    %v4521 = vpack.c.b16 %v3179, %v3168
    %v4522 = vpack.c.b16 %v3180, %v3169
    %v4523 = vpack.c.b16 %v3192, %v3181
    %v4524 = vpack.c.b16 %v3193, %v3182
    %v4525 = vpack.c.b16 %v3194, %v3183
    %v4526 = vpack.c.b16 %v3195, %v3184
    %v4527 = vpack.c.b16 %v3196, %v3185
    %v4528 = vpack.c.b16 %v3197, %v3186
    %v4529 = vpack.c.b16 %v3198, %v3187
    %v4530 = vpack.c.b16 %v3199, %v3188
    %v4531 = vpack.c.b16 %v3200, %v3189
    %v4532 = vpack.c.b16 %v3201, %v3190
    %v4533 = vpack.c.b16 %v3202, %v3191
    %v4534 = vpack.c.b16 %v3214, %v3203
    %v4535 = vpack.c.b16 %v3215, %v3204
    %v4536 = vpack.c.b16 %v3216, %v3205
    %v4537 = vpack.c.b16 %v3217, %v3206
    %v4538 = vpack.c.b16 %v3218, %v3207
    %v4539 = vpack.c.b16 %v3219, %v3208
    %v4540 = vpack.c.b16 %v3220, %v3209
    %v4541 = vpack.c.b16 %v3221, %v3210
    %v4542 = vpack.c.b16 %v3222, %v3211
    %v4543 = vpack.c.b16 %v3223, %v3212
    %v4544 = vpack.c.b16 %v3224, %v3213
    %v4545 = vpack.c.b16 %v3236, %v3225
    %v4546 = vpack.c.b16 %v3237, %v3226
    %v4547 = vpack.c.b16 %v3238, %v3227
    %v4548 = vpack.c.b16 %v3239, %v3228
    %v4549 = vpack.c.b16 %v3240, %v3229
    %v4550 = vpack.c.b16 %v3241, %v3230
    %v4551 = vpack.c.b16 %v3242, %v3231
    %v4552 = vpack.c.b16 %v3243, %v3232
    %v4553 = vpack.c.b16 %v3244, %v3233
    %v4554 = vpack.c.b16 %v3245, %v3234
    %v4555 = vpack.c.b16 %v3246, %v3235
    %v4556 = vpack.c.b16 %v3258, %v3247
    %v4557 = vpack.c.b16 %v3259, %v3248
    %v4558 = vpack.c.b16 %v3260, %v3249
    %v4559 = vpack.c.b16 %v3261, %v3250
    %v4560 = vpack.c.b16 %v3262, %v3251
    %v4561 = vpack.c.b16 %v3263, %v3252
    %v4562 = vpack.c.b16 %v3264, %v3253
    %v4563 = vpack.c.b16 %v3265, %v3254
    %v4564 = vpack.c.b16 %v3266, %v3255
    %v4565 = vpack.c.b16 %v3267, %v3256
    %v4566 = vpack.c.b16 %v3268, %v3257
    %v4567 = vpack.c.b16 %v3280, %v3269
    %v4568 = vpack.c.b16 %v3281, %v3270
    %v4569 = vpack.c.b16 %v3282, %v3271
    %v4570 = vpack.c.b16 %v3283, %v3272
    %v4571 = vpack.c.b16 %v3284, %v3273
    %v4572 = vpack.c.b16 %v3285, %v3274
    %v4573 = vpack.c.b16 %v3286, %v3275
    %v4574 = vpack.c.b16 %v3287, %v3276
    %v4575 = vpack.c.b16 %v3288, %v3277
    %v4576 = vpack.c.b16 %v3289, %v3278
    %v4577 = vpack.c.b16 %v3290, %v3279
    %v4578 = vpack.c.b16 %v3302, %v3291
    %v4579 = vpack.c.b16 %v3303, %v3292
    %v4580 = vpack.c.b16 %v3304, %v3293
    %v4581 = vpack.c.b16 %v3305, %v3294
    %v4582 = vpack.c.b16 %v3306, %v3295
    %v4583 = vpack.c.b16 %v3307, %v3296
    %v4584 = vpack.c.b16 %v3308, %v3297
    %v4585 = vpack.c.b16 %v3309, %v3298
    %v4586 = vpack.c.b16 %v3310, %v3299
    %v4587 = vpack.c.b16 %v3311, %v3300
    %v4588 = vpack.c.b16 %v3312, %v3301
    %v4589 = vpack.c.b16 %v3324, %v3313
    %v4590 = vpack.c.b16 %v3325, %v3314
    %v4591 = vpack.c.b16 %v3326, %v3315
    %v4592 = vpack.c.b16 %v3327, %v3316
    %v4593 = vpack.c.b16 %v3328, %v3317
    %v4594 = vpack.c.b16 %v3329, %v3318
    %v4595 = vpack.c.b16 %v3330, %v3319
    %v4596 = vpack.c.b16 %v3331, %v3320
    %v4597 = vpack.c.b16 %v3332, %v3321
    %v4598 = vpack.c.b16 %v3333, %v3322
    %v4599 = vpack.c.b16 %v3334, %v3323
    %v4600 = vpack.c.b16 %v3346, %v3335
    %v4601 = vpack.c.b16 %v3347, %v3336
    %v4602 = vpack.c.b16 %v3348, %v3337
    %v4603 = vpack.c.b16 %v3349, %v3338
    %v4604 = vpack.c.b16 %v3350, %v3339
    %v4605 = vpack.c.b16 %v3351, %v3340
    %v4606 = vpack.c.b16 %v3352, %v3341
    %v4607 = vpack.c.b16 %v3353, %v3342
    %v4608 = vpack.c.b16 %v3354, %v3343
    %v4609 = vpack.c.b16 %v3355, %v3344
    %v4610 = vpack.c.b16 %v3356, %v3345
    %v4611 = vpack.c.b16 %v3368, %v3357
    %v4612 = vpack.c.b16 %v3369, %v3358
    %v4613 = vpack.c.b16 %v3370, %v3359
    %v4614 = vpack.c.b16 %v3371, %v3360
    %v4615 = vpack.c.b16 %v3372, %v3361
    %v4616 = vpack.c.b16 %v3373, %v3362
    %v4617 = vpack.c.b16 %v3374, %v3363
    %v4618 = vpack.c.b16 %v3375, %v3364
    %v4619 = vpack.c.b16 %v3376, %v3365
    %v4620 = vpack.c.b16 %v3377, %v3366
    %v4621 = vpack.c.b16 %v3378, %v3367
    %v4622 = vpack.c.b16 %v3390, %v3379
    %v4623 = vpack.c.b16 %v3391, %v3380
    %v4624 = vpack.c.b16 %v3392, %v3381
    %v4625 = vpack.c.b16 %v3393, %v3382
    %v4626 = vpack.c.b16 %v3394, %v3383
    %v4627 = vpack.c.b16 %v3395, %v3384
    %v4628 = vpack.c.b16 %v3396, %v3385
    %v4629 = vpack.c.b16 %v3397, %v3386
    %v4630 = vpack.c.b16 %v3398, %v3387
    %v4631 = vpack.c.b16 %v3399, %v3388
    %v4632 = vpack.c.b16 %v3400, %v3389
    %v4633 = vpack.c.b16 %v3412, %v3401
    %v4634 = vpack.c.b16 %v3413, %v3402
    %v4635 = vpack.c.b16 %v3414, %v3403
    %v4636 = vpack.c.b16 %v3415, %v3404
    %v4637 = vpack.c.b16 %v3416, %v3405
    %v4638 = vpack.c.b16 %v3417, %v3406
    %v4639 = vpack.c.b16 %v3418, %v3407
    %v4640 = vpack.c.b16 %v3419, %v3408
    %v4641 = vpack.c.b16 %v3420, %v3409
    %v4642 = vpack.c.b16 %v3421, %v3410
    %v4643 = vpack.c.b16 %v3422, %v3411
    %v4644 = vpack.c.b16 %v3434, %v3423
    %v4645 = vpack.c.b16 %v3435, %v3424
    %v4646 = vpack.c.b16 %v3436, %v3425
    %v4647 = vpack.c.b16 %v3437, %v3426
    %v4648 = vpack.c.b16 %v3438, %v3427
    %v4649 = vpack.c.b16 %v3439, %v3428
    %v4650 = vpack.c.b16 %v3440, %v3429
    %v4651 = vpack.c.b16 %v3441, %v3430
    %v4652 = vpack.c.b16 %v3442, %v3431
    %v4653 = vpack.c.b16 %v3443, %v3432
    %v4654 = vpack.c.b16 %v3444, %v3433
    %v4655 = vpack.c.b16 %v3456, %v3445
    %v4656 = vpack.c.b16 %v3457, %v3446
    %v4657 = vpack.c.b16 %v3458, %v3447
    %v4658 = vpack.c.b16 %v3459, %v3448
    %v4659 = vpack.c.b16 %v3460, %v3449
    %v4660 = vpack.c.b16 %v3461, %v3450
    %v4661 = vpack.c.b16 %v3462, %v3451
    %v4662 = vpack.c.b16 %v3463, %v3452
    %v4663 = vpack.c.b16 %v3464, %v3453
    %v4664 = vpack.c.b16 %v3465, %v3454
    %v4665 = vpack.c.b16 %v3466, %v3455
    %v4666 = vpack.c.b16 %v3478, %v3467
    %v4667 = vpack.c.b16 %v3479, %v3468
    %v4668 = vpack.c.b16 %v3480, %v3469
    %v4669 = vpack.c.b16 %v3481, %v3470
    %v4670 = vpack.c.b16 %v3482, %v3471
    %v4671 = vpack.c.b16 %v3483, %v3472
    %v4672 = vpack.c.b16 %v3484, %v3473
    %v4673 = vpack.c.b16 %v3485, %v3474
    %v4674 = vpack.c.b16 %v3486, %v3475
    %v4675 = vpack.c.b16 %v3487, %v3476
    %v4676 = vpack.c.b16 %v3488, %v3477
    %v4677 = vpack.c.b16 %v3500, %v3489
    %v4678 = vpack.c.b16 %v3501, %v3490
    %v4679 = vpack.c.b16 %v3502, %v3491
    %v4680 = vpack.c.b16 %v3503, %v3492
    %v4681 = vpack.c.b16 %v3504, %v3493
    %v4682 = vpack.c.b16 %v3505, %v3494
    %v4683 = vpack.c.b16 %v3506, %v3495
    %v4684 = vpack.c.b16 %v3507, %v3496
    %v4685 = vpack.c.b16 %v3508, %v3497
    %v4686 = vpack.c.b16 %v3509, %v3498
    %v4687 = vpack.c.b16 %v3510, %v3499
    %v4688 = vpack.c.b16 %v3522, %v3511
    %v4689 = vpack.c.b16 %v3523, %v3512
    %v4690 = vpack.c.b16 %v3524, %v3513
    %v4691 = vpack.c.b16 %v3525, %v3514
    %v4692 = vpack.c.b16 %v3526, %v3515
    %v4693 = vpack.c.b16 %v3527, %v3516
    %v4694 = vpack.c.b16 %v3528, %v3517
    %v4695 = vpack.c.b16 %v3529, %v3518
    %v4696 = vpack.c.b16 %v3530, %v3519
    %v4697 = vpack.c.b16 %v3531, %v3520
    %v4698 = vpack.c.b16 %v3532, %v3521
    %v4699 = vpack.c.b16 %v3544, %v3533
    %v4700 = vpack.c.b16 %v3545, %v3534
    %v4701 = vpack.c.b16 %v3546, %v3535
    %v4702 = vpack.c.b16 %v3547, %v3536
    %v4703 = vpack.c.b16 %v3548, %v3537
    %v4704 = vpack.c.b16 %v3549, %v3538
    %v4705 = vpack.c.b16 %v3550, %v3539
    %v4706 = vpack.c.b16 %v3551, %v3540
    %v4707 = vpack.c.b16 %v3552, %v3541
    %v4708 = vpack.c.b16 %v3553, %v3542
    %v4709 = vpack.c.b16 %v3554, %v3543
    %v4710 = vpack.c.b16 %v3566, %v3555
    %v4711 = vpack.c.b16 %v3567, %v3556
    %v4712 = vpack.c.b16 %v3568, %v3557
    %v4713 = vpack.c.b16 %v3569, %v3558
    %v4714 = vpack.c.b16 %v3570, %v3559
    %v4715 = vpack.c.b16 %v3571, %v3560
    %v4716 = vpack.c.b16 %v3572, %v3561
    %v4717 = vpack.c.b16 %v3573, %v3562
    %v4718 = vpack.c.b16 %v3574, %v3563
    %v4719 = vpack.c.b16 %v3575, %v3564
    %v4720 = vpack.c.b16 %v3576, %v3565
    %v4721 = vpack.c.b16 %v3588, %v3577
    %v4722 = vpack.c.b16 %v3589, %v3578
    %v4723 = vpack.c.b16 %v3590, %v3579
    %v4724 = vpack.c.b16 %v3591, %v3580
    %v4725 = vpack.c.b16 %v3592, %v3581
    %v4726 = vpack.c.b16 %v3593, %v3582
    %v4727 = vpack.c.b16 %v3594, %v3583
    %v4728 = vpack.c.b16 %v3595, %v3584
    %v4729 = vpack.c.b16 %v3596, %v3585
    %v4730 = vpack.c.b16 %v3597, %v3586
    %v4731 = vpack.c.b16 %v3598, %v3587
    %v4732 = vpack.c.b16 %v3610, %v3599
    %v4733 = vpack.c.b16 %v3611, %v3600
    %v4734 = vpack.c.b16 %v3612, %v3601
    %v4735 = vpack.c.b16 %v3613, %v3602
    %v4736 = vpack.c.b16 %v3614, %v3603
    %v4737 = vpack.c.b16 %v3615, %v3604
    %v4738 = vpack.c.b16 %v3616, %v3605
    %v4739 = vpack.c.b16 %v3617, %v3606
    %v4740 = vpack.c.b16 %v3618, %v3607
    %v4741 = vpack.c.b16 %v3619, %v3608
    %v4742 = vpack.c.b16 %v3620, %v3609
    %v4743 = vpack.c.b16 %v3632, %v3621
    %v4744 = vpack.c.b16 %v3633, %v3622
    %v4745 = vpack.c.b16 %v3634, %v3623
    %v4746 = vpack.c.b16 %v3635, %v3624
    %v4747 = vpack.c.b16 %v3636, %v3625
    %v4748 = vpack.c.b16 %v3637, %v3626
    %v4749 = vpack.c.b16 %v3638, %v3627
    %v4750 = vpack.c.b16 %v3639, %v3628
    %v4751 = vpack.c.b16 %v3640, %v3629
    %v4752 = vpack.c.b16 %v3641, %v3630
    %v4753 = vpack.c.b16 %v3642, %v3631
    %v4754 = vpack.c.b16 %v3654, %v3643
    %v4755 = vpack.c.b16 %v3655, %v3644
    %v4756 = vpack.c.b16 %v3656, %v3645
    %v4757 = vpack.c.b16 %v3657, %v3646
    %v4758 = vpack.c.b16 %v3658, %v3647
    %v4759 = vpack.c.b16 %v3659, %v3648
    %v4760 = vpack.c.b16 %v3660, %v3649
    %v4761 = vpack.c.b16 %v3661, %v3650
    %v4762 = vpack.c.b16 %v3662, %v3651
    %v4763 = vpack.c.b16 %v3663, %v3652
    %v4764 = vpack.c.b16 %v3664, %v3653
    %v4765 = vpack.c.b16 %v3676, %v3665
    %v4766 = vpack.c.b16 %v3677, %v3666
    %v4767 = vpack.c.b16 %v3678, %v3667
    %v4768 = vpack.c.b16 %v3679, %v3668
    %v4769 = vpack.c.b16 %v3680, %v3669
    %v4770 = vpack.c.b16 %v3681, %v3670
    %v4771 = vpack.c.b16 %v3682, %v3671
    %v4772 = vpack.c.b16 %v3683, %v3672
    %v4773 = vpack.c.b16 %v3684, %v3673
    %v4774 = vpack.c.b16 %v3685, %v3674
    %v4775 = vpack.c.b16 %v3686, %v3675
    %v4776 = vpack.c.b16 %v3698, %v3687
    %v4777 = vpack.c.b16 %v3699, %v3688
    %v4778 = vpack.c.b16 %v3700, %v3689
    %v4779 = vpack.c.b16 %v3701, %v3690
    %v4780 = vpack.c.b16 %v3702, %v3691
    %v4781 = vpack.c.b16 %v3703, %v3692
    %v4782 = vpack.c.b16 %v3704, %v3693
    %v4783 = vpack.c.b16 %v3705, %v3694
    %v4784 = vpack.c.b16 %v3706, %v3695
    %v4785 = vpack.c.b16 %v3707, %v3696
    %v4786 = vpack.c.b16 %v3708, %v3697
    %v4787 = vpack.c.b16 %v3720, %v3709
    %v4788 = vpack.c.b16 %v3721, %v3710
    %v4789 = vpack.c.b16 %v3722, %v3711
    %v4790 = vpack.c.b16 %v3723, %v3712
    %v4791 = vpack.c.b16 %v3724, %v3713
    %v4792 = vpack.c.b16 %v3725, %v3714
    %v4793 = vpack.c.b16 %v3726, %v3715
    %v4794 = vpack.c.b16 %v3727, %v3716
    %v4795 = vpack.c.b16 %v3728, %v3717
    %v4796 = vpack.c.b16 %v3729, %v3718
    %v4797 = vpack.c.b16 %v3730, %v3719
    %v4798 = vpack.c.b16 %v3742, %v3731
    %v4799 = vpack.c.b16 %v3743, %v3732
    %v4800 = vpack.c.b16 %v3744, %v3733
    %v4801 = vpack.c.b16 %v3745, %v3734
    %v4802 = vpack.c.b16 %v3746, %v3735
    %v4803 = vpack.c.b16 %v3747, %v3736
    %v4804 = vpack.c.b16 %v3748, %v3737
    %v4805 = vpack.c.b16 %v3749, %v3738
    %v4806 = vpack.c.b16 %v3750, %v3739
    %v4807 = vpack.c.b16 %v3751, %v3740
    %v4808 = vpack.c.b16 %v3752, %v3741
    %v4809 = vpack.c.b16 %v3764, %v3753
    %v4810 = vpack.c.b16 %v3765, %v3754
    %v4811 = vpack.c.b16 %v3766, %v3755
    %v4812 = vpack.c.b16 %v3767, %v3756
    %v4813 = vpack.c.b16 %v3768, %v3757
    %v4814 = vpack.c.b16 %v3769, %v3758
    %v4815 = vpack.c.b16 %v3770, %v3759
    %v4816 = vpack.c.b16 %v3771, %v3760
    %v4817 = vpack.c.b16 %v3772, %v3761
    %v4818 = vpack.c.b16 %v3773, %v3762
    %v4819 = vpack.c.b16 %v3774, %v3763
    %v4820 = vpack.c.b16 %v3786, %v3775
    %v4821 = vpack.c.b16 %v3787, %v3776
    %v4822 = vpack.c.b16 %v3788, %v3777
    %v4823 = vpack.c.b16 %v3789, %v3778
    %v4824 = vpack.c.b16 %v3790, %v3779
    %v4825 = vpack.c.b16 %v3791, %v3780
    %v4826 = vpack.c.b16 %v3792, %v3781
    %v4827 = vpack.c.b16 %v3793, %v3782
    %v4828 = vpack.c.b16 %v3794, %v3783
    %v4829 = vpack.c.b16 %v3795, %v3784
    %v4830 = vpack.c.b16 %v3796, %v3785
    %v4831 = vpack.c.b16 %v3808, %v3797
    %v4832 = vpack.c.b16 %v3809, %v3798
    %v4833 = vpack.c.b16 %v3810, %v3799
    %v4834 = vpack.c.b16 %v3811, %v3800
    %v4835 = vpack.c.b16 %v3812, %v3801
    %v4836 = vpack.c.b16 %v3813, %v3802
    %v4837 = vpack.c.b16 %v3814, %v3803
    %v4838 = vpack.c.b16 %v3815, %v3804
    %v4839 = vpack.c.b16 %v3816, %v3805
    %v4840 = vpack.c.b16 %v3817, %v3806
    %v4841 = vpack.c.b16 %v3818, %v3807
    %v4842 = vpack.c.b16 %v3830, %v3819
    %v4843 = vpack.c.b16 %v3831, %v3820
    %v4844 = vpack.c.b16 %v3832, %v3821
    %v4845 = vpack.c.b16 %v3833, %v3822
    %v4846 = vpack.c.b16 %v3834, %v3823
    %v4847 = vpack.c.b16 %v3835, %v3824
    %v4848 = vpack.c.b16 %v3836, %v3825
    %v4849 = vpack.c.b16 %v3837, %v3826
    %v4850 = vpack.c.b16 %v3838, %v3827
    %v4851 = vpack.c.b16 %v3839, %v3828
    %v4852 = vpack.c.b16 %v3840, %v3829
    %v4853 = vpack.c.b16 %v3852, %v3841
    %v4854 = vpack.c.b16 %v3853, %v3842
    %v4855 = vpack.c.b16 %v3854, %v3843
    %v4856 = vpack.c.b16 %v3855, %v3844
    %v4857 = vpack.c.b16 %v3856, %v3845
    %v4858 = vpack.c.b16 %v3857, %v3846
    %v4859 = vpack.c.b16 %v3858, %v3847
    %v4860 = vpack.c.b16 %v3859, %v3848
    %v4861 = vpack.c.b16 %v3860, %v3849
    %v4862 = vpack.c.b16 %v3861, %v3850
    %v4863 = vpack.c.b16 %v3862, %v3851
    %v4864 = vpack.c.b16 %v3874, %v3863
    %v4865 = vpack.c.b16 %v3875, %v3864
    %v4866 = vpack.c.b16 %v3876, %v3865
    %v4867 = vpack.c.b16 %v3877, %v3866
    %v4868 = vpack.c.b16 %v3878, %v3867
    %v4869 = vpack.c.b16 %v3879, %v3868
    %v4870 = vpack.c.b16 %v3880, %v3869
    %v4871 = vpack.c.b16 %v3881, %v3870
    %v4872 = vpack.c.b16 %v3882, %v3871
    %v4873 = vpack.c.b16 %v3883, %v3872
    %v4874 = vpack.c.b16 %v3884, %v3873
    %v4875 = vpack.c.b16 %v3896, %v3885
    %v4876 = vpack.c.b16 %v3897, %v3886
    %v4877 = vpack.c.b16 %v3898, %v3887
    %v4878 = vpack.c.b16 %v3899, %v3888
    %v4879 = vpack.c.b16 %v3900, %v3889
    %v4880 = vpack.c.b16 %v3901, %v3890
    %v4881 = vpack.c.b16 %v3902, %v3891
    %v4882 = vpack.c.b16 %v3903, %v3892
    %v4883 = vpack.c.b16 %v3904, %v3893
    %v4884 = vpack.c.b16 %v3905, %v3894
    %v4885 = vpack.c.b16 %v3906, %v3895
    %v4886 = vpack.c.b16 %v3918, %v3907
    %v4887 = vpack.c.b16 %v3919, %v3908
    %v4888 = vpack.c.b16 %v3920, %v3909
    %v4889 = vpack.c.b16 %v3921, %v3910
    %v4890 = vpack.c.b16 %v3922, %v3911
    %v4891 = vpack.c.b16 %v3923, %v3912
    %v4892 = vpack.c.b16 %v3924, %v3913
    %v4893 = vpack.c.b16 %v3925, %v3914
    %v4894 = vpack.c.b16 %v3926, %v3915
    %v4895 = vpack.c.b16 %v3927, %v3916
    %v4896 = vpack.c.b16 %v3928, %v3917
    %v4897 = vpack.c.b16 %v3940, %v3929
    %v4898 = vpack.c.b16 %v3941, %v3930
    %v4899 = vpack.c.b16 %v3942, %v3931
    %v4900 = vpack.c.b16 %v3943, %v3932
    %v4901 = vpack.c.b16 %v3944, %v3933
    %v4902 = vpack.c.b16 %v3945, %v3934
    %v4903 = vpack.c.b16 %v3946, %v3935
    %v4904 = vpack.c.b16 %v3947, %v3936
    %v4905 = vpack.c.b16 %v3948, %v3937
    %v4906 = vpack.c.b16 %v3949, %v3938
    %v4907 = vpack.c.b16 %v3950, %v3939
    %v4908 = vpack.c.b16 %v3962, %v3951
    %v4909 = vpack.c.b16 %v3963, %v3952
    %v4910 = vpack.c.b16 %v3964, %v3953
    %v4911 = vpack.c.b16 %v3965, %v3954
    %v4912 = vpack.c.b16 %v3966, %v3955
    %v4913 = vpack.c.b16 %v3967, %v3956
    %v4914 = vpack.c.b16 %v3968, %v3957
    %v4915 = vpack.c.b16 %v3969, %v3958
    %v4916 = vpack.c.b16 %v3970, %v3959
    %v4917 = vpack.c.b16 %v3971, %v3960
    %v4918 = vpack.c.b16 %v3972, %v3961
    %v4919 = vpack.c.b16 %v3984, %v3973
    %v4920 = vpack.c.b16 %v3985, %v3974
    %v4921 = vpack.c.b16 %v3986, %v3975
    %v4922 = vpack.c.b16 %v3987, %v3976
    %v4923 = vpack.c.b16 %v3988, %v3977
    %v4924 = vpack.c.b16 %v3989, %v3978
    %v4925 = vpack.c.b16 %v3990, %v3979
    %v4926 = vpack.c.b16 %v3991, %v3980
    %v4927 = vpack.c.b16 %v3992, %v3981
    %v4928 = vpack.c.b16 %v3993, %v3982
    %v4929 = vpack.c.b16 %v3994, %v3983
    %v4930 = vpack.c.b16 %v4006, %v3995
    %v4931 = vpack.c.b16 %v4007, %v3996
    %v4932 = vpack.c.b16 %v4008, %v3997
    %v4933 = vpack.c.b16 %v4009, %v3998
    %v4934 = vpack.c.b16 %v4010, %v3999
    %v4935 = vpack.c.b16 %v4011, %v4000
    %v4936 = vpack.c.b16 %v4012, %v4001
    %v4937 = vpack.c.b16 %v4013, %v4002
    %v4938 = vpack.c.b16 %v4014, %v4003
    %v4939 = vpack.c.b16 %v4015, %v4004
    %v4940 = vpack.c.b16 %v4016, %v4005
    %vm5865 = vcmask 523264
    %v5867 = vsel %vm5865, %v93, 0
    %5869 = vmatprep.subr.bf16.mxu0 %v4095
    %5870 = vmatpush1.bf16.msra.mxu0 %v4094
    %5871 = vmatprep.subr.bf16.mxu0 %v4084
    %5872 = vmatpush1.bf16.msra.mxu0 %v4083
    %5873 = vmatprep.subr.bf16.mxu0 %v4073
    %5874 = vmatpush1.bf16.msra.mxu0 %v4072
    %5875 = vmatprep.subr.bf16.mxu0 %v4062
    %5876 = vmatpush1.bf16.msra.mxu0 %v4061
    %5877 = vmatprep.subr.bf16.mxu0 %v4051
    %5878 = vmatpush1.bf16.msra.mxu0 %v4050
    %5879 = vmatprep.subr.bf16.mxu0 %v4040
    %5880 = vmatpush1.bf16.msra.mxu0 %v4039
    %5881 = vmatprep.subr.bf16.mxu0 %v4029
    %5882 = vmatpush1.bf16.msra.mxu0 %v4028
    %5883 = vmatprep.subr.bf16.mxu0 %v4018
    %5884 = vmatpush1.bf16.msra.mxu0 %v4017
    %5885 = vmatprep.subr.bf16.mxu0 %v4183
    %5886 = vmatpush2.bf16.msra.mxu0 %v4182
    %5887 = vmatprep.subr.bf16.mxu0 %v4172
    %5888 = vmatpush2.bf16.msra.mxu0 %v4171
    %5889 = vmatprep.subr.bf16.mxu0 %v4161
    %5890 = vmatpush2.bf16.msra.mxu0 %v4160
    %5891 = vmatprep.subr.bf16.mxu0 %v4150
    %5892 = vmatpush2.bf16.msra.mxu0 %v4149
    %5893 = vmatprep.subr.bf16.mxu0 %v4139
    %5894 = vmatpush2.bf16.msra.mxu0 %v4138
    %5895 = vmatprep.subr.bf16.mxu0 %v4128
    %5896 = vmatpush2.bf16.msra.mxu0 %v4127
    %5897 = vmatprep.subr.bf16.mxu0 %v4117
    %5898 = vmatpush2.bf16.msra.mxu0 %v4116
    %5899 = vmatprep.subr.bf16.mxu0 %v4106
    %5900 = vmatpush2.bf16.msra.mxu0 %v4105
    %5901 = vmatprep.mubr.bf16.mxu0 %v84
    %5902 = vmatmul.mubr.bf16.gmra.mxu0 %v83
    %v5903 = vpop.f32.mrf.mxu0
    %v5904 = vadd.f32 %v1109, %v5903
    %v5905 = vpop.f32.mrf.mxu0
    %v5906 = vadd.f32 %v1113, %v5905
    %v5907 = vpop.f32.mrf.mxu0
    %v5908 = vpop.f32.mrf.mxu0
    %5909 = vdwg.mxu0
    %5910 = vmatprep.subr.bf16.mxu0 %v4271
    %5911 = vmatpush1.bf16.msra.mxu0 %v4270
    %5912 = vmatprep.subr.bf16.mxu0 %v4260
    %5913 = vmatpush1.bf16.msra.mxu0 %v4259
    %5914 = vmatprep.subr.bf16.mxu0 %v4249
    %5915 = vmatpush1.bf16.msra.mxu0 %v4248
    %5916 = vmatprep.subr.bf16.mxu0 %v4238
    %5917 = vmatpush1.bf16.msra.mxu0 %v4237
    %5918 = vmatprep.subr.bf16.mxu0 %v4227
    %5919 = vmatpush1.bf16.msra.mxu0 %v4226
    %5920 = vmatprep.subr.bf16.mxu0 %v4216
    %5921 = vmatpush1.bf16.msra.mxu0 %v4215
    %5922 = vmatprep.subr.bf16.mxu0 %v4205
    %5923 = vmatpush1.bf16.msra.mxu0 %v4204
    %5924 = vmatprep.subr.bf16.mxu0 %v4194
    %5925 = vmatpush1.bf16.msra.mxu0 %v4193
    %5926 = vmatprep.subr.bf16.mxu0 %v4359
    %5927 = vmatpush2.bf16.msra.mxu0 %v4358
    %5928 = vmatprep.subr.bf16.mxu0 %v4348
    %5929 = vmatpush2.bf16.msra.mxu0 %v4347
    %5930 = vmatprep.subr.bf16.mxu0 %v4337
    %5931 = vmatpush2.bf16.msra.mxu0 %v4336
    %5932 = vmatprep.subr.bf16.mxu0 %v4326
    %5933 = vmatpush2.bf16.msra.mxu0 %v4325
    %5934 = vmatprep.subr.bf16.mxu0 %v4315
    %5935 = vmatpush2.bf16.msra.mxu0 %v4314
    %5936 = vmatprep.subr.bf16.mxu0 %v4304
    %5937 = vmatpush2.bf16.msra.mxu0 %v4303
    %5938 = vmatprep.subr.bf16.mxu0 %v4293
    %5939 = vmatpush2.bf16.msra.mxu0 %v4292
    %5940 = vmatprep.subr.bf16.mxu0 %v4282
    %5941 = vmatpush2.bf16.msra.mxu0 %v4281
    %5942 = vmatprep.mubr.bf16.mxu0 %v86
    %5943 = vmatmul.mubr.bf16.gmra.mxu0 %v85
    %v5944 = vpop.f32.mrf.mxu0
    %v5945 = vadd.f32 %v5904, %v5944
    %v5946 = vpop.f32.mrf.mxu0
    %v5947 = vadd.f32 %v5906, %v5946
    %v5948 = vpop.f32.mrf.mxu0
    %v5949 = vpop.f32.mrf.mxu0
    %5950 = vdwg.mxu0
    %5951 = vmatprep.subr.bf16.mxu0 %v4447
    %5952 = vmatpush1.bf16.msra.mxu0 %v4446
    %5953 = vmatprep.subr.bf16.mxu0 %v4436
    %5954 = vmatpush1.bf16.msra.mxu0 %v4435
    %5955 = vmatprep.subr.bf16.mxu0 %v4425
    %5956 = vmatpush1.bf16.msra.mxu0 %v4424
    %5957 = vmatprep.subr.bf16.mxu0 %v4414
    %5958 = vmatpush1.bf16.msra.mxu0 %v4413
    %5959 = vmatprep.subr.bf16.mxu0 %v4403
    %5960 = vmatpush1.bf16.msra.mxu0 %v4402
    %5961 = vmatprep.subr.bf16.mxu0 %v4392
    %5962 = vmatpush1.bf16.msra.mxu0 %v4391
    %5963 = vmatprep.subr.bf16.mxu0 %v4381
    %5964 = vmatpush1.bf16.msra.mxu0 %v4380
    %5965 = vmatprep.subr.bf16.mxu0 %v4370
    %5966 = vmatpush1.bf16.msra.mxu0 %v4369
    %5967 = vmatprep.subr.bf16.mxu0 %v4535
    %5968 = vmatpush2.bf16.msra.mxu0 %v4534
    %5969 = vmatprep.subr.bf16.mxu0 %v4524
    %5970 = vmatpush2.bf16.msra.mxu0 %v4523
    %5971 = vmatprep.subr.bf16.mxu0 %v4513
    %5972 = vmatpush2.bf16.msra.mxu0 %v4512
    %5973 = vmatprep.subr.bf16.mxu0 %v4502
    %5974 = vmatpush2.bf16.msra.mxu0 %v4501
    %5975 = vmatprep.subr.bf16.mxu0 %v4491
    %5976 = vmatpush2.bf16.msra.mxu0 %v4490
    %5977 = vmatprep.subr.bf16.mxu0 %v4480
    %5978 = vmatpush2.bf16.msra.mxu0 %v4479
    %5979 = vmatprep.subr.bf16.mxu0 %v4469
    %5980 = vmatpush2.bf16.msra.mxu0 %v4468
    %5981 = vmatprep.subr.bf16.mxu0 %v4458
    %5982 = vmatpush2.bf16.msra.mxu0 %v4457
    %5983 = vmatprep.mubr.bf16.mxu0 %v88
    %5984 = vmatmul.mubr.bf16.gmra.mxu0 %v87
    %v5985 = vpop.f32.mrf.mxu0
    %v5986 = vadd.f32 %v5945, %v5985
    %v5987 = vpop.f32.mrf.mxu0
    %v5988 = vadd.f32 %v5947, %v5987
    %v5989 = vpop.f32.mrf.mxu0
    %v5990 = vpop.f32.mrf.mxu0
    %5991 = vdwg.mxu0
    %5992 = vmatprep.subr.bf16.mxu0 %v4623
    %5993 = vmatpush1.bf16.msra.mxu0 %v4622
    %5994 = vmatprep.subr.bf16.mxu0 %v4612
    %5995 = vmatpush1.bf16.msra.mxu0 %v4611
    %5996 = vmatprep.subr.bf16.mxu0 %v4601
    %5997 = vmatpush1.bf16.msra.mxu0 %v4600
    %5998 = vmatprep.subr.bf16.mxu0 %v4590
    %5999 = vmatpush1.bf16.msra.mxu0 %v4589
    %6000 = vmatprep.subr.bf16.mxu0 %v4579
    %6001 = vmatpush1.bf16.msra.mxu0 %v4578
    %6002 = vmatprep.subr.bf16.mxu0 %v4568
    %6003 = vmatpush1.bf16.msra.mxu0 %v4567
    %6004 = vmatprep.subr.bf16.mxu0 %v4557
    %6005 = vmatpush1.bf16.msra.mxu0 %v4556
    %6006 = vmatprep.subr.bf16.mxu0 %v4546
    %6007 = vmatpush1.bf16.msra.mxu0 %v4545
    %6008 = vmatprep.subr.bf16.mxu0 %v4711
    %6009 = vmatpush2.bf16.msra.mxu0 %v4710
    %6010 = vmatprep.subr.bf16.mxu0 %v4700
    %6011 = vmatpush2.bf16.msra.mxu0 %v4699
    %6012 = vmatprep.subr.bf16.mxu0 %v4689
    %6013 = vmatpush2.bf16.msra.mxu0 %v4688
    %6014 = vmatprep.subr.bf16.mxu0 %v4678
    %6015 = vmatpush2.bf16.msra.mxu0 %v4677
    %6016 = vmatprep.subr.bf16.mxu0 %v4667
    %6017 = vmatpush2.bf16.msra.mxu0 %v4666
    %6018 = vmatprep.subr.bf16.mxu0 %v4656
    %6019 = vmatpush2.bf16.msra.mxu0 %v4655
    %6020 = vmatprep.subr.bf16.mxu0 %v4645
    %6021 = vmatpush2.bf16.msra.mxu0 %v4644
    %6022 = vmatprep.subr.bf16.mxu0 %v4634
    %6023 = vmatpush2.bf16.msra.mxu0 %v4633
    %6024 = vmatprep.mubr.bf16.mxu0 %v90
    %6025 = vmatmul.mubr.bf16.gmra.mxu0 %v89
    %v6026 = vpop.f32.mrf.mxu0
    %v6027 = vadd.f32 %v5986, %v6026
    %v6028 = vpop.f32.mrf.mxu0
    %v6029 = vadd.f32 %v5988, %v6028
    %v6030 = vpop.f32.mrf.mxu0
    %v6031 = vpop.f32.mrf.mxu0
    %6032 = vdwg.mxu0
    %6033 = vmatprep.subr.bf16.mxu0 %v4799
    %6034 = vmatpush1.bf16.msra.mxu0 %v4798
    %6035 = vmatprep.subr.bf16.mxu0 %v4788
    %6036 = vmatpush1.bf16.msra.mxu0 %v4787
    %6037 = vmatprep.subr.bf16.mxu0 %v4777
    %6038 = vmatpush1.bf16.msra.mxu0 %v4776
    %6039 = vmatprep.subr.bf16.mxu0 %v4766
    %6040 = vmatpush1.bf16.msra.mxu0 %v4765
    %6041 = vmatprep.subr.bf16.mxu0 %v4755
    %6042 = vmatpush1.bf16.msra.mxu0 %v4754
    %6043 = vmatprep.subr.bf16.mxu0 %v4744
    %6044 = vmatpush1.bf16.msra.mxu0 %v4743
    %6045 = vmatprep.subr.bf16.mxu0 %v4733
    %6046 = vmatpush1.bf16.msra.mxu0 %v4732
    %6047 = vmatprep.subr.bf16.mxu0 %v4722
    %6048 = vmatpush1.bf16.msra.mxu0 %v4721
    %6049 = vmatprep.subr.bf16.mxu0 %v4887
    %6050 = vmatpush2.bf16.msra.mxu0 %v4886
    %6051 = vmatprep.subr.bf16.mxu0 %v4876
    %6052 = vmatpush2.bf16.msra.mxu0 %v4875
    %6053 = vmatprep.subr.bf16.mxu0 %v4865
    %6054 = vmatpush2.bf16.msra.mxu0 %v4864
    %6055 = vmatprep.subr.bf16.mxu0 %v4854
    %6056 = vmatpush2.bf16.msra.mxu0 %v4853
    %6057 = vmatprep.subr.bf16.mxu0 %v4843
    %6058 = vmatpush2.bf16.msra.mxu0 %v4842
    %6059 = vmatprep.subr.bf16.mxu0 %v4832
    %6060 = vmatpush2.bf16.msra.mxu0 %v4831
    %6061 = vmatprep.subr.bf16.mxu0 %v4821
    %6062 = vmatpush2.bf16.msra.mxu0 %v4820
    %6063 = vmatprep.subr.bf16.mxu0 %v4810
    %6064 = vmatpush2.bf16.msra.mxu0 %v4809
    %6065 = vmatprep.mubr.bf16.mxu0 %v92
    %6066 = vmatmul.mubr.bf16.gmra.mxu0 %v91
    %v6067 = vpop.f32.mrf.mxu0
    %v6068 = vadd.f32 %v6027, %v6067
    %v6069 = vpop.f32.mrf.mxu0
    %v6070 = vadd.f32 %v6029, %v6069
    %v6071 = vpop.f32.mrf.mxu0
    %v6072 = vpop.f32.mrf.mxu0
    %6073 = vdwg.mxu0
    %6074 = vmatprep.subr.bf16.mxu0 0
    %6075 = vmatpush1.bf16.msra.mxu0 0
    %6076 = vmatprep.subr.bf16.mxu0 0
    %6077 = vmatpush1.bf16.msra.mxu0 0
    %6078 = vmatprep.subr.bf16.mxu0 0
    %6079 = vmatpush1.bf16.msra.mxu0 0
    %6080 = vmatprep.subr.bf16.mxu0 0
    %6081 = vmatpush1.bf16.msra.mxu0 0
    %6082 = vmatprep.subr.bf16.mxu0 %v4931
    %6083 = vmatpush1.bf16.msra.mxu0 %v4930
    %6084 = vmatprep.subr.bf16.mxu0 %v4920
    %6085 = vmatpush1.bf16.msra.mxu0 %v4919
    %6086 = vmatprep.subr.bf16.mxu0 %v4909
    %6087 = vmatpush1.bf16.msra.mxu0 %v4908
    %6088 = vmatprep.subr.bf16.mxu0 %v4898
    %6089 = vmatpush1.bf16.msra.mxu0 %v4897
    %6090 = vmatprep.subr.bf16.mxu0 0
    %6091 = vmatpush2.bf16.msra.mxu0 0
    %6092 = vmatprep.subr.bf16.mxu0 0
    %6093 = vmatpush2.bf16.msra.mxu0 0
    %6094 = vmatprep.subr.bf16.mxu0 0
    %6095 = vmatpush2.bf16.msra.mxu0 0
    %6096 = vmatprep.subr.bf16.mxu0 0
    %6097 = vmatpush2.bf16.msra.mxu0 0
    %6098 = vmatprep.subr.bf16.mxu0 0
    %6099 = vmatpush2.bf16.msra.mxu0 0
    %6100 = vmatprep.subr.bf16.mxu0 0
    %6101 = vmatpush2.bf16.msra.mxu0 0
    %6102 = vmatprep.subr.bf16.mxu0 0
    %6103 = vmatpush2.bf16.msra.mxu0 0
    %6104 = vmatprep.subr.bf16.mxu0 0
    %6105 = vmatpush2.bf16.msra.mxu0 0
    %6106 = vmatprep.mubr.bf16.mxu0 0
    %6107 = vmatmul.mubr.bf16.gmra.mxu0 %v5867
    %v6108 = vpop.f32.mrf.mxu0
    %v6109 = vadd.f32 %v6068, %v6108
    %v6110 = vpop.f32.mrf.mxu0
    %v6111 = vadd.f32 %v6070, %v6110
    %v6112 = vpop.f32.mrf.mxu0
    %v6113 = vpop.f32.mrf.mxu0
    %6114 = vdwg.mxu0
    %6115 = vmatprep.subr.bf16.mxu0 %v4097
    %6116 = vmatpush1.bf16.msra.mxu0 %v4096
    %6117 = vmatprep.subr.bf16.mxu0 %v4086
    %6118 = vmatpush1.bf16.msra.mxu0 %v4085
    %6119 = vmatprep.subr.bf16.mxu0 %v4075
    %6120 = vmatpush1.bf16.msra.mxu0 %v4074
    %6121 = vmatprep.subr.bf16.mxu0 %v4064
    %6122 = vmatpush1.bf16.msra.mxu0 %v4063
    %6123 = vmatprep.subr.bf16.mxu0 %v4053
    %6124 = vmatpush1.bf16.msra.mxu0 %v4052
    %6125 = vmatprep.subr.bf16.mxu0 %v4042
    %6126 = vmatpush1.bf16.msra.mxu0 %v4041
    %6127 = vmatprep.subr.bf16.mxu0 %v4031
    %6128 = vmatpush1.bf16.msra.mxu0 %v4030
    %6129 = vmatprep.subr.bf16.mxu0 %v4020
    %6130 = vmatpush1.bf16.msra.mxu0 %v4019
    %6131 = vmatprep.subr.bf16.mxu0 %v4185
    %6132 = vmatpush2.bf16.msra.mxu0 %v4184
    %6133 = vmatprep.subr.bf16.mxu0 %v4174
    %6134 = vmatpush2.bf16.msra.mxu0 %v4173
    %6135 = vmatprep.subr.bf16.mxu0 %v4163
    %6136 = vmatpush2.bf16.msra.mxu0 %v4162
    %6137 = vmatprep.subr.bf16.mxu0 %v4152
    %6138 = vmatpush2.bf16.msra.mxu0 %v4151
    %6139 = vmatprep.subr.bf16.mxu0 %v4141
    %6140 = vmatpush2.bf16.msra.mxu0 %v4140
    %6141 = vmatprep.subr.bf16.mxu0 %v4130
    %6142 = vmatpush2.bf16.msra.mxu0 %v4129
    %6143 = vmatprep.subr.bf16.mxu0 %v4119
    %6144 = vmatpush2.bf16.msra.mxu0 %v4118
    %6145 = vmatprep.subr.bf16.mxu0 %v4108
    %6146 = vmatpush2.bf16.msra.mxu0 %v4107
    %6147 = vmatprep.mubr.bf16.mxu0 %v84
    %6148 = vmatmul.mubr.bf16.gmra.mxu0 %v83
    %v6149 = vpop.f32.mrf.mxu0
    %v6150 = vadd.f32 %v1117, %v6149
    %v6151 = vpop.f32.mrf.mxu0
    %v6152 = vadd.f32 %v1121, %v6151
    %v6153 = vpop.f32.mrf.mxu0
    %v6154 = vpop.f32.mrf.mxu0
    %6155 = vdwg.mxu0
    %6156 = vmatprep.subr.bf16.mxu0 %v4273
    %6157 = vmatpush1.bf16.msra.mxu0 %v4272
    %6158 = vmatprep.subr.bf16.mxu0 %v4262
    %6159 = vmatpush1.bf16.msra.mxu0 %v4261
    %6160 = vmatprep.subr.bf16.mxu0 %v4251
    %6161 = vmatpush1.bf16.msra.mxu0 %v4250
    %6162 = vmatprep.subr.bf16.mxu0 %v4240
    %6163 = vmatpush1.bf16.msra.mxu0 %v4239
    %6164 = vmatprep.subr.bf16.mxu0 %v4229
    %6165 = vmatpush1.bf16.msra.mxu0 %v4228
    %6166 = vmatprep.subr.bf16.mxu0 %v4218
    %6167 = vmatpush1.bf16.msra.mxu0 %v4217
    %6168 = vmatprep.subr.bf16.mxu0 %v4207
    %6169 = vmatpush1.bf16.msra.mxu0 %v4206
    %6170 = vmatprep.subr.bf16.mxu0 %v4196
    %6171 = vmatpush1.bf16.msra.mxu0 %v4195
    %6172 = vmatprep.subr.bf16.mxu0 %v4361
    %6173 = vmatpush2.bf16.msra.mxu0 %v4360
    %6174 = vmatprep.subr.bf16.mxu0 %v4350
    %6175 = vmatpush2.bf16.msra.mxu0 %v4349
    %6176 = vmatprep.subr.bf16.mxu0 %v4339
    %6177 = vmatpush2.bf16.msra.mxu0 %v4338
    %6178 = vmatprep.subr.bf16.mxu0 %v4328
    %6179 = vmatpush2.bf16.msra.mxu0 %v4327
    %6180 = vmatprep.subr.bf16.mxu0 %v4317
    %6181 = vmatpush2.bf16.msra.mxu0 %v4316
    %6182 = vmatprep.subr.bf16.mxu0 %v4306
    %6183 = vmatpush2.bf16.msra.mxu0 %v4305
    %6184 = vmatprep.subr.bf16.mxu0 %v4295
    %6185 = vmatpush2.bf16.msra.mxu0 %v4294
    %6186 = vmatprep.subr.bf16.mxu0 %v4284
    %6187 = vmatpush2.bf16.msra.mxu0 %v4283
    %6188 = vmatprep.mubr.bf16.mxu0 %v86
    %6189 = vmatmul.mubr.bf16.gmra.mxu0 %v85
    %v6190 = vpop.f32.mrf.mxu0
    %v6191 = vadd.f32 %v6150, %v6190
    %v6192 = vpop.f32.mrf.mxu0
    %v6193 = vadd.f32 %v6152, %v6192
    %v6194 = vpop.f32.mrf.mxu0
    %v6195 = vpop.f32.mrf.mxu0
    %6196 = vdwg.mxu0
    %6197 = vmatprep.subr.bf16.mxu0 %v4449
    %6198 = vmatpush1.bf16.msra.mxu0 %v4448
    %6199 = vmatprep.subr.bf16.mxu0 %v4438
    %6200 = vmatpush1.bf16.msra.mxu0 %v4437
    %6201 = vmatprep.subr.bf16.mxu0 %v4427
    %6202 = vmatpush1.bf16.msra.mxu0 %v4426
    %6203 = vmatprep.subr.bf16.mxu0 %v4416
    %6204 = vmatpush1.bf16.msra.mxu0 %v4415
    %6205 = vmatprep.subr.bf16.mxu0 %v4405
    %6206 = vmatpush1.bf16.msra.mxu0 %v4404
    %6207 = vmatprep.subr.bf16.mxu0 %v4394
    %6208 = vmatpush1.bf16.msra.mxu0 %v4393
    %6209 = vmatprep.subr.bf16.mxu0 %v4383
    %6210 = vmatpush1.bf16.msra.mxu0 %v4382
    %6211 = vmatprep.subr.bf16.mxu0 %v4372
    %6212 = vmatpush1.bf16.msra.mxu0 %v4371
    %6213 = vmatprep.subr.bf16.mxu0 %v4537
    %6214 = vmatpush2.bf16.msra.mxu0 %v4536
    %6215 = vmatprep.subr.bf16.mxu0 %v4526
    %6216 = vmatpush2.bf16.msra.mxu0 %v4525
    %6217 = vmatprep.subr.bf16.mxu0 %v4515
    %6218 = vmatpush2.bf16.msra.mxu0 %v4514
    %6219 = vmatprep.subr.bf16.mxu0 %v4504
    %6220 = vmatpush2.bf16.msra.mxu0 %v4503
    %6221 = vmatprep.subr.bf16.mxu0 %v4493
    %6222 = vmatpush2.bf16.msra.mxu0 %v4492
    %6223 = vmatprep.subr.bf16.mxu0 %v4482
    %6224 = vmatpush2.bf16.msra.mxu0 %v4481
    %6225 = vmatprep.subr.bf16.mxu0 %v4471
    %6226 = vmatpush2.bf16.msra.mxu0 %v4470
    %6227 = vmatprep.subr.bf16.mxu0 %v4460
    %6228 = vmatpush2.bf16.msra.mxu0 %v4459
    %6229 = vmatprep.mubr.bf16.mxu0 %v88
    %6230 = vmatmul.mubr.bf16.gmra.mxu0 %v87
    %v6231 = vpop.f32.mrf.mxu0
    %v6232 = vadd.f32 %v6191, %v6231
    %v6233 = vpop.f32.mrf.mxu0
    %v6234 = vadd.f32 %v6193, %v6233
    %v6235 = vpop.f32.mrf.mxu0
    %v6236 = vpop.f32.mrf.mxu0
    %6237 = vdwg.mxu0
    %6238 = vmatprep.subr.bf16.mxu0 %v4625
    %6239 = vmatpush1.bf16.msra.mxu0 %v4624
    %6240 = vmatprep.subr.bf16.mxu0 %v4614
    %6241 = vmatpush1.bf16.msra.mxu0 %v4613
    %6242 = vmatprep.subr.bf16.mxu0 %v4603
    %6243 = vmatpush1.bf16.msra.mxu0 %v4602
    %6244 = vmatprep.subr.bf16.mxu0 %v4592
    %6245 = vmatpush1.bf16.msra.mxu0 %v4591
    %6246 = vmatprep.subr.bf16.mxu0 %v4581
    %6247 = vmatpush1.bf16.msra.mxu0 %v4580
    %6248 = vmatprep.subr.bf16.mxu0 %v4570
    %6249 = vmatpush1.bf16.msra.mxu0 %v4569
    %6250 = vmatprep.subr.bf16.mxu0 %v4559
    %6251 = vmatpush1.bf16.msra.mxu0 %v4558
    %6252 = vmatprep.subr.bf16.mxu0 %v4548
    %6253 = vmatpush1.bf16.msra.mxu0 %v4547
    %6254 = vmatprep.subr.bf16.mxu0 %v4713
    %6255 = vmatpush2.bf16.msra.mxu0 %v4712
    %6256 = vmatprep.subr.bf16.mxu0 %v4702
    %6257 = vmatpush2.bf16.msra.mxu0 %v4701
    %6258 = vmatprep.subr.bf16.mxu0 %v4691
    %6259 = vmatpush2.bf16.msra.mxu0 %v4690
    %6260 = vmatprep.subr.bf16.mxu0 %v4680
    %6261 = vmatpush2.bf16.msra.mxu0 %v4679
    %6262 = vmatprep.subr.bf16.mxu0 %v4669
    %6263 = vmatpush2.bf16.msra.mxu0 %v4668
    %6264 = vmatprep.subr.bf16.mxu0 %v4658
    %6265 = vmatpush2.bf16.msra.mxu0 %v4657
    %6266 = vmatprep.subr.bf16.mxu0 %v4647
    %6267 = vmatpush2.bf16.msra.mxu0 %v4646
    %6268 = vmatprep.subr.bf16.mxu0 %v4636
    %6269 = vmatpush2.bf16.msra.mxu0 %v4635
    %6270 = vmatprep.mubr.bf16.mxu0 %v90
    %6271 = vmatmul.mubr.bf16.gmra.mxu0 %v89
    %v6272 = vpop.f32.mrf.mxu0
    %v6273 = vadd.f32 %v6232, %v6272
    %v6274 = vpop.f32.mrf.mxu0
    %v6275 = vadd.f32 %v6234, %v6274
    %v6276 = vpop.f32.mrf.mxu0
    %v6277 = vpop.f32.mrf.mxu0
    %6278 = vdwg.mxu0
    %6279 = vmatprep.subr.bf16.mxu0 %v4801
    %6280 = vmatpush1.bf16.msra.mxu0 %v4800
    %6281 = vmatprep.subr.bf16.mxu0 %v4790
    %6282 = vmatpush1.bf16.msra.mxu0 %v4789
    %6283 = vmatprep.subr.bf16.mxu0 %v4779
    %6284 = vmatpush1.bf16.msra.mxu0 %v4778
    %6285 = vmatprep.subr.bf16.mxu0 %v4768
    %6286 = vmatpush1.bf16.msra.mxu0 %v4767
    %6287 = vmatprep.subr.bf16.mxu0 %v4757
    %6288 = vmatpush1.bf16.msra.mxu0 %v4756
    %6289 = vmatprep.subr.bf16.mxu0 %v4746
    %6290 = vmatpush1.bf16.msra.mxu0 %v4745
    %6291 = vmatprep.subr.bf16.mxu0 %v4735
    %6292 = vmatpush1.bf16.msra.mxu0 %v4734
    %6293 = vmatprep.subr.bf16.mxu0 %v4724
    %6294 = vmatpush1.bf16.msra.mxu0 %v4723
    %6295 = vmatprep.subr.bf16.mxu0 %v4889
    %6296 = vmatpush2.bf16.msra.mxu0 %v4888
    %6297 = vmatprep.subr.bf16.mxu0 %v4878
    %6298 = vmatpush2.bf16.msra.mxu0 %v4877
    %6299 = vmatprep.subr.bf16.mxu0 %v4867
    %6300 = vmatpush2.bf16.msra.mxu0 %v4866
    %6301 = vmatprep.subr.bf16.mxu0 %v4856
    %6302 = vmatpush2.bf16.msra.mxu0 %v4855
    %6303 = vmatprep.subr.bf16.mxu0 %v4845
    %6304 = vmatpush2.bf16.msra.mxu0 %v4844
    %6305 = vmatprep.subr.bf16.mxu0 %v4834
    %6306 = vmatpush2.bf16.msra.mxu0 %v4833
    %6307 = vmatprep.subr.bf16.mxu0 %v4823
    %6308 = vmatpush2.bf16.msra.mxu0 %v4822
    %6309 = vmatprep.subr.bf16.mxu0 %v4812
    %6310 = vmatpush2.bf16.msra.mxu0 %v4811
    %6311 = vmatprep.mubr.bf16.mxu0 %v92
    %6312 = vmatmul.mubr.bf16.gmra.mxu0 %v91
    %v6313 = vpop.f32.mrf.mxu0
    %v6314 = vadd.f32 %v6273, %v6313
    %v6315 = vpop.f32.mrf.mxu0
    %v6316 = vadd.f32 %v6275, %v6315
    %v6317 = vpop.f32.mrf.mxu0
    %v6318 = vpop.f32.mrf.mxu0
    %6319 = vdwg.mxu0
    %6320 = vmatprep.subr.bf16.mxu0 0
    %6321 = vmatpush1.bf16.msra.mxu0 0
    %6322 = vmatprep.subr.bf16.mxu0 0
    %6323 = vmatpush1.bf16.msra.mxu0 0
    %6324 = vmatprep.subr.bf16.mxu0 0
    %6325 = vmatpush1.bf16.msra.mxu0 0
    %6326 = vmatprep.subr.bf16.mxu0 0
    %6327 = vmatpush1.bf16.msra.mxu0 0
    %6328 = vmatprep.subr.bf16.mxu0 %v4933
    %6329 = vmatpush1.bf16.msra.mxu0 %v4932
    %6330 = vmatprep.subr.bf16.mxu0 %v4922
    %6331 = vmatpush1.bf16.msra.mxu0 %v4921
    %6332 = vmatprep.subr.bf16.mxu0 %v4911
    %6333 = vmatpush1.bf16.msra.mxu0 %v4910
    %6334 = vmatprep.subr.bf16.mxu0 %v4900
    %6335 = vmatpush1.bf16.msra.mxu0 %v4899
    %6336 = vmatprep.subr.bf16.mxu0 0
    %6337 = vmatpush2.bf16.msra.mxu0 0
    %6338 = vmatprep.subr.bf16.mxu0 0
    %6339 = vmatpush2.bf16.msra.mxu0 0
    %6340 = vmatprep.subr.bf16.mxu0 0
    %6341 = vmatpush2.bf16.msra.mxu0 0
    %6342 = vmatprep.subr.bf16.mxu0 0
    %6343 = vmatpush2.bf16.msra.mxu0 0
    %6344 = vmatprep.subr.bf16.mxu0 0
    %6345 = vmatpush2.bf16.msra.mxu0 0
    %6346 = vmatprep.subr.bf16.mxu0 0
    %6347 = vmatpush2.bf16.msra.mxu0 0
    %6348 = vmatprep.subr.bf16.mxu0 0
    %6349 = vmatpush2.bf16.msra.mxu0 0
    %6350 = vmatprep.subr.bf16.mxu0 0
    %6351 = vmatpush2.bf16.msra.mxu0 0
    %6352 = vmatprep.mubr.bf16.mxu0 0
    %6353 = vmatmul.mubr.bf16.gmra.mxu0 %v5867
    %v6354 = vpop.f32.mrf.mxu0
    %v6355 = vadd.f32 %v6314, %v6354
    %v6356 = vpop.f32.mrf.mxu0
    %v6357 = vadd.f32 %v6316, %v6356
    %v6358 = vpop.f32.mrf.mxu0
    %v6359 = vpop.f32.mrf.mxu0
    %6360 = vdwg.mxu0
    %6361 = vmatprep.subr.bf16.mxu0 %v4099
    %6362 = vmatpush1.bf16.msra.mxu0 %v4098
    %6363 = vmatprep.subr.bf16.mxu0 %v4088
    %6364 = vmatpush1.bf16.msra.mxu0 %v4087
    %6365 = vmatprep.subr.bf16.mxu0 %v4077
    %6366 = vmatpush1.bf16.msra.mxu0 %v4076
    %6367 = vmatprep.subr.bf16.mxu0 %v4066
    %6368 = vmatpush1.bf16.msra.mxu0 %v4065
    %6369 = vmatprep.subr.bf16.mxu0 %v4055
    %6370 = vmatpush1.bf16.msra.mxu0 %v4054
    %6371 = vmatprep.subr.bf16.mxu0 %v4044
    %6372 = vmatpush1.bf16.msra.mxu0 %v4043
    %6373 = vmatprep.subr.bf16.mxu0 %v4033
    %6374 = vmatpush1.bf16.msra.mxu0 %v4032
    %6375 = vmatprep.subr.bf16.mxu0 %v4022
    %6376 = vmatpush1.bf16.msra.mxu0 %v4021
    %6377 = vmatprep.subr.bf16.mxu0 %v4187
    %6378 = vmatpush2.bf16.msra.mxu0 %v4186
    %6379 = vmatprep.subr.bf16.mxu0 %v4176
    %6380 = vmatpush2.bf16.msra.mxu0 %v4175
    %6381 = vmatprep.subr.bf16.mxu0 %v4165
    %6382 = vmatpush2.bf16.msra.mxu0 %v4164
    %6383 = vmatprep.subr.bf16.mxu0 %v4154
    %6384 = vmatpush2.bf16.msra.mxu0 %v4153
    %6385 = vmatprep.subr.bf16.mxu0 %v4143
    %6386 = vmatpush2.bf16.msra.mxu0 %v4142
    %6387 = vmatprep.subr.bf16.mxu0 %v4132
    %6388 = vmatpush2.bf16.msra.mxu0 %v4131
    %6389 = vmatprep.subr.bf16.mxu0 %v4121
    %6390 = vmatpush2.bf16.msra.mxu0 %v4120
    %6391 = vmatprep.subr.bf16.mxu0 %v4110
    %6392 = vmatpush2.bf16.msra.mxu0 %v4109
    %6393 = vmatprep.mubr.bf16.mxu0 %v84
    %6394 = vmatmul.mubr.bf16.gmra.mxu0 %v83
    %v6395 = vpop.f32.mrf.mxu0
    %v6396 = vadd.f32 %v1125, %v6395
    %v6397 = vpop.f32.mrf.mxu0
    %v6398 = vadd.f32 %v1129, %v6397
    %v6399 = vpop.f32.mrf.mxu0
    %v6400 = vpop.f32.mrf.mxu0
    %6401 = vdwg.mxu0
    %6402 = vmatprep.subr.bf16.mxu0 %v4275
    %6403 = vmatpush1.bf16.msra.mxu0 %v4274
    %6404 = vmatprep.subr.bf16.mxu0 %v4264
    %6405 = vmatpush1.bf16.msra.mxu0 %v4263
    %6406 = vmatprep.subr.bf16.mxu0 %v4253
    %6407 = vmatpush1.bf16.msra.mxu0 %v4252
    %6408 = vmatprep.subr.bf16.mxu0 %v4242
    %6409 = vmatpush1.bf16.msra.mxu0 %v4241
    %6410 = vmatprep.subr.bf16.mxu0 %v4231
    %6411 = vmatpush1.bf16.msra.mxu0 %v4230
    %6412 = vmatprep.subr.bf16.mxu0 %v4220
    %6413 = vmatpush1.bf16.msra.mxu0 %v4219
    %6414 = vmatprep.subr.bf16.mxu0 %v4209
    %6415 = vmatpush1.bf16.msra.mxu0 %v4208
    %6416 = vmatprep.subr.bf16.mxu0 %v4198
    %6417 = vmatpush1.bf16.msra.mxu0 %v4197
    %6418 = vmatprep.subr.bf16.mxu0 %v4363
    %6419 = vmatpush2.bf16.msra.mxu0 %v4362
    %6420 = vmatprep.subr.bf16.mxu0 %v4352
    %6421 = vmatpush2.bf16.msra.mxu0 %v4351
    %6422 = vmatprep.subr.bf16.mxu0 %v4341
    %6423 = vmatpush2.bf16.msra.mxu0 %v4340
    %6424 = vmatprep.subr.bf16.mxu0 %v4330
    %6425 = vmatpush2.bf16.msra.mxu0 %v4329
    %6426 = vmatprep.subr.bf16.mxu0 %v4319
    %6427 = vmatpush2.bf16.msra.mxu0 %v4318
    %6428 = vmatprep.subr.bf16.mxu0 %v4308
    %6429 = vmatpush2.bf16.msra.mxu0 %v4307
    %6430 = vmatprep.subr.bf16.mxu0 %v4297
    %6431 = vmatpush2.bf16.msra.mxu0 %v4296
    %6432 = vmatprep.subr.bf16.mxu0 %v4286
    %6433 = vmatpush2.bf16.msra.mxu0 %v4285
    %6434 = vmatprep.mubr.bf16.mxu0 %v86
    %6435 = vmatmul.mubr.bf16.gmra.mxu0 %v85
    %v6436 = vpop.f32.mrf.mxu0
    %v6437 = vadd.f32 %v6396, %v6436
    %v6438 = vpop.f32.mrf.mxu0
    %v6439 = vadd.f32 %v6398, %v6438
    %v6440 = vpop.f32.mrf.mxu0
    %v6441 = vpop.f32.mrf.mxu0
    %6442 = vdwg.mxu0
    %6443 = vmatprep.subr.bf16.mxu0 %v4451
    %6444 = vmatpush1.bf16.msra.mxu0 %v4450
    %6445 = vmatprep.subr.bf16.mxu0 %v4440
    %6446 = vmatpush1.bf16.msra.mxu0 %v4439
    %6447 = vmatprep.subr.bf16.mxu0 %v4429
    %6448 = vmatpush1.bf16.msra.mxu0 %v4428
    %6449 = vmatprep.subr.bf16.mxu0 %v4418
    %6450 = vmatpush1.bf16.msra.mxu0 %v4417
    %6451 = vmatprep.subr.bf16.mxu0 %v4407
    %6452 = vmatpush1.bf16.msra.mxu0 %v4406
    %6453 = vmatprep.subr.bf16.mxu0 %v4396
    %6454 = vmatpush1.bf16.msra.mxu0 %v4395
    %6455 = vmatprep.subr.bf16.mxu0 %v4385
    %6456 = vmatpush1.bf16.msra.mxu0 %v4384
    %6457 = vmatprep.subr.bf16.mxu0 %v4374
    %6458 = vmatpush1.bf16.msra.mxu0 %v4373
    %6459 = vmatprep.subr.bf16.mxu0 %v4539
    %6460 = vmatpush2.bf16.msra.mxu0 %v4538
    %6461 = vmatprep.subr.bf16.mxu0 %v4528
    %6462 = vmatpush2.bf16.msra.mxu0 %v4527
    %6463 = vmatprep.subr.bf16.mxu0 %v4517
    %6464 = vmatpush2.bf16.msra.mxu0 %v4516
    %6465 = vmatprep.subr.bf16.mxu0 %v4506
    %6466 = vmatpush2.bf16.msra.mxu0 %v4505
    %6467 = vmatprep.subr.bf16.mxu0 %v4495
    %6468 = vmatpush2.bf16.msra.mxu0 %v4494
    %6469 = vmatprep.subr.bf16.mxu0 %v4484
    %6470 = vmatpush2.bf16.msra.mxu0 %v4483
    %6471 = vmatprep.subr.bf16.mxu0 %v4473
    %6472 = vmatpush2.bf16.msra.mxu0 %v4472
    %6473 = vmatprep.subr.bf16.mxu0 %v4462
    %6474 = vmatpush2.bf16.msra.mxu0 %v4461
    %6475 = vmatprep.mubr.bf16.mxu0 %v88
    %6476 = vmatmul.mubr.bf16.gmra.mxu0 %v87
    %v6477 = vpop.f32.mrf.mxu0
    %v6478 = vadd.f32 %v6437, %v6477
    %v6479 = vpop.f32.mrf.mxu0
    %v6480 = vadd.f32 %v6439, %v6479
    %v6481 = vpop.f32.mrf.mxu0
    %v6482 = vpop.f32.mrf.mxu0
    %6483 = vdwg.mxu0
    %6484 = vmatprep.subr.bf16.mxu0 %v4627
    %6485 = vmatpush1.bf16.msra.mxu0 %v4626
    %6486 = vmatprep.subr.bf16.mxu0 %v4616
    %6487 = vmatpush1.bf16.msra.mxu0 %v4615
    %6488 = vmatprep.subr.bf16.mxu0 %v4605
    %6489 = vmatpush1.bf16.msra.mxu0 %v4604
    %6490 = vmatprep.subr.bf16.mxu0 %v4594
    %6491 = vmatpush1.bf16.msra.mxu0 %v4593
    %6492 = vmatprep.subr.bf16.mxu0 %v4583
    %6493 = vmatpush1.bf16.msra.mxu0 %v4582
    %6494 = vmatprep.subr.bf16.mxu0 %v4572
    %6495 = vmatpush1.bf16.msra.mxu0 %v4571
    %6496 = vmatprep.subr.bf16.mxu0 %v4561
    %6497 = vmatpush1.bf16.msra.mxu0 %v4560
    %6498 = vmatprep.subr.bf16.mxu0 %v4550
    %6499 = vmatpush1.bf16.msra.mxu0 %v4549
    %6500 = vmatprep.subr.bf16.mxu0 %v4715
    %6501 = vmatpush2.bf16.msra.mxu0 %v4714
    %6502 = vmatprep.subr.bf16.mxu0 %v4704
    %6503 = vmatpush2.bf16.msra.mxu0 %v4703
    %6504 = vmatprep.subr.bf16.mxu0 %v4693
    %6505 = vmatpush2.bf16.msra.mxu0 %v4692
    %6506 = vmatprep.subr.bf16.mxu0 %v4682
    %6507 = vmatpush2.bf16.msra.mxu0 %v4681
    %6508 = vmatprep.subr.bf16.mxu0 %v4671
    %6509 = vmatpush2.bf16.msra.mxu0 %v4670
    %6510 = vmatprep.subr.bf16.mxu0 %v4660
    %6511 = vmatpush2.bf16.msra.mxu0 %v4659
    %6512 = vmatprep.subr.bf16.mxu0 %v4649
    %6513 = vmatpush2.bf16.msra.mxu0 %v4648
    %6514 = vmatprep.subr.bf16.mxu0 %v4638
    %6515 = vmatpush2.bf16.msra.mxu0 %v4637
    %6516 = vmatprep.mubr.bf16.mxu0 %v90
    %6517 = vmatmul.mubr.bf16.gmra.mxu0 %v89
    %v6518 = vpop.f32.mrf.mxu0
    %v6519 = vadd.f32 %v6478, %v6518
    %v6520 = vpop.f32.mrf.mxu0
    %v6521 = vadd.f32 %v6480, %v6520
    %v6522 = vpop.f32.mrf.mxu0
    %v6523 = vpop.f32.mrf.mxu0
    %6524 = vdwg.mxu0
    %6525 = vmatprep.subr.bf16.mxu0 %v4803
    %6526 = vmatpush1.bf16.msra.mxu0 %v4802
    %6527 = vmatprep.subr.bf16.mxu0 %v4792
    %6528 = vmatpush1.bf16.msra.mxu0 %v4791
    %6529 = vmatprep.subr.bf16.mxu0 %v4781
    %6530 = vmatpush1.bf16.msra.mxu0 %v4780
    %6531 = vmatprep.subr.bf16.mxu0 %v4770
    %6532 = vmatpush1.bf16.msra.mxu0 %v4769
    %6533 = vmatprep.subr.bf16.mxu0 %v4759
    %6534 = vmatpush1.bf16.msra.mxu0 %v4758
    %6535 = vmatprep.subr.bf16.mxu0 %v4748
    %6536 = vmatpush1.bf16.msra.mxu0 %v4747
    %6537 = vmatprep.subr.bf16.mxu0 %v4737
    %6538 = vmatpush1.bf16.msra.mxu0 %v4736
    %6539 = vmatprep.subr.bf16.mxu0 %v4726
    %6540 = vmatpush1.bf16.msra.mxu0 %v4725
    %6541 = vmatprep.subr.bf16.mxu0 %v4891
    %6542 = vmatpush2.bf16.msra.mxu0 %v4890
    %6543 = vmatprep.subr.bf16.mxu0 %v4880
    %6544 = vmatpush2.bf16.msra.mxu0 %v4879
    %6545 = vmatprep.subr.bf16.mxu0 %v4869
    %6546 = vmatpush2.bf16.msra.mxu0 %v4868
    %6547 = vmatprep.subr.bf16.mxu0 %v4858
    %6548 = vmatpush2.bf16.msra.mxu0 %v4857
    %6549 = vmatprep.subr.bf16.mxu0 %v4847
    %6550 = vmatpush2.bf16.msra.mxu0 %v4846
    %6551 = vmatprep.subr.bf16.mxu0 %v4836
    %6552 = vmatpush2.bf16.msra.mxu0 %v4835
    %6553 = vmatprep.subr.bf16.mxu0 %v4825
    %6554 = vmatpush2.bf16.msra.mxu0 %v4824
    %6555 = vmatprep.subr.bf16.mxu0 %v4814
    %6556 = vmatpush2.bf16.msra.mxu0 %v4813
    %6557 = vmatprep.mubr.bf16.mxu0 %v92
    %6558 = vmatmul.mubr.bf16.gmra.mxu0 %v91
    %v6559 = vpop.f32.mrf.mxu0
    %v6560 = vadd.f32 %v6519, %v6559
    %v6561 = vpop.f32.mrf.mxu0
    %v6562 = vadd.f32 %v6521, %v6561
    %v6563 = vpop.f32.mrf.mxu0
    %v6564 = vpop.f32.mrf.mxu0
    %6565 = vdwg.mxu0
    %6566 = vmatprep.subr.bf16.mxu0 0
    %6567 = vmatpush1.bf16.msra.mxu0 0
    %6568 = vmatprep.subr.bf16.mxu0 0
    %6569 = vmatpush1.bf16.msra.mxu0 0
    %6570 = vmatprep.subr.bf16.mxu0 0
    %6571 = vmatpush1.bf16.msra.mxu0 0
    %6572 = vmatprep.subr.bf16.mxu0 0
    %6573 = vmatpush1.bf16.msra.mxu0 0
    %6574 = vmatprep.subr.bf16.mxu0 %v4935
    %6575 = vmatpush1.bf16.msra.mxu0 %v4934
    %6576 = vmatprep.subr.bf16.mxu0 %v4924
    %6577 = vmatpush1.bf16.msra.mxu0 %v4923
    %6578 = vmatprep.subr.bf16.mxu0 %v4913
    %6579 = vmatpush1.bf16.msra.mxu0 %v4912
    %6580 = vmatprep.subr.bf16.mxu0 %v4902
    %6581 = vmatpush1.bf16.msra.mxu0 %v4901
    %6582 = vmatprep.subr.bf16.mxu0 0
    %6583 = vmatpush2.bf16.msra.mxu0 0
    %6584 = vmatprep.subr.bf16.mxu0 0
    %6585 = vmatpush2.bf16.msra.mxu0 0
    %6586 = vmatprep.subr.bf16.mxu0 0
    %6587 = vmatpush2.bf16.msra.mxu0 0
    %6588 = vmatprep.subr.bf16.mxu0 0
    %6589 = vmatpush2.bf16.msra.mxu0 0
    %6590 = vmatprep.subr.bf16.mxu0 0
    %6591 = vmatpush2.bf16.msra.mxu0 0
    %6592 = vmatprep.subr.bf16.mxu0 0
    %6593 = vmatpush2.bf16.msra.mxu0 0
    %6594 = vmatprep.subr.bf16.mxu0 0
    %6595 = vmatpush2.bf16.msra.mxu0 0
    %6596 = vmatprep.subr.bf16.mxu0 0
    %6597 = vmatpush2.bf16.msra.mxu0 0
    %6598 = vmatprep.mubr.bf16.mxu0 0
    %6599 = vmatmul.mubr.bf16.gmra.mxu0 %v5867
    %v6600 = vpop.f32.mrf.mxu0
    %v6601 = vadd.f32 %v6560, %v6600
    %v6602 = vpop.f32.mrf.mxu0
    %v6603 = vadd.f32 %v6562, %v6602
    %v6604 = vpop.f32.mrf.mxu0
    %v6605 = vpop.f32.mrf.mxu0
    %6606 = vdwg.mxu0
    %6607 = vmatprep.subr.bf16.mxu0 %v4101
    %6608 = vmatpush1.bf16.msra.mxu0 %v4100
    %6609 = vmatprep.subr.bf16.mxu0 %v4090
    %6610 = vmatpush1.bf16.msra.mxu0 %v4089
    %6611 = vmatprep.subr.bf16.mxu0 %v4079
    %6612 = vmatpush1.bf16.msra.mxu0 %v4078
    %6613 = vmatprep.subr.bf16.mxu0 %v4068
    %6614 = vmatpush1.bf16.msra.mxu0 %v4067
    %6615 = vmatprep.subr.bf16.mxu0 %v4057
    %6616 = vmatpush1.bf16.msra.mxu0 %v4056
    %6617 = vmatprep.subr.bf16.mxu0 %v4046
    %6618 = vmatpush1.bf16.msra.mxu0 %v4045
    %6619 = vmatprep.subr.bf16.mxu0 %v4035
    %6620 = vmatpush1.bf16.msra.mxu0 %v4034
    %6621 = vmatprep.subr.bf16.mxu0 %v4024
    %6622 = vmatpush1.bf16.msra.mxu0 %v4023
    %6623 = vmatprep.subr.bf16.mxu0 %v4189
    %6624 = vmatpush2.bf16.msra.mxu0 %v4188
    %6625 = vmatprep.subr.bf16.mxu0 %v4178
    %6626 = vmatpush2.bf16.msra.mxu0 %v4177
    %6627 = vmatprep.subr.bf16.mxu0 %v4167
    %6628 = vmatpush2.bf16.msra.mxu0 %v4166
    %6629 = vmatprep.subr.bf16.mxu0 %v4156
    %6630 = vmatpush2.bf16.msra.mxu0 %v4155
    %6631 = vmatprep.subr.bf16.mxu0 %v4145
    %6632 = vmatpush2.bf16.msra.mxu0 %v4144
    %6633 = vmatprep.subr.bf16.mxu0 %v4134
    %6634 = vmatpush2.bf16.msra.mxu0 %v4133
    %6635 = vmatprep.subr.bf16.mxu0 %v4123
    %6636 = vmatpush2.bf16.msra.mxu0 %v4122
    %6637 = vmatprep.subr.bf16.mxu0 %v4112
    %6638 = vmatpush2.bf16.msra.mxu0 %v4111
    %6639 = vmatprep.mubr.bf16.mxu0 %v84
    %6640 = vmatmul.mubr.bf16.gmra.mxu0 %v83
    %v6641 = vpop.f32.mrf.mxu0
    %v6642 = vadd.f32 %v1133, %v6641
    %v6643 = vpop.f32.mrf.mxu0
    %v6644 = vadd.f32 %v1137, %v6643
    %v6645 = vpop.f32.mrf.mxu0
    %v6646 = vpop.f32.mrf.mxu0
    %6647 = vdwg.mxu0
    %6648 = vmatprep.subr.bf16.mxu0 %v4277
    %6649 = vmatpush1.bf16.msra.mxu0 %v4276
    %6650 = vmatprep.subr.bf16.mxu0 %v4266
    %6651 = vmatpush1.bf16.msra.mxu0 %v4265
    %6652 = vmatprep.subr.bf16.mxu0 %v4255
    %6653 = vmatpush1.bf16.msra.mxu0 %v4254
    %6654 = vmatprep.subr.bf16.mxu0 %v4244
    %6655 = vmatpush1.bf16.msra.mxu0 %v4243
    %6656 = vmatprep.subr.bf16.mxu0 %v4233
    %6657 = vmatpush1.bf16.msra.mxu0 %v4232
    %6658 = vmatprep.subr.bf16.mxu0 %v4222
    %6659 = vmatpush1.bf16.msra.mxu0 %v4221
    %6660 = vmatprep.subr.bf16.mxu0 %v4211
    %6661 = vmatpush1.bf16.msra.mxu0 %v4210
    %6662 = vmatprep.subr.bf16.mxu0 %v4200
    %6663 = vmatpush1.bf16.msra.mxu0 %v4199
    %6664 = vmatprep.subr.bf16.mxu0 %v4365
    %6665 = vmatpush2.bf16.msra.mxu0 %v4364
    %6666 = vmatprep.subr.bf16.mxu0 %v4354
    %6667 = vmatpush2.bf16.msra.mxu0 %v4353
    %6668 = vmatprep.subr.bf16.mxu0 %v4343
    %6669 = vmatpush2.bf16.msra.mxu0 %v4342
    %6670 = vmatprep.subr.bf16.mxu0 %v4332
    %6671 = vmatpush2.bf16.msra.mxu0 %v4331
    %6672 = vmatprep.subr.bf16.mxu0 %v4321
    %6673 = vmatpush2.bf16.msra.mxu0 %v4320
    %6674 = vmatprep.subr.bf16.mxu0 %v4310
    %6675 = vmatpush2.bf16.msra.mxu0 %v4309
    %6676 = vmatprep.subr.bf16.mxu0 %v4299
    %6677 = vmatpush2.bf16.msra.mxu0 %v4298
    %6678 = vmatprep.subr.bf16.mxu0 %v4288
    %6679 = vmatpush2.bf16.msra.mxu0 %v4287
    %6680 = vmatprep.mubr.bf16.mxu0 %v86
    %6681 = vmatmul.mubr.bf16.gmra.mxu0 %v85
    %v6682 = vpop.f32.mrf.mxu0
    %v6683 = vadd.f32 %v6642, %v6682
    %v6684 = vpop.f32.mrf.mxu0
    %v6685 = vadd.f32 %v6644, %v6684
    %v6686 = vpop.f32.mrf.mxu0
    %v6687 = vpop.f32.mrf.mxu0
    %6688 = vdwg.mxu0
    %6689 = vmatprep.subr.bf16.mxu0 %v4453
    %6690 = vmatpush1.bf16.msra.mxu0 %v4452
    %6691 = vmatprep.subr.bf16.mxu0 %v4442
    %6692 = vmatpush1.bf16.msra.mxu0 %v4441
    %6693 = vmatprep.subr.bf16.mxu0 %v4431
    %6694 = vmatpush1.bf16.msra.mxu0 %v4430
    %6695 = vmatprep.subr.bf16.mxu0 %v4420
    %6696 = vmatpush1.bf16.msra.mxu0 %v4419
    %6697 = vmatprep.subr.bf16.mxu0 %v4409
    %6698 = vmatpush1.bf16.msra.mxu0 %v4408
    %6699 = vmatprep.subr.bf16.mxu0 %v4398
    %6700 = vmatpush1.bf16.msra.mxu0 %v4397
    %6701 = vmatprep.subr.bf16.mxu0 %v4387
    %6702 = vmatpush1.bf16.msra.mxu0 %v4386
    %6703 = vmatprep.subr.bf16.mxu0 %v4376
    %6704 = vmatpush1.bf16.msra.mxu0 %v4375
    %6705 = vmatprep.subr.bf16.mxu0 %v4541
    %6706 = vmatpush2.bf16.msra.mxu0 %v4540
    %6707 = vmatprep.subr.bf16.mxu0 %v4530
    %6708 = vmatpush2.bf16.msra.mxu0 %v4529
    %6709 = vmatprep.subr.bf16.mxu0 %v4519
    %6710 = vmatpush2.bf16.msra.mxu0 %v4518
    %6711 = vmatprep.subr.bf16.mxu0 %v4508
    %6712 = vmatpush2.bf16.msra.mxu0 %v4507
    %6713 = vmatprep.subr.bf16.mxu0 %v4497
    %6714 = vmatpush2.bf16.msra.mxu0 %v4496
    %6715 = vmatprep.subr.bf16.mxu0 %v4486
    %6716 = vmatpush2.bf16.msra.mxu0 %v4485
    %6717 = vmatprep.subr.bf16.mxu0 %v4475
    %6718 = vmatpush2.bf16.msra.mxu0 %v4474
    %6719 = vmatprep.subr.bf16.mxu0 %v4464
    %6720 = vmatpush2.bf16.msra.mxu0 %v4463
    %6721 = vmatprep.mubr.bf16.mxu0 %v88
    %6722 = vmatmul.mubr.bf16.gmra.mxu0 %v87
    %v6723 = vpop.f32.mrf.mxu0
    %v6724 = vadd.f32 %v6683, %v6723
    %v6725 = vpop.f32.mrf.mxu0
    %v6726 = vadd.f32 %v6685, %v6725
    %v6727 = vpop.f32.mrf.mxu0
    %v6728 = vpop.f32.mrf.mxu0
    %6729 = vdwg.mxu0
    %6730 = vmatprep.subr.bf16.mxu0 %v4629
    %6731 = vmatpush1.bf16.msra.mxu0 %v4628
    %6732 = vmatprep.subr.bf16.mxu0 %v4618
    %6733 = vmatpush1.bf16.msra.mxu0 %v4617
    %6734 = vmatprep.subr.bf16.mxu0 %v4607
    %6735 = vmatpush1.bf16.msra.mxu0 %v4606
    %6736 = vmatprep.subr.bf16.mxu0 %v4596
    %6737 = vmatpush1.bf16.msra.mxu0 %v4595
    %6738 = vmatprep.subr.bf16.mxu0 %v4585
    %6739 = vmatpush1.bf16.msra.mxu0 %v4584
    %6740 = vmatprep.subr.bf16.mxu0 %v4574
    %6741 = vmatpush1.bf16.msra.mxu0 %v4573
    %6742 = vmatprep.subr.bf16.mxu0 %v4563
    %6743 = vmatpush1.bf16.msra.mxu0 %v4562
    %6744 = vmatprep.subr.bf16.mxu0 %v4552
    %6745 = vmatpush1.bf16.msra.mxu0 %v4551
    %6746 = vmatprep.subr.bf16.mxu0 %v4717
    %6747 = vmatpush2.bf16.msra.mxu0 %v4716
    %6748 = vmatprep.subr.bf16.mxu0 %v4706
    %6749 = vmatpush2.bf16.msra.mxu0 %v4705
    %6750 = vmatprep.subr.bf16.mxu0 %v4695
    %6751 = vmatpush2.bf16.msra.mxu0 %v4694
    %6752 = vmatprep.subr.bf16.mxu0 %v4684
    %6753 = vmatpush2.bf16.msra.mxu0 %v4683
    %6754 = vmatprep.subr.bf16.mxu0 %v4673
    %6755 = vmatpush2.bf16.msra.mxu0 %v4672
    %6756 = vmatprep.subr.bf16.mxu0 %v4662
    %6757 = vmatpush2.bf16.msra.mxu0 %v4661
    %6758 = vmatprep.subr.bf16.mxu0 %v4651
    %6759 = vmatpush2.bf16.msra.mxu0 %v4650
    %6760 = vmatprep.subr.bf16.mxu0 %v4640
    %6761 = vmatpush2.bf16.msra.mxu0 %v4639
    %6762 = vmatprep.mubr.bf16.mxu0 %v90
    %6763 = vmatmul.mubr.bf16.gmra.mxu0 %v89
    %v6764 = vpop.f32.mrf.mxu0
    %v6765 = vadd.f32 %v6724, %v6764
    %v6766 = vpop.f32.mrf.mxu0
    %v6767 = vadd.f32 %v6726, %v6766
    %v6768 = vpop.f32.mrf.mxu0
    %v6769 = vpop.f32.mrf.mxu0
    %6770 = vdwg.mxu0
    %6771 = vmatprep.subr.bf16.mxu0 %v4805
    %6772 = vmatpush1.bf16.msra.mxu0 %v4804
    %6773 = vmatprep.subr.bf16.mxu0 %v4794
    %6774 = vmatpush1.bf16.msra.mxu0 %v4793
    %6775 = vmatprep.subr.bf16.mxu0 %v4783
    %6776 = vmatpush1.bf16.msra.mxu0 %v4782
    %6777 = vmatprep.subr.bf16.mxu0 %v4772
    %6778 = vmatpush1.bf16.msra.mxu0 %v4771
    %6779 = vmatprep.subr.bf16.mxu0 %v4761
    %6780 = vmatpush1.bf16.msra.mxu0 %v4760
    %6781 = vmatprep.subr.bf16.mxu0 %v4750
    %6782 = vmatpush1.bf16.msra.mxu0 %v4749
    %6783 = vmatprep.subr.bf16.mxu0 %v4739
    %6784 = vmatpush1.bf16.msra.mxu0 %v4738
    %6785 = vmatprep.subr.bf16.mxu0 %v4728
    %6786 = vmatpush1.bf16.msra.mxu0 %v4727
    %6787 = vmatprep.subr.bf16.mxu0 %v4893
    %6788 = vmatpush2.bf16.msra.mxu0 %v4892
    %6789 = vmatprep.subr.bf16.mxu0 %v4882
    %6790 = vmatpush2.bf16.msra.mxu0 %v4881
    %6791 = vmatprep.subr.bf16.mxu0 %v4871
    %6792 = vmatpush2.bf16.msra.mxu0 %v4870
    %6793 = vmatprep.subr.bf16.mxu0 %v4860
    %6794 = vmatpush2.bf16.msra.mxu0 %v4859
    %6795 = vmatprep.subr.bf16.mxu0 %v4849
    %6796 = vmatpush2.bf16.msra.mxu0 %v4848
    %6797 = vmatprep.subr.bf16.mxu0 %v4838
    %6798 = vmatpush2.bf16.msra.mxu0 %v4837
    %6799 = vmatprep.subr.bf16.mxu0 %v4827
    %6800 = vmatpush2.bf16.msra.mxu0 %v4826
    %6801 = vmatprep.subr.bf16.mxu0 %v4816
    %6802 = vmatpush2.bf16.msra.mxu0 %v4815
    %6803 = vmatprep.mubr.bf16.mxu0 %v92
    %6804 = vmatmul.mubr.bf16.gmra.mxu0 %v91
    %v6805 = vpop.f32.mrf.mxu0
    %v6806 = vadd.f32 %v6765, %v6805
    %v6807 = vpop.f32.mrf.mxu0
    %v6808 = vadd.f32 %v6767, %v6807
    %v6809 = vpop.f32.mrf.mxu0
    %v6810 = vpop.f32.mrf.mxu0
    %6811 = vdwg.mxu0
    %6812 = vmatprep.subr.bf16.mxu0 0
    %6813 = vmatpush1.bf16.msra.mxu0 0
    %6814 = vmatprep.subr.bf16.mxu0 0
    %6815 = vmatpush1.bf16.msra.mxu0 0
    %6816 = vmatprep.subr.bf16.mxu0 0
    %6817 = vmatpush1.bf16.msra.mxu0 0
    %6818 = vmatprep.subr.bf16.mxu0 0
    %6819 = vmatpush1.bf16.msra.mxu0 0
    %6820 = vmatprep.subr.bf16.mxu0 %v4937
    %6821 = vmatpush1.bf16.msra.mxu0 %v4936
    %6822 = vmatprep.subr.bf16.mxu0 %v4926
    %6823 = vmatpush1.bf16.msra.mxu0 %v4925
    %6824 = vmatprep.subr.bf16.mxu0 %v4915
    %6825 = vmatpush1.bf16.msra.mxu0 %v4914
    %6826 = vmatprep.subr.bf16.mxu0 %v4904
    %6827 = vmatpush1.bf16.msra.mxu0 %v4903
    %6828 = vmatprep.subr.bf16.mxu0 0
    %6829 = vmatpush2.bf16.msra.mxu0 0
    %6830 = vmatprep.subr.bf16.mxu0 0
    %6831 = vmatpush2.bf16.msra.mxu0 0
    %6832 = vmatprep.subr.bf16.mxu0 0
    %6833 = vmatpush2.bf16.msra.mxu0 0
    %6834 = vmatprep.subr.bf16.mxu0 0
    %6835 = vmatpush2.bf16.msra.mxu0 0
    %6836 = vmatprep.subr.bf16.mxu0 0
    %6837 = vmatpush2.bf16.msra.mxu0 0
    %6838 = vmatprep.subr.bf16.mxu0 0
    %6839 = vmatpush2.bf16.msra.mxu0 0
    %6840 = vmatprep.subr.bf16.mxu0 0
    %6841 = vmatpush2.bf16.msra.mxu0 0
    %6842 = vmatprep.subr.bf16.mxu0 0
    %6843 = vmatpush2.bf16.msra.mxu0 0
    %6844 = vmatprep.mubr.bf16.mxu0 0
    %6845 = vmatmul.mubr.bf16.gmra.mxu0 %v5867
    %v6846 = vpop.f32.mrf.mxu0
    %v6847 = vadd.f32 %v6806, %v6846
    %v6848 = vpop.f32.mrf.mxu0
    %v6849 = vadd.f32 %v6808, %v6848
    %v6850 = vpop.f32.mrf.mxu0
    %v6851 = vpop.f32.mrf.mxu0
    %6852 = vdwg.mxu0
    %6853 = vmatprep.subr.bf16.mxu0 %v4103
    %6854 = vmatpush1.bf16.msra.mxu0 %v4102
    %6855 = vmatprep.subr.bf16.mxu0 %v4092
    %6856 = vmatpush1.bf16.msra.mxu0 %v4091
    %6857 = vmatprep.subr.bf16.mxu0 %v4081
    %6858 = vmatpush1.bf16.msra.mxu0 %v4080
    %6859 = vmatprep.subr.bf16.mxu0 %v4070
    %6860 = vmatpush1.bf16.msra.mxu0 %v4069
    %6861 = vmatprep.subr.bf16.mxu0 %v4059
    %6862 = vmatpush1.bf16.msra.mxu0 %v4058
    %6863 = vmatprep.subr.bf16.mxu0 %v4048
    %6864 = vmatpush1.bf16.msra.mxu0 %v4047
    %6865 = vmatprep.subr.bf16.mxu0 %v4037
    %6866 = vmatpush1.bf16.msra.mxu0 %v4036
    %6867 = vmatprep.subr.bf16.mxu0 %v4026
    %6868 = vmatpush1.bf16.msra.mxu0 %v4025
    %6869 = vmatprep.subr.bf16.mxu0 %v4191
    %6870 = vmatpush2.bf16.msra.mxu0 %v4190
    %6871 = vmatprep.subr.bf16.mxu0 %v4180
    %6872 = vmatpush2.bf16.msra.mxu0 %v4179
    %6873 = vmatprep.subr.bf16.mxu0 %v4169
    %6874 = vmatpush2.bf16.msra.mxu0 %v4168
    %6875 = vmatprep.subr.bf16.mxu0 %v4158
    %6876 = vmatpush2.bf16.msra.mxu0 %v4157
    %6877 = vmatprep.subr.bf16.mxu0 %v4147
    %6878 = vmatpush2.bf16.msra.mxu0 %v4146
    %6879 = vmatprep.subr.bf16.mxu0 %v4136
    %6880 = vmatpush2.bf16.msra.mxu0 %v4135
    %6881 = vmatprep.subr.bf16.mxu0 %v4125
    %6882 = vmatpush2.bf16.msra.mxu0 %v4124
    %6883 = vmatprep.subr.bf16.mxu0 %v4114
    %6884 = vmatpush2.bf16.msra.mxu0 %v4113
    %6885 = vmatprep.mubr.bf16.mxu0 %v84
    %6886 = vmatmul.mubr.bf16.gmra.mxu0 %v83
    %v6887 = vpop.f32.mrf.mxu0
    %v6888 = vadd.f32 %v1141, %v6887
    %v6889 = vpop.f32.mrf.mxu0
    %v6890 = vadd.f32 %v1145, %v6889
    %v6891 = vpop.f32.mrf.mxu0
    %v6892 = vpop.f32.mrf.mxu0
    %6893 = vdwg.mxu0
    %6894 = vmatprep.subr.bf16.mxu0 %v4279
    %6895 = vmatpush1.bf16.msra.mxu0 %v4278
    %6896 = vmatprep.subr.bf16.mxu0 %v4268
    %6897 = vmatpush1.bf16.msra.mxu0 %v4267
    %6898 = vmatprep.subr.bf16.mxu0 %v4257
    %6899 = vmatpush1.bf16.msra.mxu0 %v4256
    %6900 = vmatprep.subr.bf16.mxu0 %v4246
    %6901 = vmatpush1.bf16.msra.mxu0 %v4245
    %6902 = vmatprep.subr.bf16.mxu0 %v4235
    %6903 = vmatpush1.bf16.msra.mxu0 %v4234
    %6904 = vmatprep.subr.bf16.mxu0 %v4224
    %6905 = vmatpush1.bf16.msra.mxu0 %v4223
    %6906 = vmatprep.subr.bf16.mxu0 %v4213
    %6907 = vmatpush1.bf16.msra.mxu0 %v4212
    %6908 = vmatprep.subr.bf16.mxu0 %v4202
    %6909 = vmatpush1.bf16.msra.mxu0 %v4201
    %6910 = vmatprep.subr.bf16.mxu0 %v4367
    %6911 = vmatpush2.bf16.msra.mxu0 %v4366
    %6912 = vmatprep.subr.bf16.mxu0 %v4356
    %6913 = vmatpush2.bf16.msra.mxu0 %v4355
    %6914 = vmatprep.subr.bf16.mxu0 %v4345
    %6915 = vmatpush2.bf16.msra.mxu0 %v4344
    %6916 = vmatprep.subr.bf16.mxu0 %v4334
    %6917 = vmatpush2.bf16.msra.mxu0 %v4333
    %6918 = vmatprep.subr.bf16.mxu0 %v4323
    %6919 = vmatpush2.bf16.msra.mxu0 %v4322
    %6920 = vmatprep.subr.bf16.mxu0 %v4312
    %6921 = vmatpush2.bf16.msra.mxu0 %v4311
    %6922 = vmatprep.subr.bf16.mxu0 %v4301
    %6923 = vmatpush2.bf16.msra.mxu0 %v4300
    %6924 = vmatprep.subr.bf16.mxu0 %v4290
    %6925 = vmatpush2.bf16.msra.mxu0 %v4289
    %6926 = vmatprep.mubr.bf16.mxu0 %v86
    %6927 = vmatmul.mubr.bf16.gmra.mxu0 %v85
    %v6928 = vpop.f32.mrf.mxu0
    %v6929 = vadd.f32 %v6888, %v6928
    %v6930 = vpop.f32.mrf.mxu0
    %v6931 = vadd.f32 %v6890, %v6930
    %v6932 = vpop.f32.mrf.mxu0
    %v6933 = vpop.f32.mrf.mxu0
    %6934 = vdwg.mxu0
    %6935 = vmatprep.subr.bf16.mxu0 %v4455
    %6936 = vmatpush1.bf16.msra.mxu0 %v4454
    %6937 = vmatprep.subr.bf16.mxu0 %v4444
    %6938 = vmatpush1.bf16.msra.mxu0 %v4443
    %6939 = vmatprep.subr.bf16.mxu0 %v4433
    %6940 = vmatpush1.bf16.msra.mxu0 %v4432
    %6941 = vmatprep.subr.bf16.mxu0 %v4422
    %6942 = vmatpush1.bf16.msra.mxu0 %v4421
    %6943 = vmatprep.subr.bf16.mxu0 %v4411
    %6944 = vmatpush1.bf16.msra.mxu0 %v4410
    %6945 = vmatprep.subr.bf16.mxu0 %v4400
    %6946 = vmatpush1.bf16.msra.mxu0 %v4399
    %6947 = vmatprep.subr.bf16.mxu0 %v4389
    %6948 = vmatpush1.bf16.msra.mxu0 %v4388
    %6949 = vmatprep.subr.bf16.mxu0 %v4378
    %6950 = vmatpush1.bf16.msra.mxu0 %v4377
    %6951 = vmatprep.subr.bf16.mxu0 %v4543
    %6952 = vmatpush2.bf16.msra.mxu0 %v4542
    %6953 = vmatprep.subr.bf16.mxu0 %v4532
    %6954 = vmatpush2.bf16.msra.mxu0 %v4531
    %6955 = vmatprep.subr.bf16.mxu0 %v4521
    %6956 = vmatpush2.bf16.msra.mxu0 %v4520
    %6957 = vmatprep.subr.bf16.mxu0 %v4510
    %6958 = vmatpush2.bf16.msra.mxu0 %v4509
    %6959 = vmatprep.subr.bf16.mxu0 %v4499
    %6960 = vmatpush2.bf16.msra.mxu0 %v4498
    %6961 = vmatprep.subr.bf16.mxu0 %v4488
    %6962 = vmatpush2.bf16.msra.mxu0 %v4487
    %6963 = vmatprep.subr.bf16.mxu0 %v4477
    %6964 = vmatpush2.bf16.msra.mxu0 %v4476
    %6965 = vmatprep.subr.bf16.mxu0 %v4466
    %6966 = vmatpush2.bf16.msra.mxu0 %v4465
    %6967 = vmatprep.mubr.bf16.mxu0 %v88
    %6968 = vmatmul.mubr.bf16.gmra.mxu0 %v87
    %v6969 = vpop.f32.mrf.mxu0
    %v6970 = vadd.f32 %v6929, %v6969
    %v6971 = vpop.f32.mrf.mxu0
    %v6972 = vadd.f32 %v6931, %v6971
    %v6973 = vpop.f32.mrf.mxu0
    %v6974 = vpop.f32.mrf.mxu0
    %6975 = vdwg.mxu0
    %6976 = vmatprep.subr.bf16.mxu0 %v4631
    %6977 = vmatpush1.bf16.msra.mxu0 %v4630
    %6978 = vmatprep.subr.bf16.mxu0 %v4620
    %6979 = vmatpush1.bf16.msra.mxu0 %v4619
    %6980 = vmatprep.subr.bf16.mxu0 %v4609
    %6981 = vmatpush1.bf16.msra.mxu0 %v4608
    %6982 = vmatprep.subr.bf16.mxu0 %v4598
    %6983 = vmatpush1.bf16.msra.mxu0 %v4597
    %6984 = vmatprep.subr.bf16.mxu0 %v4587
    %6985 = vmatpush1.bf16.msra.mxu0 %v4586
    %6986 = vmatprep.subr.bf16.mxu0 %v4576
    %6987 = vmatpush1.bf16.msra.mxu0 %v4575
    %6988 = vmatprep.subr.bf16.mxu0 %v4565
    %6989 = vmatpush1.bf16.msra.mxu0 %v4564
    %6990 = vmatprep.subr.bf16.mxu0 %v4554
    %6991 = vmatpush1.bf16.msra.mxu0 %v4553
    %6992 = vmatprep.subr.bf16.mxu0 %v4719
    %6993 = vmatpush2.bf16.msra.mxu0 %v4718
    %6994 = vmatprep.subr.bf16.mxu0 %v4708
    %6995 = vmatpush2.bf16.msra.mxu0 %v4707
    %6996 = vmatprep.subr.bf16.mxu0 %v4697
    %6997 = vmatpush2.bf16.msra.mxu0 %v4696
    %6998 = vmatprep.subr.bf16.mxu0 %v4686
    %6999 = vmatpush2.bf16.msra.mxu0 %v4685
    %7000 = vmatprep.subr.bf16.mxu0 %v4675
    %7001 = vmatpush2.bf16.msra.mxu0 %v4674
    %7002 = vmatprep.subr.bf16.mxu0 %v4664
    %7003 = vmatpush2.bf16.msra.mxu0 %v4663
    %7004 = vmatprep.subr.bf16.mxu0 %v4653
    %7005 = vmatpush2.bf16.msra.mxu0 %v4652
    %7006 = vmatprep.subr.bf16.mxu0 %v4642
    %7007 = vmatpush2.bf16.msra.mxu0 %v4641
    %7008 = vmatprep.mubr.bf16.mxu0 %v90
    %7009 = vmatmul.mubr.bf16.gmra.mxu0 %v89
    %v7010 = vpop.f32.mrf.mxu0
    %v7011 = vadd.f32 %v6970, %v7010
    %v7012 = vpop.f32.mrf.mxu0
    %v7013 = vadd.f32 %v6972, %v7012
    %v7014 = vpop.f32.mrf.mxu0
    %v7015 = vpop.f32.mrf.mxu0
    %7016 = vdwg.mxu0
    %7017 = vmatprep.subr.bf16.mxu0 %v4807
    %7018 = vmatpush1.bf16.msra.mxu0 %v4806
    %7019 = vmatprep.subr.bf16.mxu0 %v4796
    %7020 = vmatpush1.bf16.msra.mxu0 %v4795
    %7021 = vmatprep.subr.bf16.mxu0 %v4785
    %7022 = vmatpush1.bf16.msra.mxu0 %v4784
    %7023 = vmatprep.subr.bf16.mxu0 %v4774
    %7024 = vmatpush1.bf16.msra.mxu0 %v4773
    %7025 = vmatprep.subr.bf16.mxu0 %v4763
    %7026 = vmatpush1.bf16.msra.mxu0 %v4762
    %7027 = vmatprep.subr.bf16.mxu0 %v4752
    %7028 = vmatpush1.bf16.msra.mxu0 %v4751
    %7029 = vmatprep.subr.bf16.mxu0 %v4741
    %7030 = vmatpush1.bf16.msra.mxu0 %v4740
    %7031 = vmatprep.subr.bf16.mxu0 %v4730
    %7032 = vmatpush1.bf16.msra.mxu0 %v4729
    %7033 = vmatprep.subr.bf16.mxu0 %v4895
    %7034 = vmatpush2.bf16.msra.mxu0 %v4894
    %7035 = vmatprep.subr.bf16.mxu0 %v4884
    %7036 = vmatpush2.bf16.msra.mxu0 %v4883
    %7037 = vmatprep.subr.bf16.mxu0 %v4873
    %7038 = vmatpush2.bf16.msra.mxu0 %v4872
    %7039 = vmatprep.subr.bf16.mxu0 %v4862
    %7040 = vmatpush2.bf16.msra.mxu0 %v4861
    %7041 = vmatprep.subr.bf16.mxu0 %v4851
    %7042 = vmatpush2.bf16.msra.mxu0 %v4850
    %7043 = vmatprep.subr.bf16.mxu0 %v4840
    %7044 = vmatpush2.bf16.msra.mxu0 %v4839
    %7045 = vmatprep.subr.bf16.mxu0 %v4829
    %7046 = vmatpush2.bf16.msra.mxu0 %v4828
    %7047 = vmatprep.subr.bf16.mxu0 %v4818
    %7048 = vmatpush2.bf16.msra.mxu0 %v4817
    %7049 = vmatprep.mubr.bf16.mxu0 %v92
    %7050 = vmatmul.mubr.bf16.gmra.mxu0 %v91
    %v7051 = vpop.f32.mrf.mxu0
    %v7052 = vadd.f32 %v7011, %v7051
    %v7053 = vpop.f32.mrf.mxu0
    %v7054 = vadd.f32 %v7013, %v7053
    %v7055 = vpop.f32.mrf.mxu0
    %v7056 = vpop.f32.mrf.mxu0
    %7057 = vdwg.mxu0
    %7058 = vmatprep.subr.bf16.mxu0 0
    %7059 = vmatpush1.bf16.msra.mxu0 0
    %7060 = vmatprep.subr.bf16.mxu0 0
    %7061 = vmatpush1.bf16.msra.mxu0 0
    %7062 = vmatprep.subr.bf16.mxu0 0
    %7063 = vmatpush1.bf16.msra.mxu0 0
    %7064 = vmatprep.subr.bf16.mxu0 0
    %7065 = vmatpush1.bf16.msra.mxu0 0
    %7066 = vmatprep.subr.bf16.mxu0 %v4939
    %7067 = vmatpush1.bf16.msra.mxu0 %v4938
    %7068 = vmatprep.subr.bf16.mxu0 %v4928
    %7069 = vmatpush1.bf16.msra.mxu0 %v4927
    %7070 = vmatprep.subr.bf16.mxu0 %v4917
    %7071 = vmatpush1.bf16.msra.mxu0 %v4916
    %7072 = vmatprep.subr.bf16.mxu0 %v4906
    %7073 = vmatpush1.bf16.msra.mxu0 %v4905
    %7074 = vmatprep.subr.bf16.mxu0 0
    %7075 = vmatpush2.bf16.msra.mxu0 0
    %7076 = vmatprep.subr.bf16.mxu0 0
    %7077 = vmatpush2.bf16.msra.mxu0 0
    %7078 = vmatprep.subr.bf16.mxu0 0
    %7079 = vmatpush2.bf16.msra.mxu0 0
    %7080 = vmatprep.subr.bf16.mxu0 0
    %7081 = vmatpush2.bf16.msra.mxu0 0
    %7082 = vmatprep.subr.bf16.mxu0 0
    %7083 = vmatpush2.bf16.msra.mxu0 0
    %7084 = vmatprep.subr.bf16.mxu0 0
    %7085 = vmatpush2.bf16.msra.mxu0 0
    %7086 = vmatprep.subr.bf16.mxu0 0
    %7087 = vmatpush2.bf16.msra.mxu0 0
    %7088 = vmatprep.subr.bf16.mxu0 0
    %7089 = vmatpush2.bf16.msra.mxu0 0
    %7090 = vmatprep.mubr.bf16.mxu0 0
    %7091 = vmatmul.mubr.bf16.gmra.mxu0 %v5867
    %v7092 = vpop.f32.mrf.mxu0
    %v7093 = vadd.f32 %v7052, %v7092
    %v7094 = vpop.f32.mrf.mxu0
    %v7095 = vadd.f32 %v7054, %v7094
    %v7096 = vpop.f32.mrf.mxu0
    %v7097 = vpop.f32.mrf.mxu0
    %7098 = vdwg.mxu0
    %7099 = vmatprep.subr.bf16.mxu0 0
    %7100 = vmatpush1.bf16.msra.mxu0 %v4104
    %7101 = vmatprep.subr.bf16.mxu0 0
    %7102 = vmatpush1.bf16.msra.mxu0 %v4093
    %7103 = vmatprep.subr.bf16.mxu0 0
    %7104 = vmatpush1.bf16.msra.mxu0 %v4082
    %7105 = vmatprep.subr.bf16.mxu0 0
    %7106 = vmatpush1.bf16.msra.mxu0 %v4071
    %7107 = vmatprep.subr.bf16.mxu0 0
    %7108 = vmatpush1.bf16.msra.mxu0 %v4060
    %7109 = vmatprep.subr.bf16.mxu0 0
    %7110 = vmatpush1.bf16.msra.mxu0 %v4049
    %7111 = vmatprep.subr.bf16.mxu0 0
    %7112 = vmatpush1.bf16.msra.mxu0 %v4038
    %7113 = vmatprep.subr.bf16.mxu0 0
    %7114 = vmatpush1.bf16.msra.mxu0 %v4027
    %7115 = vmatprep.subr.bf16.mxu0 0
    %7116 = vmatpush2.bf16.msra.mxu0 %v4192
    %7117 = vmatprep.subr.bf16.mxu0 0
    %7118 = vmatpush2.bf16.msra.mxu0 %v4181
    %7119 = vmatprep.subr.bf16.mxu0 0
    %7120 = vmatpush2.bf16.msra.mxu0 %v4170
    %7121 = vmatprep.subr.bf16.mxu0 0
    %7122 = vmatpush2.bf16.msra.mxu0 %v4159
    %7123 = vmatprep.subr.bf16.mxu0 0
    %7124 = vmatpush2.bf16.msra.mxu0 %v4148
    %7125 = vmatprep.subr.bf16.mxu0 0
    %7126 = vmatpush2.bf16.msra.mxu0 %v4137
    %7127 = vmatprep.subr.bf16.mxu0 0
    %7128 = vmatpush2.bf16.msra.mxu0 %v4126
    %7129 = vmatprep.subr.bf16.mxu0 0
    %7130 = vmatpush2.bf16.msra.mxu0 %v4115
    %7131 = vmatprep.mubr.bf16.mxu0 %v84
    %7132 = vmatmul.mubr.bf16.gmra.mxu0 %v83
    %v7133 = vpop.f32.mrf.mxu0
    %v7134 = vadd.f32 %v1149, %v7133
    %v7135 = vpop.f32.mrf.mxu0
    %v7136 = vpop.f32.mrf.mxu0
    %v7137 = vpop.f32.mrf.mxu0
    %7138 = vdwg.mxu0
    %7139 = vmatprep.subr.bf16.mxu0 0
    %7140 = vmatpush1.bf16.msra.mxu0 %v4280
    %7141 = vmatprep.subr.bf16.mxu0 0
    %7142 = vmatpush1.bf16.msra.mxu0 %v4269
    %7143 = vmatprep.subr.bf16.mxu0 0
    %7144 = vmatpush1.bf16.msra.mxu0 %v4258
    %7145 = vmatprep.subr.bf16.mxu0 0
    %7146 = vmatpush1.bf16.msra.mxu0 %v4247
    %7147 = vmatprep.subr.bf16.mxu0 0
    %7148 = vmatpush1.bf16.msra.mxu0 %v4236
    %7149 = vmatprep.subr.bf16.mxu0 0
    %7150 = vmatpush1.bf16.msra.mxu0 %v4225
    %7151 = vmatprep.subr.bf16.mxu0 0
    %7152 = vmatpush1.bf16.msra.mxu0 %v4214
    %7153 = vmatprep.subr.bf16.mxu0 0
    %7154 = vmatpush1.bf16.msra.mxu0 %v4203
    %7155 = vmatprep.subr.bf16.mxu0 0
    %7156 = vmatpush2.bf16.msra.mxu0 %v4368
    %7157 = vmatprep.subr.bf16.mxu0 0
    %7158 = vmatpush2.bf16.msra.mxu0 %v4357
    %7159 = vmatprep.subr.bf16.mxu0 0
    %7160 = vmatpush2.bf16.msra.mxu0 %v4346
    %7161 = vmatprep.subr.bf16.mxu0 0
    %7162 = vmatpush2.bf16.msra.mxu0 %v4335
    %7163 = vmatprep.subr.bf16.mxu0 0
    %7164 = vmatpush2.bf16.msra.mxu0 %v4324
    %7165 = vmatprep.subr.bf16.mxu0 0
    %7166 = vmatpush2.bf16.msra.mxu0 %v4313
    %7167 = vmatprep.subr.bf16.mxu0 0
    %7168 = vmatpush2.bf16.msra.mxu0 %v4302
    %7169 = vmatprep.subr.bf16.mxu0 0
    %7170 = vmatpush2.bf16.msra.mxu0 %v4291
    %7171 = vmatprep.mubr.bf16.mxu0 %v86
    %7172 = vmatmul.mubr.bf16.gmra.mxu0 %v85
    %v7173 = vpop.f32.mrf.mxu0
    %v7174 = vadd.f32 %v7134, %v7173
    %v7175 = vpop.f32.mrf.mxu0
    %v7176 = vpop.f32.mrf.mxu0
    %v7177 = vpop.f32.mrf.mxu0
    %7178 = vdwg.mxu0
    %7179 = vmatprep.subr.bf16.mxu0 0
    %7180 = vmatpush1.bf16.msra.mxu0 %v4456
    %7181 = vmatprep.subr.bf16.mxu0 0
    %7182 = vmatpush1.bf16.msra.mxu0 %v4445
    %7183 = vmatprep.subr.bf16.mxu0 0
    %7184 = vmatpush1.bf16.msra.mxu0 %v4434
    %7185 = vmatprep.subr.bf16.mxu0 0
    %7186 = vmatpush1.bf16.msra.mxu0 %v4423
    %7187 = vmatprep.subr.bf16.mxu0 0
    %7188 = vmatpush1.bf16.msra.mxu0 %v4412
    %7189 = vmatprep.subr.bf16.mxu0 0
    %7190 = vmatpush1.bf16.msra.mxu0 %v4401
    %7191 = vmatprep.subr.bf16.mxu0 0
    %7192 = vmatpush1.bf16.msra.mxu0 %v4390
    %7193 = vmatprep.subr.bf16.mxu0 0
    %7194 = vmatpush1.bf16.msra.mxu0 %v4379
    %7195 = vmatprep.subr.bf16.mxu0 0
    %7196 = vmatpush2.bf16.msra.mxu0 %v4544
    %7197 = vmatprep.subr.bf16.mxu0 0
    %7198 = vmatpush2.bf16.msra.mxu0 %v4533
    %7199 = vmatprep.subr.bf16.mxu0 0
    %7200 = vmatpush2.bf16.msra.mxu0 %v4522
    %7201 = vmatprep.subr.bf16.mxu0 0
    %7202 = vmatpush2.bf16.msra.mxu0 %v4511
    %7203 = vmatprep.subr.bf16.mxu0 0
    %7204 = vmatpush2.bf16.msra.mxu0 %v4500
    %7205 = vmatprep.subr.bf16.mxu0 0
    %7206 = vmatpush2.bf16.msra.mxu0 %v4489
    %7207 = vmatprep.subr.bf16.mxu0 0
    %7208 = vmatpush2.bf16.msra.mxu0 %v4478
    %7209 = vmatprep.subr.bf16.mxu0 0
    %7210 = vmatpush2.bf16.msra.mxu0 %v4467
    %7211 = vmatprep.mubr.bf16.mxu0 %v88
    %7212 = vmatmul.mubr.bf16.gmra.mxu0 %v87
    %v7213 = vpop.f32.mrf.mxu0
    %v7214 = vadd.f32 %v7174, %v7213
    %v7215 = vpop.f32.mrf.mxu0
    %v7216 = vpop.f32.mrf.mxu0
    %v7217 = vpop.f32.mrf.mxu0
    %7218 = vdwg.mxu0
    %7219 = vmatprep.subr.bf16.mxu0 0
    %7220 = vmatpush1.bf16.msra.mxu0 %v4632
    %7221 = vmatprep.subr.bf16.mxu0 0
    %7222 = vmatpush1.bf16.msra.mxu0 %v4621
    %7223 = vmatprep.subr.bf16.mxu0 0
    %7224 = vmatpush1.bf16.msra.mxu0 %v4610
    %7225 = vmatprep.subr.bf16.mxu0 0
    %7226 = vmatpush1.bf16.msra.mxu0 %v4599
    %7227 = vmatprep.subr.bf16.mxu0 0
    %7228 = vmatpush1.bf16.msra.mxu0 %v4588
    %7229 = vmatprep.subr.bf16.mxu0 0
    %7230 = vmatpush1.bf16.msra.mxu0 %v4577
    %7231 = vmatprep.subr.bf16.mxu0 0
    %7232 = vmatpush1.bf16.msra.mxu0 %v4566
    %7233 = vmatprep.subr.bf16.mxu0 0
    %7234 = vmatpush1.bf16.msra.mxu0 %v4555
    %7235 = vmatprep.subr.bf16.mxu0 0
    %7236 = vmatpush2.bf16.msra.mxu0 %v4720
    %7237 = vmatprep.subr.bf16.mxu0 0
    %7238 = vmatpush2.bf16.msra.mxu0 %v4709
    %7239 = vmatprep.subr.bf16.mxu0 0
    %7240 = vmatpush2.bf16.msra.mxu0 %v4698
    %7241 = vmatprep.subr.bf16.mxu0 0
    %7242 = vmatpush2.bf16.msra.mxu0 %v4687
    %7243 = vmatprep.subr.bf16.mxu0 0
    %7244 = vmatpush2.bf16.msra.mxu0 %v4676
    %7245 = vmatprep.subr.bf16.mxu0 0
    %7246 = vmatpush2.bf16.msra.mxu0 %v4665
    %7247 = vmatprep.subr.bf16.mxu0 0
    %7248 = vmatpush2.bf16.msra.mxu0 %v4654
    %7249 = vmatprep.subr.bf16.mxu0 0
    %7250 = vmatpush2.bf16.msra.mxu0 %v4643
    %7251 = vmatprep.mubr.bf16.mxu0 %v90
    %7252 = vmatmul.mubr.bf16.gmra.mxu0 %v89
    %v7253 = vpop.f32.mrf.mxu0
    %v7254 = vadd.f32 %v7214, %v7253
    %v7255 = vpop.f32.mrf.mxu0
    %v7256 = vpop.f32.mrf.mxu0
    %v7257 = vpop.f32.mrf.mxu0
    %7258 = vdwg.mxu0
    %7259 = vmatprep.subr.bf16.mxu0 0
    %7260 = vmatpush1.bf16.msra.mxu0 %v4808
    %7261 = vmatprep.subr.bf16.mxu0 0
    %7262 = vmatpush1.bf16.msra.mxu0 %v4797
    %7263 = vmatprep.subr.bf16.mxu0 0
    %7264 = vmatpush1.bf16.msra.mxu0 %v4786
    %7265 = vmatprep.subr.bf16.mxu0 0
    %7266 = vmatpush1.bf16.msra.mxu0 %v4775
    %7267 = vmatprep.subr.bf16.mxu0 0
    %7268 = vmatpush1.bf16.msra.mxu0 %v4764
    %7269 = vmatprep.subr.bf16.mxu0 0
    %7270 = vmatpush1.bf16.msra.mxu0 %v4753
    %7271 = vmatprep.subr.bf16.mxu0 0
    %7272 = vmatpush1.bf16.msra.mxu0 %v4742
    %7273 = vmatprep.subr.bf16.mxu0 0
    %7274 = vmatpush1.bf16.msra.mxu0 %v4731
    %7275 = vmatprep.subr.bf16.mxu0 0
    %7276 = vmatpush2.bf16.msra.mxu0 %v4896
    %7277 = vmatprep.subr.bf16.mxu0 0
    %7278 = vmatpush2.bf16.msra.mxu0 %v4885
    %7279 = vmatprep.subr.bf16.mxu0 0
    %7280 = vmatpush2.bf16.msra.mxu0 %v4874
    %7281 = vmatprep.subr.bf16.mxu0 0
    %7282 = vmatpush2.bf16.msra.mxu0 %v4863
    %7283 = vmatprep.subr.bf16.mxu0 0
    %7284 = vmatpush2.bf16.msra.mxu0 %v4852
    %7285 = vmatprep.subr.bf16.mxu0 0
    %7286 = vmatpush2.bf16.msra.mxu0 %v4841
    %7287 = vmatprep.subr.bf16.mxu0 0
    %7288 = vmatpush2.bf16.msra.mxu0 %v4830
    %7289 = vmatprep.subr.bf16.mxu0 0
    %7290 = vmatpush2.bf16.msra.mxu0 %v4819
    %7291 = vmatprep.mubr.bf16.mxu0 %v92
    %7292 = vmatmul.mubr.bf16.gmra.mxu0 %v91
    %v7293 = vpop.f32.mrf.mxu0
    %v7294 = vadd.f32 %v7254, %v7293
    %v7295 = vpop.f32.mrf.mxu0
    %v7296 = vpop.f32.mrf.mxu0
    %v7297 = vpop.f32.mrf.mxu0
    %7298 = vdwg.mxu0
    %7299 = vmatprep.subr.bf16.mxu0 0
    %7300 = vmatpush1.bf16.msra.mxu0 0
    %7301 = vmatprep.subr.bf16.mxu0 0
    %7302 = vmatpush1.bf16.msra.mxu0 0
    %7303 = vmatprep.subr.bf16.mxu0 0
    %7304 = vmatpush1.bf16.msra.mxu0 0
    %7305 = vmatprep.subr.bf16.mxu0 0
    %7306 = vmatpush1.bf16.msra.mxu0 0
    %7307 = vmatprep.subr.bf16.mxu0 0
    %7308 = vmatpush1.bf16.msra.mxu0 %v4940
    %7309 = vmatprep.subr.bf16.mxu0 0
    %7310 = vmatpush1.bf16.msra.mxu0 %v4929
    %7311 = vmatprep.subr.bf16.mxu0 0
    %7312 = vmatpush1.bf16.msra.mxu0 %v4918
    %7313 = vmatprep.subr.bf16.mxu0 0
    %7314 = vmatpush1.bf16.msra.mxu0 %v4907
    %7315 = vmatprep.subr.bf16.mxu0 0
    %7316 = vmatpush2.bf16.msra.mxu0 0
    %7317 = vmatprep.subr.bf16.mxu0 0
    %7318 = vmatpush2.bf16.msra.mxu0 0
    %7319 = vmatprep.subr.bf16.mxu0 0
    %7320 = vmatpush2.bf16.msra.mxu0 0
    %7321 = vmatprep.subr.bf16.mxu0 0
    %7322 = vmatpush2.bf16.msra.mxu0 0
    %7323 = vmatprep.subr.bf16.mxu0 0
    %7324 = vmatpush2.bf16.msra.mxu0 0
    %7325 = vmatprep.subr.bf16.mxu0 0
    %7326 = vmatpush2.bf16.msra.mxu0 0
    %7327 = vmatprep.subr.bf16.mxu0 0
    %7328 = vmatpush2.bf16.msra.mxu0 0
    %7329 = vmatprep.subr.bf16.mxu0 0
    %7330 = vmatpush2.bf16.msra.mxu0 0
    %7331 = vmatprep.mubr.bf16.mxu0 0
    %7332 = vmatmul.mubr.bf16.gmra.mxu0 %v5867
    %v7333 = vpop.f32.mrf.mxu0
    %v7334 = vadd.f32 %v7294, %v7333
    %v7335 = vpop.f32.mrf.mxu0
    %v7336 = vpop.f32.mrf.mxu0
    %v7337 = vpop.f32.mrf.mxu0
    %7338 = vdwg.mxu0
    %v7339 = vmax.f32 %v6109, 0.0
    %v7340 = vmax.f32 %v6111, 0.0
    %v7341 = vmax.f32 %v6355, 0.0
    %v7342 = vmax.f32 %v6357, 0.0
    %v7343 = vmax.f32 %v6601, 0.0
    %v7344 = vmax.f32 %v6603, 0.0
    %v7345 = vmax.f32 %v6847, 0.0
    %v7346 = vmax.f32 %v6849, 0.0
    %v7347 = vmax.f32 %v7093, 0.0
    %v7348 = vmax.f32 %v7095, 0.0
    %v7349 = vmax.f32 %v7334, 0.0
    %v7350 = vpack.c.bf16 %v7339, %v7339
    %v7351 = vpack.c.bf16 %v7340, %v7340
    %v7352 = vpack.c.bf16 %v7341, %v7341
    %v7353 = vpack.c.bf16 %v7342, %v7342
    %v7354 = vpack.c.bf16 %v7343, %v7343
    %v7355 = vpack.c.bf16 %v7344, %v7344
    %v7356 = vpack.c.bf16 %v7345, %v7345
    %v7357 = vpack.c.bf16 %v7346, %v7346
    %v7358 = vpack.c.bf16 %v7347, %v7347
    %v7359 = vpack.c.bf16 %v7348, %v7348
    %v7360 = vpack.c.bf16 %v7349, %v7349
    %v7361 = vld [vmem:[#allocation6] sm:$0xff]
    %v7362 = vld [vmem:[#allocation6 + $0x8] sm:$0xff]
    %v7363 = vld [vmem:[#allocation6 + $0x10] sm:$0xff]
    %v7364 = vld [vmem:[#allocation6 + $0x18] sm:$0xff]
    %v7365 = vld [vmem:[#allocation6 + $0x20] sm:$0xff]
    %v7366 = vld [vmem:[#allocation6 + $0x28] sm:$0xf]
    %v7367 = vld [vmem:[#allocation6 + $0x2c] sm:$0xff]
    %v7368 = vld [vmem:[#allocation6 + $0x34] sm:$0xff]
    %v7369 = vld [vmem:[#allocation6 + $0x3c] sm:$0xff]
    %v7370 = vld [vmem:[#allocation6 + $0x44] sm:$0xff]
    %v7371 = vld [vmem:[#allocation6 + $0x4c] sm:$0xff]
    %v7372 = vld [vmem:[#allocation6 + $0x54] sm:$0xf]
    %v7373 = vld [vmem:[#allocation6 + $0x58] sm:$0xff]
    %v7374 = vld [vmem:[#allocation6 + $0x60] sm:$0xff]
    %v7375 = vld [vmem:[#allocation6 + $0x68] sm:$0xff]
    %v7376 = vld [vmem:[#allocation6 + $0x70] sm:$0xff]
    %v7377 = vld [vmem:[#allocation6 + $0x78] sm:$0xff]
    %v7378 = vld [vmem:[#allocation6 + $0x80] sm:$0xf]
    %v7379 = vld [vmem:[#allocation6 + $0x84] sm:$0xff]
    %v7380 = vld [vmem:[#allocation6 + $0x8c] sm:$0xff]
    %v7381 = vld [vmem:[#allocation6 + $0x94] sm:$0xff]
    %v7382 = vld [vmem:[#allocation6 + $0x9c] sm:$0xff]
    %v7383 = vld [vmem:[#allocation6 + $0xa4] sm:$0xff]
    %v7384 = vld [vmem:[#allocation6 + $0xac] sm:$0xf]
    %v7385 = vld [vmem:[#allocation6 + $0xb0] sm:$0xff]
    %v7386 = vld [vmem:[#allocation6 + $0xb8] sm:$0xff]
    %v7387 = vld [vmem:[#allocation6 + $0xc0] sm:$0xff]
    %v7388 = vld [vmem:[#allocation6 + $0xc8] sm:$0xff]
    %v7389 = vld [vmem:[#allocation6 + $0xd0] sm:$0xff]
    %v7390 = vld [vmem:[#allocation6 + $0xd8] sm:$0xf]
    %v7391 = vld [vmem:[#allocation6 + $0xdc] sm:$0xff]
    %v7392 = vld [vmem:[#allocation6 + $0xe4] sm:$0xff]
    %v7393 = vld [vmem:[#allocation6 + $0xec] sm:$0xff]
    %v7394 = vld [vmem:[#allocation6 + $0xf4] sm:$0xff]
    %v7395 = vld [vmem:[#allocation6 + $0xfc] sm:$0xff]
    %v7396 = vld [vmem:[#allocation6 + $0x104] sm:$0xf]
    %v7397 = vld [vmem:[#allocation6 + $0x108] sm:$0xff]
    %v7398 = vld [vmem:[#allocation6 + $0x110] sm:$0xff]
    %v7399 = vld [vmem:[#allocation6 + $0x118] sm:$0xff]
    %v7400 = vld [vmem:[#allocation6 + $0x120] sm:$0xff]
    %v7401 = vld [vmem:[#allocation6 + $0x128] sm:$0xff]
    %v7402 = vld [vmem:[#allocation6 + $0x130] sm:$0xf]
    %v7403 = vld [vmem:[#allocation6 + $0x134] sm:$0xff]
    %v7404 = vld [vmem:[#allocation6 + $0x13c] sm:$0xff]
    %v7405 = vld [vmem:[#allocation6 + $0x144] sm:$0xff]
    %v7406 = vld [vmem:[#allocation6 + $0x14c] sm:$0xff]
    %v7407 = vld [vmem:[#allocation6 + $0x154] sm:$0xff]
    %v7408 = vld [vmem:[#allocation6 + $0x15c] sm:$0xf]
    %v7409 = vld [vmem:[#allocation6 + $0x160] sm:$0xff]
    %v7410 = vld [vmem:[#allocation6 + $0x168] sm:$0xff]
    %v7411 = vld [vmem:[#allocation6 + $0x170] sm:$0xff]
    %v7412 = vld [vmem:[#allocation6 + $0x178] sm:$0xff]
    %v7413 = vld [vmem:[#allocation6 + $0x180] sm:$0xff]
    %v7414 = vld [vmem:[#allocation6 + $0x188] sm:$0xf]
    %v7415 = vld [vmem:[#allocation6 + $0x18c] sm:$0xff]
    %v7416 = vld [vmem:[#allocation6 + $0x194] sm:$0xff]
    %v7417 = vld [vmem:[#allocation6 + $0x19c] sm:$0xff]
    %v7418 = vld [vmem:[#allocation6 + $0x1a4] sm:$0xff]
    %v7419 = vld [vmem:[#allocation6 + $0x1ac] sm:$0xff]
    %v7420 = vld [vmem:[#allocation6 + $0x1b4] sm:$0xf]
    %v7421 = vld [vmem:[#allocation6 + $0x1b8] sm:$0xff]
    %v7422 = vld [vmem:[#allocation6 + $0x1c0] sm:$0xff]
    %v7423 = vld [vmem:[#allocation6 + $0x1c8] sm:$0xff]
    %v7424 = vld [vmem:[#allocation6 + $0x1d0] sm:$0xff]
    %v7425 = vld [vmem:[#allocation6 + $0x1d8] sm:$0xff]
    %v7426 = vld [vmem:[#allocation6 + $0x1e0] sm:$0xf]
    %v7427 = vld [vmem:[#allocation6 + $0x1e4] sm:$0xff]
    %v7428 = vld [vmem:[#allocation6 + $0x1ec] sm:$0xff]
    %v7429 = vld [vmem:[#allocation6 + $0x1f4] sm:$0xff]
    %v7430 = vld [vmem:[#allocation6 + $0x1fc] sm:$0xff]
    %v7431 = vld [vmem:[#allocation6 + $0x204] sm:$0xff]
    %v7432 = vld [vmem:[#allocation6 + $0x20c] sm:$0xf]
    %v7433 = vld [vmem:[#allocation6 + $0x210] sm:$0xff]
    %v7434 = vld [vmem:[#allocation6 + $0x218] sm:$0xff]
    %v7435 = vld [vmem:[#allocation6 + $0x220] sm:$0xff]
    %v7436 = vld [vmem:[#allocation6 + $0x228] sm:$0xff]
    %v7437 = vld [vmem:[#allocation6 + $0x230] sm:$0xff]
    %v7438 = vld [vmem:[#allocation6 + $0x238] sm:$0xf]
    %v7439 = vld [vmem:[#allocation6 + $0x23c] sm:$0xff]
    %v7440 = vld [vmem:[#allocation6 + $0x244] sm:$0xff]
    %v7441 = vld [vmem:[#allocation6 + $0x24c] sm:$0xff]
    %v7442 = vld [vmem:[#allocation6 + $0x254] sm:$0xff]
    %v7443 = vld [vmem:[#allocation6 + $0x25c] sm:$0xff]
    %v7444 = vld [vmem:[#allocation6 + $0x264] sm:$0xf]
    %v7445 = vld [vmem:[#allocation6 + $0x268] sm:$0xff]
    %v7446 = vld [vmem:[#allocation6 + $0x270] sm:$0xff]
    %v7447 = vld [vmem:[#allocation6 + $0x278] sm:$0xff]
    %v7448 = vld [vmem:[#allocation6 + $0x280] sm:$0xff]
    %v7449 = vld [vmem:[#allocation6 + $0x288] sm:$0xff]
    %v7450 = vld [vmem:[#allocation6 + $0x290] sm:$0xf]
    %v7451 = vld [vmem:[#allocation6 + $0x294] sm:$0xff]
    %v7452 = vld [vmem:[#allocation6 + $0x29c] sm:$0xff]
    %v7453 = vld [vmem:[#allocation6 + $0x2a4] sm:$0xff]
    %v7454 = vld [vmem:[#allocation6 + $0x2ac] sm:$0xff]
    %v7455 = vld [vmem:[#allocation6 + $0x2b4] sm:$0xff]
    %v7456 = vld [vmem:[#allocation6 + $0x2bc] sm:$0xf]
    %v7457 = vld [vmem:[#allocation6 + $0x2c0] sm:$0xff]
    %v7458 = vld [vmem:[#allocation6 + $0x2c8] sm:$0xff]
    %v7459 = vld [vmem:[#allocation6 + $0x2d0] sm:$0xff]
    %v7460 = vld [vmem:[#allocation6 + $0x2d8] sm:$0xff]
    %v7461 = vld [vmem:[#allocation6 + $0x2e0] sm:$0xff]
    %v7462 = vld [vmem:[#allocation6 + $0x2e8] sm:$0xf]
    %v7463 = vld [vmem:[#allocation6 + $0x2ec] sm:$0xff]
    %v7464 = vld [vmem:[#allocation6 + $0x2f4] sm:$0xff]
    %v7465 = vld [vmem:[#allocation6 + $0x2fc] sm:$0xff]
    %v7466 = vld [vmem:[#allocation6 + $0x304] sm:$0xff]
    %v7467 = vld [vmem:[#allocation6 + $0x30c] sm:$0xff]
    %v7468 = vld [vmem:[#allocation6 + $0x314] sm:$0xf]
    %v7469 = vld [vmem:[#allocation6 + $0x318] sm:$0xff]
    %v7470 = vld [vmem:[#allocation6 + $0x320] sm:$0xff]
    %v7471 = vld [vmem:[#allocation6 + $0x328] sm:$0xff]
    %v7472 = vld [vmem:[#allocation6 + $0x330] sm:$0xff]
    %v7473 = vld [vmem:[#allocation6 + $0x338] sm:$0xff]
    %v7474 = vld [vmem:[#allocation6 + $0x340] sm:$0xf]
    %v7475 = vld [vmem:[#allocation6 + $0x344] sm:$0xff]
    %v7476 = vld [vmem:[#allocation6 + $0x34c] sm:$0xff]
    %v7477 = vld [vmem:[#allocation6 + $0x354] sm:$0xff]
    %v7478 = vld [vmem:[#allocation6 + $0x35c] sm:$0xff]
    %v7479 = vld [vmem:[#allocation6 + $0x364] sm:$0xff]
    %v7480 = vld [vmem:[#allocation6 + $0x36c] sm:$0xf]
    %v7481 = vld [vmem:[#allocation6 + $0x370] sm:$0xff]
    %v7482 = vld [vmem:[#allocation6 + $0x378] sm:$0xff]
    %v7483 = vld [vmem:[#allocation6 + $0x380] sm:$0xff]
    %v7484 = vld [vmem:[#allocation6 + $0x388] sm:$0xff]
    %v7485 = vld [vmem:[#allocation6 + $0x390] sm:$0xff]
    %v7486 = vld [vmem:[#allocation6 + $0x398] sm:$0xf]
    %v7487 = vld [vmem:[#allocation6 + $0x39c] sm:$0xff]
    %v7488 = vld [vmem:[#allocation6 + $0x3a4] sm:$0xff]
    %v7489 = vld [vmem:[#allocation6 + $0x3ac] sm:$0xff]
    %v7490 = vld [vmem:[#allocation6 + $0x3b4] sm:$0xff]
    %v7491 = vld [vmem:[#allocation6 + $0x3bc] sm:$0xff]
    %v7492 = vld [vmem:[#allocation6 + $0x3c4] sm:$0xf]
    %v7493 = vld [vmem:[#allocation6 + $0x3c8] sm:$0xff]
    %v7494 = vld [vmem:[#allocation6 + $0x3d0] sm:$0xff]
    %v7495 = vld [vmem:[#allocation6 + $0x3d8] sm:$0xff]
    %v7496 = vld [vmem:[#allocation6 + $0x3e0] sm:$0xff]
    %v7497 = vld [vmem:[#allocation6 + $0x3e8] sm:$0xff]
    %v7498 = vld [vmem:[#allocation6 + $0x3f0] sm:$0xf]
    %v7499 = vld [vmem:[#allocation6 + $0x3f4] sm:$0xff]
    %v7500 = vld [vmem:[#allocation6 + $0x3fc] sm:$0xff]
    %v7501 = vld [vmem:[#allocation6 + $0x404] sm:$0xff]
    %v7502 = vld [vmem:[#allocation6 + $0x40c] sm:$0xff]
    %v7503 = vld [vmem:[#allocation6 + $0x414] sm:$0xff]
    %v7504 = vld [vmem:[#allocation6 + $0x41c] sm:$0xf]
    %v7505 = vld [vmem:[#allocation6 + $0x420] sm:$0xff]
    %v7506 = vld [vmem:[#allocation6 + $0x428] sm:$0xff]
    %v7507 = vld [vmem:[#allocation6 + $0x430] sm:$0xff]
    %v7508 = vld [vmem:[#allocation6 + $0x438] sm:$0xff]
    %v7509 = vld [vmem:[#allocation6 + $0x440] sm:$0xff]
    %v7510 = vld [vmem:[#allocation6 + $0x448] sm:$0xf]
    %v7511 = vld [vmem:[#allocation6 + $0x44c] sm:$0xff]
    %v7512 = vld [vmem:[#allocation6 + $0x454] sm:$0xff]
    %v7513 = vld [vmem:[#allocation6 + $0x45c] sm:$0xff]
    %v7514 = vld [vmem:[#allocation6 + $0x464] sm:$0xff]
    %v7515 = vld [vmem:[#allocation6 + $0x46c] sm:$0xff]
    %v7516 = vld [vmem:[#allocation6 + $0x474] sm:$0xf]
    %v7517 = vld [vmem:[#allocation6 + $0x478] sm:$0xff]
    %v7518 = vld [vmem:[#allocation6 + $0x480] sm:$0xff]
    %v7519 = vld [vmem:[#allocation6 + $0x488] sm:$0xff]
    %v7520 = vld [vmem:[#allocation6 + $0x490] sm:$0xff]
    %v7521 = vld [vmem:[#allocation6 + $0x498] sm:$0xff]
    %v7522 = vld [vmem:[#allocation6 + $0x4a0] sm:$0xf]
    %v7523 = vld [vmem:[#allocation6 + $0x4a4] sm:$0xff]
    %v7524 = vld [vmem:[#allocation6 + $0x4ac] sm:$0xff]
    %v7525 = vld [vmem:[#allocation6 + $0x4b4] sm:$0xff]
    %v7526 = vld [vmem:[#allocation6 + $0x4bc] sm:$0xff]
    %v7527 = vld [vmem:[#allocation6 + $0x4c4] sm:$0xff]
    %v7528 = vld [vmem:[#allocation6 + $0x4cc] sm:$0xf]
    %v7529 = vld [vmem:[#allocation6 + $0x4d0] sm:$0xff]
    %v7530 = vld [vmem:[#allocation6 + $0x4d8] sm:$0xff]
    %v7531 = vld [vmem:[#allocation6 + $0x4e0] sm:$0xff]
    %v7532 = vld [vmem:[#allocation6 + $0x4e8] sm:$0xff]
    %v7533 = vld [vmem:[#allocation6 + $0x4f0] sm:$0xff]
    %v7534 = vld [vmem:[#allocation6 + $0x4f8] sm:$0xf]
    %v7535 = vld [vmem:[#allocation6 + $0x4fc] sm:$0xff]
    %v7536 = vld [vmem:[#allocation6 + $0x504] sm:$0xff]
    %v7537 = vld [vmem:[#allocation6 + $0x50c] sm:$0xff]
    %v7538 = vld [vmem:[#allocation6 + $0x514] sm:$0xff]
    %v7539 = vld [vmem:[#allocation6 + $0x51c] sm:$0xff]
    %v7540 = vld [vmem:[#allocation6 + $0x524] sm:$0xf]
    %v7541 = vld [vmem:[#allocation6 + $0x528] sm:$0xff]
    %v7542 = vld [vmem:[#allocation6 + $0x530] sm:$0xff]
    %v7543 = vld [vmem:[#allocation6 + $0x538] sm:$0xff]
    %v7544 = vld [vmem:[#allocation6 + $0x540] sm:$0xff]
    %v7545 = vld [vmem:[#allocation6 + $0x548] sm:$0xff]
    %v7546 = vld [vmem:[#allocation6 + $0x550] sm:$0xf]
    %v7547 = vld [vmem:[#allocation6 + $0x554] sm:$0xff]
    %v7548 = vld [vmem:[#allocation6 + $0x55c] sm:$0xff]
    %v7549 = vld [vmem:[#allocation6 + $0x564] sm:$0xff]
    %v7550 = vld [vmem:[#allocation6 + $0x56c] sm:$0xff]
    %v7551 = vld [vmem:[#allocation6 + $0x574] sm:$0xff]
    %v7552 = vld [vmem:[#allocation6 + $0x57c] sm:$0xf]
    %v7553 = vld [vmem:[#allocation6 + $0x580] sm:$0xff]
    %v7554 = vld [vmem:[#allocation6 + $0x588] sm:$0xff]
    %v7555 = vld [vmem:[#allocation6 + $0x590] sm:$0xff]
    %v7556 = vld [vmem:[#allocation6 + $0x598] sm:$0xff]
    %v7557 = vld [vmem:[#allocation6 + $0x5a0] sm:$0xff]
    %v7558 = vld [vmem:[#allocation6 + $0x5a8] sm:$0xf]
    %v7559 = vld [vmem:[#allocation6 + $0x5ac] sm:$0xff]
    %v7560 = vld [vmem:[#allocation6 + $0x5b4] sm:$0xff]
    %v7561 = vld [vmem:[#allocation6 + $0x5bc] sm:$0xff]
    %v7562 = vld [vmem:[#allocation6 + $0x5c4] sm:$0xff]
    %v7563 = vld [vmem:[#allocation6 + $0x5cc] sm:$0xff]
    %v7564 = vld [vmem:[#allocation6 + $0x5d4] sm:$0xf]
    %v7565 = vld [vmem:[#allocation6 + $0x5d8] sm:$0xff]
    %v7566 = vld [vmem:[#allocation6 + $0x5e0] sm:$0xff]
    %v7567 = vld [vmem:[#allocation6 + $0x5e8] sm:$0xff]
    %v7568 = vld [vmem:[#allocation6 + $0x5f0] sm:$0xff]
    %v7569 = vld [vmem:[#allocation6 + $0x5f8] sm:$0xff]
    %v7570 = vld [vmem:[#allocation6 + $0x600] sm:$0xf]
    %v7571 = vld [vmem:[#allocation6 + $0x604] sm:$0xff]
    %v7572 = vld [vmem:[#allocation6 + $0x60c] sm:$0xff]
    %v7573 = vld [vmem:[#allocation6 + $0x614] sm:$0xff]
    %v7574 = vld [vmem:[#allocation6 + $0x61c] sm:$0xff]
    %v7575 = vld [vmem:[#allocation6 + $0x624] sm:$0xff]
    %v7576 = vld [vmem:[#allocation6 + $0x62c] sm:$0xf]
    %v7577 = vld [vmem:[#allocation6 + $0x630] sm:$0xff]
    %v7578 = vld [vmem:[#allocation6 + $0x638] sm:$0xff]
    %v7579 = vld [vmem:[#allocation6 + $0x640] sm:$0xff]
    %v7580 = vld [vmem:[#allocation6 + $0x648] sm:$0xff]
    %v7581 = vld [vmem:[#allocation6 + $0x650] sm:$0xff]
    %v7582 = vld [vmem:[#allocation6 + $0x658] sm:$0xf]
    %v7583 = vld [vmem:[#allocation6 + $0x65c] sm:$0xff]
    %v7584 = vld [vmem:[#allocation6 + $0x664] sm:$0xff]
    %v7585 = vld [vmem:[#allocation6 + $0x66c] sm:$0xff]
    %v7586 = vld [vmem:[#allocation6 + $0x674] sm:$0xff]
    %v7587 = vld [vmem:[#allocation6 + $0x67c] sm:$0xff]
    %v7588 = vld [vmem:[#allocation6 + $0x684] sm:$0xf]
    %v7589 = vld [vmem:[#allocation6 + $0x688] sm:$0xff]
    %v7590 = vld [vmem:[#allocation6 + $0x690] sm:$0xff]
    %v7591 = vld [vmem:[#allocation6 + $0x698] sm:$0xff]
    %v7592 = vld [vmem:[#allocation6 + $0x6a0] sm:$0xff]
    %v7593 = vld [vmem:[#allocation6 + $0x6a8] sm:$0xff]
    %v7594 = vld [vmem:[#allocation6 + $0x6b0] sm:$0xf]
    %v7595 = vld [vmem:[#allocation6 + $0x6b4] sm:$0xff]
    %v7596 = vld [vmem:[#allocation6 + $0x6bc] sm:$0xff]
    %v7597 = vld [vmem:[#allocation6 + $0x6c4] sm:$0xff]
    %v7598 = vld [vmem:[#allocation6 + $0x6cc] sm:$0xff]
    %v7599 = vld [vmem:[#allocation6 + $0x6d4] sm:$0xff]
    %v7600 = vld [vmem:[#allocation6 + $0x6dc] sm:$0xf]
    %v7601 = vld [vmem:[#allocation6 + $0x6e0] sm:$0xff]
    %v7602 = vld [vmem:[#allocation6 + $0x6e8] sm:$0xff]
    %v7603 = vld [vmem:[#allocation6 + $0x6f0] sm:$0xff]
    %v7604 = vld [vmem:[#allocation6 + $0x6f8] sm:$0xff]
    %v7605 = vld [vmem:[#allocation6 + $0x700] sm:$0xff]
    %v7606 = vld [vmem:[#allocation6 + $0x708] sm:$0xf]
    %v7607 = vld [vmem:[#allocation6 + $0x70c] sm:$0xff]
    %v7608 = vld [vmem:[#allocation6 + $0x714] sm:$0xff]
    %v7609 = vld [vmem:[#allocation6 + $0x71c] sm:$0xff]
    %v7610 = vld [vmem:[#allocation6 + $0x724] sm:$0xff]
    %v7611 = vld [vmem:[#allocation6 + $0x72c] sm:$0xff]
    %v7612 = vld [vmem:[#allocation6 + $0x734] sm:$0xf]
    %v7613 = vld [vmem:[#allocation6 + $0x738] sm:$0xff]
    %v7614 = vld [vmem:[#allocation6 + $0x740] sm:$0xff]
    %v7615 = vld [vmem:[#allocation6 + $0x748] sm:$0xff]
    %v7616 = vld [vmem:[#allocation6 + $0x750] sm:$0xff]
    %v7617 = vld [vmem:[#allocation6 + $0x758] sm:$0xff]
    %v7618 = vld [vmem:[#allocation6 + $0x760] sm:$0xf]
    %v7619 = vld [vmem:[#allocation6 + $0x764] sm:$0xff]
    %v7620 = vld [vmem:[#allocation6 + $0x76c] sm:$0xff]
    %v7621 = vld [vmem:[#allocation6 + $0x774] sm:$0xff]
    %v7622 = vld [vmem:[#allocation6 + $0x77c] sm:$0xff]
    %v7623 = vld [vmem:[#allocation6 + $0x784] sm:$0xff]
    %v7624 = vld [vmem:[#allocation6 + $0x78c] sm:$0xf]
    %v7625 = vld [vmem:[#allocation6 + $0x790] sm:$0xff]
    %v7626 = vld [vmem:[#allocation6 + $0x798] sm:$0xff]
    %v7627 = vld [vmem:[#allocation6 + $0x7a0] sm:$0xff]
    %v7628 = vld [vmem:[#allocation6 + $0x7a8] sm:$0xff]
    %v7629 = vld [vmem:[#allocation6 + $0x7b0] sm:$0xff]
    %v7630 = vld [vmem:[#allocation6 + $0x7b8] sm:$0xf]
    %v7631 = vld [vmem:[#allocation6 + $0x7bc] sm:$0xff]
    %v7632 = vld [vmem:[#allocation6 + $0x7c4] sm:$0xff]
    %v7633 = vld [vmem:[#allocation6 + $0x7cc] sm:$0xff]
    %v7634 = vld [vmem:[#allocation6 + $0x7d4] sm:$0xff]
    %v7635 = vld [vmem:[#allocation6 + $0x7dc] sm:$0xff]
    %v7636 = vld [vmem:[#allocation6 + $0x7e4] sm:$0xf]
    %v7637 = vld [vmem:[#allocation6 + $0x7e8] sm:$0xff]
    %v7638 = vld [vmem:[#allocation6 + $0x7f0] sm:$0xff]
    %v7639 = vld [vmem:[#allocation6 + $0x7f8] sm:$0xff]
    %v7640 = vld [vmem:[#allocation6 + $0x800] sm:$0xff]
    %v7641 = vld [vmem:[#allocation6 + $0x808] sm:$0xff]
    %v7642 = vld [vmem:[#allocation6 + $0x810] sm:$0xf]
    %v7643 = vld [vmem:[#allocation6 + $0x814] sm:$0xff]
    %v7644 = vld [vmem:[#allocation6 + $0x81c] sm:$0xff]
    %v7645 = vld [vmem:[#allocation6 + $0x824] sm:$0xff]
    %v7646 = vld [vmem:[#allocation6 + $0x82c] sm:$0xff]
    %v7647 = vld [vmem:[#allocation6 + $0x834] sm:$0xff]
    %v7648 = vld [vmem:[#allocation6 + $0x83c] sm:$0xf]
    %v7649 = vld [vmem:[#allocation6 + $0x840] sm:$0xff]
    %v7650 = vld [vmem:[#allocation6 + $0x848] sm:$0xff]
    %v7651 = vld [vmem:[#allocation6 + $0x850] sm:$0xff]
    %v7652 = vld [vmem:[#allocation6 + $0x858] sm:$0xff]
    %v7653 = vld [vmem:[#allocation6 + $0x860] sm:$0xff]
    %v7654 = vld [vmem:[#allocation6 + $0x868] sm:$0xf]
    %v7655 = vld [vmem:[#allocation6 + $0x86c] sm:$0xff]
    %v7656 = vld [vmem:[#allocation6 + $0x874] sm:$0xff]
    %v7657 = vld [vmem:[#allocation6 + $0x87c] sm:$0xff]
    %v7658 = vld [vmem:[#allocation6 + $0x884] sm:$0xff]
    %v7659 = vld [vmem:[#allocation6 + $0x88c] sm:$0xff]
    %v7660 = vld [vmem:[#allocation6 + $0x894] sm:$0xf]
    %v7661 = vld [vmem:[#allocation6 + $0x898] sm:$0xff]
    %v7662 = vld [vmem:[#allocation6 + $0x8a0] sm:$0xff]
    %v7663 = vld [vmem:[#allocation6 + $0x8a8] sm:$0xff]
    %v7664 = vld [vmem:[#allocation6 + $0x8b0] sm:$0xff]
    %v7665 = vld [vmem:[#allocation6 + $0x8b8] sm:$0xff]
    %v7666 = vld [vmem:[#allocation6 + $0x8c0] sm:$0xf]
    %v7667 = vld [vmem:[#allocation6 + $0x8c4] sm:$0xff]
    %v7668 = vld [vmem:[#allocation6 + $0x8cc] sm:$0xff]
    %v7669 = vld [vmem:[#allocation6 + $0x8d4] sm:$0xff]
    %v7670 = vld [vmem:[#allocation6 + $0x8dc] sm:$0xff]
    %v7671 = vld [vmem:[#allocation6 + $0x8e4] sm:$0xff]
    %v7672 = vld [vmem:[#allocation6 + $0x8ec] sm:$0xf]
    %v7673 = vld [vmem:[#allocation6 + $0x8f0] sm:$0xff]
    %v7674 = vld [vmem:[#allocation6 + $0x8f8] sm:$0xff]
    %v7675 = vld [vmem:[#allocation6 + $0x900] sm:$0xff]
    %v7676 = vld [vmem:[#allocation6 + $0x908] sm:$0xff]
    %v7677 = vld [vmem:[#allocation6 + $0x910] sm:$0xff]
    %v7678 = vld [vmem:[#allocation6 + $0x918] sm:$0xf]
    %v7679 = vld [vmem:[#allocation6 + $0x91c] sm:$0xff]
    %v7680 = vld [vmem:[#allocation6 + $0x924] sm:$0xff]
    %v7681 = vld [vmem:[#allocation6 + $0x92c] sm:$0xff]
    %v7682 = vld [vmem:[#allocation6 + $0x934] sm:$0xff]
    %v7683 = vld [vmem:[#allocation6 + $0x93c] sm:$0xff]
    %v7684 = vld [vmem:[#allocation6 + $0x944] sm:$0xf]
    %v7685 = vld [vmem:[#allocation6 + $0x948] sm:$0xff]
    %v7686 = vld [vmem:[#allocation6 + $0x950] sm:$0xff]
    %v7687 = vld [vmem:[#allocation6 + $0x958] sm:$0xff]
    %v7688 = vld [vmem:[#allocation6 + $0x960] sm:$0xff]
    %v7689 = vld [vmem:[#allocation6 + $0x968] sm:$0xff]
    %v7690 = vld [vmem:[#allocation6 + $0x970] sm:$0xf]
    %v7691 = vld [vmem:[#allocation6 + $0x974] sm:$0xff]
    %v7692 = vld [vmem:[#allocation6 + $0x97c] sm:$0xff]
    %v7693 = vld [vmem:[#allocation6 + $0x984] sm:$0xff]
    %v7694 = vld [vmem:[#allocation6 + $0x98c] sm:$0xff]
    %v7695 = vld [vmem:[#allocation6 + $0x994] sm:$0xff]
    %v7696 = vld [vmem:[#allocation6 + $0x99c] sm:$0xf]
    %v7697 = vld [vmem:[#allocation6 + $0x9a0] sm:$0xff]
    %v7698 = vld [vmem:[#allocation6 + $0x9a8] sm:$0xff]
    %v7699 = vld [vmem:[#allocation6 + $0x9b0] sm:$0xff]
    %v7700 = vld [vmem:[#allocation6 + $0x9b8] sm:$0xff]
    %v7701 = vld [vmem:[#allocation6 + $0x9c0] sm:$0xff]
    %v7702 = vld [vmem:[#allocation6 + $0x9c8] sm:$0xf]
    %v7703 = vld [vmem:[#allocation6 + $0x9cc] sm:$0xff]
    %v7704 = vld [vmem:[#allocation6 + $0x9d4] sm:$0xff]
    %v7705 = vld [vmem:[#allocation6 + $0x9dc] sm:$0xff]
    %v7706 = vld [vmem:[#allocation6 + $0x9e4] sm:$0xff]
    %v7707 = vld [vmem:[#allocation6 + $0x9ec] sm:$0xff]
    %v7708 = vld [vmem:[#allocation6 + $0x9f4] sm:$0xf]
    %v7709 = vld [vmem:[#allocation6 + $0x9f8] sm:$0xff]
    %v7710 = vld [vmem:[#allocation6 + $0xa00] sm:$0xff]
    %v7711 = vld [vmem:[#allocation6 + $0xa08] sm:$0xff]
    %v7712 = vld [vmem:[#allocation6 + $0xa10] sm:$0xff]
    %v7713 = vld [vmem:[#allocation6 + $0xa18] sm:$0xff]
    %v7714 = vld [vmem:[#allocation6 + $0xa20] sm:$0xf]
    %v7715 = vld [vmem:[#allocation6 + $0xa24] sm:$0xff]
    %v7716 = vld [vmem:[#allocation6 + $0xa2c] sm:$0xff]
    %v7717 = vld [vmem:[#allocation6 + $0xa34] sm:$0xff]
    %v7718 = vld [vmem:[#allocation6 + $0xa3c] sm:$0xff]
    %v7719 = vld [vmem:[#allocation6 + $0xa44] sm:$0xff]
    %v7720 = vld [vmem:[#allocation6 + $0xa4c] sm:$0xf]
    %v7721 = vld [vmem:[#allocation6 + $0xa50] sm:$0xff]
    %v7722 = vld [vmem:[#allocation6 + $0xa58] sm:$0xff]
    %v7723 = vld [vmem:[#allocation6 + $0xa60] sm:$0xff]
    %v7724 = vld [vmem:[#allocation6 + $0xa68] sm:$0xff]
    %v7725 = vld [vmem:[#allocation6 + $0xa70] sm:$0xff]
    %v7726 = vld [vmem:[#allocation6 + $0xa78] sm:$0xf]
    %v7727 = vld [vmem:[#allocation6 + $0xa7c] sm:$0xff]
    %v7728 = vld [vmem:[#allocation6 + $0xa84] sm:$0xff]
    %v7729 = vld [vmem:[#allocation6 + $0xa8c] sm:$0xff]
    %v7730 = vld [vmem:[#allocation6 + $0xa94] sm:$0xff]
    %v7731 = vld [vmem:[#allocation6 + $0xa9c] sm:$0xff]
    %v7732 = vld [vmem:[#allocation6 + $0xaa4] sm:$0xf]
    %v7733 = vld [vmem:[#allocation6 + $0xaa8] sm:$0xff]
    %v7734 = vld [vmem:[#allocation6 + $0xab0] sm:$0xff]
    %v7735 = vld [vmem:[#allocation6 + $0xab8] sm:$0xff]
    %v7736 = vld [vmem:[#allocation6 + $0xac0] sm:$0xff]
    %v7737 = vld [vmem:[#allocation6 + $0xac8] sm:$0xff]
    %v7738 = vld [vmem:[#allocation6 + $0xad0] sm:$0xf]
    %v7739 = vld [vmem:[#allocation6 + $0xad4] sm:$0xff]
    %v7740 = vld [vmem:[#allocation6 + $0xadc] sm:$0xff]
    %v7741 = vld [vmem:[#allocation6 + $0xae4] sm:$0xff]
    %v7742 = vld [vmem:[#allocation6 + $0xaec] sm:$0xff]
    %v7743 = vld [vmem:[#allocation6 + $0xaf4] sm:$0xff]
    %v7744 = vld [vmem:[#allocation6 + $0xafc] sm:$0xf]
    %v7745 = vld [vmem:[#allocation6 + $0xb00] sm:$0xff]
    %v7746 = vld [vmem:[#allocation6 + $0xb08] sm:$0xff]
    %v7747 = vld [vmem:[#allocation6 + $0xb10] sm:$0xff]
    %v7748 = vld [vmem:[#allocation6 + $0xb18] sm:$0xff]
    %v7749 = vld [vmem:[#allocation6 + $0xb20] sm:$0xff]
    %v7750 = vld [vmem:[#allocation6 + $0xb28] sm:$0xf]
    %v7751 = vld [vmem:[#allocation6 + $0xb2c] sm:$0xff]
    %v7752 = vld [vmem:[#allocation6 + $0xb34] sm:$0xff]
    %v7753 = vld [vmem:[#allocation6 + $0xb3c] sm:$0xff]
    %v7754 = vld [vmem:[#allocation6 + $0xb44] sm:$0xff]
    %v7755 = vld [vmem:[#allocation6 + $0xb4c] sm:$0xff]
    %v7756 = vld [vmem:[#allocation6 + $0xb54] sm:$0xf]
    %v7757 = vld [vmem:[#allocation6 + $0xb58] sm:$0xff]
    %v7758 = vld [vmem:[#allocation6 + $0xb60] sm:$0xff]
    %v7759 = vld [vmem:[#allocation6 + $0xb68] sm:$0xff]
    %v7760 = vld [vmem:[#allocation6 + $0xb70] sm:$0xff]
    %v7761 = vld [vmem:[#allocation6 + $0xb78] sm:$0xff]
    %v7762 = vld [vmem:[#allocation6 + $0xb80] sm:$0xf]
    %v7763 = vld [vmem:[#allocation6 + $0xb84] sm:$0xff]
    %v7764 = vld [vmem:[#allocation6 + $0xb8c] sm:$0xff]
    %v7765 = vld [vmem:[#allocation6 + $0xb94] sm:$0xff]
    %v7766 = vld [vmem:[#allocation6 + $0xb9c] sm:$0xff]
    %v7767 = vld [vmem:[#allocation6 + $0xba4] sm:$0xff]
    %v7768 = vld [vmem:[#allocation6 + $0xbac] sm:$0xf]
    %v7769 = vld [vmem:[#allocation6 + $0xbb0] sm:$0xff]
    %v7770 = vld [vmem:[#allocation6 + $0xbb8] sm:$0xff]
    %v7771 = vld [vmem:[#allocation6 + $0xbc0] sm:$0xff]
    %v7772 = vld [vmem:[#allocation6 + $0xbc8] sm:$0xff]
    %v7773 = vld [vmem:[#allocation6 + $0xbd0] sm:$0xff]
    %v7774 = vld [vmem:[#allocation6 + $0xbd8] sm:$0xf]
    %v7775 = vld [vmem:[#allocation6 + $0xbdc] sm:$0xff]
    %v7776 = vld [vmem:[#allocation6 + $0xbe4] sm:$0xff]
    %v7777 = vld [vmem:[#allocation6 + $0xbec] sm:$0xff]
    %v7778 = vld [vmem:[#allocation6 + $0xbf4] sm:$0xff]
    %v7779 = vld [vmem:[#allocation6 + $0xbfc] sm:$0xff]
    %v7780 = vld [vmem:[#allocation6 + $0xc04] sm:$0xf]
    %v7781 = vld [vmem:[#allocation6 + $0xc08] sm:$0xff]
    %v7782 = vld [vmem:[#allocation6 + $0xc10] sm:$0xff]
    %v7783 = vld [vmem:[#allocation6 + $0xc18] sm:$0xff]
    %v7784 = vld [vmem:[#allocation6 + $0xc20] sm:$0xff]
    %v7785 = vld [vmem:[#allocation6 + $0xc28] sm:$0xff]
    %v7786 = vld [vmem:[#allocation6 + $0xc30] sm:$0xf]
    %v7787 = vld [vmem:[#allocation6 + $0xc34] sm:$0xff]
    %v7788 = vld [vmem:[#allocation6 + $0xc3c] sm:$0xff]
    %v7789 = vld [vmem:[#allocation6 + $0xc44] sm:$0xff]
    %v7790 = vld [vmem:[#allocation6 + $0xc4c] sm:$0xff]
    %v7791 = vld [vmem:[#allocation6 + $0xc54] sm:$0xff]
    %v7792 = vld [vmem:[#allocation6 + $0xc5c] sm:$0xf]
    %v7793 = vld [vmem:[#allocation6 + $0xc60] sm:$0xff]
    %v7794 = vld [vmem:[#allocation6 + $0xc68] sm:$0xff]
    %v7795 = vld [vmem:[#allocation6 + $0xc70] sm:$0xff]
    %v7796 = vld [vmem:[#allocation6 + $0xc78] sm:$0xff]
    %v7797 = vld [vmem:[#allocation6 + $0xc80] sm:$0xff]
    %v7798 = vld [vmem:[#allocation6 + $0xc88] sm:$0xf]
    %v7799 = vld [vmem:[#allocation6 + $0xc8c] sm:$0xff]
    %v7800 = vld [vmem:[#allocation6 + $0xc94] sm:$0xff]
    %v7801 = vld [vmem:[#allocation6 + $0xc9c] sm:$0xff]
    %v7802 = vld [vmem:[#allocation6 + $0xca4] sm:$0xff]
    %v7803 = vld [vmem:[#allocation6 + $0xcac] sm:$0xff]
    %v7804 = vld [vmem:[#allocation6 + $0xcb4] sm:$0xf]
    %v7805 = vld [vmem:[#allocation6 + $0xcb8] sm:$0xff]
    %v7806 = vld [vmem:[#allocation6 + $0xcc0] sm:$0xff]
    %v7807 = vld [vmem:[#allocation6 + $0xcc8] sm:$0xff]
    %v7808 = vld [vmem:[#allocation6 + $0xcd0] sm:$0xff]
    %v7809 = vld [vmem:[#allocation6 + $0xcd8] sm:$0xff]
    %v7810 = vld [vmem:[#allocation6 + $0xce0] sm:$0xf]
    %v7811 = vld [vmem:[#allocation6 + $0xce4] sm:$0xff]
    %v7812 = vld [vmem:[#allocation6 + $0xcec] sm:$0xff]
    %v7813 = vld [vmem:[#allocation6 + $0xcf4] sm:$0xff]
    %v7814 = vld [vmem:[#allocation6 + $0xcfc] sm:$0xff]
    %v7815 = vld [vmem:[#allocation6 + $0xd04] sm:$0xff]
    %v7816 = vld [vmem:[#allocation6 + $0xd0c] sm:$0xf]
    %v7817 = vld [vmem:[#allocation6 + $0xd10] sm:$0xff]
    %v7818 = vld [vmem:[#allocation6 + $0xd18] sm:$0xff]
    %v7819 = vld [vmem:[#allocation6 + $0xd20] sm:$0xff]
    %v7820 = vld [vmem:[#allocation6 + $0xd28] sm:$0xff]
    %v7821 = vld [vmem:[#allocation6 + $0xd30] sm:$0xff]
    %v7822 = vld [vmem:[#allocation6 + $0xd38] sm:$0xf]
    %v7823 = vld [vmem:[#allocation6 + $0xd3c] sm:$0xff]
    %v7824 = vld [vmem:[#allocation6 + $0xd44] sm:$0xff]
    %v7825 = vld [vmem:[#allocation6 + $0xd4c] sm:$0xff]
    %v7826 = vld [vmem:[#allocation6 + $0xd54] sm:$0xff]
    %v7827 = vld [vmem:[#allocation6 + $0xd5c] sm:$0xff]
    %v7828 = vld [vmem:[#allocation6 + $0xd64] sm:$0xf]
    %v7829 = vld [vmem:[#allocation6 + $0xd68] sm:$0xff]
    %v7830 = vld [vmem:[#allocation6 + $0xd70] sm:$0xff]
    %v7831 = vld [vmem:[#allocation6 + $0xd78] sm:$0xff]
    %v7832 = vld [vmem:[#allocation6 + $0xd80] sm:$0xff]
    %v7833 = vld [vmem:[#allocation6 + $0xd88] sm:$0xff]
    %v7834 = vld [vmem:[#allocation6 + $0xd90] sm:$0xf]
    %v7835 = vld [vmem:[#allocation6 + $0xd94] sm:$0xff]
    %v7836 = vld [vmem:[#allocation6 + $0xd9c] sm:$0xff]
    %v7837 = vld [vmem:[#allocation6 + $0xda4] sm:$0xff]
    %v7838 = vld [vmem:[#allocation6 + $0xdac] sm:$0xff]
    %v7839 = vld [vmem:[#allocation6 + $0xdb4] sm:$0xff]
    %v7840 = vld [vmem:[#allocation6 + $0xdbc] sm:$0xf]
    %v7841 = vld [vmem:[#allocation6 + $0xdc0] sm:$0xff]
    %v7842 = vld [vmem:[#allocation6 + $0xdc8] sm:$0xff]
    %v7843 = vld [vmem:[#allocation6 + $0xdd0] sm:$0xff]
    %v7844 = vld [vmem:[#allocation6 + $0xdd8] sm:$0xff]
    %v7845 = vld [vmem:[#allocation6 + $0xde0] sm:$0xff]
    %v7846 = vld [vmem:[#allocation6 + $0xde8] sm:$0xf]
    %v7847 = vld [vmem:[#allocation6 + $0xdec] sm:$0xff]
    %v7848 = vld [vmem:[#allocation6 + $0xdf4] sm:$0xff]
    %v7849 = vld [vmem:[#allocation6 + $0xdfc] sm:$0xff]
    %v7850 = vld [vmem:[#allocation6 + $0xe04] sm:$0xff]
    %v7851 = vld [vmem:[#allocation6 + $0xe0c] sm:$0xff]
    %v7852 = vld [vmem:[#allocation6 + $0xe14] sm:$0xf]
    %v7853 = vld [vmem:[#allocation6 + $0xe18] sm:$0xff]
    %v7854 = vld [vmem:[#allocation6 + $0xe20] sm:$0xff]
    %v7855 = vld [vmem:[#allocation6 + $0xe28] sm:$0xff]
    %v7856 = vld [vmem:[#allocation6 + $0xe30] sm:$0xff]
    %v7857 = vld [vmem:[#allocation6 + $0xe38] sm:$0xff]
    %v7858 = vld [vmem:[#allocation6 + $0xe40] sm:$0xf]
    %v7859 = vld [vmem:[#allocation6 + $0xe44] sm:$0xff]
    %v7860 = vld [vmem:[#allocation6 + $0xe4c] sm:$0xff]
    %v7861 = vld [vmem:[#allocation6 + $0xe54] sm:$0xff]
    %v7862 = vld [vmem:[#allocation6 + $0xe5c] sm:$0xff]
    %v7863 = vld [vmem:[#allocation6 + $0xe64] sm:$0xff]
    %v7864 = vld [vmem:[#allocation6 + $0xe6c] sm:$0xf]
    %v7865 = vld [vmem:[#allocation6 + $0xe70] sm:$0xff]
    %v7866 = vld [vmem:[#allocation6 + $0xe78] sm:$0xff]
    %v7867 = vld [vmem:[#allocation6 + $0xe80] sm:$0xff]
    %v7868 = vld [vmem:[#allocation6 + $0xe88] sm:$0xff]
    %v7869 = vld [vmem:[#allocation6 + $0xe90] sm:$0xff]
    %v7870 = vld [vmem:[#allocation6 + $0xe98] sm:$0xf]
    %v7871 = vld [vmem:[#allocation6 + $0xe9c] sm:$0xff]
    %v7872 = vld [vmem:[#allocation6 + $0xea4] sm:$0xff]
    %v7873 = vld [vmem:[#allocation6 + $0xeac] sm:$0xff]
    %v7874 = vld [vmem:[#allocation6 + $0xeb4] sm:$0xff]
    %v7875 = vld [vmem:[#allocation6 + $0xebc] sm:$0xff]
    %v7876 = vld [vmem:[#allocation6 + $0xec4] sm:$0xf]
    %v7877 = vld [vmem:[#allocation6 + $0xec8] sm:$0xff]
    %v7878 = vld [vmem:[#allocation6 + $0xed0] sm:$0xff]
    %v7879 = vld [vmem:[#allocation6 + $0xed8] sm:$0xff]
    %v7880 = vld [vmem:[#allocation6 + $0xee0] sm:$0xff]
    %v7881 = vld [vmem:[#allocation6 + $0xee8] sm:$0xff]
    %v7882 = vld [vmem:[#allocation6 + $0xef0] sm:$0xf]
    %v7883 = vld [vmem:[#allocation6 + $0xef4] sm:$0xff]
    %v7884 = vld [vmem:[#allocation6 + $0xefc] sm:$0xff]
    %v7885 = vld [vmem:[#allocation6 + $0xf04] sm:$0xff]
    %v7886 = vld [vmem:[#allocation6 + $0xf0c] sm:$0xff]
    %v7887 = vld [vmem:[#allocation6 + $0xf14] sm:$0xff]
    %v7888 = vld [vmem:[#allocation6 + $0xf1c] sm:$0xf]
    %v7889 = vld [vmem:[#allocation6 + $0xf20] sm:$0xff]
    %v7890 = vld [vmem:[#allocation6 + $0xf28] sm:$0xff]
    %v7891 = vld [vmem:[#allocation6 + $0xf30] sm:$0xff]
    %v7892 = vld [vmem:[#allocation6 + $0xf38] sm:$0xff]
    %v7893 = vld [vmem:[#allocation6 + $0xf40] sm:$0xff]
    %v7894 = vld [vmem:[#allocation6 + $0xf48] sm:$0xf]
    %v7895 = vld [vmem:[#allocation6 + $0xf4c] sm:$0xff]
    %v7896 = vld [vmem:[#allocation6 + $0xf54] sm:$0xff]
    %v7897 = vld [vmem:[#allocation6 + $0xf5c] sm:$0xff]
    %v7898 = vld [vmem:[#allocation6 + $0xf64] sm:$0xff]
    %v7899 = vld [vmem:[#allocation6 + $0xf6c] sm:$0xff]
    %v7900 = vld [vmem:[#allocation6 + $0xf74] sm:$0xf]
    %v7901 = vld [vmem:[#allocation6 + $0xf78] sm:$0xff]
    %v7902 = vld [vmem:[#allocation6 + $0xf80] sm:$0xff]
    %v7903 = vld [vmem:[#allocation6 + $0xf88] sm:$0xff]
    %v7904 = vld [vmem:[#allocation6 + $0xf90] sm:$0xff]
    %v7905 = vld [vmem:[#allocation6 + $0xf98] sm:$0xff]
    %v7906 = vld [vmem:[#allocation6 + $0xfa0] sm:$0xf]
    %v7907 = vld [vmem:[#allocation6 + $0xfa4] sm:$0xff]
    %v7908 = vld [vmem:[#allocation6 + $0xfac] sm:$0xff]
    %v7909 = vld [vmem:[#allocation6 + $0xfb4] sm:$0xff]
    %v7910 = vld [vmem:[#allocation6 + $0xfbc] sm:$0xff]
    %v7911 = vld [vmem:[#allocation6 + $0xfc4] sm:$0xff]
    %v7912 = vld [vmem:[#allocation6 + $0xfcc] sm:$0xf]
    %v7913 = vld [vmem:[#allocation6 + $0xfd0] sm:$0xff]
    %v7914 = vld [vmem:[#allocation6 + $0xfd8] sm:$0xff]
    %v7915 = vld [vmem:[#allocation6 + $0xfe0] sm:$0xff]
    %v7916 = vld [vmem:[#allocation6 + $0xfe8] sm:$0xff]
    %v7917 = vld [vmem:[#allocation6 + $0xff0] sm:$0xff]
    %v7918 = vld [vmem:[#allocation6 + $0xff8] sm:$0xf]
    %v7919 = vld [vmem:[#allocation6 + $0xffc] sm:$0xff]
    %v7920 = vld [vmem:[#allocation6 + $0x1004] sm:$0xff]
    %v7921 = vld [vmem:[#allocation6 + $0x100c] sm:$0xff]
    %v7922 = vld [vmem:[#allocation6 + $0x1014] sm:$0xff]
    %v7923 = vld [vmem:[#allocation6 + $0x101c] sm:$0xff]
    %v7924 = vld [vmem:[#allocation6 + $0x1024] sm:$0xf]
    %v7925 = vld [vmem:[#allocation6 + $0x1028] sm:$0xff]
    %v7926 = vld [vmem:[#allocation6 + $0x1030] sm:$0xff]
    %v7927 = vld [vmem:[#allocation6 + $0x1038] sm:$0xff]
    %v7928 = vld [vmem:[#allocation6 + $0x1040] sm:$0xff]
    %v7929 = vld [vmem:[#allocation6 + $0x1048] sm:$0xff]
    %v7930 = vld [vmem:[#allocation6 + $0x1050] sm:$0xf]
    %v7931 = vld [vmem:[#allocation6 + $0x1054] sm:$0xff]
    %v7932 = vld [vmem:[#allocation6 + $0x105c] sm:$0xff]
    %v7933 = vld [vmem:[#allocation6 + $0x1064] sm:$0xff]
    %v7934 = vld [vmem:[#allocation6 + $0x106c] sm:$0xff]
    %v7935 = vld [vmem:[#allocation6 + $0x1074] sm:$0xff]
    %v7936 = vld [vmem:[#allocation6 + $0x107c] sm:$0xf]
    %v7937 = vld [vmem:[#allocation6 + $0x1080] sm:$0xff]
    %v7938 = vld [vmem:[#allocation6 + $0x1088] sm:$0xff]
    %v7939 = vld [vmem:[#allocation6 + $0x1090] sm:$0xff]
    %v7940 = vld [vmem:[#allocation6 + $0x1098] sm:$0xff]
    %v7941 = vld [vmem:[#allocation6 + $0x10a0] sm:$0xff]
    %v7942 = vld [vmem:[#allocation6 + $0x10a8] sm:$0xf]
    %v7943 = vld [vmem:[#allocation6 + $0x10ac] sm:$0xff]
    %v7944 = vld [vmem:[#allocation6 + $0x10b4] sm:$0xff]
    %v7945 = vld [vmem:[#allocation6 + $0x10bc] sm:$0xff]
    %v7946 = vld [vmem:[#allocation6 + $0x10c4] sm:$0xff]
    %v7947 = vld [vmem:[#allocation6 + $0x10cc] sm:$0xff]
    %v7948 = vld [vmem:[#allocation6 + $0x10d4] sm:$0xf]
    %v7949 = vld [vmem:[#allocation6 + $0x10d8] sm:$0xff]
    %v7950 = vld [vmem:[#allocation6 + $0x10e0] sm:$0xff]
    %v7951 = vld [vmem:[#allocation6 + $0x10e8] sm:$0xff]
    %v7952 = vld [vmem:[#allocation6 + $0x10f0] sm:$0xff]
    %v7953 = vld [vmem:[#allocation6 + $0x10f8] sm:$0xff]
    %v7954 = vld [vmem:[#allocation6 + $0x1100] sm:$0xf]
    %v7955 = vld [vmem:[#allocation6 + $0x1104] sm:$0xff]
    %v7956 = vld [vmem:[#allocation6 + $0x110c] sm:$0xff]
    %v7957 = vld [vmem:[#allocation6 + $0x1114] sm:$0xff]
    %v7958 = vld [vmem:[#allocation6 + $0x111c] sm:$0xff]
    %v7959 = vld [vmem:[#allocation6 + $0x1124] sm:$0xff]
    %v7960 = vld [vmem:[#allocation6 + $0x112c] sm:$0xf]
    %v7961 = vld [vmem:[#allocation6 + $0x1130] sm:$0xff]
    %v7962 = vld [vmem:[#allocation6 + $0x1138] sm:$0xff]
    %v7963 = vld [vmem:[#allocation6 + $0x1140] sm:$0xff]
    %v7964 = vld [vmem:[#allocation6 + $0x1148] sm:$0xff]
    %v7965 = vld [vmem:[#allocation6 + $0x1150] sm:$0xff]
    %v7966 = vld [vmem:[#allocation6 + $0x1158] sm:$0xf]
    %v7967 = vld [vmem:[#allocation6 + $0x115c] sm:$0xff]
    %v7968 = vld [vmem:[#allocation6 + $0x1164] sm:$0xff]
    %v7969 = vld [vmem:[#allocation6 + $0x116c] sm:$0xff]
    %v7970 = vld [vmem:[#allocation6 + $0x1174] sm:$0xff]
    %v7971 = vld [vmem:[#allocation6 + $0x117c] sm:$0xff]
    %v7972 = vld [vmem:[#allocation6 + $0x1184] sm:$0xf]
    %v7973 = vld [vmem:[#allocation6 + $0x1188] sm:$0xff]
    %v7974 = vld [vmem:[#allocation6 + $0x1190] sm:$0xff]
    %v7975 = vld [vmem:[#allocation6 + $0x1198] sm:$0xff]
    %v7976 = vld [vmem:[#allocation6 + $0x11a0] sm:$0xff]
    %v7977 = vld [vmem:[#allocation6 + $0x11a8] sm:$0xff]
    %v7978 = vld [vmem:[#allocation6 + $0x11b0] sm:$0xf]
    %v7979 = vld [vmem:[#allocation6 + $0x11b4] sm:$0xff]
    %v7980 = vld [vmem:[#allocation6 + $0x11bc] sm:$0xff]
    %v7981 = vld [vmem:[#allocation6 + $0x11c4] sm:$0xff]
    %v7982 = vld [vmem:[#allocation6 + $0x11cc] sm:$0xff]
    %v7983 = vld [vmem:[#allocation6 + $0x11d4] sm:$0xff]
    %v7984 = vld [vmem:[#allocation6 + $0x11dc] sm:$0xf]
    %v7985 = vld [vmem:[#allocation6 + $0x11e0] sm:$0xff]
    %v7986 = vld [vmem:[#allocation6 + $0x11e8] sm:$0xff]
    %v7987 = vld [vmem:[#allocation6 + $0x11f0] sm:$0xff]
    %v7988 = vld [vmem:[#allocation6 + $0x11f8] sm:$0xff]
    %v7989 = vld [vmem:[#allocation6 + $0x1200] sm:$0xff]
    %v7990 = vld [vmem:[#allocation6 + $0x1208] sm:$0xf]
    %v7991 = vld [vmem:[#allocation6 + $0x120c] sm:$0xff]
    %v7992 = vld [vmem:[#allocation6 + $0x1214] sm:$0xff]
    %v7993 = vld [vmem:[#allocation6 + $0x121c] sm:$0xff]
    %v7994 = vld [vmem:[#allocation6 + $0x1224] sm:$0xff]
    %v7995 = vld [vmem:[#allocation6 + $0x122c] sm:$0xff]
    %v7996 = vld [vmem:[#allocation6 + $0x1234] sm:$0xf]
    %v7997 = vld [vmem:[#allocation6 + $0x1238] sm:$0xff]
    %v7998 = vld [vmem:[#allocation6 + $0x1240] sm:$0xff]
    %v7999 = vld [vmem:[#allocation6 + $0x1248] sm:$0xff]
    %v8000 = vld [vmem:[#allocation6 + $0x1250] sm:$0xff]
    %v8001 = vld [vmem:[#allocation6 + $0x1258] sm:$0xff]
    %v8002 = vld [vmem:[#allocation6 + $0x1260] sm:$0xf]
    %v8003 = vld [vmem:[#allocation6 + $0x1264] sm:$0xff]
    %v8004 = vld [vmem:[#allocation6 + $0x126c] sm:$0xff]
    %v8005 = vld [vmem:[#allocation6 + $0x1274] sm:$0xff]
    %v8006 = vld [vmem:[#allocation6 + $0x127c] sm:$0xff]
    %v8007 = vld [vmem:[#allocation6 + $0x1284] sm:$0xff]
    %v8008 = vld [vmem:[#allocation6 + $0x128c] sm:$0xf]
    %v8009 = vld [vmem:[#allocation6 + $0x1290] sm:$0xff]
    %v8010 = vld [vmem:[#allocation6 + $0x1298] sm:$0xff]
    %v8011 = vld [vmem:[#allocation6 + $0x12a0] sm:$0xff]
    %v8012 = vld [vmem:[#allocation6 + $0x12a8] sm:$0xff]
    %v8013 = vld [vmem:[#allocation6 + $0x12b0] sm:$0xff]
    %v8014 = vld [vmem:[#allocation6 + $0x12b8] sm:$0xf]
    %v8015 = vld [vmem:[#allocation6 + $0x12bc] sm:$0xff]
    %v8016 = vld [vmem:[#allocation6 + $0x12c4] sm:$0xff]
    %v8017 = vld [vmem:[#allocation6 + $0x12cc] sm:$0xff]
    %v8018 = vld [vmem:[#allocation6 + $0x12d4] sm:$0xff]
    %v8019 = vld [vmem:[#allocation6 + $0x12dc] sm:$0xff]
    %v8020 = vld [vmem:[#allocation6 + $0x12e4] sm:$0xf]
    %v8021 = vld [vmem:[#allocation6 + $0x12e8] sm:$0xff]
    %v8022 = vld [vmem:[#allocation6 + $0x12f0] sm:$0xff]
    %v8023 = vld [vmem:[#allocation6 + $0x12f8] sm:$0xff]
    %v8024 = vld [vmem:[#allocation6 + $0x1300] sm:$0xff]
    %v8025 = vld [vmem:[#allocation6 + $0x1308] sm:$0xff]
    %v8026 = vld [vmem:[#allocation6 + $0x1310] sm:$0xf]
    %v8027 = vld [vmem:[#allocation6 + $0x1314] sm:$0xff]
    %v8028 = vld [vmem:[#allocation6 + $0x131c] sm:$0xff]
    %v8029 = vld [vmem:[#allocation6 + $0x1324] sm:$0xff]
    %v8030 = vld [vmem:[#allocation6 + $0x132c] sm:$0xff]
    %v8031 = vld [vmem:[#allocation6 + $0x1334] sm:$0xff]
    %v8032 = vld [vmem:[#allocation6 + $0x133c] sm:$0xf]
    %v8033 = vld [vmem:[#allocation6 + $0x1340] sm:$0xff]
    %v8034 = vld [vmem:[#allocation6 + $0x1348] sm:$0xff]
    %v8035 = vld [vmem:[#allocation6 + $0x1350] sm:$0xff]
    %v8036 = vld [vmem:[#allocation6 + $0x1358] sm:$0xff]
    %v8037 = vld [vmem:[#allocation6 + $0x1360] sm:$0xff]
    %v8038 = vld [vmem:[#allocation6 + $0x1368] sm:$0xf]
    %v8039 = vld [vmem:[#allocation6 + $0x136c] sm:$0xff]
    %v8040 = vld [vmem:[#allocation6 + $0x1374] sm:$0xff]
    %v8041 = vld [vmem:[#allocation6 + $0x137c] sm:$0xff]
    %v8042 = vld [vmem:[#allocation6 + $0x1384] sm:$0xff]
    %v8043 = vld [vmem:[#allocation6 + $0x138c] sm:$0xff]
    %v8044 = vld [vmem:[#allocation6 + $0x1394] sm:$0xf]
    %v8045 = vld [vmem:[#allocation6 + $0x1398] sm:$0xff]
    %v8046 = vld [vmem:[#allocation6 + $0x13a0] sm:$0xff]
    %v8047 = vld [vmem:[#allocation6 + $0x13a8] sm:$0xff]
    %v8048 = vld [vmem:[#allocation6 + $0x13b0] sm:$0xff]
    %v8049 = vld [vmem:[#allocation6 + $0x13b8] sm:$0xff]
    %v8050 = vld [vmem:[#allocation6 + $0x13c0] sm:$0xf]
    %v8051 = vld [vmem:[#allocation6 + $0x13c4] sm:$0xff]
    %v8052 = vld [vmem:[#allocation6 + $0x13cc] sm:$0xff]
    %v8053 = vld [vmem:[#allocation6 + $0x13d4] sm:$0xff]
    %v8054 = vld [vmem:[#allocation6 + $0x13dc] sm:$0xff]
    %v8055 = vld [vmem:[#allocation6 + $0x13e4] sm:$0xff]
    %v8056 = vld [vmem:[#allocation6 + $0x13ec] sm:$0xf]
    %v8057 = vld [vmem:[#allocation6 + $0x13f0] sm:$0xff]
    %v8058 = vld [vmem:[#allocation6 + $0x13f8] sm:$0xff]
    %v8059 = vld [vmem:[#allocation6 + $0x1400] sm:$0xff]
    %v8060 = vld [vmem:[#allocation6 + $0x1408] sm:$0xff]
    %v8061 = vld [vmem:[#allocation6 + $0x1410] sm:$0xff]
    %v8062 = vld [vmem:[#allocation6 + $0x1418] sm:$0xf]
    %v8063 = vld [vmem:[#allocation6 + $0x141c] sm:$0xff]
    %v8064 = vld [vmem:[#allocation6 + $0x1424] sm:$0xff]
    %v8065 = vld [vmem:[#allocation6 + $0x142c] sm:$0xff]
    %v8066 = vld [vmem:[#allocation6 + $0x1434] sm:$0xff]
    %v8067 = vld [vmem:[#allocation6 + $0x143c] sm:$0xff]
    %v8068 = vld [vmem:[#allocation6 + $0x1444] sm:$0xf]
    %v8069 = vld [vmem:[#allocation6 + $0x1448] sm:$0xff]
    %v8070 = vld [vmem:[#allocation6 + $0x1450] sm:$0xff]
    %v8071 = vld [vmem:[#allocation6 + $0x1458] sm:$0xff]
    %v8072 = vld [vmem:[#allocation6 + $0x1460] sm:$0xff]
    %v8073 = vld [vmem:[#allocation6 + $0x1468] sm:$0xff]
    %v8074 = vld [vmem:[#allocation6 + $0x1470] sm:$0xf]
    %v8075 = vld [vmem:[#allocation6 + $0x1474] sm:$0xff]
    %v8076 = vld [vmem:[#allocation6 + $0x147c] sm:$0xff]
    %v8077 = vld [vmem:[#allocation6 + $0x1484] sm:$0xff]
    %v8078 = vld [vmem:[#allocation6 + $0x148c] sm:$0xff]
    %v8079 = vld [vmem:[#allocation6 + $0x1494] sm:$0xff]
    %v8080 = vld [vmem:[#allocation6 + $0x149c] sm:$0xf]
    %v8081 = vld [vmem:[#allocation6 + $0x14a0] sm:$0xff]
    %v8082 = vld [vmem:[#allocation6 + $0x14a8] sm:$0xff]
    %v8083 = vld [vmem:[#allocation6 + $0x14b0] sm:$0xff]
    %v8084 = vld [vmem:[#allocation6 + $0x14b8] sm:$0xff]
    %v8085 = vld [vmem:[#allocation6 + $0x14c0] sm:$0xff]
    %v8086 = vld [vmem:[#allocation6 + $0x14c8] sm:$0xf]
    %v8087 = vld [vmem:[#allocation6 + $0x14cc] sm:$0xff]
    %v8088 = vld [vmem:[#allocation6 + $0x14d4] sm:$0xff]
    %v8089 = vld [vmem:[#allocation6 + $0x14dc] sm:$0xff]
    %v8090 = vld [vmem:[#allocation6 + $0x14e4] sm:$0xff]
    %v8091 = vld [vmem:[#allocation6 + $0x14ec] sm:$0xff]
    %v8092 = vld [vmem:[#allocation6 + $0x14f4] sm:$0xf]
    %v8093 = vld [vmem:[#allocation6 + $0x14f8] sm:$0xff]
    %v8094 = vld [vmem:[#allocation6 + $0x1500] sm:$0xff]
    %v8095 = vld [vmem:[#allocation6 + $0x1508] sm:$0xff]
    %v8096 = vld [vmem:[#allocation6 + $0x1510] sm:$0xff]
    %v8097 = vld [vmem:[#allocation6 + $0x1518] sm:$0xff]
    %v8098 = vld [vmem:[#allocation6 + $0x1520] sm:$0xf]
    %v8099 = vld [vmem:[#allocation6 + $0x1524] sm:$0xff]
    %v8100 = vld [vmem:[#allocation6 + $0x152c] sm:$0xff]
    %v8101 = vld [vmem:[#allocation6 + $0x1534] sm:$0xff]
    %v8102 = vld [vmem:[#allocation6 + $0x153c] sm:$0xff]
    %v8103 = vld [vmem:[#allocation6 + $0x1544] sm:$0xff]
    %v8104 = vld [vmem:[#allocation6 + $0x154c] sm:$0xf]
    %v8105 = vld [vmem:[#allocation6 + $0x1550] sm:$0xff]
    %v8106 = vld [vmem:[#allocation6 + $0x1558] sm:$0xff]
    %v8107 = vld [vmem:[#allocation6 + $0x1560] sm:$0xff]
    %v8108 = vld [vmem:[#allocation6 + $0x1568] sm:$0xff]
    %v8109 = vld [vmem:[#allocation6 + $0x1570] sm:$0xff]
    %v8110 = vld [vmem:[#allocation6 + $0x1578] sm:$0xf]
    %v8111 = vld [vmem:[#allocation6 + $0x157c] sm:$0xff]
    %v8112 = vld [vmem:[#allocation6 + $0x1584] sm:$0xff]
    %v8113 = vld [vmem:[#allocation6 + $0x158c] sm:$0xff]
    %v8114 = vld [vmem:[#allocation6 + $0x1594] sm:$0xff]
    %v8115 = vld [vmem:[#allocation6 + $0x159c] sm:$0xff]
    %v8116 = vld [vmem:[#allocation6 + $0x15a4] sm:$0xf]
    %v8117 = vld [vmem:[#allocation6 + $0x15a8] sm:$0xff]
    %v8118 = vld [vmem:[#allocation6 + $0x15b0] sm:$0xff]
    %v8119 = vld [vmem:[#allocation6 + $0x15b8] sm:$0xff]
    %v8120 = vld [vmem:[#allocation6 + $0x15c0] sm:$0xff]
    %v8121 = vld [vmem:[#allocation6 + $0x15c8] sm:$0xff]
    %v8122 = vld [vmem:[#allocation6 + $0x15d0] sm:$0xf]
    %v8123 = vld [vmem:[#allocation6 + $0x15d4] sm:$0xff]
    %v8124 = vld [vmem:[#allocation6 + $0x15dc] sm:$0xff]
    %v8125 = vld [vmem:[#allocation6 + $0x15e4] sm:$0xff]
    %v8126 = vld [vmem:[#allocation6 + $0x15ec] sm:$0xff]
    %v8127 = vld [vmem:[#allocation6 + $0x15f4] sm:$0xff]
    %v8128 = vld [vmem:[#allocation6 + $0x15fc] sm:$0xf]
    %v8129 = vld [vmem:[#allocation6 + $0x1600] sm:$0xff]
    %v8130 = vld [vmem:[#allocation6 + $0x1608] sm:$0xff]
    %v8131 = vld [vmem:[#allocation6 + $0x1610] sm:$0xff]
    %v8132 = vld [vmem:[#allocation6 + $0x1618] sm:$0xff]
    %v8133 = vld [vmem:[#allocation6 + $0x1620] sm:$0xff]
    %v8134 = vld [vmem:[#allocation6 + $0x1628] sm:$0xf]
    %v8135 = vld [vmem:[#allocation6 + $0x162c] sm:$0xff]
    %v8136 = vld [vmem:[#allocation6 + $0x1634] sm:$0xff]
    %v8137 = vld [vmem:[#allocation6 + $0x163c] sm:$0xff]
    %v8138 = vld [vmem:[#allocation6 + $0x1644] sm:$0xff]
    %v8139 = vld [vmem:[#allocation6 + $0x164c] sm:$0xff]
    %v8140 = vld [vmem:[#allocation6 + $0x1654] sm:$0xf]
    %v8141 = vld [vmem:[#allocation6 + $0x1658] sm:$0xff]
    %v8142 = vld [vmem:[#allocation6 + $0x1660] sm:$0xff]
    %v8143 = vld [vmem:[#allocation6 + $0x1668] sm:$0xff]
    %v8144 = vld [vmem:[#allocation6 + $0x1670] sm:$0xff]
    %v8145 = vld [vmem:[#allocation6 + $0x1678] sm:$0xff]
    %v8146 = vld [vmem:[#allocation6 + $0x1680] sm:$0xf]
    %v8147 = vld [vmem:[#allocation6 + $0x1684] sm:$0xff]
    %v8148 = vld [vmem:[#allocation6 + $0x168c] sm:$0xff]
    %v8149 = vld [vmem:[#allocation6 + $0x1694] sm:$0xff]
    %v8150 = vld [vmem:[#allocation6 + $0x169c] sm:$0xff]
    %v8151 = vld [vmem:[#allocation6 + $0x16a4] sm:$0xff]
    %v8152 = vld [vmem:[#allocation6 + $0x16ac] sm:$0xf]
    %v8153 = vld [vmem:[#allocation6 + $0x16b0] sm:$0xff]
    %v8154 = vld [vmem:[#allocation6 + $0x16b8] sm:$0xff]
    %v8155 = vld [vmem:[#allocation6 + $0x16c0] sm:$0xff]
    %v8156 = vld [vmem:[#allocation6 + $0x16c8] sm:$0xff]
    %v8157 = vld [vmem:[#allocation6 + $0x16d0] sm:$0xff]
    %v8158 = vld [vmem:[#allocation6 + $0x16d8] sm:$0xf]
    %v8159 = vld [vmem:[#allocation6 + $0x16dc] sm:$0xff]
    %v8160 = vld [vmem:[#allocation6 + $0x16e4] sm:$0xff]
    %v8161 = vld [vmem:[#allocation6 + $0x16ec] sm:$0xff]
    %v8162 = vld [vmem:[#allocation6 + $0x16f4] sm:$0xff]
    %v8163 = vld [vmem:[#allocation6 + $0x16fc] sm:$0xff]
    %v8164 = vld [vmem:[#allocation6 + $0x1704] sm:$0xf]
    %v8165 = vld [vmem:[#allocation6 + $0x1708] sm:$0xff]
    %v8166 = vld [vmem:[#allocation6 + $0x1710] sm:$0xff]
    %v8167 = vld [vmem:[#allocation6 + $0x1718] sm:$0xff]
    %v8168 = vld [vmem:[#allocation6 + $0x1720] sm:$0xff]
    %v8169 = vld [vmem:[#allocation6 + $0x1728] sm:$0xff]
    %v8170 = vld [vmem:[#allocation6 + $0x1730] sm:$0xf]
    %v8171 = vld [vmem:[#allocation6 + $0x1734] sm:$0xff]
    %v8172 = vld [vmem:[#allocation6 + $0x173c] sm:$0xff]
    %v8173 = vld [vmem:[#allocation6 + $0x1744] sm:$0xff]
    %v8174 = vld [vmem:[#allocation6 + $0x174c] sm:$0xff]
    %v8175 = vld [vmem:[#allocation6 + $0x1754] sm:$0xff]
    %v8176 = vld [vmem:[#allocation6 + $0x175c] sm:$0xf]
    %v8177 = vld [vmem:[#allocation6 + $0x1760] sm:$0xff]
    %v8178 = vld [vmem:[#allocation6 + $0x1768] sm:$0xff]
    %v8179 = vld [vmem:[#allocation6 + $0x1770] sm:$0xff]
    %v8180 = vld [vmem:[#allocation6 + $0x1778] sm:$0xff]
    %v8181 = vld [vmem:[#allocation6 + $0x1780] sm:$0xff]
    %v8182 = vld [vmem:[#allocation6 + $0x1788] sm:$0xf]
    %v8183 = vld [vmem:[#allocation6 + $0x178c] sm:$0xff]
    %v8184 = vld [vmem:[#allocation6 + $0x1794] sm:$0xff]
    %v8185 = vld [vmem:[#allocation6 + $0x179c] sm:$0xff]
    %v8186 = vld [vmem:[#allocation6 + $0x17a4] sm:$0xff]
    %v8187 = vld [vmem:[#allocation6 + $0x17ac] sm:$0xff]
    %v8188 = vld [vmem:[#allocation6 + $0x17b4] sm:$0xf]
    %v8189 = vld [vmem:[#allocation6 + $0x17b8] sm:$0xff]
    %v8190 = vld [vmem:[#allocation6 + $0x17c0] sm:$0xff]
    %v8191 = vld [vmem:[#allocation6 + $0x17c8] sm:$0xff]
    %v8192 = vld [vmem:[#allocation6 + $0x17d0] sm:$0xff]
    %v8193 = vld [vmem:[#allocation6 + $0x17d8] sm:$0xff]
    %v8194 = vld [vmem:[#allocation6 + $0x17e0] sm:$0xf]
    %v8195 = vld [vmem:[#allocation6 + $0x17e4] sm:$0xff]
    %v8196 = vld [vmem:[#allocation6 + $0x17ec] sm:$0xff]
    %v8197 = vld [vmem:[#allocation6 + $0x17f4] sm:$0xff]
    %v8198 = vld [vmem:[#allocation6 + $0x17fc] sm:$0xff]
    %v8199 = vld [vmem:[#allocation6 + $0x1804] sm:$0xff]
    %v8200 = vld [vmem:[#allocation6 + $0x180c] sm:$0xf]
    %v8201 = vld [vmem:[#allocation6 + $0x1810] sm:$0xff]
    %v8202 = vld [vmem:[#allocation6 + $0x1818] sm:$0xff]
    %v8203 = vld [vmem:[#allocation6 + $0x1820] sm:$0xff]
    %v8204 = vld [vmem:[#allocation6 + $0x1828] sm:$0xff]
    %v8205 = vld [vmem:[#allocation6 + $0x1830] sm:$0xff]
    %v8206 = vld [vmem:[#allocation6 + $0x1838] sm:$0xf]
    %v8207 = vld [vmem:[#allocation6 + $0x183c] sm:$0xff]
    %v8208 = vld [vmem:[#allocation6 + $0x1844] sm:$0xff]
    %v8209 = vld [vmem:[#allocation6 + $0x184c] sm:$0xff]
    %v8210 = vld [vmem:[#allocation6 + $0x1854] sm:$0xff]
    %v8211 = vld [vmem:[#allocation6 + $0x185c] sm:$0xff]
    %v8212 = vld [vmem:[#allocation6 + $0x1864] sm:$0xf]
    %v8213 = vld [vmem:[#allocation6 + $0x1868] sm:$0xff]
    %v8214 = vld [vmem:[#allocation6 + $0x1870] sm:$0xff]
    %v8215 = vld [vmem:[#allocation6 + $0x1878] sm:$0xff]
    %v8216 = vld [vmem:[#allocation6 + $0x1880] sm:$0xff]
    %v8217 = vld [vmem:[#allocation6 + $0x1888] sm:$0xff]
    %v8218 = vld [vmem:[#allocation6 + $0x1890] sm:$0xf]
    %v8219 = vld [vmem:[#allocation6 + $0x1894] sm:$0xff]
    %v8220 = vld [vmem:[#allocation6 + $0x189c] sm:$0xff]
    %v8221 = vld [vmem:[#allocation6 + $0x18a4] sm:$0xff]
    %v8222 = vld [vmem:[#allocation6 + $0x18ac] sm:$0xff]
    %v8223 = vld [vmem:[#allocation6 + $0x18b4] sm:$0xff]
    %v8224 = vld [vmem:[#allocation6 + $0x18bc] sm:$0xf]
    %v8225 = vld [vmem:[#allocation6 + $0x18c0] sm:$0xff]
    %v8226 = vld [vmem:[#allocation6 + $0x18c8] sm:$0xff]
    %v8227 = vld [vmem:[#allocation6 + $0x18d0] sm:$0xff]
    %v8228 = vld [vmem:[#allocation6 + $0x18d8] sm:$0xff]
    %v8229 = vld [vmem:[#allocation6 + $0x18e0] sm:$0xff]
    %v8230 = vld [vmem:[#allocation6 + $0x18e8] sm:$0xf]
    %v8231 = vld [vmem:[#allocation6 + $0x18ec] sm:$0xff]
    %v8232 = vld [vmem:[#allocation6 + $0x18f4] sm:$0xff]
    %v8233 = vld [vmem:[#allocation6 + $0x18fc] sm:$0xff]
    %v8234 = vld [vmem:[#allocation6 + $0x1904] sm:$0xff]
    %v8235 = vld [vmem:[#allocation6 + $0x190c] sm:$0xff]
    %v8236 = vld [vmem:[#allocation6 + $0x1914] sm:$0xf]
    %v8237 = vld [vmem:[#allocation6 + $0x1918] sm:$0xff]
    %v8238 = vld [vmem:[#allocation6 + $0x1920] sm:$0xff]
    %v8239 = vld [vmem:[#allocation6 + $0x1928] sm:$0xff]
    %v8240 = vld [vmem:[#allocation6 + $0x1930] sm:$0xff]
    %v8241 = vld [vmem:[#allocation6 + $0x1938] sm:$0xff]
    %v8242 = vld [vmem:[#allocation6 + $0x1940] sm:$0xf]
    %v8243 = vld [vmem:[#allocation6 + $0x1944] sm:$0xff]
    %v8244 = vld [vmem:[#allocation6 + $0x194c] sm:$0xff]
    %v8245 = vld [vmem:[#allocation6 + $0x1954] sm:$0xff]
    %v8246 = vld [vmem:[#allocation6 + $0x195c] sm:$0xff]
    %v8247 = vld [vmem:[#allocation6 + $0x1964] sm:$0xff]
    %v8248 = vld [vmem:[#allocation6 + $0x196c] sm:$0xf]
    %v8249 = vld [vmem:[#allocation6 + $0x1970] sm:$0xff]
    %v8250 = vld [vmem:[#allocation6 + $0x1978] sm:$0xff]
    %v8251 = vld [vmem:[#allocation6 + $0x1980] sm:$0xff]
    %v8252 = vld [vmem:[#allocation6 + $0x1988] sm:$0xff]
    %v8253 = vld [vmem:[#allocation6 + $0x1990] sm:$0xff]
    %v8254 = vld [vmem:[#allocation6 + $0x1998] sm:$0xf]
    %v8255 = vld [vmem:[#allocation6 + $0x199c] sm:$0xff]
    %v8256 = vld [vmem:[#allocation6 + $0x19a4] sm:$0xff]
    %v8257 = vld [vmem:[#allocation6 + $0x19ac] sm:$0xff]
    %v8258 = vld [vmem:[#allocation6 + $0x19b4] sm:$0xff]
    %v8259 = vld [vmem:[#allocation6 + $0x19bc] sm:$0xff]
    %v8260 = vld [vmem:[#allocation6 + $0x19c4] sm:$0xf]
    %v8261 = vld [vmem:[#allocation6 + $0x19c8] sm:$0xff]
    %v8262 = vld [vmem:[#allocation6 + $0x19d0] sm:$0xff]
    %v8263 = vld [vmem:[#allocation6 + $0x19d8] sm:$0xff]
    %v8264 = vld [vmem:[#allocation6 + $0x19e0] sm:$0xff]
    %v8265 = vld [vmem:[#allocation6 + $0x19e8] sm:$0xff]
    %v8266 = vld [vmem:[#allocation6 + $0x19f0] sm:$0xf]
    %v8267 = vld [vmem:[#allocation6 + $0x19f4] sm:$0xff]
    %v8268 = vld [vmem:[#allocation6 + $0x19fc] sm:$0xff]
    %v8269 = vld [vmem:[#allocation6 + $0x1a04] sm:$0xff]
    %v8270 = vld [vmem:[#allocation6 + $0x1a0c] sm:$0xff]
    %v8271 = vld [vmem:[#allocation6 + $0x1a14] sm:$0xff]
    %v8272 = vld [vmem:[#allocation6 + $0x1a1c] sm:$0xf]
    %v8273 = vld [vmem:[#allocation6 + $0x1a20] sm:$0xff]
    %v8274 = vld [vmem:[#allocation6 + $0x1a28] sm:$0xff]
    %v8275 = vld [vmem:[#allocation6 + $0x1a30] sm:$0xff]
    %v8276 = vld [vmem:[#allocation6 + $0x1a38] sm:$0xff]
    %v8277 = vld [vmem:[#allocation6 + $0x1a40] sm:$0xff]
    %v8278 = vld [vmem:[#allocation6 + $0x1a48] sm:$0xf]
    %v8279 = vld [vmem:[#allocation6 + $0x1a4c] sm:$0xff]
    %v8280 = vld [vmem:[#allocation6 + $0x1a54] sm:$0xff]
    %v8281 = vld [vmem:[#allocation6 + $0x1a5c] sm:$0xff]
    %v8282 = vld [vmem:[#allocation6 + $0x1a64] sm:$0xff]
    %v8283 = vld [vmem:[#allocation6 + $0x1a6c] sm:$0xff]
    %v8284 = vld [vmem:[#allocation6 + $0x1a74] sm:$0xf]
    %v8285 = vld [vmem:[#allocation6 + $0x1a78] sm:$0xff]
    %v8286 = vld [vmem:[#allocation6 + $0x1a80] sm:$0xff]
    %v8287 = vld [vmem:[#allocation6 + $0x1a88] sm:$0xff]
    %v8288 = vld [vmem:[#allocation6 + $0x1a90] sm:$0xff]
    %v8289 = vld [vmem:[#allocation6 + $0x1a98] sm:$0xff]
    %v8290 = vld [vmem:[#allocation6 + $0x1aa0] sm:$0xf]
    %v8291 = vld [vmem:[#allocation6 + $0x1aa4] sm:$0xff]
    %v8292 = vld [vmem:[#allocation6 + $0x1aac] sm:$0xff]
    %v8293 = vld [vmem:[#allocation6 + $0x1ab4] sm:$0xff]
    %v8294 = vld [vmem:[#allocation6 + $0x1abc] sm:$0xff]
    %v8295 = vld [vmem:[#allocation6 + $0x1ac4] sm:$0xff]
    %v8296 = vld [vmem:[#allocation6 + $0x1acc] sm:$0xf]
    %v8297 = vld [vmem:[#allocation6 + $0x1ad0] sm:$0xff]
    %v8298 = vld [vmem:[#allocation6 + $0x1ad8] sm:$0xff]
    %v8299 = vld [vmem:[#allocation6 + $0x1ae0] sm:$0xff]
    %v8300 = vld [vmem:[#allocation6 + $0x1ae8] sm:$0xff]
    %v8301 = vld [vmem:[#allocation6 + $0x1af0] sm:$0xff]
    %v8302 = vld [vmem:[#allocation6 + $0x1af8] sm:$0xf]
    %v8303 = vld [vmem:[#allocation6 + $0x1afc] sm:$0xff]
    %v8304 = vld [vmem:[#allocation6 + $0x1b04] sm:$0xff]
    %v8305 = vld [vmem:[#allocation6 + $0x1b0c] sm:$0xff]
    %v8306 = vld [vmem:[#allocation6 + $0x1b14] sm:$0xff]
    %v8307 = vld [vmem:[#allocation6 + $0x1b1c] sm:$0xff]
    %v8308 = vld [vmem:[#allocation6 + $0x1b24] sm:$0xf]
    %v8309 = vld [vmem:[#allocation6 + $0x1b28] sm:$0xff]
    %v8310 = vld [vmem:[#allocation6 + $0x1b30] sm:$0xff]
    %v8311 = vld [vmem:[#allocation6 + $0x1b38] sm:$0xff]
    %v8312 = vld [vmem:[#allocation6 + $0x1b40] sm:$0xff]
    %v8313 = vld [vmem:[#allocation6 + $0x1b48] sm:$0xff]
    %v8314 = vld [vmem:[#allocation6 + $0x1b50] sm:$0xf]
    %v8315 = vld [vmem:[#allocation6 + $0x1b54] sm:$0xff]
    %v8316 = vld [vmem:[#allocation6 + $0x1b5c] sm:$0xff]
    %v8317 = vld [vmem:[#allocation6 + $0x1b64] sm:$0xff]
    %v8318 = vld [vmem:[#allocation6 + $0x1b6c] sm:$0xff]
    %v8319 = vld [vmem:[#allocation6 + $0x1b74] sm:$0xff]
    %v8320 = vld [vmem:[#allocation6 + $0x1b7c] sm:$0xf]
    %v8321 = vld [vmem:[#allocation6 + $0x1b80] sm:$0xff]
    %v8322 = vld [vmem:[#allocation6 + $0x1b88] sm:$0xff]
    %v8323 = vld [vmem:[#allocation6 + $0x1b90] sm:$0xff]
    %v8324 = vld [vmem:[#allocation6 + $0x1b98] sm:$0xff]
    %v8325 = vld [vmem:[#allocation6 + $0x1ba0] sm:$0xff]
    %v8326 = vld [vmem:[#allocation6 + $0x1ba8] sm:$0xf]
    %v8327 = vld [vmem:[#allocation6 + $0x1bac] sm:$0xff]
    %v8328 = vld [vmem:[#allocation6 + $0x1bb4] sm:$0xff]
    %v8329 = vld [vmem:[#allocation6 + $0x1bbc] sm:$0xff]
    %v8330 = vld [vmem:[#allocation6 + $0x1bc4] sm:$0xff]
    %v8331 = vld [vmem:[#allocation6 + $0x1bcc] sm:$0xff]
    %v8332 = vld [vmem:[#allocation6 + $0x1bd4] sm:$0xf]
    %v8333 = vld [vmem:[#allocation6 + $0x1bd8] sm:$0xff]
    %v8334 = vld [vmem:[#allocation6 + $0x1be0] sm:$0xff]
    %v8335 = vld [vmem:[#allocation6 + $0x1be8] sm:$0xff]
    %v8336 = vld [vmem:[#allocation6 + $0x1bf0] sm:$0xff]
    %v8337 = vld [vmem:[#allocation6 + $0x1bf8] sm:$0xff]
    %v8338 = vld [vmem:[#allocation6 + $0x1c00] sm:$0xf]
    %v8339 = vld [vmem:[#allocation6 + $0x1c04] sm:$0xff]
    %v8340 = vld [vmem:[#allocation6 + $0x1c0c] sm:$0xff]
    %v8341 = vld [vmem:[#allocation6 + $0x1c14] sm:$0xff]
    %v8342 = vld [vmem:[#allocation6 + $0x1c1c] sm:$0xff]
    %v8343 = vld [vmem:[#allocation6 + $0x1c24] sm:$0xff]
    %v8344 = vld [vmem:[#allocation6 + $0x1c2c] sm:$0xf]
    %v8345 = vld [vmem:[#allocation6 + $0x1c30] sm:$0xff]
    %v8346 = vld [vmem:[#allocation6 + $0x1c38] sm:$0xff]
    %v8347 = vld [vmem:[#allocation6 + $0x1c40] sm:$0xff]
    %v8348 = vld [vmem:[#allocation6 + $0x1c48] sm:$0xff]
    %v8349 = vld [vmem:[#allocation6 + $0x1c50] sm:$0xff]
    %v8350 = vld [vmem:[#allocation6 + $0x1c58] sm:$0xf]
    %v8351 = vld [vmem:[#allocation6 + $0x1c5c] sm:$0xff]
    %v8352 = vld [vmem:[#allocation6 + $0x1c64] sm:$0xff]
    %v8353 = vld [vmem:[#allocation6 + $0x1c6c] sm:$0xff]
    %v8354 = vld [vmem:[#allocation6 + $0x1c74] sm:$0xff]
    %v8355 = vld [vmem:[#allocation6 + $0x1c7c] sm:$0xff]
    %v8356 = vld [vmem:[#allocation6 + $0x1c84] sm:$0xf]
    %v8357 = vld [vmem:[#allocation6 + $0x1c88] sm:$0xff]
    %v8358 = vld [vmem:[#allocation6 + $0x1c90] sm:$0xff]
    %v8359 = vld [vmem:[#allocation6 + $0x1c98] sm:$0xff]
    %v8360 = vld [vmem:[#allocation6 + $0x1ca0] sm:$0xff]
    %v8361 = vld [vmem:[#allocation6 + $0x1ca8] sm:$0xff]
    %v8362 = vld [vmem:[#allocation6 + $0x1cb0] sm:$0xf]
    %v8363 = vld [vmem:[#allocation6 + $0x1cb4] sm:$0xff]
    %v8364 = vld [vmem:[#allocation6 + $0x1cbc] sm:$0xff]
    %v8365 = vld [vmem:[#allocation6 + $0x1cc4] sm:$0xff]
    %v8366 = vld [vmem:[#allocation6 + $0x1ccc] sm:$0xff]
    %v8367 = vld [vmem:[#allocation6 + $0x1cd4] sm:$0xff]
    %v8368 = vld [vmem:[#allocation6 + $0x1cdc] sm:$0xf]
    %v9377 = vunpack.c.l.b16 %v7361
    %v9378 = vunpack.c.h.b16 %v7361
    %v9379 = vunpack.c.l.b16 %v7362
    %v9380 = vunpack.c.h.b16 %v7362
    %v9381 = vunpack.c.l.b16 %v7363
    %v9382 = vunpack.c.h.b16 %v7363
    %v9383 = vunpack.c.l.b16 %v7364
    %v9384 = vunpack.c.h.b16 %v7364
    %v9385 = vunpack.c.l.b16 %v7365
    %v9386 = vunpack.c.h.b16 %v7365
    %v9387 = vunpack.c.l.b16 %v7366
    %v9388 = vunpack.c.l.b16 %v7367
    %v9389 = vunpack.c.h.b16 %v7367
    %v9390 = vunpack.c.l.b16 %v7368
    %v9391 = vunpack.c.h.b16 %v7368
    %v9392 = vunpack.c.l.b16 %v7369
    %v9393 = vunpack.c.h.b16 %v7369
    %v9394 = vunpack.c.l.b16 %v7370
    %v9395 = vunpack.c.h.b16 %v7370
    %v9396 = vunpack.c.l.b16 %v7371
    %v9397 = vunpack.c.h.b16 %v7371
    %v9398 = vunpack.c.l.b16 %v7372
    %v9399 = vunpack.c.l.b16 %v7373
    %v9400 = vunpack.c.h.b16 %v7373
    %v9401 = vunpack.c.l.b16 %v7374
    %v9402 = vunpack.c.h.b16 %v7374
    %v9403 = vunpack.c.l.b16 %v7375
    %v9404 = vunpack.c.h.b16 %v7375
    %v9405 = vunpack.c.l.b16 %v7376
    %v9406 = vunpack.c.h.b16 %v7376
    %v9407 = vunpack.c.l.b16 %v7377
    %v9408 = vunpack.c.h.b16 %v7377
    %v9409 = vunpack.c.l.b16 %v7378
    %v9410 = vunpack.c.l.b16 %v7379
    %v9411 = vunpack.c.h.b16 %v7379
    %v9412 = vunpack.c.l.b16 %v7380
    %v9413 = vunpack.c.h.b16 %v7380
    %v9414 = vunpack.c.l.b16 %v7381
    %v9415 = vunpack.c.h.b16 %v7381
    %v9416 = vunpack.c.l.b16 %v7382
    %v9417 = vunpack.c.h.b16 %v7382
    %v9418 = vunpack.c.l.b16 %v7383
    %v9419 = vunpack.c.h.b16 %v7383
    %v9420 = vunpack.c.l.b16 %v7384
    %v9421 = vunpack.c.l.b16 %v7385
    %v9422 = vunpack.c.h.b16 %v7385
    %v9423 = vunpack.c.l.b16 %v7386
    %v9424 = vunpack.c.h.b16 %v7386
    %v9425 = vunpack.c.l.b16 %v7387
    %v9426 = vunpack.c.h.b16 %v7387
    %v9427 = vunpack.c.l.b16 %v7388
    %v9428 = vunpack.c.h.b16 %v7388
    %v9429 = vunpack.c.l.b16 %v7389
    %v9430 = vunpack.c.h.b16 %v7389
    %v9431 = vunpack.c.l.b16 %v7390
    %v9432 = vunpack.c.l.b16 %v7391
    %v9433 = vunpack.c.h.b16 %v7391
    %v9434 = vunpack.c.l.b16 %v7392
    %v9435 = vunpack.c.h.b16 %v7392
    %v9436 = vunpack.c.l.b16 %v7393
    %v9437 = vunpack.c.h.b16 %v7393
    %v9438 = vunpack.c.l.b16 %v7394
    %v9439 = vunpack.c.h.b16 %v7394
    %v9440 = vunpack.c.l.b16 %v7395
    %v9441 = vunpack.c.h.b16 %v7395
    %v9442 = vunpack.c.l.b16 %v7396
    %v9443 = vunpack.c.l.b16 %v7397
    %v9444 = vunpack.c.h.b16 %v7397
    %v9445 = vunpack.c.l.b16 %v7398
    %v9446 = vunpack.c.h.b16 %v7398
    %v9447 = vunpack.c.l.b16 %v7399
    %v9448 = vunpack.c.h.b16 %v7399
    %v9449 = vunpack.c.l.b16 %v7400
    %v9450 = vunpack.c.h.b16 %v7400
    %v9451 = vunpack.c.l.b16 %v7401
    %v9452 = vunpack.c.h.b16 %v7401
    %v9453 = vunpack.c.l.b16 %v7402
    %v9454 = vunpack.c.l.b16 %v7403
    %v9455 = vunpack.c.h.b16 %v7403
    %v9456 = vunpack.c.l.b16 %v7404
    %v9457 = vunpack.c.h.b16 %v7404
    %v9458 = vunpack.c.l.b16 %v7405
    %v9459 = vunpack.c.h.b16 %v7405
    %v9460 = vunpack.c.l.b16 %v7406
    %v9461 = vunpack.c.h.b16 %v7406
    %v9462 = vunpack.c.l.b16 %v7407
    %v9463 = vunpack.c.h.b16 %v7407
    %v9464 = vunpack.c.l.b16 %v7408
    %v9465 = vunpack.c.l.b16 %v7409
    %v9466 = vunpack.c.h.b16 %v7409
    %v9467 = vunpack.c.l.b16 %v7410
    %v9468 = vunpack.c.h.b16 %v7410
    %v9469 = vunpack.c.l.b16 %v7411
    %v9470 = vunpack.c.h.b16 %v7411
    %v9471 = vunpack.c.l.b16 %v7412
    %v9472 = vunpack.c.h.b16 %v7412
    %v9473 = vunpack.c.l.b16 %v7413
    %v9474 = vunpack.c.h.b16 %v7413
    %v9475 = vunpack.c.l.b16 %v7414
    %v9476 = vunpack.c.l.b16 %v7415
    %v9477 = vunpack.c.h.b16 %v7415
    %v9478 = vunpack.c.l.b16 %v7416
    %v9479 = vunpack.c.h.b16 %v7416
    %v9480 = vunpack.c.l.b16 %v7417
    %v9481 = vunpack.c.h.b16 %v7417
    %v9482 = vunpack.c.l.b16 %v7418
    %v9483 = vunpack.c.h.b16 %v7418
    %v9484 = vunpack.c.l.b16 %v7419
    %v9485 = vunpack.c.h.b16 %v7419
    %v9486 = vunpack.c.l.b16 %v7420
    %v9487 = vunpack.c.l.b16 %v7421
    %v9488 = vunpack.c.h.b16 %v7421
    %v9489 = vunpack.c.l.b16 %v7422
    %v9490 = vunpack.c.h.b16 %v7422
    %v9491 = vunpack.c.l.b16 %v7423
    %v9492 = vunpack.c.h.b16 %v7423
    %v9493 = vunpack.c.l.b16 %v7424
    %v9494 = vunpack.c.h.b16 %v7424
    %v9495 = vunpack.c.l.b16 %v7425
    %v9496 = vunpack.c.h.b16 %v7425
    %v9497 = vunpack.c.l.b16 %v7426
    %v9498 = vunpack.c.l.b16 %v7427
    %v9499 = vunpack.c.h.b16 %v7427
    %v9500 = vunpack.c.l.b16 %v7428
    %v9501 = vunpack.c.h.b16 %v7428
    %v9502 = vunpack.c.l.b16 %v7429
    %v9503 = vunpack.c.h.b16 %v7429
    %v9504 = vunpack.c.l.b16 %v7430
    %v9505 = vunpack.c.h.b16 %v7430
    %v9506 = vunpack.c.l.b16 %v7431
    %v9507 = vunpack.c.h.b16 %v7431
    %v9508 = vunpack.c.l.b16 %v7432
    %v9509 = vunpack.c.l.b16 %v7433
    %v9510 = vunpack.c.h.b16 %v7433
    %v9511 = vunpack.c.l.b16 %v7434
    %v9512 = vunpack.c.h.b16 %v7434
    %v9513 = vunpack.c.l.b16 %v7435
    %v9514 = vunpack.c.h.b16 %v7435
    %v9515 = vunpack.c.l.b16 %v7436
    %v9516 = vunpack.c.h.b16 %v7436
    %v9517 = vunpack.c.l.b16 %v7437
    %v9518 = vunpack.c.h.b16 %v7437
    %v9519 = vunpack.c.l.b16 %v7438
    %v9520 = vunpack.c.l.b16 %v7439
    %v9521 = vunpack.c.h.b16 %v7439
    %v9522 = vunpack.c.l.b16 %v7440
    %v9523 = vunpack.c.h.b16 %v7440
    %v9524 = vunpack.c.l.b16 %v7441
    %v9525 = vunpack.c.h.b16 %v7441
    %v9526 = vunpack.c.l.b16 %v7442
    %v9527 = vunpack.c.h.b16 %v7442
    %v9528 = vunpack.c.l.b16 %v7443
    %v9529 = vunpack.c.h.b16 %v7443
    %v9530 = vunpack.c.l.b16 %v7444
    %v9531 = vunpack.c.l.b16 %v7445
    %v9532 = vunpack.c.h.b16 %v7445
    %v9533 = vunpack.c.l.b16 %v7446
    %v9534 = vunpack.c.h.b16 %v7446
    %v9535 = vunpack.c.l.b16 %v7447
    %v9536 = vunpack.c.h.b16 %v7447
    %v9537 = vunpack.c.l.b16 %v7448
    %v9538 = vunpack.c.h.b16 %v7448
    %v9539 = vunpack.c.l.b16 %v7449
    %v9540 = vunpack.c.h.b16 %v7449
    %v9541 = vunpack.c.l.b16 %v7450
    %v9542 = vunpack.c.l.b16 %v7451
    %v9543 = vunpack.c.h.b16 %v7451
    %v9544 = vunpack.c.l.b16 %v7452
    %v9545 = vunpack.c.h.b16 %v7452
    %v9546 = vunpack.c.l.b16 %v7453
    %v9547 = vunpack.c.h.b16 %v7453
    %v9548 = vunpack.c.l.b16 %v7454
    %v9549 = vunpack.c.h.b16 %v7454
    %v9550 = vunpack.c.l.b16 %v7455
    %v9551 = vunpack.c.h.b16 %v7455
    %v9552 = vunpack.c.l.b16 %v7456
    %v9553 = vunpack.c.l.b16 %v7457
    %v9554 = vunpack.c.h.b16 %v7457
    %v9555 = vunpack.c.l.b16 %v7458
    %v9556 = vunpack.c.h.b16 %v7458
    %v9557 = vunpack.c.l.b16 %v7459
    %v9558 = vunpack.c.h.b16 %v7459
    %v9559 = vunpack.c.l.b16 %v7460
    %v9560 = vunpack.c.h.b16 %v7460
    %v9561 = vunpack.c.l.b16 %v7461
    %v9562 = vunpack.c.h.b16 %v7461
    %v9563 = vunpack.c.l.b16 %v7462
    %v9564 = vunpack.c.l.b16 %v7463
    %v9565 = vunpack.c.h.b16 %v7463
    %v9566 = vunpack.c.l.b16 %v7464
    %v9567 = vunpack.c.h.b16 %v7464
    %v9568 = vunpack.c.l.b16 %v7465
    %v9569 = vunpack.c.h.b16 %v7465
    %v9570 = vunpack.c.l.b16 %v7466
    %v9571 = vunpack.c.h.b16 %v7466
    %v9572 = vunpack.c.l.b16 %v7467
    %v9573 = vunpack.c.h.b16 %v7467
    %v9574 = vunpack.c.l.b16 %v7468
    %v9575 = vunpack.c.l.b16 %v7469
    %v9576 = vunpack.c.h.b16 %v7469
    %v9577 = vunpack.c.l.b16 %v7470
    %v9578 = vunpack.c.h.b16 %v7470
    %v9579 = vunpack.c.l.b16 %v7471
    %v9580 = vunpack.c.h.b16 %v7471
    %v9581 = vunpack.c.l.b16 %v7472
    %v9582 = vunpack.c.h.b16 %v7472
    %v9583 = vunpack.c.l.b16 %v7473
    %v9584 = vunpack.c.h.b16 %v7473
    %v9585 = vunpack.c.l.b16 %v7474
    %v9586 = vunpack.c.l.b16 %v7475
    %v9587 = vunpack.c.h.b16 %v7475
    %v9588 = vunpack.c.l.b16 %v7476
    %v9589 = vunpack.c.h.b16 %v7476
    %v9590 = vunpack.c.l.b16 %v7477
    %v9591 = vunpack.c.h.b16 %v7477
    %v9592 = vunpack.c.l.b16 %v7478
    %v9593 = vunpack.c.h.b16 %v7478
    %v9594 = vunpack.c.l.b16 %v7479
    %v9595 = vunpack.c.h.b16 %v7479
    %v9596 = vunpack.c.l.b16 %v7480
    %v9597 = vunpack.c.l.b16 %v7481
    %v9598 = vunpack.c.h.b16 %v7481
    %v9599 = vunpack.c.l.b16 %v7482
    %v9600 = vunpack.c.h.b16 %v7482
    %v9601 = vunpack.c.l.b16 %v7483
    %v9602 = vunpack.c.h.b16 %v7483
    %v9603 = vunpack.c.l.b16 %v7484
    %v9604 = vunpack.c.h.b16 %v7484
    %v9605 = vunpack.c.l.b16 %v7485
    %v9606 = vunpack.c.h.b16 %v7485
    %v9607 = vunpack.c.l.b16 %v7486
    %v9608 = vunpack.c.l.b16 %v7487
    %v9609 = vunpack.c.h.b16 %v7487
    %v9610 = vunpack.c.l.b16 %v7488
    %v9611 = vunpack.c.h.b16 %v7488
    %v9612 = vunpack.c.l.b16 %v7489
    %v9613 = vunpack.c.h.b16 %v7489
    %v9614 = vunpack.c.l.b16 %v7490
    %v9615 = vunpack.c.h.b16 %v7490
    %v9616 = vunpack.c.l.b16 %v7491
    %v9617 = vunpack.c.h.b16 %v7491
    %v9618 = vunpack.c.l.b16 %v7492
    %v9619 = vunpack.c.l.b16 %v7493
    %v9620 = vunpack.c.h.b16 %v7493
    %v9621 = vunpack.c.l.b16 %v7494
    %v9622 = vunpack.c.h.b16 %v7494
    %v9623 = vunpack.c.l.b16 %v7495
    %v9624 = vunpack.c.h.b16 %v7495
    %v9625 = vunpack.c.l.b16 %v7496
    %v9626 = vunpack.c.h.b16 %v7496
    %v9627 = vunpack.c.l.b16 %v7497
    %v9628 = vunpack.c.h.b16 %v7497
    %v9629 = vunpack.c.l.b16 %v7498
    %v9630 = vunpack.c.l.b16 %v7499
    %v9631 = vunpack.c.h.b16 %v7499
    %v9632 = vunpack.c.l.b16 %v7500
    %v9633 = vunpack.c.h.b16 %v7500
    %v9634 = vunpack.c.l.b16 %v7501
    %v9635 = vunpack.c.h.b16 %v7501
    %v9636 = vunpack.c.l.b16 %v7502
    %v9637 = vunpack.c.h.b16 %v7502
    %v9638 = vunpack.c.l.b16 %v7503
    %v9639 = vunpack.c.h.b16 %v7503
    %v9640 = vunpack.c.l.b16 %v7504
    %v9641 = vunpack.c.l.b16 %v7505
    %v9642 = vunpack.c.h.b16 %v7505
    %v9643 = vunpack.c.l.b16 %v7506
    %v9644 = vunpack.c.h.b16 %v7506
    %v9645 = vunpack.c.l.b16 %v7507
    %v9646 = vunpack.c.h.b16 %v7507
    %v9647 = vunpack.c.l.b16 %v7508
    %v9648 = vunpack.c.h.b16 %v7508
    %v9649 = vunpack.c.l.b16 %v7509
    %v9650 = vunpack.c.h.b16 %v7509
    %v9651 = vunpack.c.l.b16 %v7510
    %v9652 = vunpack.c.l.b16 %v7511
    %v9653 = vunpack.c.h.b16 %v7511
    %v9654 = vunpack.c.l.b16 %v7512
    %v9655 = vunpack.c.h.b16 %v7512
    %v9656 = vunpack.c.l.b16 %v7513
    %v9657 = vunpack.c.h.b16 %v7513
    %v9658 = vunpack.c.l.b16 %v7514
    %v9659 = vunpack.c.h.b16 %v7514
    %v9660 = vunpack.c.l.b16 %v7515
    %v9661 = vunpack.c.h.b16 %v7515
    %v9662 = vunpack.c.l.b16 %v7516
    %v9663 = vunpack.c.l.b16 %v7517
    %v9664 = vunpack.c.h.b16 %v7517
    %v9665 = vunpack.c.l.b16 %v7518
    %v9666 = vunpack.c.h.b16 %v7518
    %v9667 = vunpack.c.l.b16 %v7519
    %v9668 = vunpack.c.h.b16 %v7519
    %v9669 = vunpack.c.l.b16 %v7520
    %v9670 = vunpack.c.h.b16 %v7520
    %v9671 = vunpack.c.l.b16 %v7521
    %v9672 = vunpack.c.h.b16 %v7521
    %v9673 = vunpack.c.l.b16 %v7522
    %v9674 = vunpack.c.l.b16 %v7523
    %v9675 = vunpack.c.h.b16 %v7523
    %v9676 = vunpack.c.l.b16 %v7524
    %v9677 = vunpack.c.h.b16 %v7524
    %v9678 = vunpack.c.l.b16 %v7525
    %v9679 = vunpack.c.h.b16 %v7525
    %v9680 = vunpack.c.l.b16 %v7526
    %v9681 = vunpack.c.h.b16 %v7526
    %v9682 = vunpack.c.l.b16 %v7527
    %v9683 = vunpack.c.h.b16 %v7527
    %v9684 = vunpack.c.l.b16 %v7528
    %v9685 = vunpack.c.l.b16 %v7529
    %v9686 = vunpack.c.h.b16 %v7529
    %v9687 = vunpack.c.l.b16 %v7530
    %v9688 = vunpack.c.h.b16 %v7530
    %v9689 = vunpack.c.l.b16 %v7531
    %v9690 = vunpack.c.h.b16 %v7531
    %v9691 = vunpack.c.l.b16 %v7532
    %v9692 = vunpack.c.h.b16 %v7532
    %v9693 = vunpack.c.l.b16 %v7533
    %v9694 = vunpack.c.h.b16 %v7533
    %v9695 = vunpack.c.l.b16 %v7534
    %v9696 = vunpack.c.l.b16 %v7535
    %v9697 = vunpack.c.h.b16 %v7535
    %v9698 = vunpack.c.l.b16 %v7536
    %v9699 = vunpack.c.h.b16 %v7536
    %v9700 = vunpack.c.l.b16 %v7537
    %v9701 = vunpack.c.h.b16 %v7537
    %v9702 = vunpack.c.l.b16 %v7538
    %v9703 = vunpack.c.h.b16 %v7538
    %v9704 = vunpack.c.l.b16 %v7539
    %v9705 = vunpack.c.h.b16 %v7539
    %v9706 = vunpack.c.l.b16 %v7540
    %v9707 = vunpack.c.l.b16 %v7541
    %v9708 = vunpack.c.h.b16 %v7541
    %v9709 = vunpack.c.l.b16 %v7542
    %v9710 = vunpack.c.h.b16 %v7542
    %v9711 = vunpack.c.l.b16 %v7543
    %v9712 = vunpack.c.h.b16 %v7543
    %v9713 = vunpack.c.l.b16 %v7544
    %v9714 = vunpack.c.h.b16 %v7544
    %v9715 = vunpack.c.l.b16 %v7545
    %v9716 = vunpack.c.h.b16 %v7545
    %v9717 = vunpack.c.l.b16 %v7546
    %v9718 = vunpack.c.l.b16 %v7547
    %v9719 = vunpack.c.h.b16 %v7547
    %v9720 = vunpack.c.l.b16 %v7548
    %v9721 = vunpack.c.h.b16 %v7548
    %v9722 = vunpack.c.l.b16 %v7549
    %v9723 = vunpack.c.h.b16 %v7549
    %v9724 = vunpack.c.l.b16 %v7550
    %v9725 = vunpack.c.h.b16 %v7550
    %v9726 = vunpack.c.l.b16 %v7551
    %v9727 = vunpack.c.h.b16 %v7551
    %v9728 = vunpack.c.l.b16 %v7552
    %v9729 = vunpack.c.l.b16 %v7553
    %v9730 = vunpack.c.h.b16 %v7553
    %v9731 = vunpack.c.l.b16 %v7554
    %v9732 = vunpack.c.h.b16 %v7554
    %v9733 = vunpack.c.l.b16 %v7555
    %v9734 = vunpack.c.h.b16 %v7555
    %v9735 = vunpack.c.l.b16 %v7556
    %v9736 = vunpack.c.h.b16 %v7556
    %v9737 = vunpack.c.l.b16 %v7557
    %v9738 = vunpack.c.h.b16 %v7557
    %v9739 = vunpack.c.l.b16 %v7558
    %v9740 = vunpack.c.l.b16 %v7559
    %v9741 = vunpack.c.h.b16 %v7559
    %v9742 = vunpack.c.l.b16 %v7560
    %v9743 = vunpack.c.h.b16 %v7560
    %v9744 = vunpack.c.l.b16 %v7561
    %v9745 = vunpack.c.h.b16 %v7561
    %v9746 = vunpack.c.l.b16 %v7562
    %v9747 = vunpack.c.h.b16 %v7562
    %v9748 = vunpack.c.l.b16 %v7563
    %v9749 = vunpack.c.h.b16 %v7563
    %v9750 = vunpack.c.l.b16 %v7564
    %v9751 = vunpack.c.l.b16 %v7565
    %v9752 = vunpack.c.h.b16 %v7565
    %v9753 = vunpack.c.l.b16 %v7566
    %v9754 = vunpack.c.h.b16 %v7566
    %v9755 = vunpack.c.l.b16 %v7567
    %v9756 = vunpack.c.h.b16 %v7567
    %v9757 = vunpack.c.l.b16 %v7568
    %v9758 = vunpack.c.h.b16 %v7568
    %v9759 = vunpack.c.l.b16 %v7569
    %v9760 = vunpack.c.h.b16 %v7569
    %v9761 = vunpack.c.l.b16 %v7570
    %v9762 = vunpack.c.l.b16 %v7571
    %v9763 = vunpack.c.h.b16 %v7571
    %v9764 = vunpack.c.l.b16 %v7572
    %v9765 = vunpack.c.h.b16 %v7572
    %v9766 = vunpack.c.l.b16 %v7573
    %v9767 = vunpack.c.h.b16 %v7573
    %v9768 = vunpack.c.l.b16 %v7574
    %v9769 = vunpack.c.h.b16 %v7574
    %v9770 = vunpack.c.l.b16 %v7575
    %v9771 = vunpack.c.h.b16 %v7575
    %v9772 = vunpack.c.l.b16 %v7576
    %v9773 = vunpack.c.l.b16 %v7577
    %v9774 = vunpack.c.h.b16 %v7577
    %v9775 = vunpack.c.l.b16 %v7578
    %v9776 = vunpack.c.h.b16 %v7578
    %v9777 = vunpack.c.l.b16 %v7579
    %v9778 = vunpack.c.h.b16 %v7579
    %v9779 = vunpack.c.l.b16 %v7580
    %v9780 = vunpack.c.h.b16 %v7580
    %v9781 = vunpack.c.l.b16 %v7581
    %v9782 = vunpack.c.h.b16 %v7581
    %v9783 = vunpack.c.l.b16 %v7582
    %v9784 = vunpack.c.l.b16 %v7583
    %v9785 = vunpack.c.h.b16 %v7583
    %v9786 = vunpack.c.l.b16 %v7584
    %v9787 = vunpack.c.h.b16 %v7584
    %v9788 = vunpack.c.l.b16 %v7585
    %v9789 = vunpack.c.h.b16 %v7585
    %v9790 = vunpack.c.l.b16 %v7586
    %v9791 = vunpack.c.h.b16 %v7586
    %v9792 = vunpack.c.l.b16 %v7587
    %v9793 = vunpack.c.h.b16 %v7587
    %v9794 = vunpack.c.l.b16 %v7588
    %v9795 = vunpack.c.l.b16 %v7589
    %v9796 = vunpack.c.h.b16 %v7589
    %v9797 = vunpack.c.l.b16 %v7590
    %v9798 = vunpack.c.h.b16 %v7590
    %v9799 = vunpack.c.l.b16 %v7591
    %v9800 = vunpack.c.h.b16 %v7591
    %v9801 = vunpack.c.l.b16 %v7592
    %v9802 = vunpack.c.h.b16 %v7592
    %v9803 = vunpack.c.l.b16 %v7593
    %v9804 = vunpack.c.h.b16 %v7593
    %v9805 = vunpack.c.l.b16 %v7594
    %v9806 = vunpack.c.l.b16 %v7595
    %v9807 = vunpack.c.h.b16 %v7595
    %v9808 = vunpack.c.l.b16 %v7596
    %v9809 = vunpack.c.h.b16 %v7596
    %v9810 = vunpack.c.l.b16 %v7597
    %v9811 = vunpack.c.h.b16 %v7597
    %v9812 = vunpack.c.l.b16 %v7598
    %v9813 = vunpack.c.h.b16 %v7598
    %v9814 = vunpack.c.l.b16 %v7599
    %v9815 = vunpack.c.h.b16 %v7599
    %v9816 = vunpack.c.l.b16 %v7600
    %v9817 = vunpack.c.l.b16 %v7601
    %v9818 = vunpack.c.h.b16 %v7601
    %v9819 = vunpack.c.l.b16 %v7602
    %v9820 = vunpack.c.h.b16 %v7602
    %v9821 = vunpack.c.l.b16 %v7603
    %v9822 = vunpack.c.h.b16 %v7603
    %v9823 = vunpack.c.l.b16 %v7604
    %v9824 = vunpack.c.h.b16 %v7604
    %v9825 = vunpack.c.l.b16 %v7605
    %v9826 = vunpack.c.h.b16 %v7605
    %v9827 = vunpack.c.l.b16 %v7606
    %v9828 = vunpack.c.l.b16 %v7607
    %v9829 = vunpack.c.h.b16 %v7607
    %v9830 = vunpack.c.l.b16 %v7608
    %v9831 = vunpack.c.h.b16 %v7608
    %v9832 = vunpack.c.l.b16 %v7609
    %v9833 = vunpack.c.h.b16 %v7609
    %v9834 = vunpack.c.l.b16 %v7610
    %v9835 = vunpack.c.h.b16 %v7610
    %v9836 = vunpack.c.l.b16 %v7611
    %v9837 = vunpack.c.h.b16 %v7611
    %v9838 = vunpack.c.l.b16 %v7612
    %v9839 = vunpack.c.l.b16 %v7613
    %v9840 = vunpack.c.h.b16 %v7613
    %v9841 = vunpack.c.l.b16 %v7614
    %v9842 = vunpack.c.h.b16 %v7614
    %v9843 = vunpack.c.l.b16 %v7615
    %v9844 = vunpack.c.h.b16 %v7615
    %v9845 = vunpack.c.l.b16 %v7616
    %v9846 = vunpack.c.h.b16 %v7616
    %v9847 = vunpack.c.l.b16 %v7617
    %v9848 = vunpack.c.h.b16 %v7617
    %v9849 = vunpack.c.l.b16 %v7618
    %v9850 = vunpack.c.l.b16 %v7619
    %v9851 = vunpack.c.h.b16 %v7619
    %v9852 = vunpack.c.l.b16 %v7620
    %v9853 = vunpack.c.h.b16 %v7620
    %v9854 = vunpack.c.l.b16 %v7621
    %v9855 = vunpack.c.h.b16 %v7621
    %v9856 = vunpack.c.l.b16 %v7622
    %v9857 = vunpack.c.h.b16 %v7622
    %v9858 = vunpack.c.l.b16 %v7623
    %v9859 = vunpack.c.h.b16 %v7623
    %v9860 = vunpack.c.l.b16 %v7624
    %v9861 = vunpack.c.l.b16 %v7625
    %v9862 = vunpack.c.h.b16 %v7625
    %v9863 = vunpack.c.l.b16 %v7626
    %v9864 = vunpack.c.h.b16 %v7626
    %v9865 = vunpack.c.l.b16 %v7627
    %v9866 = vunpack.c.h.b16 %v7627
    %v9867 = vunpack.c.l.b16 %v7628
    %v9868 = vunpack.c.h.b16 %v7628
    %v9869 = vunpack.c.l.b16 %v7629
    %v9870 = vunpack.c.h.b16 %v7629
    %v9871 = vunpack.c.l.b16 %v7630
    %v9872 = vunpack.c.l.b16 %v7631
    %v9873 = vunpack.c.h.b16 %v7631
    %v9874 = vunpack.c.l.b16 %v7632
    %v9875 = vunpack.c.h.b16 %v7632
    %v9876 = vunpack.c.l.b16 %v7633
    %v9877 = vunpack.c.h.b16 %v7633
    %v9878 = vunpack.c.l.b16 %v7634
    %v9879 = vunpack.c.h.b16 %v7634
    %v9880 = vunpack.c.l.b16 %v7635
    %v9881 = vunpack.c.h.b16 %v7635
    %v9882 = vunpack.c.l.b16 %v7636
    %v9883 = vunpack.c.l.b16 %v7637
    %v9884 = vunpack.c.h.b16 %v7637
    %v9885 = vunpack.c.l.b16 %v7638
    %v9886 = vunpack.c.h.b16 %v7638
    %v9887 = vunpack.c.l.b16 %v7639
    %v9888 = vunpack.c.h.b16 %v7639
    %v9889 = vunpack.c.l.b16 %v7640
    %v9890 = vunpack.c.h.b16 %v7640
    %v9891 = vunpack.c.l.b16 %v7641
    %v9892 = vunpack.c.h.b16 %v7641
    %v9893 = vunpack.c.l.b16 %v7642
    %v9894 = vunpack.c.l.b16 %v7643
    %v9895 = vunpack.c.h.b16 %v7643
    %v9896 = vunpack.c.l.b16 %v7644
    %v9897 = vunpack.c.h.b16 %v7644
    %v9898 = vunpack.c.l.b16 %v7645
    %v9899 = vunpack.c.h.b16 %v7645
    %v9900 = vunpack.c.l.b16 %v7646
    %v9901 = vunpack.c.h.b16 %v7646
    %v9902 = vunpack.c.l.b16 %v7647
    %v9903 = vunpack.c.h.b16 %v7647
    %v9904 = vunpack.c.l.b16 %v7648
    %v9905 = vunpack.c.l.b16 %v7649
    %v9906 = vunpack.c.h.b16 %v7649
    %v9907 = vunpack.c.l.b16 %v7650
    %v9908 = vunpack.c.h.b16 %v7650
    %v9909 = vunpack.c.l.b16 %v7651
    %v9910 = vunpack.c.h.b16 %v7651
    %v9911 = vunpack.c.l.b16 %v7652
    %v9912 = vunpack.c.h.b16 %v7652
    %v9913 = vunpack.c.l.b16 %v7653
    %v9914 = vunpack.c.h.b16 %v7653
    %v9915 = vunpack.c.l.b16 %v7654
    %v9916 = vunpack.c.l.b16 %v7655
    %v9917 = vunpack.c.h.b16 %v7655
    %v9918 = vunpack.c.l.b16 %v7656
    %v9919 = vunpack.c.h.b16 %v7656
    %v9920 = vunpack.c.l.b16 %v7657
    %v9921 = vunpack.c.h.b16 %v7657
    %v9922 = vunpack.c.l.b16 %v7658
    %v9923 = vunpack.c.h.b16 %v7658
    %v9924 = vunpack.c.l.b16 %v7659
    %v9925 = vunpack.c.h.b16 %v7659
    %v9926 = vunpack.c.l.b16 %v7660
    %v9927 = vunpack.c.l.b16 %v7661
    %v9928 = vunpack.c.h.b16 %v7661
    %v9929 = vunpack.c.l.b16 %v7662
    %v9930 = vunpack.c.h.b16 %v7662
    %v9931 = vunpack.c.l.b16 %v7663
    %v9932 = vunpack.c.h.b16 %v7663
    %v9933 = vunpack.c.l.b16 %v7664
    %v9934 = vunpack.c.h.b16 %v7664
    %v9935 = vunpack.c.l.b16 %v7665
    %v9936 = vunpack.c.h.b16 %v7665
    %v9937 = vunpack.c.l.b16 %v7666
    %v9938 = vunpack.c.l.b16 %v7667
    %v9939 = vunpack.c.h.b16 %v7667
    %v9940 = vunpack.c.l.b16 %v7668
    %v9941 = vunpack.c.h.b16 %v7668
    %v9942 = vunpack.c.l.b16 %v7669
    %v9943 = vunpack.c.h.b16 %v7669
    %v9944 = vunpack.c.l.b16 %v7670
    %v9945 = vunpack.c.h.b16 %v7670
    %v9946 = vunpack.c.l.b16 %v7671
    %v9947 = vunpack.c.h.b16 %v7671
    %v9948 = vunpack.c.l.b16 %v7672
    %v9949 = vunpack.c.l.b16 %v7673
    %v9950 = vunpack.c.h.b16 %v7673
    %v9951 = vunpack.c.l.b16 %v7674
    %v9952 = vunpack.c.h.b16 %v7674
    %v9953 = vunpack.c.l.b16 %v7675
    %v9954 = vunpack.c.h.b16 %v7675
    %v9955 = vunpack.c.l.b16 %v7676
    %v9956 = vunpack.c.h.b16 %v7676
    %v9957 = vunpack.c.l.b16 %v7677
    %v9958 = vunpack.c.h.b16 %v7677
    %v9959 = vunpack.c.l.b16 %v7678
    %v9960 = vunpack.c.l.b16 %v7679
    %v9961 = vunpack.c.h.b16 %v7679
    %v9962 = vunpack.c.l.b16 %v7680
    %v9963 = vunpack.c.h.b16 %v7680
    %v9964 = vunpack.c.l.b16 %v7681
    %v9965 = vunpack.c.h.b16 %v7681
    %v9966 = vunpack.c.l.b16 %v7682
    %v9967 = vunpack.c.h.b16 %v7682
    %v9968 = vunpack.c.l.b16 %v7683
    %v9969 = vunpack.c.h.b16 %v7683
    %v9970 = vunpack.c.l.b16 %v7684
    %v9971 = vunpack.c.l.b16 %v7685
    %v9972 = vunpack.c.h.b16 %v7685
    %v9973 = vunpack.c.l.b16 %v7686
    %v9974 = vunpack.c.h.b16 %v7686
    %v9975 = vunpack.c.l.b16 %v7687
    %v9976 = vunpack.c.h.b16 %v7687
    %v9977 = vunpack.c.l.b16 %v7688
    %v9978 = vunpack.c.h.b16 %v7688
    %v9979 = vunpack.c.l.b16 %v7689
    %v9980 = vunpack.c.h.b16 %v7689
    %v9981 = vunpack.c.l.b16 %v7690
    %v9982 = vunpack.c.l.b16 %v7691
    %v9983 = vunpack.c.h.b16 %v7691
    %v9984 = vunpack.c.l.b16 %v7692
    %v9985 = vunpack.c.h.b16 %v7692
    %v9986 = vunpack.c.l.b16 %v7693
    %v9987 = vunpack.c.h.b16 %v7693
    %v9988 = vunpack.c.l.b16 %v7694
    %v9989 = vunpack.c.h.b16 %v7694
    %v9990 = vunpack.c.l.b16 %v7695
    %v9991 = vunpack.c.h.b16 %v7695
    %v9992 = vunpack.c.l.b16 %v7696
    %v9993 = vunpack.c.l.b16 %v7697
    %v9994 = vunpack.c.h.b16 %v7697
    %v9995 = vunpack.c.l.b16 %v7698
    %v9996 = vunpack.c.h.b16 %v7698
    %v9997 = vunpack.c.l.b16 %v7699
    %v9998 = vunpack.c.h.b16 %v7699
    %v9999 = vunpack.c.l.b16 %v7700
    %v10000 = vunpack.c.h.b16 %v7700
    %v10001 = vunpack.c.l.b16 %v7701
    %v10002 = vunpack.c.h.b16 %v7701
    %v10003 = vunpack.c.l.b16 %v7702
    %v10004 = vunpack.c.l.b16 %v7703
    %v10005 = vunpack.c.h.b16 %v7703
    %v10006 = vunpack.c.l.b16 %v7704
    %v10007 = vunpack.c.h.b16 %v7704
    %v10008 = vunpack.c.l.b16 %v7705
    %v10009 = vunpack.c.h.b16 %v7705
    %v10010 = vunpack.c.l.b16 %v7706
    %v10011 = vunpack.c.h.b16 %v7706
    %v10012 = vunpack.c.l.b16 %v7707
    %v10013 = vunpack.c.h.b16 %v7707
    %v10014 = vunpack.c.l.b16 %v7708
    %v10015 = vunpack.c.l.b16 %v7709
    %v10016 = vunpack.c.h.b16 %v7709
    %v10017 = vunpack.c.l.b16 %v7710
    %v10018 = vunpack.c.h.b16 %v7710
    %v10019 = vunpack.c.l.b16 %v7711
    %v10020 = vunpack.c.h.b16 %v7711
    %v10021 = vunpack.c.l.b16 %v7712
    %v10022 = vunpack.c.h.b16 %v7712
    %v10023 = vunpack.c.l.b16 %v7713
    %v10024 = vunpack.c.h.b16 %v7713
    %v10025 = vunpack.c.l.b16 %v7714
    %v10026 = vunpack.c.l.b16 %v7715
    %v10027 = vunpack.c.h.b16 %v7715
    %v10028 = vunpack.c.l.b16 %v7716
    %v10029 = vunpack.c.h.b16 %v7716
    %v10030 = vunpack.c.l.b16 %v7717
    %v10031 = vunpack.c.h.b16 %v7717
    %v10032 = vunpack.c.l.b16 %v7718
    %v10033 = vunpack.c.h.b16 %v7718
    %v10034 = vunpack.c.l.b16 %v7719
    %v10035 = vunpack.c.h.b16 %v7719
    %v10036 = vunpack.c.l.b16 %v7720
    %v10037 = vunpack.c.l.b16 %v7721
    %v10038 = vunpack.c.h.b16 %v7721
    %v10039 = vunpack.c.l.b16 %v7722
    %v10040 = vunpack.c.h.b16 %v7722
    %v10041 = vunpack.c.l.b16 %v7723
    %v10042 = vunpack.c.h.b16 %v7723
    %v10043 = vunpack.c.l.b16 %v7724
    %v10044 = vunpack.c.h.b16 %v7724
    %v10045 = vunpack.c.l.b16 %v7725
    %v10046 = vunpack.c.h.b16 %v7725
    %v10047 = vunpack.c.l.b16 %v7726
    %v10048 = vunpack.c.l.b16 %v7727
    %v10049 = vunpack.c.h.b16 %v7727
    %v10050 = vunpack.c.l.b16 %v7728
    %v10051 = vunpack.c.h.b16 %v7728
    %v10052 = vunpack.c.l.b16 %v7729
    %v10053 = vunpack.c.h.b16 %v7729
    %v10054 = vunpack.c.l.b16 %v7730
    %v10055 = vunpack.c.h.b16 %v7730
    %v10056 = vunpack.c.l.b16 %v7731
    %v10057 = vunpack.c.h.b16 %v7731
    %v10058 = vunpack.c.l.b16 %v7732
    %v10059 = vunpack.c.l.b16 %v7733
    %v10060 = vunpack.c.h.b16 %v7733
    %v10061 = vunpack.c.l.b16 %v7734
    %v10062 = vunpack.c.h.b16 %v7734
    %v10063 = vunpack.c.l.b16 %v7735
    %v10064 = vunpack.c.h.b16 %v7735
    %v10065 = vunpack.c.l.b16 %v7736
    %v10066 = vunpack.c.h.b16 %v7736
    %v10067 = vunpack.c.l.b16 %v7737
    %v10068 = vunpack.c.h.b16 %v7737
    %v10069 = vunpack.c.l.b16 %v7738
    %v10070 = vunpack.c.l.b16 %v7739
    %v10071 = vunpack.c.h.b16 %v7739
    %v10072 = vunpack.c.l.b16 %v7740
    %v10073 = vunpack.c.h.b16 %v7740
    %v10074 = vunpack.c.l.b16 %v7741
    %v10075 = vunpack.c.h.b16 %v7741
    %v10076 = vunpack.c.l.b16 %v7742
    %v10077 = vunpack.c.h.b16 %v7742
    %v10078 = vunpack.c.l.b16 %v7743
    %v10079 = vunpack.c.h.b16 %v7743
    %v10080 = vunpack.c.l.b16 %v7744
    %v10081 = vunpack.c.l.b16 %v7745
    %v10082 = vunpack.c.h.b16 %v7745
    %v10083 = vunpack.c.l.b16 %v7746
    %v10084 = vunpack.c.h.b16 %v7746
    %v10085 = vunpack.c.l.b16 %v7747
    %v10086 = vunpack.c.h.b16 %v7747
    %v10087 = vunpack.c.l.b16 %v7748
    %v10088 = vunpack.c.h.b16 %v7748
    %v10089 = vunpack.c.l.b16 %v7749
    %v10090 = vunpack.c.h.b16 %v7749
    %v10091 = vunpack.c.l.b16 %v7750
    %v10092 = vunpack.c.l.b16 %v7751
    %v10093 = vunpack.c.h.b16 %v7751
    %v10094 = vunpack.c.l.b16 %v7752
    %v10095 = vunpack.c.h.b16 %v7752
    %v10096 = vunpack.c.l.b16 %v7753
    %v10097 = vunpack.c.h.b16 %v7753
    %v10098 = vunpack.c.l.b16 %v7754
    %v10099 = vunpack.c.h.b16 %v7754
    %v10100 = vunpack.c.l.b16 %v7755
    %v10101 = vunpack.c.h.b16 %v7755
    %v10102 = vunpack.c.l.b16 %v7756
    %v10103 = vunpack.c.l.b16 %v7757
    %v10104 = vunpack.c.h.b16 %v7757
    %v10105 = vunpack.c.l.b16 %v7758
    %v10106 = vunpack.c.h.b16 %v7758
    %v10107 = vunpack.c.l.b16 %v7759
    %v10108 = vunpack.c.h.b16 %v7759
    %v10109 = vunpack.c.l.b16 %v7760
    %v10110 = vunpack.c.h.b16 %v7760
    %v10111 = vunpack.c.l.b16 %v7761
    %v10112 = vunpack.c.h.b16 %v7761
    %v10113 = vunpack.c.l.b16 %v7762
    %v10114 = vunpack.c.l.b16 %v7763
    %v10115 = vunpack.c.h.b16 %v7763
    %v10116 = vunpack.c.l.b16 %v7764
    %v10117 = vunpack.c.h.b16 %v7764
    %v10118 = vunpack.c.l.b16 %v7765
    %v10119 = vunpack.c.h.b16 %v7765
    %v10120 = vunpack.c.l.b16 %v7766
    %v10121 = vunpack.c.h.b16 %v7766
    %v10122 = vunpack.c.l.b16 %v7767
    %v10123 = vunpack.c.h.b16 %v7767
    %v10124 = vunpack.c.l.b16 %v7768
    %v10125 = vunpack.c.l.b16 %v7769
    %v10126 = vunpack.c.h.b16 %v7769
    %v10127 = vunpack.c.l.b16 %v7770
    %v10128 = vunpack.c.h.b16 %v7770
    %v10129 = vunpack.c.l.b16 %v7771
    %v10130 = vunpack.c.h.b16 %v7771
    %v10131 = vunpack.c.l.b16 %v7772
    %v10132 = vunpack.c.h.b16 %v7772
    %v10133 = vunpack.c.l.b16 %v7773
    %v10134 = vunpack.c.h.b16 %v7773
    %v10135 = vunpack.c.l.b16 %v7774
    %v10136 = vunpack.c.l.b16 %v7775
    %v10137 = vunpack.c.h.b16 %v7775
    %v10138 = vunpack.c.l.b16 %v7776
    %v10139 = vunpack.c.h.b16 %v7776
    %v10140 = vunpack.c.l.b16 %v7777
    %v10141 = vunpack.c.h.b16 %v7777
    %v10142 = vunpack.c.l.b16 %v7778
    %v10143 = vunpack.c.h.b16 %v7778
    %v10144 = vunpack.c.l.b16 %v7779
    %v10145 = vunpack.c.h.b16 %v7779
    %v10146 = vunpack.c.l.b16 %v7780
    %v10147 = vunpack.c.l.b16 %v7781
    %v10148 = vunpack.c.h.b16 %v7781
    %v10149 = vunpack.c.l.b16 %v7782
    %v10150 = vunpack.c.h.b16 %v7782
    %v10151 = vunpack.c.l.b16 %v7783
    %v10152 = vunpack.c.h.b16 %v7783
    %v10153 = vunpack.c.l.b16 %v7784
    %v10154 = vunpack.c.h.b16 %v7784
    %v10155 = vunpack.c.l.b16 %v7785
    %v10156 = vunpack.c.h.b16 %v7785
    %v10157 = vunpack.c.l.b16 %v7786
    %v10158 = vunpack.c.l.b16 %v7787
    %v10159 = vunpack.c.h.b16 %v7787
    %v10160 = vunpack.c.l.b16 %v7788
    %v10161 = vunpack.c.h.b16 %v7788
    %v10162 = vunpack.c.l.b16 %v7789
    %v10163 = vunpack.c.h.b16 %v7789
    %v10164 = vunpack.c.l.b16 %v7790
    %v10165 = vunpack.c.h.b16 %v7790
    %v10166 = vunpack.c.l.b16 %v7791
    %v10167 = vunpack.c.h.b16 %v7791
    %v10168 = vunpack.c.l.b16 %v7792
    %v10169 = vunpack.c.l.b16 %v7793
    %v10170 = vunpack.c.h.b16 %v7793
    %v10171 = vunpack.c.l.b16 %v7794
    %v10172 = vunpack.c.h.b16 %v7794
    %v10173 = vunpack.c.l.b16 %v7795
    %v10174 = vunpack.c.h.b16 %v7795
    %v10175 = vunpack.c.l.b16 %v7796
    %v10176 = vunpack.c.h.b16 %v7796
    %v10177 = vunpack.c.l.b16 %v7797
    %v10178 = vunpack.c.h.b16 %v7797
    %v10179 = vunpack.c.l.b16 %v7798
    %v10180 = vunpack.c.l.b16 %v7799
    %v10181 = vunpack.c.h.b16 %v7799
    %v10182 = vunpack.c.l.b16 %v7800
    %v10183 = vunpack.c.h.b16 %v7800
    %v10184 = vunpack.c.l.b16 %v7801
    %v10185 = vunpack.c.h.b16 %v7801
    %v10186 = vunpack.c.l.b16 %v7802
    %v10187 = vunpack.c.h.b16 %v7802
    %v10188 = vunpack.c.l.b16 %v7803
    %v10189 = vunpack.c.h.b16 %v7803
    %v10190 = vunpack.c.l.b16 %v7804
    %v10191 = vunpack.c.l.b16 %v7805
    %v10192 = vunpack.c.h.b16 %v7805
    %v10193 = vunpack.c.l.b16 %v7806
    %v10194 = vunpack.c.h.b16 %v7806
    %v10195 = vunpack.c.l.b16 %v7807
    %v10196 = vunpack.c.h.b16 %v7807
    %v10197 = vunpack.c.l.b16 %v7808
    %v10198 = vunpack.c.h.b16 %v7808
    %v10199 = vunpack.c.l.b16 %v7809
    %v10200 = vunpack.c.h.b16 %v7809
    %v10201 = vunpack.c.l.b16 %v7810
    %v10202 = vunpack.c.l.b16 %v7811
    %v10203 = vunpack.c.h.b16 %v7811
    %v10204 = vunpack.c.l.b16 %v7812
    %v10205 = vunpack.c.h.b16 %v7812
    %v10206 = vunpack.c.l.b16 %v7813
    %v10207 = vunpack.c.h.b16 %v7813
    %v10208 = vunpack.c.l.b16 %v7814
    %v10209 = vunpack.c.h.b16 %v7814
    %v10210 = vunpack.c.l.b16 %v7815
    %v10211 = vunpack.c.h.b16 %v7815
    %v10212 = vunpack.c.l.b16 %v7816
    %v10213 = vunpack.c.l.b16 %v7817
    %v10214 = vunpack.c.h.b16 %v7817
    %v10215 = vunpack.c.l.b16 %v7818
    %v10216 = vunpack.c.h.b16 %v7818
    %v10217 = vunpack.c.l.b16 %v7819
    %v10218 = vunpack.c.h.b16 %v7819
    %v10219 = vunpack.c.l.b16 %v7820
    %v10220 = vunpack.c.h.b16 %v7820
    %v10221 = vunpack.c.l.b16 %v7821
    %v10222 = vunpack.c.h.b16 %v7821
    %v10223 = vunpack.c.l.b16 %v7822
    %v10224 = vunpack.c.l.b16 %v7823
    %v10225 = vunpack.c.h.b16 %v7823
    %v10226 = vunpack.c.l.b16 %v7824
    %v10227 = vunpack.c.h.b16 %v7824
    %v10228 = vunpack.c.l.b16 %v7825
    %v10229 = vunpack.c.h.b16 %v7825
    %v10230 = vunpack.c.l.b16 %v7826
    %v10231 = vunpack.c.h.b16 %v7826
    %v10232 = vunpack.c.l.b16 %v7827
    %v10233 = vunpack.c.h.b16 %v7827
    %v10234 = vunpack.c.l.b16 %v7828
    %v10235 = vunpack.c.l.b16 %v7829
    %v10236 = vunpack.c.h.b16 %v7829
    %v10237 = vunpack.c.l.b16 %v7830
    %v10238 = vunpack.c.h.b16 %v7830
    %v10239 = vunpack.c.l.b16 %v7831
    %v10240 = vunpack.c.h.b16 %v7831
    %v10241 = vunpack.c.l.b16 %v7832
    %v10242 = vunpack.c.h.b16 %v7832
    %v10243 = vunpack.c.l.b16 %v7833
    %v10244 = vunpack.c.h.b16 %v7833
    %v10245 = vunpack.c.l.b16 %v7834
    %v10246 = vunpack.c.l.b16 %v7835
    %v10247 = vunpack.c.h.b16 %v7835
    %v10248 = vunpack.c.l.b16 %v7836
    %v10249 = vunpack.c.h.b16 %v7836
    %v10250 = vunpack.c.l.b16 %v7837
    %v10251 = vunpack.c.h.b16 %v7837
    %v10252 = vunpack.c.l.b16 %v7838
    %v10253 = vunpack.c.h.b16 %v7838
    %v10254 = vunpack.c.l.b16 %v7839
    %v10255 = vunpack.c.h.b16 %v7839
    %v10256 = vunpack.c.l.b16 %v7840
    %v10257 = vunpack.c.l.b16 %v7841
    %v10258 = vunpack.c.h.b16 %v7841
    %v10259 = vunpack.c.l.b16 %v7842
    %v10260 = vunpack.c.h.b16 %v7842
    %v10261 = vunpack.c.l.b16 %v7843
    %v10262 = vunpack.c.h.b16 %v7843
    %v10263 = vunpack.c.l.b16 %v7844
    %v10264 = vunpack.c.h.b16 %v7844
    %v10265 = vunpack.c.l.b16 %v7845
    %v10266 = vunpack.c.h.b16 %v7845
    %v10267 = vunpack.c.l.b16 %v7846
    %v10268 = vunpack.c.l.b16 %v7847
    %v10269 = vunpack.c.h.b16 %v7847
    %v10270 = vunpack.c.l.b16 %v7848
    %v10271 = vunpack.c.h.b16 %v7848
    %v10272 = vunpack.c.l.b16 %v7849
    %v10273 = vunpack.c.h.b16 %v7849
    %v10274 = vunpack.c.l.b16 %v7850
    %v10275 = vunpack.c.h.b16 %v7850
    %v10276 = vunpack.c.l.b16 %v7851
    %v10277 = vunpack.c.h.b16 %v7851
    %v10278 = vunpack.c.l.b16 %v7852
    %v10279 = vunpack.c.l.b16 %v7853
    %v10280 = vunpack.c.h.b16 %v7853
    %v10281 = vunpack.c.l.b16 %v7854
    %v10282 = vunpack.c.h.b16 %v7854
    %v10283 = vunpack.c.l.b16 %v7855
    %v10284 = vunpack.c.h.b16 %v7855
    %v10285 = vunpack.c.l.b16 %v7856
    %v10286 = vunpack.c.h.b16 %v7856
    %v10287 = vunpack.c.l.b16 %v7857
    %v10288 = vunpack.c.h.b16 %v7857
    %v10289 = vunpack.c.l.b16 %v7858
    %v10290 = vunpack.c.l.b16 %v7859
    %v10291 = vunpack.c.h.b16 %v7859
    %v10292 = vunpack.c.l.b16 %v7860
    %v10293 = vunpack.c.h.b16 %v7860
    %v10294 = vunpack.c.l.b16 %v7861
    %v10295 = vunpack.c.h.b16 %v7861
    %v10296 = vunpack.c.l.b16 %v7862
    %v10297 = vunpack.c.h.b16 %v7862
    %v10298 = vunpack.c.l.b16 %v7863
    %v10299 = vunpack.c.h.b16 %v7863
    %v10300 = vunpack.c.l.b16 %v7864
    %v10301 = vunpack.c.l.b16 %v7865
    %v10302 = vunpack.c.h.b16 %v7865
    %v10303 = vunpack.c.l.b16 %v7866
    %v10304 = vunpack.c.h.b16 %v7866
    %v10305 = vunpack.c.l.b16 %v7867
    %v10306 = vunpack.c.h.b16 %v7867
    %v10307 = vunpack.c.l.b16 %v7868
    %v10308 = vunpack.c.h.b16 %v7868
    %v10309 = vunpack.c.l.b16 %v7869
    %v10310 = vunpack.c.h.b16 %v7869
    %v10311 = vunpack.c.l.b16 %v7870
    %v10312 = vunpack.c.l.b16 %v7871
    %v10313 = vunpack.c.h.b16 %v7871
    %v10314 = vunpack.c.l.b16 %v7872
    %v10315 = vunpack.c.h.b16 %v7872
    %v10316 = vunpack.c.l.b16 %v7873
    %v10317 = vunpack.c.h.b16 %v7873
    %v10318 = vunpack.c.l.b16 %v7874
    %v10319 = vunpack.c.h.b16 %v7874
    %v10320 = vunpack.c.l.b16 %v7875
    %v10321 = vunpack.c.h.b16 %v7875
    %v10322 = vunpack.c.l.b16 %v7876
    %v10323 = vunpack.c.l.b16 %v7877
    %v10324 = vunpack.c.h.b16 %v7877
    %v10325 = vunpack.c.l.b16 %v7878
    %v10326 = vunpack.c.h.b16 %v7878
    %v10327 = vunpack.c.l.b16 %v7879
    %v10328 = vunpack.c.h.b16 %v7879
    %v10329 = vunpack.c.l.b16 %v7880
    %v10330 = vunpack.c.h.b16 %v7880
    %v10331 = vunpack.c.l.b16 %v7881
    %v10332 = vunpack.c.h.b16 %v7881
    %v10333 = vunpack.c.l.b16 %v7882
    %v10334 = vunpack.c.l.b16 %v7883
    %v10335 = vunpack.c.h.b16 %v7883
    %v10336 = vunpack.c.l.b16 %v7884
    %v10337 = vunpack.c.h.b16 %v7884
    %v10338 = vunpack.c.l.b16 %v7885
    %v10339 = vunpack.c.h.b16 %v7885
    %v10340 = vunpack.c.l.b16 %v7886
    %v10341 = vunpack.c.h.b16 %v7886
    %v10342 = vunpack.c.l.b16 %v7887
    %v10343 = vunpack.c.h.b16 %v7887
    %v10344 = vunpack.c.l.b16 %v7888
    %v10345 = vunpack.c.l.b16 %v7889
    %v10346 = vunpack.c.h.b16 %v7889
    %v10347 = vunpack.c.l.b16 %v7890
    %v10348 = vunpack.c.h.b16 %v7890
    %v10349 = vunpack.c.l.b16 %v7891
    %v10350 = vunpack.c.h.b16 %v7891
    %v10351 = vunpack.c.l.b16 %v7892
    %v10352 = vunpack.c.h.b16 %v7892
    %v10353 = vunpack.c.l.b16 %v7893
    %v10354 = vunpack.c.h.b16 %v7893
    %v10355 = vunpack.c.l.b16 %v7894
    %v10356 = vunpack.c.l.b16 %v7895
    %v10357 = vunpack.c.h.b16 %v7895
    %v10358 = vunpack.c.l.b16 %v7896
    %v10359 = vunpack.c.h.b16 %v7896
    %v10360 = vunpack.c.l.b16 %v7897
    %v10361 = vunpack.c.h.b16 %v7897
    %v10362 = vunpack.c.l.b16 %v7898
    %v10363 = vunpack.c.h.b16 %v7898
    %v10364 = vunpack.c.l.b16 %v7899
    %v10365 = vunpack.c.h.b16 %v7899
    %v10366 = vunpack.c.l.b16 %v7900
    %v10367 = vunpack.c.l.b16 %v7901
    %v10368 = vunpack.c.h.b16 %v7901
    %v10369 = vunpack.c.l.b16 %v7902
    %v10370 = vunpack.c.h.b16 %v7902
    %v10371 = vunpack.c.l.b16 %v7903
    %v10372 = vunpack.c.h.b16 %v7903
    %v10373 = vunpack.c.l.b16 %v7904
    %v10374 = vunpack.c.h.b16 %v7904
    %v10375 = vunpack.c.l.b16 %v7905
    %v10376 = vunpack.c.h.b16 %v7905
    %v10377 = vunpack.c.l.b16 %v7906
    %v10378 = vunpack.c.l.b16 %v7907
    %v10379 = vunpack.c.h.b16 %v7907
    %v10380 = vunpack.c.l.b16 %v7908
    %v10381 = vunpack.c.h.b16 %v7908
    %v10382 = vunpack.c.l.b16 %v7909
    %v10383 = vunpack.c.h.b16 %v7909
    %v10384 = vunpack.c.l.b16 %v7910
    %v10385 = vunpack.c.h.b16 %v7910
    %v10386 = vunpack.c.l.b16 %v7911
    %v10387 = vunpack.c.h.b16 %v7911
    %v10388 = vunpack.c.l.b16 %v7912
    %v10389 = vunpack.c.l.b16 %v7913
    %v10390 = vunpack.c.h.b16 %v7913
    %v10391 = vunpack.c.l.b16 %v7914
    %v10392 = vunpack.c.h.b16 %v7914
    %v10393 = vunpack.c.l.b16 %v7915
    %v10394 = vunpack.c.h.b16 %v7915
    %v10395 = vunpack.c.l.b16 %v7916
    %v10396 = vunpack.c.h.b16 %v7916
    %v10397 = vunpack.c.l.b16 %v7917
    %v10398 = vunpack.c.h.b16 %v7917
    %v10399 = vunpack.c.l.b16 %v7918
    %v10400 = vunpack.c.l.b16 %v7919
    %v10401 = vunpack.c.h.b16 %v7919
    %v10402 = vunpack.c.l.b16 %v7920
    %v10403 = vunpack.c.h.b16 %v7920
    %v10404 = vunpack.c.l.b16 %v7921
    %v10405 = vunpack.c.h.b16 %v7921
    %v10406 = vunpack.c.l.b16 %v7922
    %v10407 = vunpack.c.h.b16 %v7922
    %v10408 = vunpack.c.l.b16 %v7923
    %v10409 = vunpack.c.h.b16 %v7923
    %v10410 = vunpack.c.l.b16 %v7924
    %v10411 = vunpack.c.l.b16 %v7925
    %v10412 = vunpack.c.h.b16 %v7925
    %v10413 = vunpack.c.l.b16 %v7926
    %v10414 = vunpack.c.h.b16 %v7926
    %v10415 = vunpack.c.l.b16 %v7927
    %v10416 = vunpack.c.h.b16 %v7927
    %v10417 = vunpack.c.l.b16 %v7928
    %v10418 = vunpack.c.h.b16 %v7928
    %v10419 = vunpack.c.l.b16 %v7929
    %v10420 = vunpack.c.h.b16 %v7929
    %v10421 = vunpack.c.l.b16 %v7930
    %v10422 = vunpack.c.l.b16 %v7931
    %v10423 = vunpack.c.h.b16 %v7931
    %v10424 = vunpack.c.l.b16 %v7932
    %v10425 = vunpack.c.h.b16 %v7932
    %v10426 = vunpack.c.l.b16 %v7933
    %v10427 = vunpack.c.h.b16 %v7933
    %v10428 = vunpack.c.l.b16 %v7934
    %v10429 = vunpack.c.h.b16 %v7934
    %v10430 = vunpack.c.l.b16 %v7935
    %v10431 = vunpack.c.h.b16 %v7935
    %v10432 = vunpack.c.l.b16 %v7936
    %v10433 = vunpack.c.l.b16 %v7937
    %v10434 = vunpack.c.h.b16 %v7937
    %v10435 = vunpack.c.l.b16 %v7938
    %v10436 = vunpack.c.h.b16 %v7938
    %v10437 = vunpack.c.l.b16 %v7939
    %v10438 = vunpack.c.h.b16 %v7939
    %v10439 = vunpack.c.l.b16 %v7940
    %v10440 = vunpack.c.h.b16 %v7940
    %v10441 = vunpack.c.l.b16 %v7941
    %v10442 = vunpack.c.h.b16 %v7941
    %v10443 = vunpack.c.l.b16 %v7942
    %v10444 = vunpack.c.l.b16 %v7943
    %v10445 = vunpack.c.h.b16 %v7943
    %v10446 = vunpack.c.l.b16 %v7944
    %v10447 = vunpack.c.h.b16 %v7944
    %v10448 = vunpack.c.l.b16 %v7945
    %v10449 = vunpack.c.h.b16 %v7945
    %v10450 = vunpack.c.l.b16 %v7946
    %v10451 = vunpack.c.h.b16 %v7946
    %v10452 = vunpack.c.l.b16 %v7947
    %v10453 = vunpack.c.h.b16 %v7947
    %v10454 = vunpack.c.l.b16 %v7948
    %v10455 = vunpack.c.l.b16 %v7949
    %v10456 = vunpack.c.h.b16 %v7949
    %v10457 = vunpack.c.l.b16 %v7950
    %v10458 = vunpack.c.h.b16 %v7950
    %v10459 = vunpack.c.l.b16 %v7951
    %v10460 = vunpack.c.h.b16 %v7951
    %v10461 = vunpack.c.l.b16 %v7952
    %v10462 = vunpack.c.h.b16 %v7952
    %v10463 = vunpack.c.l.b16 %v7953
    %v10464 = vunpack.c.h.b16 %v7953
    %v10465 = vunpack.c.l.b16 %v7954
    %v10466 = vunpack.c.l.b16 %v7955
    %v10467 = vunpack.c.h.b16 %v7955
    %v10468 = vunpack.c.l.b16 %v7956
    %v10469 = vunpack.c.h.b16 %v7956
    %v10470 = vunpack.c.l.b16 %v7957
    %v10471 = vunpack.c.h.b16 %v7957
    %v10472 = vunpack.c.l.b16 %v7958
    %v10473 = vunpack.c.h.b16 %v7958
    %v10474 = vunpack.c.l.b16 %v7959
    %v10475 = vunpack.c.h.b16 %v7959
    %v10476 = vunpack.c.l.b16 %v7960
    %v10477 = vunpack.c.l.b16 %v7961
    %v10478 = vunpack.c.h.b16 %v7961
    %v10479 = vunpack.c.l.b16 %v7962
    %v10480 = vunpack.c.h.b16 %v7962
    %v10481 = vunpack.c.l.b16 %v7963
    %v10482 = vunpack.c.h.b16 %v7963
    %v10483 = vunpack.c.l.b16 %v7964
    %v10484 = vunpack.c.h.b16 %v7964
    %v10485 = vunpack.c.l.b16 %v7965
    %v10486 = vunpack.c.h.b16 %v7965
    %v10487 = vunpack.c.l.b16 %v7966
    %v10488 = vunpack.c.l.b16 %v7967
    %v10489 = vunpack.c.h.b16 %v7967
    %v10490 = vunpack.c.l.b16 %v7968
    %v10491 = vunpack.c.h.b16 %v7968
    %v10492 = vunpack.c.l.b16 %v7969
    %v10493 = vunpack.c.h.b16 %v7969
    %v10494 = vunpack.c.l.b16 %v7970
    %v10495 = vunpack.c.h.b16 %v7970
    %v10496 = vunpack.c.l.b16 %v7971
    %v10497 = vunpack.c.h.b16 %v7971
    %v10498 = vunpack.c.l.b16 %v7972
    %v10499 = vunpack.c.l.b16 %v7973
    %v10500 = vunpack.c.h.b16 %v7973
    %v10501 = vunpack.c.l.b16 %v7974
    %v10502 = vunpack.c.h.b16 %v7974
    %v10503 = vunpack.c.l.b16 %v7975
    %v10504 = vunpack.c.h.b16 %v7975
    %v10505 = vunpack.c.l.b16 %v7976
    %v10506 = vunpack.c.h.b16 %v7976
    %v10507 = vunpack.c.l.b16 %v7977
    %v10508 = vunpack.c.h.b16 %v7977
    %v10509 = vunpack.c.l.b16 %v7978
    %v10510 = vunpack.c.l.b16 %v7979
    %v10511 = vunpack.c.h.b16 %v7979
    %v10512 = vunpack.c.l.b16 %v7980
    %v10513 = vunpack.c.h.b16 %v7980
    %v10514 = vunpack.c.l.b16 %v7981
    %v10515 = vunpack.c.h.b16 %v7981
    %v10516 = vunpack.c.l.b16 %v7982
    %v10517 = vunpack.c.h.b16 %v7982
    %v10518 = vunpack.c.l.b16 %v7983
    %v10519 = vunpack.c.h.b16 %v7983
    %v10520 = vunpack.c.l.b16 %v7984
    %v10521 = vunpack.c.l.b16 %v7985
    %v10522 = vunpack.c.h.b16 %v7985
    %v10523 = vunpack.c.l.b16 %v7986
    %v10524 = vunpack.c.h.b16 %v7986
    %v10525 = vunpack.c.l.b16 %v7987
    %v10526 = vunpack.c.h.b16 %v7987
    %v10527 = vunpack.c.l.b16 %v7988
    %v10528 = vunpack.c.h.b16 %v7988
    %v10529 = vunpack.c.l.b16 %v7989
    %v10530 = vunpack.c.h.b16 %v7989
    %v10531 = vunpack.c.l.b16 %v7990
    %v10532 = vunpack.c.l.b16 %v7991
    %v10533 = vunpack.c.h.b16 %v7991
    %v10534 = vunpack.c.l.b16 %v7992
    %v10535 = vunpack.c.h.b16 %v7992
    %v10536 = vunpack.c.l.b16 %v7993
    %v10537 = vunpack.c.h.b16 %v7993
    %v10538 = vunpack.c.l.b16 %v7994
    %v10539 = vunpack.c.h.b16 %v7994
    %v10540 = vunpack.c.l.b16 %v7995
    %v10541 = vunpack.c.h.b16 %v7995
    %v10542 = vunpack.c.l.b16 %v7996
    %v10543 = vunpack.c.l.b16 %v7997
    %v10544 = vunpack.c.h.b16 %v7997
    %v10545 = vunpack.c.l.b16 %v7998
    %v10546 = vunpack.c.h.b16 %v7998
    %v10547 = vunpack.c.l.b16 %v7999
    %v10548 = vunpack.c.h.b16 %v7999
    %v10549 = vunpack.c.l.b16 %v8000
    %v10550 = vunpack.c.h.b16 %v8000
    %v10551 = vunpack.c.l.b16 %v8001
    %v10552 = vunpack.c.h.b16 %v8001
    %v10553 = vunpack.c.l.b16 %v8002
    %v10554 = vunpack.c.l.b16 %v8003
    %v10555 = vunpack.c.h.b16 %v8003
    %v10556 = vunpack.c.l.b16 %v8004
    %v10557 = vunpack.c.h.b16 %v8004
    %v10558 = vunpack.c.l.b16 %v8005
    %v10559 = vunpack.c.h.b16 %v8005
    %v10560 = vunpack.c.l.b16 %v8006
    %v10561 = vunpack.c.h.b16 %v8006
    %v10562 = vunpack.c.l.b16 %v8007
    %v10563 = vunpack.c.h.b16 %v8007
    %v10564 = vunpack.c.l.b16 %v8008
    %v10565 = vunpack.c.l.b16 %v8009
    %v10566 = vunpack.c.h.b16 %v8009
    %v10567 = vunpack.c.l.b16 %v8010
    %v10568 = vunpack.c.h.b16 %v8010
    %v10569 = vunpack.c.l.b16 %v8011
    %v10570 = vunpack.c.h.b16 %v8011
    %v10571 = vunpack.c.l.b16 %v8012
    %v10572 = vunpack.c.h.b16 %v8012
    %v10573 = vunpack.c.l.b16 %v8013
    %v10574 = vunpack.c.h.b16 %v8013
    %v10575 = vunpack.c.l.b16 %v8014
    %v10576 = vunpack.c.l.b16 %v8015
    %v10577 = vunpack.c.h.b16 %v8015
    %v10578 = vunpack.c.l.b16 %v8016
    %v10579 = vunpack.c.h.b16 %v8016
    %v10580 = vunpack.c.l.b16 %v8017
    %v10581 = vunpack.c.h.b16 %v8017
    %v10582 = vunpack.c.l.b16 %v8018
    %v10583 = vunpack.c.h.b16 %v8018
    %v10584 = vunpack.c.l.b16 %v8019
    %v10585 = vunpack.c.h.b16 %v8019
    %v10586 = vunpack.c.l.b16 %v8020
    %v10587 = vunpack.c.l.b16 %v8021
    %v10588 = vunpack.c.h.b16 %v8021
    %v10589 = vunpack.c.l.b16 %v8022
    %v10590 = vunpack.c.h.b16 %v8022
    %v10591 = vunpack.c.l.b16 %v8023
    %v10592 = vunpack.c.h.b16 %v8023
    %v10593 = vunpack.c.l.b16 %v8024
    %v10594 = vunpack.c.h.b16 %v8024
    %v10595 = vunpack.c.l.b16 %v8025
    %v10596 = vunpack.c.h.b16 %v8025
    %v10597 = vunpack.c.l.b16 %v8026
    %v10598 = vunpack.c.l.b16 %v8027
    %v10599 = vunpack.c.h.b16 %v8027
    %v10600 = vunpack.c.l.b16 %v8028
    %v10601 = vunpack.c.h.b16 %v8028
    %v10602 = vunpack.c.l.b16 %v8029
    %v10603 = vunpack.c.h.b16 %v8029
    %v10604 = vunpack.c.l.b16 %v8030
    %v10605 = vunpack.c.h.b16 %v8030
    %v10606 = vunpack.c.l.b16 %v8031
    %v10607 = vunpack.c.h.b16 %v8031
    %v10608 = vunpack.c.l.b16 %v8032
    %v10609 = vunpack.c.l.b16 %v8033
    %v10610 = vunpack.c.h.b16 %v8033
    %v10611 = vunpack.c.l.b16 %v8034
    %v10612 = vunpack.c.h.b16 %v8034
    %v10613 = vunpack.c.l.b16 %v8035
    %v10614 = vunpack.c.h.b16 %v8035
    %v10615 = vunpack.c.l.b16 %v8036
    %v10616 = vunpack.c.h.b16 %v8036
    %v10617 = vunpack.c.l.b16 %v8037
    %v10618 = vunpack.c.h.b16 %v8037
    %v10619 = vunpack.c.l.b16 %v8038
    %v10620 = vunpack.c.l.b16 %v8039
    %v10621 = vunpack.c.h.b16 %v8039
    %v10622 = vunpack.c.l.b16 %v8040
    %v10623 = vunpack.c.h.b16 %v8040
    %v10624 = vunpack.c.l.b16 %v8041
    %v10625 = vunpack.c.h.b16 %v8041
    %v10626 = vunpack.c.l.b16 %v8042
    %v10627 = vunpack.c.h.b16 %v8042
    %v10628 = vunpack.c.l.b16 %v8043
    %v10629 = vunpack.c.h.b16 %v8043
    %v10630 = vunpack.c.l.b16 %v8044
    %v10631 = vunpack.c.l.b16 %v8045
    %v10632 = vunpack.c.h.b16 %v8045
    %v10633 = vunpack.c.l.b16 %v8046
    %v10634 = vunpack.c.h.b16 %v8046
    %v10635 = vunpack.c.l.b16 %v8047
    %v10636 = vunpack.c.h.b16 %v8047
    %v10637 = vunpack.c.l.b16 %v8048
    %v10638 = vunpack.c.h.b16 %v8048
    %v10639 = vunpack.c.l.b16 %v8049
    %v10640 = vunpack.c.h.b16 %v8049
    %v10641 = vunpack.c.l.b16 %v8050
    %v10642 = vunpack.c.l.b16 %v8051
    %v10643 = vunpack.c.h.b16 %v8051
    %v10644 = vunpack.c.l.b16 %v8052
    %v10645 = vunpack.c.h.b16 %v8052
    %v10646 = vunpack.c.l.b16 %v8053
    %v10647 = vunpack.c.h.b16 %v8053
    %v10648 = vunpack.c.l.b16 %v8054
    %v10649 = vunpack.c.h.b16 %v8054
    %v10650 = vunpack.c.l.b16 %v8055
    %v10651 = vunpack.c.h.b16 %v8055
    %v10652 = vunpack.c.l.b16 %v8056
    %v10653 = vunpack.c.l.b16 %v8057
    %v10654 = vunpack.c.h.b16 %v8057
    %v10655 = vunpack.c.l.b16 %v8058
    %v10656 = vunpack.c.h.b16 %v8058
    %v10657 = vunpack.c.l.b16 %v8059
    %v10658 = vunpack.c.h.b16 %v8059
    %v10659 = vunpack.c.l.b16 %v8060
    %v10660 = vunpack.c.h.b16 %v8060
    %v10661 = vunpack.c.l.b16 %v8061
    %v10662 = vunpack.c.h.b16 %v8061
    %v10663 = vunpack.c.l.b16 %v8062
    %v10664 = vunpack.c.l.b16 %v8063
    %v10665 = vunpack.c.h.b16 %v8063
    %v10666 = vunpack.c.l.b16 %v8064
    %v10667 = vunpack.c.h.b16 %v8064
    %v10668 = vunpack.c.l.b16 %v8065
    %v10669 = vunpack.c.h.b16 %v8065
    %v10670 = vunpack.c.l.b16 %v8066
    %v10671 = vunpack.c.h.b16 %v8066
    %v10672 = vunpack.c.l.b16 %v8067
    %v10673 = vunpack.c.h.b16 %v8067
    %v10674 = vunpack.c.l.b16 %v8068
    %v10675 = vunpack.c.l.b16 %v8069
    %v10676 = vunpack.c.h.b16 %v8069
    %v10677 = vunpack.c.l.b16 %v8070
    %v10678 = vunpack.c.h.b16 %v8070
    %v10679 = vunpack.c.l.b16 %v8071
    %v10680 = vunpack.c.h.b16 %v8071
    %v10681 = vunpack.c.l.b16 %v8072
    %v10682 = vunpack.c.h.b16 %v8072
    %v10683 = vunpack.c.l.b16 %v8073
    %v10684 = vunpack.c.h.b16 %v8073
    %v10685 = vunpack.c.l.b16 %v8074
    %v10686 = vunpack.c.l.b16 %v8075
    %v10687 = vunpack.c.h.b16 %v8075
    %v10688 = vunpack.c.l.b16 %v8076
    %v10689 = vunpack.c.h.b16 %v8076
    %v10690 = vunpack.c.l.b16 %v8077
    %v10691 = vunpack.c.h.b16 %v8077
    %v10692 = vunpack.c.l.b16 %v8078
    %v10693 = vunpack.c.h.b16 %v8078
    %v10694 = vunpack.c.l.b16 %v8079
    %v10695 = vunpack.c.h.b16 %v8079
    %v10696 = vunpack.c.l.b16 %v8080
    %v10697 = vunpack.c.l.b16 %v8081
    %v10698 = vunpack.c.h.b16 %v8081
    %v10699 = vunpack.c.l.b16 %v8082
    %v10700 = vunpack.c.h.b16 %v8082
    %v10701 = vunpack.c.l.b16 %v8083
    %v10702 = vunpack.c.h.b16 %v8083
    %v10703 = vunpack.c.l.b16 %v8084
    %v10704 = vunpack.c.h.b16 %v8084
    %v10705 = vunpack.c.l.b16 %v8085
    %v10706 = vunpack.c.h.b16 %v8085
    %v10707 = vunpack.c.l.b16 %v8086
    %v10708 = vunpack.c.l.b16 %v8087
    %v10709 = vunpack.c.h.b16 %v8087
    %v10710 = vunpack.c.l.b16 %v8088
    %v10711 = vunpack.c.h.b16 %v8088
    %v10712 = vunpack.c.l.b16 %v8089
    %v10713 = vunpack.c.h.b16 %v8089
    %v10714 = vunpack.c.l.b16 %v8090
    %v10715 = vunpack.c.h.b16 %v8090
    %v10716 = vunpack.c.l.b16 %v8091
    %v10717 = vunpack.c.h.b16 %v8091
    %v10718 = vunpack.c.l.b16 %v8092
    %v10719 = vunpack.c.l.b16 %v8093
    %v10720 = vunpack.c.h.b16 %v8093
    %v10721 = vunpack.c.l.b16 %v8094
    %v10722 = vunpack.c.h.b16 %v8094
    %v10723 = vunpack.c.l.b16 %v8095
    %v10724 = vunpack.c.h.b16 %v8095
    %v10725 = vunpack.c.l.b16 %v8096
    %v10726 = vunpack.c.h.b16 %v8096
    %v10727 = vunpack.c.l.b16 %v8097
    %v10728 = vunpack.c.h.b16 %v8097
    %v10729 = vunpack.c.l.b16 %v8098
    %v10730 = vunpack.c.l.b16 %v8099
    %v10731 = vunpack.c.h.b16 %v8099
    %v10732 = vunpack.c.l.b16 %v8100
    %v10733 = vunpack.c.h.b16 %v8100
    %v10734 = vunpack.c.l.b16 %v8101
    %v10735 = vunpack.c.h.b16 %v8101
    %v10736 = vunpack.c.l.b16 %v8102
    %v10737 = vunpack.c.h.b16 %v8102
    %v10738 = vunpack.c.l.b16 %v8103
    %v10739 = vunpack.c.h.b16 %v8103
    %v10740 = vunpack.c.l.b16 %v8104
    %v10741 = vunpack.c.l.b16 %v8105
    %v10742 = vunpack.c.h.b16 %v8105
    %v10743 = vunpack.c.l.b16 %v8106
    %v10744 = vunpack.c.h.b16 %v8106
    %v10745 = vunpack.c.l.b16 %v8107
    %v10746 = vunpack.c.h.b16 %v8107
    %v10747 = vunpack.c.l.b16 %v8108
    %v10748 = vunpack.c.h.b16 %v8108
    %v10749 = vunpack.c.l.b16 %v8109
    %v10750 = vunpack.c.h.b16 %v8109
    %v10751 = vunpack.c.l.b16 %v8110
    %v10752 = vunpack.c.l.b16 %v8111
    %v10753 = vunpack.c.h.b16 %v8111
    %v10754 = vunpack.c.l.b16 %v8112
    %v10755 = vunpack.c.h.b16 %v8112
    %v10756 = vunpack.c.l.b16 %v8113
    %v10757 = vunpack.c.h.b16 %v8113
    %v10758 = vunpack.c.l.b16 %v8114
    %v10759 = vunpack.c.h.b16 %v8114
    %v10760 = vunpack.c.l.b16 %v8115
    %v10761 = vunpack.c.h.b16 %v8115
    %v10762 = vunpack.c.l.b16 %v8116
    %v10763 = vunpack.c.l.b16 %v8117
    %v10764 = vunpack.c.h.b16 %v8117
    %v10765 = vunpack.c.l.b16 %v8118
    %v10766 = vunpack.c.h.b16 %v8118
    %v10767 = vunpack.c.l.b16 %v8119
    %v10768 = vunpack.c.h.b16 %v8119
    %v10769 = vunpack.c.l.b16 %v8120
    %v10770 = vunpack.c.h.b16 %v8120
    %v10771 = vunpack.c.l.b16 %v8121
    %v10772 = vunpack.c.h.b16 %v8121
    %v10773 = vunpack.c.l.b16 %v8122
    %v10774 = vunpack.c.l.b16 %v8123
    %v10775 = vunpack.c.h.b16 %v8123
    %v10776 = vunpack.c.l.b16 %v8124
    %v10777 = vunpack.c.h.b16 %v8124
    %v10778 = vunpack.c.l.b16 %v8125
    %v10779 = vunpack.c.h.b16 %v8125
    %v10780 = vunpack.c.l.b16 %v8126
    %v10781 = vunpack.c.h.b16 %v8126
    %v10782 = vunpack.c.l.b16 %v8127
    %v10783 = vunpack.c.h.b16 %v8127
    %v10784 = vunpack.c.l.b16 %v8128
    %v10785 = vunpack.c.l.b16 %v8129
    %v10786 = vunpack.c.h.b16 %v8129
    %v10787 = vunpack.c.l.b16 %v8130
    %v10788 = vunpack.c.h.b16 %v8130
    %v10789 = vunpack.c.l.b16 %v8131
    %v10790 = vunpack.c.h.b16 %v8131
    %v10791 = vunpack.c.l.b16 %v8132
    %v10792 = vunpack.c.h.b16 %v8132
    %v10793 = vunpack.c.l.b16 %v8133
    %v10794 = vunpack.c.h.b16 %v8133
    %v10795 = vunpack.c.l.b16 %v8134
    %v10796 = vunpack.c.l.b16 %v8135
    %v10797 = vunpack.c.h.b16 %v8135
    %v10798 = vunpack.c.l.b16 %v8136
    %v10799 = vunpack.c.h.b16 %v8136
    %v10800 = vunpack.c.l.b16 %v8137
    %v10801 = vunpack.c.h.b16 %v8137
    %v10802 = vunpack.c.l.b16 %v8138
    %v10803 = vunpack.c.h.b16 %v8138
    %v10804 = vunpack.c.l.b16 %v8139
    %v10805 = vunpack.c.h.b16 %v8139
    %v10806 = vunpack.c.l.b16 %v8140
    %v10807 = vunpack.c.l.b16 %v8141
    %v10808 = vunpack.c.h.b16 %v8141
    %v10809 = vunpack.c.l.b16 %v8142
    %v10810 = vunpack.c.h.b16 %v8142
    %v10811 = vunpack.c.l.b16 %v8143
    %v10812 = vunpack.c.h.b16 %v8143
    %v10813 = vunpack.c.l.b16 %v8144
    %v10814 = vunpack.c.h.b16 %v8144
    %v10815 = vunpack.c.l.b16 %v8145
    %v10816 = vunpack.c.h.b16 %v8145
    %v10817 = vunpack.c.l.b16 %v8146
    %v10818 = vunpack.c.l.b16 %v8147
    %v10819 = vunpack.c.h.b16 %v8147
    %v10820 = vunpack.c.l.b16 %v8148
    %v10821 = vunpack.c.h.b16 %v8148
    %v10822 = vunpack.c.l.b16 %v8149
    %v10823 = vunpack.c.h.b16 %v8149
    %v10824 = vunpack.c.l.b16 %v8150
    %v10825 = vunpack.c.h.b16 %v8150
    %v10826 = vunpack.c.l.b16 %v8151
    %v10827 = vunpack.c.h.b16 %v8151
    %v10828 = vunpack.c.l.b16 %v8152
    %v10829 = vunpack.c.l.b16 %v8153
    %v10830 = vunpack.c.h.b16 %v8153
    %v10831 = vunpack.c.l.b16 %v8154
    %v10832 = vunpack.c.h.b16 %v8154
    %v10833 = vunpack.c.l.b16 %v8155
    %v10834 = vunpack.c.h.b16 %v8155
    %v10835 = vunpack.c.l.b16 %v8156
    %v10836 = vunpack.c.h.b16 %v8156
    %v10837 = vunpack.c.l.b16 %v8157
    %v10838 = vunpack.c.h.b16 %v8157
    %v10839 = vunpack.c.l.b16 %v8158
    %v10840 = vunpack.c.l.b16 %v8159
    %v10841 = vunpack.c.h.b16 %v8159
    %v10842 = vunpack.c.l.b16 %v8160
    %v10843 = vunpack.c.h.b16 %v8160
    %v10844 = vunpack.c.l.b16 %v8161
    %v10845 = vunpack.c.h.b16 %v8161
    %v10846 = vunpack.c.l.b16 %v8162
    %v10847 = vunpack.c.h.b16 %v8162
    %v10848 = vunpack.c.l.b16 %v8163
    %v10849 = vunpack.c.h.b16 %v8163
    %v10850 = vunpack.c.l.b16 %v8164
    %v10851 = vunpack.c.l.b16 %v8165
    %v10852 = vunpack.c.h.b16 %v8165
    %v10853 = vunpack.c.l.b16 %v8166
    %v10854 = vunpack.c.h.b16 %v8166
    %v10855 = vunpack.c.l.b16 %v8167
    %v10856 = vunpack.c.h.b16 %v8167
    %v10857 = vunpack.c.l.b16 %v8168
    %v10858 = vunpack.c.h.b16 %v8168
    %v10859 = vunpack.c.l.b16 %v8169
    %v10860 = vunpack.c.h.b16 %v8169
    %v10861 = vunpack.c.l.b16 %v8170
    %v10862 = vunpack.c.l.b16 %v8171
    %v10863 = vunpack.c.h.b16 %v8171
    %v10864 = vunpack.c.l.b16 %v8172
    %v10865 = vunpack.c.h.b16 %v8172
    %v10866 = vunpack.c.l.b16 %v8173
    %v10867 = vunpack.c.h.b16 %v8173
    %v10868 = vunpack.c.l.b16 %v8174
    %v10869 = vunpack.c.h.b16 %v8174
    %v10870 = vunpack.c.l.b16 %v8175
    %v10871 = vunpack.c.h.b16 %v8175
    %v10872 = vunpack.c.l.b16 %v8176
    %v10873 = vunpack.c.l.b16 %v8177
    %v10874 = vunpack.c.h.b16 %v8177
    %v10875 = vunpack.c.l.b16 %v8178
    %v10876 = vunpack.c.h.b16 %v8178
    %v10877 = vunpack.c.l.b16 %v8179
    %v10878 = vunpack.c.h.b16 %v8179
    %v10879 = vunpack.c.l.b16 %v8180
    %v10880 = vunpack.c.h.b16 %v8180
    %v10881 = vunpack.c.l.b16 %v8181
    %v10882 = vunpack.c.h.b16 %v8181
    %v10883 = vunpack.c.l.b16 %v8182
    %v10884 = vunpack.c.l.b16 %v8183
    %v10885 = vunpack.c.h.b16 %v8183
    %v10886 = vunpack.c.l.b16 %v8184
    %v10887 = vunpack.c.h.b16 %v8184
    %v10888 = vunpack.c.l.b16 %v8185
    %v10889 = vunpack.c.h.b16 %v8185
    %v10890 = vunpack.c.l.b16 %v8186
    %v10891 = vunpack.c.h.b16 %v8186
    %v10892 = vunpack.c.l.b16 %v8187
    %v10893 = vunpack.c.h.b16 %v8187
    %v10894 = vunpack.c.l.b16 %v8188
    %v10895 = vunpack.c.l.b16 %v8189
    %v10896 = vunpack.c.h.b16 %v8189
    %v10897 = vunpack.c.l.b16 %v8190
    %v10898 = vunpack.c.h.b16 %v8190
    %v10899 = vunpack.c.l.b16 %v8191
    %v10900 = vunpack.c.h.b16 %v8191
    %v10901 = vunpack.c.l.b16 %v8192
    %v10902 = vunpack.c.h.b16 %v8192
    %v10903 = vunpack.c.l.b16 %v8193
    %v10904 = vunpack.c.h.b16 %v8193
    %v10905 = vunpack.c.l.b16 %v8194
    %v10906 = vunpack.c.l.b16 %v8195
    %v10907 = vunpack.c.h.b16 %v8195
    %v10908 = vunpack.c.l.b16 %v8196
    %v10909 = vunpack.c.h.b16 %v8196
    %v10910 = vunpack.c.l.b16 %v8197
    %v10911 = vunpack.c.h.b16 %v8197
    %v10912 = vunpack.c.l.b16 %v8198
    %v10913 = vunpack.c.h.b16 %v8198
    %v10914 = vunpack.c.l.b16 %v8199
    %v10915 = vunpack.c.h.b16 %v8199
    %v10916 = vunpack.c.l.b16 %v8200
    %v10917 = vunpack.c.l.b16 %v8201
    %v10918 = vunpack.c.h.b16 %v8201
    %v10919 = vunpack.c.l.b16 %v8202
    %v10920 = vunpack.c.h.b16 %v8202
    %v10921 = vunpack.c.l.b16 %v8203
    %v10922 = vunpack.c.h.b16 %v8203
    %v10923 = vunpack.c.l.b16 %v8204
    %v10924 = vunpack.c.h.b16 %v8204
    %v10925 = vunpack.c.l.b16 %v8205
    %v10926 = vunpack.c.h.b16 %v8205
    %v10927 = vunpack.c.l.b16 %v8206
    %v10928 = vunpack.c.l.b16 %v8207
    %v10929 = vunpack.c.h.b16 %v8207
    %v10930 = vunpack.c.l.b16 %v8208
    %v10931 = vunpack.c.h.b16 %v8208
    %v10932 = vunpack.c.l.b16 %v8209
    %v10933 = vunpack.c.h.b16 %v8209
    %v10934 = vunpack.c.l.b16 %v8210
    %v10935 = vunpack.c.h.b16 %v8210
    %v10936 = vunpack.c.l.b16 %v8211
    %v10937 = vunpack.c.h.b16 %v8211
    %v10938 = vunpack.c.l.b16 %v8212
    %v10939 = vunpack.c.l.b16 %v8213
    %v10940 = vunpack.c.h.b16 %v8213
    %v10941 = vunpack.c.l.b16 %v8214
    %v10942 = vunpack.c.h.b16 %v8214
    %v10943 = vunpack.c.l.b16 %v8215
    %v10944 = vunpack.c.h.b16 %v8215
    %v10945 = vunpack.c.l.b16 %v8216
    %v10946 = vunpack.c.h.b16 %v8216
    %v10947 = vunpack.c.l.b16 %v8217
    %v10948 = vunpack.c.h.b16 %v8217
    %v10949 = vunpack.c.l.b16 %v8218
    %v10950 = vunpack.c.l.b16 %v8219
    %v10951 = vunpack.c.h.b16 %v8219
    %v10952 = vunpack.c.l.b16 %v8220
    %v10953 = vunpack.c.h.b16 %v8220
    %v10954 = vunpack.c.l.b16 %v8221
    %v10955 = vunpack.c.h.b16 %v8221
    %v10956 = vunpack.c.l.b16 %v8222
    %v10957 = vunpack.c.h.b16 %v8222
    %v10958 = vunpack.c.l.b16 %v8223
    %v10959 = vunpack.c.h.b16 %v8223
    %v10960 = vunpack.c.l.b16 %v8224
    %v10961 = vunpack.c.l.b16 %v8225
    %v10962 = vunpack.c.h.b16 %v8225
    %v10963 = vunpack.c.l.b16 %v8226
    %v10964 = vunpack.c.h.b16 %v8226
    %v10965 = vunpack.c.l.b16 %v8227
    %v10966 = vunpack.c.h.b16 %v8227
    %v10967 = vunpack.c.l.b16 %v8228
    %v10968 = vunpack.c.h.b16 %v8228
    %v10969 = vunpack.c.l.b16 %v8229
    %v10970 = vunpack.c.h.b16 %v8229
    %v10971 = vunpack.c.l.b16 %v8230
    %v10972 = vunpack.c.l.b16 %v8231
    %v10973 = vunpack.c.h.b16 %v8231
    %v10974 = vunpack.c.l.b16 %v8232
    %v10975 = vunpack.c.h.b16 %v8232
    %v10976 = vunpack.c.l.b16 %v8233
    %v10977 = vunpack.c.h.b16 %v8233
    %v10978 = vunpack.c.l.b16 %v8234
    %v10979 = vunpack.c.h.b16 %v8234
    %v10980 = vunpack.c.l.b16 %v8235
    %v10981 = vunpack.c.h.b16 %v8235
    %v10982 = vunpack.c.l.b16 %v8236
    %v10983 = vunpack.c.l.b16 %v8237
    %v10984 = vunpack.c.h.b16 %v8237
    %v10985 = vunpack.c.l.b16 %v8238
    %v10986 = vunpack.c.h.b16 %v8238
    %v10987 = vunpack.c.l.b16 %v8239
    %v10988 = vunpack.c.h.b16 %v8239
    %v10989 = vunpack.c.l.b16 %v8240
    %v10990 = vunpack.c.h.b16 %v8240
    %v10991 = vunpack.c.l.b16 %v8241
    %v10992 = vunpack.c.h.b16 %v8241
    %v10993 = vunpack.c.l.b16 %v8242
    %v10994 = vunpack.c.l.b16 %v8243
    %v10995 = vunpack.c.h.b16 %v8243
    %v10996 = vunpack.c.l.b16 %v8244
    %v10997 = vunpack.c.h.b16 %v8244
    %v10998 = vunpack.c.l.b16 %v8245
    %v10999 = vunpack.c.h.b16 %v8245
    %v11000 = vunpack.c.l.b16 %v8246
    %v11001 = vunpack.c.h.b16 %v8246
    %v11002 = vunpack.c.l.b16 %v8247
    %v11003 = vunpack.c.h.b16 %v8247
    %v11004 = vunpack.c.l.b16 %v8248
    %v11005 = vunpack.c.l.b16 %v8249
    %v11006 = vunpack.c.h.b16 %v8249
    %v11007 = vunpack.c.l.b16 %v8250
    %v11008 = vunpack.c.h.b16 %v8250
    %v11009 = vunpack.c.l.b16 %v8251
    %v11010 = vunpack.c.h.b16 %v8251
    %v11011 = vunpack.c.l.b16 %v8252
    %v11012 = vunpack.c.h.b16 %v8252
    %v11013 = vunpack.c.l.b16 %v8253
    %v11014 = vunpack.c.h.b16 %v8253
    %v11015 = vunpack.c.l.b16 %v8254
    %v11016 = vunpack.c.l.b16 %v8255
    %v11017 = vunpack.c.h.b16 %v8255
    %v11018 = vunpack.c.l.b16 %v8256
    %v11019 = vunpack.c.h.b16 %v8256
    %v11020 = vunpack.c.l.b16 %v8257
    %v11021 = vunpack.c.h.b16 %v8257
    %v11022 = vunpack.c.l.b16 %v8258
    %v11023 = vunpack.c.h.b16 %v8258
    %v11024 = vunpack.c.l.b16 %v8259
    %v11025 = vunpack.c.h.b16 %v8259
    %v11026 = vunpack.c.l.b16 %v8260
    %v11027 = vunpack.c.l.b16 %v8261
    %v11028 = vunpack.c.h.b16 %v8261
    %v11029 = vunpack.c.l.b16 %v8262
    %v11030 = vunpack.c.h.b16 %v8262
    %v11031 = vunpack.c.l.b16 %v8263
    %v11032 = vunpack.c.h.b16 %v8263
    %v11033 = vunpack.c.l.b16 %v8264
    %v11034 = vunpack.c.h.b16 %v8264
    %v11035 = vunpack.c.l.b16 %v8265
    %v11036 = vunpack.c.h.b16 %v8265
    %v11037 = vunpack.c.l.b16 %v8266
    %v11038 = vunpack.c.l.b16 %v8267
    %v11039 = vunpack.c.h.b16 %v8267
    %v11040 = vunpack.c.l.b16 %v8268
    %v11041 = vunpack.c.h.b16 %v8268
    %v11042 = vunpack.c.l.b16 %v8269
    %v11043 = vunpack.c.h.b16 %v8269
    %v11044 = vunpack.c.l.b16 %v8270
    %v11045 = vunpack.c.h.b16 %v8270
    %v11046 = vunpack.c.l.b16 %v8271
    %v11047 = vunpack.c.h.b16 %v8271
    %v11048 = vunpack.c.l.b16 %v8272
    %v11049 = vunpack.c.l.b16 %v8273
    %v11050 = vunpack.c.h.b16 %v8273
    %v11051 = vunpack.c.l.b16 %v8274
    %v11052 = vunpack.c.h.b16 %v8274
    %v11053 = vunpack.c.l.b16 %v8275
    %v11054 = vunpack.c.h.b16 %v8275
    %v11055 = vunpack.c.l.b16 %v8276
    %v11056 = vunpack.c.h.b16 %v8276
    %v11057 = vunpack.c.l.b16 %v8277
    %v11058 = vunpack.c.h.b16 %v8277
    %v11059 = vunpack.c.l.b16 %v8278
    %v11060 = vunpack.c.l.b16 %v8279
    %v11061 = vunpack.c.h.b16 %v8279
    %v11062 = vunpack.c.l.b16 %v8280
    %v11063 = vunpack.c.h.b16 %v8280
    %v11064 = vunpack.c.l.b16 %v8281
    %v11065 = vunpack.c.h.b16 %v8281
    %v11066 = vunpack.c.l.b16 %v8282
    %v11067 = vunpack.c.h.b16 %v8282
    %v11068 = vunpack.c.l.b16 %v8283
    %v11069 = vunpack.c.h.b16 %v8283
    %v11070 = vunpack.c.l.b16 %v8284
    %v11071 = vunpack.c.l.b16 %v8285
    %v11072 = vunpack.c.h.b16 %v8285
    %v11073 = vunpack.c.l.b16 %v8286
    %v11074 = vunpack.c.h.b16 %v8286
    %v11075 = vunpack.c.l.b16 %v8287
    %v11076 = vunpack.c.h.b16 %v8287
    %v11077 = vunpack.c.l.b16 %v8288
    %v11078 = vunpack.c.h.b16 %v8288
    %v11079 = vunpack.c.l.b16 %v8289
    %v11080 = vunpack.c.h.b16 %v8289
    %v11081 = vunpack.c.l.b16 %v8290
    %v11082 = vunpack.c.l.b16 %v8291
    %v11083 = vunpack.c.h.b16 %v8291
    %v11084 = vunpack.c.l.b16 %v8292
    %v11085 = vunpack.c.h.b16 %v8292
    %v11086 = vunpack.c.l.b16 %v8293
    %v11087 = vunpack.c.h.b16 %v8293
    %v11088 = vunpack.c.l.b16 %v8294
    %v11089 = vunpack.c.h.b16 %v8294
    %v11090 = vunpack.c.l.b16 %v8295
    %v11091 = vunpack.c.h.b16 %v8295
    %v11092 = vunpack.c.l.b16 %v8296
    %v11093 = vunpack.c.l.b16 %v8297
    %v11094 = vunpack.c.h.b16 %v8297
    %v11095 = vunpack.c.l.b16 %v8298
    %v11096 = vunpack.c.h.b16 %v8298
    %v11097 = vunpack.c.l.b16 %v8299
    %v11098 = vunpack.c.h.b16 %v8299
    %v11099 = vunpack.c.l.b16 %v8300
    %v11100 = vunpack.c.h.b16 %v8300
    %v11101 = vunpack.c.l.b16 %v8301
    %v11102 = vunpack.c.h.b16 %v8301
    %v11103 = vunpack.c.l.b16 %v8302
    %v11104 = vunpack.c.l.b16 %v8303
    %v11105 = vunpack.c.h.b16 %v8303
    %v11106 = vunpack.c.l.b16 %v8304
    %v11107 = vunpack.c.h.b16 %v8304
    %v11108 = vunpack.c.l.b16 %v8305
    %v11109 = vunpack.c.h.b16 %v8305
    %v11110 = vunpack.c.l.b16 %v8306
    %v11111 = vunpack.c.h.b16 %v8306
    %v11112 = vunpack.c.l.b16 %v8307
    %v11113 = vunpack.c.h.b16 %v8307
    %v11114 = vunpack.c.l.b16 %v8308
    %v11115 = vunpack.c.l.b16 %v8309
    %v11116 = vunpack.c.h.b16 %v8309
    %v11117 = vunpack.c.l.b16 %v8310
    %v11118 = vunpack.c.h.b16 %v8310
    %v11119 = vunpack.c.l.b16 %v8311
    %v11120 = vunpack.c.h.b16 %v8311
    %v11121 = vunpack.c.l.b16 %v8312
    %v11122 = vunpack.c.h.b16 %v8312
    %v11123 = vunpack.c.l.b16 %v8313
    %v11124 = vunpack.c.h.b16 %v8313
    %v11125 = vunpack.c.l.b16 %v8314
    %v11126 = vunpack.c.l.b16 %v8315
    %v11127 = vunpack.c.h.b16 %v8315
    %v11128 = vunpack.c.l.b16 %v8316
    %v11129 = vunpack.c.h.b16 %v8316
    %v11130 = vunpack.c.l.b16 %v8317
    %v11131 = vunpack.c.h.b16 %v8317
    %v11132 = vunpack.c.l.b16 %v8318
    %v11133 = vunpack.c.h.b16 %v8318
    %v11134 = vunpack.c.l.b16 %v8319
    %v11135 = vunpack.c.h.b16 %v8319
    %v11136 = vunpack.c.l.b16 %v8320
    %v11137 = vunpack.c.l.b16 %v8321
    %v11138 = vunpack.c.h.b16 %v8321
    %v11139 = vunpack.c.l.b16 %v8322
    %v11140 = vunpack.c.h.b16 %v8322
    %v11141 = vunpack.c.l.b16 %v8323
    %v11142 = vunpack.c.h.b16 %v8323
    %v11143 = vunpack.c.l.b16 %v8324
    %v11144 = vunpack.c.h.b16 %v8324
    %v11145 = vunpack.c.l.b16 %v8325
    %v11146 = vunpack.c.h.b16 %v8325
    %v11147 = vunpack.c.l.b16 %v8326
    %v11148 = vunpack.c.l.b16 %v8327
    %v11149 = vunpack.c.h.b16 %v8327
    %v11150 = vunpack.c.l.b16 %v8328
    %v11151 = vunpack.c.h.b16 %v8328
    %v11152 = vunpack.c.l.b16 %v8329
    %v11153 = vunpack.c.h.b16 %v8329
    %v11154 = vunpack.c.l.b16 %v8330
    %v11155 = vunpack.c.h.b16 %v8330
    %v11156 = vunpack.c.l.b16 %v8331
    %v11157 = vunpack.c.h.b16 %v8331
    %v11158 = vunpack.c.l.b16 %v8332
    %v11159 = vunpack.c.l.b16 %v8333
    %v11160 = vunpack.c.h.b16 %v8333
    %v11161 = vunpack.c.l.b16 %v8334
    %v11162 = vunpack.c.h.b16 %v8334
    %v11163 = vunpack.c.l.b16 %v8335
    %v11164 = vunpack.c.h.b16 %v8335
    %v11165 = vunpack.c.l.b16 %v8336
    %v11166 = vunpack.c.h.b16 %v8336
    %v11167 = vunpack.c.l.b16 %v8337
    %v11168 = vunpack.c.h.b16 %v8337
    %v11169 = vunpack.c.l.b16 %v8338
    %v11170 = vunpack.c.l.b16 %v8339
    %v11171 = vunpack.c.h.b16 %v8339
    %v11172 = vunpack.c.l.b16 %v8340
    %v11173 = vunpack.c.h.b16 %v8340
    %v11174 = vunpack.c.l.b16 %v8341
    %v11175 = vunpack.c.h.b16 %v8341
    %v11176 = vunpack.c.l.b16 %v8342
    %v11177 = vunpack.c.h.b16 %v8342
    %v11178 = vunpack.c.l.b16 %v8343
    %v11179 = vunpack.c.h.b16 %v8343
    %v11180 = vunpack.c.l.b16 %v8344
    %v11181 = vunpack.c.l.b16 %v8345
    %v11182 = vunpack.c.h.b16 %v8345
    %v11183 = vunpack.c.l.b16 %v8346
    %v11184 = vunpack.c.h.b16 %v8346
    %v11185 = vunpack.c.l.b16 %v8347
    %v11186 = vunpack.c.h.b16 %v8347
    %v11187 = vunpack.c.l.b16 %v8348
    %v11188 = vunpack.c.h.b16 %v8348
    %v11189 = vunpack.c.l.b16 %v8349
    %v11190 = vunpack.c.h.b16 %v8349
    %v11191 = vunpack.c.l.b16 %v8350
    %v11192 = vunpack.c.l.b16 %v8351
    %v11193 = vunpack.c.h.b16 %v8351
    %v11194 = vunpack.c.l.b16 %v8352
    %v11195 = vunpack.c.h.b16 %v8352
    %v11196 = vunpack.c.l.b16 %v8353
    %v11197 = vunpack.c.h.b16 %v8353
    %v11198 = vunpack.c.l.b16 %v8354
    %v11199 = vunpack.c.h.b16 %v8354
    %v11200 = vunpack.c.l.b16 %v8355
    %v11201 = vunpack.c.h.b16 %v8355
    %v11202 = vunpack.c.l.b16 %v8356
    %v11203 = vunpack.c.l.b16 %v8357
    %v11204 = vunpack.c.h.b16 %v8357
    %v11205 = vunpack.c.l.b16 %v8358
    %v11206 = vunpack.c.h.b16 %v8358
    %v11207 = vunpack.c.l.b16 %v8359
    %v11208 = vunpack.c.h.b16 %v8359
    %v11209 = vunpack.c.l.b16 %v8360
    %v11210 = vunpack.c.h.b16 %v8360
    %v11211 = vunpack.c.l.b16 %v8361
    %v11212 = vunpack.c.h.b16 %v8361
    %v11213 = vunpack.c.l.b16 %v8362
    %v11214 = vunpack.c.l.b16 %v8363
    %v11215 = vunpack.c.h.b16 %v8363
    %v11216 = vunpack.c.l.b16 %v8364
    %v11217 = vunpack.c.h.b16 %v8364
    %v11218 = vunpack.c.l.b16 %v8365
    %v11219 = vunpack.c.h.b16 %v8365
    %v11220 = vunpack.c.l.b16 %v8366
    %v11221 = vunpack.c.h.b16 %v8366
    %v11222 = vunpack.c.l.b16 %v8367
    %v11223 = vunpack.c.h.b16 %v8367
    %v11224 = vunpack.c.l.b16 %v8368
    %v11225 = vpack.c.b16 %v9388, %v9377
    %v11226 = vpack.c.b16 %v9389, %v9378
    %v11227 = vpack.c.b16 %v9390, %v9379
    %v11228 = vpack.c.b16 %v9391, %v9380
    %v11229 = vpack.c.b16 %v9392, %v9381
    %v11230 = vpack.c.b16 %v9393, %v9382
    %v11231 = vpack.c.b16 %v9394, %v9383
    %v11232 = vpack.c.b16 %v9395, %v9384
    %v11233 = vpack.c.b16 %v9396, %v9385
    %v11234 = vpack.c.b16 %v9397, %v9386
    %v11235 = vpack.c.b16 %v9398, %v9387
    %v11236 = vpack.c.b16 %v9410, %v9399
    %v11237 = vpack.c.b16 %v9411, %v9400
    %v11238 = vpack.c.b16 %v9412, %v9401
    %v11239 = vpack.c.b16 %v9413, %v9402
    %v11240 = vpack.c.b16 %v9414, %v9403
    %v11241 = vpack.c.b16 %v9415, %v9404
    %v11242 = vpack.c.b16 %v9416, %v9405
    %v11243 = vpack.c.b16 %v9417, %v9406
    %v11244 = vpack.c.b16 %v9418, %v9407
    %v11245 = vpack.c.b16 %v9419, %v9408
    %v11246 = vpack.c.b16 %v9420, %v9409
    %v11247 = vpack.c.b16 %v9432, %v9421
    %v11248 = vpack.c.b16 %v9433, %v9422
    %v11249 = vpack.c.b16 %v9434, %v9423
    %v11250 = vpack.c.b16 %v9435, %v9424
    %v11251 = vpack.c.b16 %v9436, %v9425
    %v11252 = vpack.c.b16 %v9437, %v9426
    %v11253 = vpack.c.b16 %v9438, %v9427
    %v11254 = vpack.c.b16 %v9439, %v9428
    %v11255 = vpack.c.b16 %v9440, %v9429
    %v11256 = vpack.c.b16 %v9441, %v9430
    %v11257 = vpack.c.b16 %v9442, %v9431
    %v11258 = vpack.c.b16 %v9454, %v9443
    %v11259 = vpack.c.b16 %v9455, %v9444
    %v11260 = vpack.c.b16 %v9456, %v9445
    %v11261 = vpack.c.b16 %v9457, %v9446
    %v11262 = vpack.c.b16 %v9458, %v9447
    %v11263 = vpack.c.b16 %v9459, %v9448
    %v11264 = vpack.c.b16 %v9460, %v9449
    %v11265 = vpack.c.b16 %v9461, %v9450
    %v11266 = vpack.c.b16 %v9462, %v9451
    %v11267 = vpack.c.b16 %v9463, %v9452
    %v11268 = vpack.c.b16 %v9464, %v9453
    %v11269 = vpack.c.b16 %v9476, %v9465
    %v11270 = vpack.c.b16 %v9477, %v9466
    %v11271 = vpack.c.b16 %v9478, %v9467
    %v11272 = vpack.c.b16 %v9479, %v9468
    %v11273 = vpack.c.b16 %v9480, %v9469
    %v11274 = vpack.c.b16 %v9481, %v9470
    %v11275 = vpack.c.b16 %v9482, %v9471
    %v11276 = vpack.c.b16 %v9483, %v9472
    %v11277 = vpack.c.b16 %v9484, %v9473
    %v11278 = vpack.c.b16 %v9485, %v9474
    %v11279 = vpack.c.b16 %v9486, %v9475
    %v11280 = vpack.c.b16 %v9498, %v9487
    %v11281 = vpack.c.b16 %v9499, %v9488
    %v11282 = vpack.c.b16 %v9500, %v9489
    %v11283 = vpack.c.b16 %v9501, %v9490
    %v11284 = vpack.c.b16 %v9502, %v9491
    %v11285 = vpack.c.b16 %v9503, %v9492
    %v11286 = vpack.c.b16 %v9504, %v9493
    %v11287 = vpack.c.b16 %v9505, %v9494
    %v11288 = vpack.c.b16 %v9506, %v9495
    %v11289 = vpack.c.b16 %v9507, %v9496
    %v11290 = vpack.c.b16 %v9508, %v9497
    %v11291 = vpack.c.b16 %v9520, %v9509
    %v11292 = vpack.c.b16 %v9521, %v9510
    %v11293 = vpack.c.b16 %v9522, %v9511
    %v11294 = vpack.c.b16 %v9523, %v9512
    %v11295 = vpack.c.b16 %v9524, %v9513
    %v11296 = vpack.c.b16 %v9525, %v9514
    %v11297 = vpack.c.b16 %v9526, %v9515
    %v11298 = vpack.c.b16 %v9527, %v9516
    %v11299 = vpack.c.b16 %v9528, %v9517
    %v11300 = vpack.c.b16 %v9529, %v9518
    %v11301 = vpack.c.b16 %v9530, %v9519
    %v11302 = vpack.c.b16 %v9542, %v9531
    %v11303 = vpack.c.b16 %v9543, %v9532
    %v11304 = vpack.c.b16 %v9544, %v9533
    %v11305 = vpack.c.b16 %v9545, %v9534
    %v11306 = vpack.c.b16 %v9546, %v9535
    %v11307 = vpack.c.b16 %v9547, %v9536
    %v11308 = vpack.c.b16 %v9548, %v9537
    %v11309 = vpack.c.b16 %v9549, %v9538
    %v11310 = vpack.c.b16 %v9550, %v9539
    %v11311 = vpack.c.b16 %v9551, %v9540
    %v11312 = vpack.c.b16 %v9552, %v9541
    %v11313 = vpack.c.b16 %v9564, %v9553
    %v11314 = vpack.c.b16 %v9565, %v9554
    %v11315 = vpack.c.b16 %v9566, %v9555
    %v11316 = vpack.c.b16 %v9567, %v9556
    %v11317 = vpack.c.b16 %v9568, %v9557
    %v11318 = vpack.c.b16 %v9569, %v9558
    %v11319 = vpack.c.b16 %v9570, %v9559
    %v11320 = vpack.c.b16 %v9571, %v9560
    %v11321 = vpack.c.b16 %v9572, %v9561
    %v11322 = vpack.c.b16 %v9573, %v9562
    %v11323 = vpack.c.b16 %v9574, %v9563
    %v11324 = vpack.c.b16 %v9586, %v9575
    %v11325 = vpack.c.b16 %v9587, %v9576
    %v11326 = vpack.c.b16 %v9588, %v9577
    %v11327 = vpack.c.b16 %v9589, %v9578
    %v11328 = vpack.c.b16 %v9590, %v9579
    %v11329 = vpack.c.b16 %v9591, %v9580
    %v11330 = vpack.c.b16 %v9592, %v9581
    %v11331 = vpack.c.b16 %v9593, %v9582
    %v11332 = vpack.c.b16 %v9594, %v9583
    %v11333 = vpack.c.b16 %v9595, %v9584
    %v11334 = vpack.c.b16 %v9596, %v9585
    %v11335 = vpack.c.b16 %v9608, %v9597
    %v11336 = vpack.c.b16 %v9609, %v9598
    %v11337 = vpack.c.b16 %v9610, %v9599
    %v11338 = vpack.c.b16 %v9611, %v9600
    %v11339 = vpack.c.b16 %v9612, %v9601
    %v11340 = vpack.c.b16 %v9613, %v9602
    %v11341 = vpack.c.b16 %v9614, %v9603
    %v11342 = vpack.c.b16 %v9615, %v9604
    %v11343 = vpack.c.b16 %v9616, %v9605
    %v11344 = vpack.c.b16 %v9617, %v9606
    %v11345 = vpack.c.b16 %v9618, %v9607
    %v11346 = vpack.c.b16 %v9630, %v9619
    %v11347 = vpack.c.b16 %v9631, %v9620
    %v11348 = vpack.c.b16 %v9632, %v9621
    %v11349 = vpack.c.b16 %v9633, %v9622
    %v11350 = vpack.c.b16 %v9634, %v9623
    %v11351 = vpack.c.b16 %v9635, %v9624
    %v11352 = vpack.c.b16 %v9636, %v9625
    %v11353 = vpack.c.b16 %v9637, %v9626
    %v11354 = vpack.c.b16 %v9638, %v9627
    %v11355 = vpack.c.b16 %v9639, %v9628
    %v11356 = vpack.c.b16 %v9640, %v9629
    %v11357 = vpack.c.b16 %v9652, %v9641
    %v11358 = vpack.c.b16 %v9653, %v9642
    %v11359 = vpack.c.b16 %v9654, %v9643
    %v11360 = vpack.c.b16 %v9655, %v9644
    %v11361 = vpack.c.b16 %v9656, %v9645
    %v11362 = vpack.c.b16 %v9657, %v9646
    %v11363 = vpack.c.b16 %v9658, %v9647
    %v11364 = vpack.c.b16 %v9659, %v9648
    %v11365 = vpack.c.b16 %v9660, %v9649
    %v11366 = vpack.c.b16 %v9661, %v9650
    %v11367 = vpack.c.b16 %v9662, %v9651
    %v11368 = vpack.c.b16 %v9674, %v9663
    %v11369 = vpack.c.b16 %v9675, %v9664
    %v11370 = vpack.c.b16 %v9676, %v9665
    %v11371 = vpack.c.b16 %v9677, %v9666
    %v11372 = vpack.c.b16 %v9678, %v9667
    %v11373 = vpack.c.b16 %v9679, %v9668
    %v11374 = vpack.c.b16 %v9680, %v9669
    %v11375 = vpack.c.b16 %v9681, %v9670
    %v11376 = vpack.c.b16 %v9682, %v9671
    %v11377 = vpack.c.b16 %v9683, %v9672
    %v11378 = vpack.c.b16 %v9684, %v9673
    %v11379 = vpack.c.b16 %v9696, %v9685
    %v11380 = vpack.c.b16 %v9697, %v9686
    %v11381 = vpack.c.b16 %v9698, %v9687
    %v11382 = vpack.c.b16 %v9699, %v9688
    %v11383 = vpack.c.b16 %v9700, %v9689
    %v11384 = vpack.c.b16 %v9701, %v9690
    %v11385 = vpack.c.b16 %v9702, %v9691
    %v11386 = vpack.c.b16 %v9703, %v9692
    %v11387 = vpack.c.b16 %v9704, %v9693
    %v11388 = vpack.c.b16 %v9705, %v9694
    %v11389 = vpack.c.b16 %v9706, %v9695
    %v11390 = vpack.c.b16 %v9718, %v9707
    %v11391 = vpack.c.b16 %v9719, %v9708
    %v11392 = vpack.c.b16 %v9720, %v9709
    %v11393 = vpack.c.b16 %v9721, %v9710
    %v11394 = vpack.c.b16 %v9722, %v9711
    %v11395 = vpack.c.b16 %v9723, %v9712
    %v11396 = vpack.c.b16 %v9724, %v9713
    %v11397 = vpack.c.b16 %v9725, %v9714
    %v11398 = vpack.c.b16 %v9726, %v9715
    %v11399 = vpack.c.b16 %v9727, %v9716
    %v11400 = vpack.c.b16 %v9728, %v9717
    %v11401 = vpack.c.b16 %v9740, %v9729
    %v11402 = vpack.c.b16 %v9741, %v9730
    %v11403 = vpack.c.b16 %v9742, %v9731
    %v11404 = vpack.c.b16 %v9743, %v9732
    %v11405 = vpack.c.b16 %v9744, %v9733
    %v11406 = vpack.c.b16 %v9745, %v9734
    %v11407 = vpack.c.b16 %v9746, %v9735
    %v11408 = vpack.c.b16 %v9747, %v9736
    %v11409 = vpack.c.b16 %v9748, %v9737
    %v11410 = vpack.c.b16 %v9749, %v9738
    %v11411 = vpack.c.b16 %v9750, %v9739
    %v11412 = vpack.c.b16 %v9762, %v9751
    %v11413 = vpack.c.b16 %v9763, %v9752
    %v11414 = vpack.c.b16 %v9764, %v9753
    %v11415 = vpack.c.b16 %v9765, %v9754
    %v11416 = vpack.c.b16 %v9766, %v9755
    %v11417 = vpack.c.b16 %v9767, %v9756
    %v11418 = vpack.c.b16 %v9768, %v9757
    %v11419 = vpack.c.b16 %v9769, %v9758
    %v11420 = vpack.c.b16 %v9770, %v9759
    %v11421 = vpack.c.b16 %v9771, %v9760
    %v11422 = vpack.c.b16 %v9772, %v9761
    %v11423 = vpack.c.b16 %v9784, %v9773
    %v11424 = vpack.c.b16 %v9785, %v9774
    %v11425 = vpack.c.b16 %v9786, %v9775
    %v11426 = vpack.c.b16 %v9787, %v9776
    %v11427 = vpack.c.b16 %v9788, %v9777
    %v11428 = vpack.c.b16 %v9789, %v9778
    %v11429 = vpack.c.b16 %v9790, %v9779
    %v11430 = vpack.c.b16 %v9791, %v9780
    %v11431 = vpack.c.b16 %v9792, %v9781
    %v11432 = vpack.c.b16 %v9793, %v9782
    %v11433 = vpack.c.b16 %v9794, %v9783
    %v11434 = vpack.c.b16 %v9806, %v9795
    %v11435 = vpack.c.b16 %v9807, %v9796
    %v11436 = vpack.c.b16 %v9808, %v9797
    %v11437 = vpack.c.b16 %v9809, %v9798
    %v11438 = vpack.c.b16 %v9810, %v9799
    %v11439 = vpack.c.b16 %v9811, %v9800
    %v11440 = vpack.c.b16 %v9812, %v9801
    %v11441 = vpack.c.b16 %v9813, %v9802
    %v11442 = vpack.c.b16 %v9814, %v9803
    %v11443 = vpack.c.b16 %v9815, %v9804
    %v11444 = vpack.c.b16 %v9816, %v9805
    %v11445 = vpack.c.b16 %v9828, %v9817
    %v11446 = vpack.c.b16 %v9829, %v9818
    %v11447 = vpack.c.b16 %v9830, %v9819
    %v11448 = vpack.c.b16 %v9831, %v9820
    %v11449 = vpack.c.b16 %v9832, %v9821
    %v11450 = vpack.c.b16 %v9833, %v9822
    %v11451 = vpack.c.b16 %v9834, %v9823
    %v11452 = vpack.c.b16 %v9835, %v9824
    %v11453 = vpack.c.b16 %v9836, %v9825
    %v11454 = vpack.c.b16 %v9837, %v9826
    %v11455 = vpack.c.b16 %v9838, %v9827
    %v11456 = vpack.c.b16 %v9850, %v9839
    %v11457 = vpack.c.b16 %v9851, %v9840
    %v11458 = vpack.c.b16 %v9852, %v9841
    %v11459 = vpack.c.b16 %v9853, %v9842
    %v11460 = vpack.c.b16 %v9854, %v9843
    %v11461 = vpack.c.b16 %v9855, %v9844
    %v11462 = vpack.c.b16 %v9856, %v9845
    %v11463 = vpack.c.b16 %v9857, %v9846
    %v11464 = vpack.c.b16 %v9858, %v9847
    %v11465 = vpack.c.b16 %v9859, %v9848
    %v11466 = vpack.c.b16 %v9860, %v9849
    %v11467 = vpack.c.b16 %v9872, %v9861
    %v11468 = vpack.c.b16 %v9873, %v9862
    %v11469 = vpack.c.b16 %v9874, %v9863
    %v11470 = vpack.c.b16 %v9875, %v9864
    %v11471 = vpack.c.b16 %v9876, %v9865
    %v11472 = vpack.c.b16 %v9877, %v9866
    %v11473 = vpack.c.b16 %v9878, %v9867
    %v11474 = vpack.c.b16 %v9879, %v9868
    %v11475 = vpack.c.b16 %v9880, %v9869
    %v11476 = vpack.c.b16 %v9881, %v9870
    %v11477 = vpack.c.b16 %v9882, %v9871
    %v11478 = vpack.c.b16 %v9894, %v9883
    %v11479 = vpack.c.b16 %v9895, %v9884
    %v11480 = vpack.c.b16 %v9896, %v9885
    %v11481 = vpack.c.b16 %v9897, %v9886
    %v11482 = vpack.c.b16 %v9898, %v9887
    %v11483 = vpack.c.b16 %v9899, %v9888
    %v11484 = vpack.c.b16 %v9900, %v9889
    %v11485 = vpack.c.b16 %v9901, %v9890
    %v11486 = vpack.c.b16 %v9902, %v9891
    %v11487 = vpack.c.b16 %v9903, %v9892
    %v11488 = vpack.c.b16 %v9904, %v9893
    %v11489 = vpack.c.b16 %v9916, %v9905
    %v11490 = vpack.c.b16 %v9917, %v9906
    %v11491 = vpack.c.b16 %v9918, %v9907
    %v11492 = vpack.c.b16 %v9919, %v9908
    %v11493 = vpack.c.b16 %v9920, %v9909
    %v11494 = vpack.c.b16 %v9921, %v9910
    %v11495 = vpack.c.b16 %v9922, %v9911
    %v11496 = vpack.c.b16 %v9923, %v9912
    %v11497 = vpack.c.b16 %v9924, %v9913
    %v11498 = vpack.c.b16 %v9925, %v9914
    %v11499 = vpack.c.b16 %v9926, %v9915
    %v11500 = vpack.c.b16 %v9938, %v9927
    %v11501 = vpack.c.b16 %v9939, %v9928
    %v11502 = vpack.c.b16 %v9940, %v9929
    %v11503 = vpack.c.b16 %v9941, %v9930
    %v11504 = vpack.c.b16 %v9942, %v9931
    %v11505 = vpack.c.b16 %v9943, %v9932
    %v11506 = vpack.c.b16 %v9944, %v9933
    %v11507 = vpack.c.b16 %v9945, %v9934
    %v11508 = vpack.c.b16 %v9946, %v9935
    %v11509 = vpack.c.b16 %v9947, %v9936
    %v11510 = vpack.c.b16 %v9948, %v9937
    %v11511 = vpack.c.b16 %v9960, %v9949
    %v11512 = vpack.c.b16 %v9961, %v9950
    %v11513 = vpack.c.b16 %v9962, %v9951
    %v11514 = vpack.c.b16 %v9963, %v9952
    %v11515 = vpack.c.b16 %v9964, %v9953
    %v11516 = vpack.c.b16 %v9965, %v9954
    %v11517 = vpack.c.b16 %v9966, %v9955
    %v11518 = vpack.c.b16 %v9967, %v9956
    %v11519 = vpack.c.b16 %v9968, %v9957
    %v11520 = vpack.c.b16 %v9969, %v9958
    %v11521 = vpack.c.b16 %v9970, %v9959
    %v11522 = vpack.c.b16 %v9982, %v9971
    %v11523 = vpack.c.b16 %v9983, %v9972
    %v11524 = vpack.c.b16 %v9984, %v9973
    %v11525 = vpack.c.b16 %v9985, %v9974
    %v11526 = vpack.c.b16 %v9986, %v9975
    %v11527 = vpack.c.b16 %v9987, %v9976
    %v11528 = vpack.c.b16 %v9988, %v9977
    %v11529 = vpack.c.b16 %v9989, %v9978
    %v11530 = vpack.c.b16 %v9990, %v9979
    %v11531 = vpack.c.b16 %v9991, %v9980
    %v11532 = vpack.c.b16 %v9992, %v9981
    %v11533 = vpack.c.b16 %v10004, %v9993
    %v11534 = vpack.c.b16 %v10005, %v9994
    %v11535 = vpack.c.b16 %v10006, %v9995
    %v11536 = vpack.c.b16 %v10007, %v9996
    %v11537 = vpack.c.b16 %v10008, %v9997
    %v11538 = vpack.c.b16 %v10009, %v9998
    %v11539 = vpack.c.b16 %v10010, %v9999
    %v11540 = vpack.c.b16 %v10011, %v10000
    %v11541 = vpack.c.b16 %v10012, %v10001
    %v11542 = vpack.c.b16 %v10013, %v10002
    %v11543 = vpack.c.b16 %v10014, %v10003
    %v11544 = vpack.c.b16 %v10026, %v10015
    %v11545 = vpack.c.b16 %v10027, %v10016
    %v11546 = vpack.c.b16 %v10028, %v10017
    %v11547 = vpack.c.b16 %v10029, %v10018
    %v11548 = vpack.c.b16 %v10030, %v10019
    %v11549 = vpack.c.b16 %v10031, %v10020
    %v11550 = vpack.c.b16 %v10032, %v10021
    %v11551 = vpack.c.b16 %v10033, %v10022
    %v11552 = vpack.c.b16 %v10034, %v10023
    %v11553 = vpack.c.b16 %v10035, %v10024
    %v11554 = vpack.c.b16 %v10036, %v10025
    %v11555 = vpack.c.b16 %v10048, %v10037
    %v11556 = vpack.c.b16 %v10049, %v10038
    %v11557 = vpack.c.b16 %v10050, %v10039
    %v11558 = vpack.c.b16 %v10051, %v10040
    %v11559 = vpack.c.b16 %v10052, %v10041
    %v11560 = vpack.c.b16 %v10053, %v10042
    %v11561 = vpack.c.b16 %v10054, %v10043
    %v11562 = vpack.c.b16 %v10055, %v10044
    %v11563 = vpack.c.b16 %v10056, %v10045
    %v11564 = vpack.c.b16 %v10057, %v10046
    %v11565 = vpack.c.b16 %v10058, %v10047
    %v11566 = vpack.c.b16 %v10070, %v10059
    %v11567 = vpack.c.b16 %v10071, %v10060
    %v11568 = vpack.c.b16 %v10072, %v10061
    %v11569 = vpack.c.b16 %v10073, %v10062
    %v11570 = vpack.c.b16 %v10074, %v10063
    %v11571 = vpack.c.b16 %v10075, %v10064
    %v11572 = vpack.c.b16 %v10076, %v10065
    %v11573 = vpack.c.b16 %v10077, %v10066
    %v11574 = vpack.c.b16 %v10078, %v10067
    %v11575 = vpack.c.b16 %v10079, %v10068
    %v11576 = vpack.c.b16 %v10080, %v10069
    %v11577 = vpack.c.b16 %v10092, %v10081
    %v11578 = vpack.c.b16 %v10093, %v10082
    %v11579 = vpack.c.b16 %v10094, %v10083
    %v11580 = vpack.c.b16 %v10095, %v10084
    %v11581 = vpack.c.b16 %v10096, %v10085
    %v11582 = vpack.c.b16 %v10097, %v10086
    %v11583 = vpack.c.b16 %v10098, %v10087
    %v11584 = vpack.c.b16 %v10099, %v10088
    %v11585 = vpack.c.b16 %v10100, %v10089
    %v11586 = vpack.c.b16 %v10101, %v10090
    %v11587 = vpack.c.b16 %v10102, %v10091
    %v11588 = vpack.c.b16 %v10114, %v10103
    %v11589 = vpack.c.b16 %v10115, %v10104
    %v11590 = vpack.c.b16 %v10116, %v10105
    %v11591 = vpack.c.b16 %v10117, %v10106
    %v11592 = vpack.c.b16 %v10118, %v10107
    %v11593 = vpack.c.b16 %v10119, %v10108
    %v11594 = vpack.c.b16 %v10120, %v10109
    %v11595 = vpack.c.b16 %v10121, %v10110
    %v11596 = vpack.c.b16 %v10122, %v10111
    %v11597 = vpack.c.b16 %v10123, %v10112
    %v11598 = vpack.c.b16 %v10124, %v10113
    %v11599 = vpack.c.b16 %v10136, %v10125
    %v11600 = vpack.c.b16 %v10137, %v10126
    %v11601 = vpack.c.b16 %v10138, %v10127
    %v11602 = vpack.c.b16 %v10139, %v10128
    %v11603 = vpack.c.b16 %v10140, %v10129
    %v11604 = vpack.c.b16 %v10141, %v10130
    %v11605 = vpack.c.b16 %v10142, %v10131
    %v11606 = vpack.c.b16 %v10143, %v10132
    %v11607 = vpack.c.b16 %v10144, %v10133
    %v11608 = vpack.c.b16 %v10145, %v10134
    %v11609 = vpack.c.b16 %v10146, %v10135
    %v11610 = vpack.c.b16 %v10158, %v10147
    %v11611 = vpack.c.b16 %v10159, %v10148
    %v11612 = vpack.c.b16 %v10160, %v10149
    %v11613 = vpack.c.b16 %v10161, %v10150
    %v11614 = vpack.c.b16 %v10162, %v10151
    %v11615 = vpack.c.b16 %v10163, %v10152
    %v11616 = vpack.c.b16 %v10164, %v10153
    %v11617 = vpack.c.b16 %v10165, %v10154
    %v11618 = vpack.c.b16 %v10166, %v10155
    %v11619 = vpack.c.b16 %v10167, %v10156
    %v11620 = vpack.c.b16 %v10168, %v10157
    %v11621 = vpack.c.b16 %v10180, %v10169
    %v11622 = vpack.c.b16 %v10181, %v10170
    %v11623 = vpack.c.b16 %v10182, %v10171
    %v11624 = vpack.c.b16 %v10183, %v10172
    %v11625 = vpack.c.b16 %v10184, %v10173
    %v11626 = vpack.c.b16 %v10185, %v10174
    %v11627 = vpack.c.b16 %v10186, %v10175
    %v11628 = vpack.c.b16 %v10187, %v10176
    %v11629 = vpack.c.b16 %v10188, %v10177
    %v11630 = vpack.c.b16 %v10189, %v10178
    %v11631 = vpack.c.b16 %v10190, %v10179
    %v11632 = vpack.c.b16 %v10202, %v10191
    %v11633 = vpack.c.b16 %v10203, %v10192
    %v11634 = vpack.c.b16 %v10204, %v10193
    %v11635 = vpack.c.b16 %v10205, %v10194
    %v11636 = vpack.c.b16 %v10206, %v10195
    %v11637 = vpack.c.b16 %v10207, %v10196
    %v11638 = vpack.c.b16 %v10208, %v10197
    %v11639 = vpack.c.b16 %v10209, %v10198
    %v11640 = vpack.c.b16 %v10210, %v10199
    %v11641 = vpack.c.b16 %v10211, %v10200
    %v11642 = vpack.c.b16 %v10212, %v10201
    %v11643 = vpack.c.b16 %v10224, %v10213
    %v11644 = vpack.c.b16 %v10225, %v10214
    %v11645 = vpack.c.b16 %v10226, %v10215
    %v11646 = vpack.c.b16 %v10227, %v10216
    %v11647 = vpack.c.b16 %v10228, %v10217
    %v11648 = vpack.c.b16 %v10229, %v10218
    %v11649 = vpack.c.b16 %v10230, %v10219
    %v11650 = vpack.c.b16 %v10231, %v10220
    %v11651 = vpack.c.b16 %v10232, %v10221
    %v11652 = vpack.c.b16 %v10233, %v10222
    %v11653 = vpack.c.b16 %v10234, %v10223
    %v11654 = vpack.c.b16 %v10246, %v10235
    %v11655 = vpack.c.b16 %v10247, %v10236
    %v11656 = vpack.c.b16 %v10248, %v10237
    %v11657 = vpack.c.b16 %v10249, %v10238
    %v11658 = vpack.c.b16 %v10250, %v10239
    %v11659 = vpack.c.b16 %v10251, %v10240
    %v11660 = vpack.c.b16 %v10252, %v10241
    %v11661 = vpack.c.b16 %v10253, %v10242
    %v11662 = vpack.c.b16 %v10254, %v10243
    %v11663 = vpack.c.b16 %v10255, %v10244
    %v11664 = vpack.c.b16 %v10256, %v10245
    %v11665 = vpack.c.b16 %v10268, %v10257
    %v11666 = vpack.c.b16 %v10269, %v10258
    %v11667 = vpack.c.b16 %v10270, %v10259
    %v11668 = vpack.c.b16 %v10271, %v10260
    %v11669 = vpack.c.b16 %v10272, %v10261
    %v11670 = vpack.c.b16 %v10273, %v10262
    %v11671 = vpack.c.b16 %v10274, %v10263
    %v11672 = vpack.c.b16 %v10275, %v10264
    %v11673 = vpack.c.b16 %v10276, %v10265
    %v11674 = vpack.c.b16 %v10277, %v10266
    %v11675 = vpack.c.b16 %v10278, %v10267
    %v11676 = vpack.c.b16 %v10290, %v10279
    %v11677 = vpack.c.b16 %v10291, %v10280
    %v11678 = vpack.c.b16 %v10292, %v10281
    %v11679 = vpack.c.b16 %v10293, %v10282
    %v11680 = vpack.c.b16 %v10294, %v10283
    %v11681 = vpack.c.b16 %v10295, %v10284
    %v11682 = vpack.c.b16 %v10296, %v10285
    %v11683 = vpack.c.b16 %v10297, %v10286
    %v11684 = vpack.c.b16 %v10298, %v10287
    %v11685 = vpack.c.b16 %v10299, %v10288
    %v11686 = vpack.c.b16 %v10300, %v10289
    %v11687 = vpack.c.b16 %v10312, %v10301
    %v11688 = vpack.c.b16 %v10313, %v10302
    %v11689 = vpack.c.b16 %v10314, %v10303
    %v11690 = vpack.c.b16 %v10315, %v10304
    %v11691 = vpack.c.b16 %v10316, %v10305
    %v11692 = vpack.c.b16 %v10317, %v10306
    %v11693 = vpack.c.b16 %v10318, %v10307
    %v11694 = vpack.c.b16 %v10319, %v10308
    %v11695 = vpack.c.b16 %v10320, %v10309
    %v11696 = vpack.c.b16 %v10321, %v10310
    %v11697 = vpack.c.b16 %v10322, %v10311
    %v11698 = vpack.c.b16 %v10334, %v10323
    %v11699 = vpack.c.b16 %v10335, %v10324
    %v11700 = vpack.c.b16 %v10336, %v10325
    %v11701 = vpack.c.b16 %v10337, %v10326
    %v11702 = vpack.c.b16 %v10338, %v10327
    %v11703 = vpack.c.b16 %v10339, %v10328
    %v11704 = vpack.c.b16 %v10340, %v10329
    %v11705 = vpack.c.b16 %v10341, %v10330
    %v11706 = vpack.c.b16 %v10342, %v10331
    %v11707 = vpack.c.b16 %v10343, %v10332
    %v11708 = vpack.c.b16 %v10344, %v10333
    %v11709 = vpack.c.b16 %v10356, %v10345
    %v11710 = vpack.c.b16 %v10357, %v10346
    %v11711 = vpack.c.b16 %v10358, %v10347
    %v11712 = vpack.c.b16 %v10359, %v10348
    %v11713 = vpack.c.b16 %v10360, %v10349
    %v11714 = vpack.c.b16 %v10361, %v10350
    %v11715 = vpack.c.b16 %v10362, %v10351
    %v11716 = vpack.c.b16 %v10363, %v10352
    %v11717 = vpack.c.b16 %v10364, %v10353
    %v11718 = vpack.c.b16 %v10365, %v10354
    %v11719 = vpack.c.b16 %v10366, %v10355
    %v11720 = vpack.c.b16 %v10378, %v10367
    %v11721 = vpack.c.b16 %v10379, %v10368
    %v11722 = vpack.c.b16 %v10380, %v10369
    %v11723 = vpack.c.b16 %v10381, %v10370
    %v11724 = vpack.c.b16 %v10382, %v10371
    %v11725 = vpack.c.b16 %v10383, %v10372
    %v11726 = vpack.c.b16 %v10384, %v10373
    %v11727 = vpack.c.b16 %v10385, %v10374
    %v11728 = vpack.c.b16 %v10386, %v10375
    %v11729 = vpack.c.b16 %v10387, %v10376
    %v11730 = vpack.c.b16 %v10388, %v10377
    %v11731 = vpack.c.b16 %v10400, %v10389
    %v11732 = vpack.c.b16 %v10401, %v10390
    %v11733 = vpack.c.b16 %v10402, %v10391
    %v11734 = vpack.c.b16 %v10403, %v10392
    %v11735 = vpack.c.b16 %v10404, %v10393
    %v11736 = vpack.c.b16 %v10405, %v10394
    %v11737 = vpack.c.b16 %v10406, %v10395
    %v11738 = vpack.c.b16 %v10407, %v10396
    %v11739 = vpack.c.b16 %v10408, %v10397
    %v11740 = vpack.c.b16 %v10409, %v10398
    %v11741 = vpack.c.b16 %v10410, %v10399
    %v11742 = vpack.c.b16 %v10422, %v10411
    %v11743 = vpack.c.b16 %v10423, %v10412
    %v11744 = vpack.c.b16 %v10424, %v10413
    %v11745 = vpack.c.b16 %v10425, %v10414
    %v11746 = vpack.c.b16 %v10426, %v10415
    %v11747 = vpack.c.b16 %v10427, %v10416
    %v11748 = vpack.c.b16 %v10428, %v10417
    %v11749 = vpack.c.b16 %v10429, %v10418
    %v11750 = vpack.c.b16 %v10430, %v10419
    %v11751 = vpack.c.b16 %v10431, %v10420
    %v11752 = vpack.c.b16 %v10432, %v10421
    %v11753 = vpack.c.b16 %v10444, %v10433
    %v11754 = vpack.c.b16 %v10445, %v10434
    %v11755 = vpack.c.b16 %v10446, %v10435
    %v11756 = vpack.c.b16 %v10447, %v10436
    %v11757 = vpack.c.b16 %v10448, %v10437
    %v11758 = vpack.c.b16 %v10449, %v10438
    %v11759 = vpack.c.b16 %v10450, %v10439
    %v11760 = vpack.c.b16 %v10451, %v10440
    %v11761 = vpack.c.b16 %v10452, %v10441
    %v11762 = vpack.c.b16 %v10453, %v10442
    %v11763 = vpack.c.b16 %v10454, %v10443
    %v11764 = vpack.c.b16 %v10466, %v10455
    %v11765 = vpack.c.b16 %v10467, %v10456
    %v11766 = vpack.c.b16 %v10468, %v10457
    %v11767 = vpack.c.b16 %v10469, %v10458
    %v11768 = vpack.c.b16 %v10470, %v10459
    %v11769 = vpack.c.b16 %v10471, %v10460
    %v11770 = vpack.c.b16 %v10472, %v10461
    %v11771 = vpack.c.b16 %v10473, %v10462
    %v11772 = vpack.c.b16 %v10474, %v10463
    %v11773 = vpack.c.b16 %v10475, %v10464
    %v11774 = vpack.c.b16 %v10476, %v10465
    %v11775 = vpack.c.b16 %v10488, %v10477
    %v11776 = vpack.c.b16 %v10489, %v10478
    %v11777 = vpack.c.b16 %v10490, %v10479
    %v11778 = vpack.c.b16 %v10491, %v10480
    %v11779 = vpack.c.b16 %v10492, %v10481
    %v11780 = vpack.c.b16 %v10493, %v10482
    %v11781 = vpack.c.b16 %v10494, %v10483
    %v11782 = vpack.c.b16 %v10495, %v10484
    %v11783 = vpack.c.b16 %v10496, %v10485
    %v11784 = vpack.c.b16 %v10497, %v10486
    %v11785 = vpack.c.b16 %v10498, %v10487
    %v11786 = vpack.c.b16 %v10510, %v10499
    %v11787 = vpack.c.b16 %v10511, %v10500
    %v11788 = vpack.c.b16 %v10512, %v10501
    %v11789 = vpack.c.b16 %v10513, %v10502
    %v11790 = vpack.c.b16 %v10514, %v10503
    %v11791 = vpack.c.b16 %v10515, %v10504
    %v11792 = vpack.c.b16 %v10516, %v10505
    %v11793 = vpack.c.b16 %v10517, %v10506
    %v11794 = vpack.c.b16 %v10518, %v10507
    %v11795 = vpack.c.b16 %v10519, %v10508
    %v11796 = vpack.c.b16 %v10520, %v10509
    %v11797 = vpack.c.b16 %v10532, %v10521
    %v11798 = vpack.c.b16 %v10533, %v10522
    %v11799 = vpack.c.b16 %v10534, %v10523
    %v11800 = vpack.c.b16 %v10535, %v10524
    %v11801 = vpack.c.b16 %v10536, %v10525
    %v11802 = vpack.c.b16 %v10537, %v10526
    %v11803 = vpack.c.b16 %v10538, %v10527
    %v11804 = vpack.c.b16 %v10539, %v10528
    %v11805 = vpack.c.b16 %v10540, %v10529
    %v11806 = vpack.c.b16 %v10541, %v10530
    %v11807 = vpack.c.b16 %v10542, %v10531
    %v11808 = vpack.c.b16 %v10554, %v10543
    %v11809 = vpack.c.b16 %v10555, %v10544
    %v11810 = vpack.c.b16 %v10556, %v10545
    %v11811 = vpack.c.b16 %v10557, %v10546
    %v11812 = vpack.c.b16 %v10558, %v10547
    %v11813 = vpack.c.b16 %v10559, %v10548
    %v11814 = vpack.c.b16 %v10560, %v10549
    %v11815 = vpack.c.b16 %v10561, %v10550
    %v11816 = vpack.c.b16 %v10562, %v10551
    %v11817 = vpack.c.b16 %v10563, %v10552
    %v11818 = vpack.c.b16 %v10564, %v10553
    %v11819 = vpack.c.b16 %v10576, %v10565
    %v11820 = vpack.c.b16 %v10577, %v10566
    %v11821 = vpack.c.b16 %v10578, %v10567
    %v11822 = vpack.c.b16 %v10579, %v10568
    %v11823 = vpack.c.b16 %v10580, %v10569
    %v11824 = vpack.c.b16 %v10581, %v10570
    %v11825 = vpack.c.b16 %v10582, %v10571
    %v11826 = vpack.c.b16 %v10583, %v10572
    %v11827 = vpack.c.b16 %v10584, %v10573
    %v11828 = vpack.c.b16 %v10585, %v10574
    %v11829 = vpack.c.b16 %v10586, %v10575
    %v11830 = vpack.c.b16 %v10598, %v10587
    %v11831 = vpack.c.b16 %v10599, %v10588
    %v11832 = vpack.c.b16 %v10600, %v10589
    %v11833 = vpack.c.b16 %v10601, %v10590
    %v11834 = vpack.c.b16 %v10602, %v10591
    %v11835 = vpack.c.b16 %v10603, %v10592
    %v11836 = vpack.c.b16 %v10604, %v10593
    %v11837 = vpack.c.b16 %v10605, %v10594
    %v11838 = vpack.c.b16 %v10606, %v10595
    %v11839 = vpack.c.b16 %v10607, %v10596
    %v11840 = vpack.c.b16 %v10608, %v10597
    %v11841 = vpack.c.b16 %v10620, %v10609
    %v11842 = vpack.c.b16 %v10621, %v10610
    %v11843 = vpack.c.b16 %v10622, %v10611
    %v11844 = vpack.c.b16 %v10623, %v10612
    %v11845 = vpack.c.b16 %v10624, %v10613
    %v11846 = vpack.c.b16 %v10625, %v10614
    %v11847 = vpack.c.b16 %v10626, %v10615
    %v11848 = vpack.c.b16 %v10627, %v10616
    %v11849 = vpack.c.b16 %v10628, %v10617
    %v11850 = vpack.c.b16 %v10629, %v10618
    %v11851 = vpack.c.b16 %v10630, %v10619
    %v11852 = vpack.c.b16 %v10642, %v10631
    %v11853 = vpack.c.b16 %v10643, %v10632
    %v11854 = vpack.c.b16 %v10644, %v10633
    %v11855 = vpack.c.b16 %v10645, %v10634
    %v11856 = vpack.c.b16 %v10646, %v10635
    %v11857 = vpack.c.b16 %v10647, %v10636
    %v11858 = vpack.c.b16 %v10648, %v10637
    %v11859 = vpack.c.b16 %v10649, %v10638
    %v11860 = vpack.c.b16 %v10650, %v10639
    %v11861 = vpack.c.b16 %v10651, %v10640
    %v11862 = vpack.c.b16 %v10652, %v10641
    %v11863 = vpack.c.b16 %v10664, %v10653
    %v11864 = vpack.c.b16 %v10665, %v10654
    %v11865 = vpack.c.b16 %v10666, %v10655
    %v11866 = vpack.c.b16 %v10667, %v10656
    %v11867 = vpack.c.b16 %v10668, %v10657
    %v11868 = vpack.c.b16 %v10669, %v10658
    %v11869 = vpack.c.b16 %v10670, %v10659
    %v11870 = vpack.c.b16 %v10671, %v10660
    %v11871 = vpack.c.b16 %v10672, %v10661
    %v11872 = vpack.c.b16 %v10673, %v10662
    %v11873 = vpack.c.b16 %v10674, %v10663
    %v11874 = vpack.c.b16 %v10686, %v10675
    %v11875 = vpack.c.b16 %v10687, %v10676
    %v11876 = vpack.c.b16 %v10688, %v10677
    %v11877 = vpack.c.b16 %v10689, %v10678
    %v11878 = vpack.c.b16 %v10690, %v10679
    %v11879 = vpack.c.b16 %v10691, %v10680
    %v11880 = vpack.c.b16 %v10692, %v10681
    %v11881 = vpack.c.b16 %v10693, %v10682
    %v11882 = vpack.c.b16 %v10694, %v10683
    %v11883 = vpack.c.b16 %v10695, %v10684
    %v11884 = vpack.c.b16 %v10696, %v10685
    %v11885 = vpack.c.b16 %v10708, %v10697
    %v11886 = vpack.c.b16 %v10709, %v10698
    %v11887 = vpack.c.b16 %v10710, %v10699
    %v11888 = vpack.c.b16 %v10711, %v10700
    %v11889 = vpack.c.b16 %v10712, %v10701
    %v11890 = vpack.c.b16 %v10713, %v10702
    %v11891 = vpack.c.b16 %v10714, %v10703
    %v11892 = vpack.c.b16 %v10715, %v10704
    %v11893 = vpack.c.b16 %v10716, %v10705
    %v11894 = vpack.c.b16 %v10717, %v10706
    %v11895 = vpack.c.b16 %v10718, %v10707
    %v11896 = vpack.c.b16 %v10730, %v10719
    %v11897 = vpack.c.b16 %v10731, %v10720
    %v11898 = vpack.c.b16 %v10732, %v10721
    %v11899 = vpack.c.b16 %v10733, %v10722
    %v11900 = vpack.c.b16 %v10734, %v10723
    %v11901 = vpack.c.b16 %v10735, %v10724
    %v11902 = vpack.c.b16 %v10736, %v10725
    %v11903 = vpack.c.b16 %v10737, %v10726
    %v11904 = vpack.c.b16 %v10738, %v10727
    %v11905 = vpack.c.b16 %v10739, %v10728
    %v11906 = vpack.c.b16 %v10740, %v10729
    %v11907 = vpack.c.b16 %v10752, %v10741
    %v11908 = vpack.c.b16 %v10753, %v10742
    %v11909 = vpack.c.b16 %v10754, %v10743
    %v11910 = vpack.c.b16 %v10755, %v10744
    %v11911 = vpack.c.b16 %v10756, %v10745
    %v11912 = vpack.c.b16 %v10757, %v10746
    %v11913 = vpack.c.b16 %v10758, %v10747
    %v11914 = vpack.c.b16 %v10759, %v10748
    %v11915 = vpack.c.b16 %v10760, %v10749
    %v11916 = vpack.c.b16 %v10761, %v10750
    %v11917 = vpack.c.b16 %v10762, %v10751
    %v11918 = vpack.c.b16 %v10774, %v10763
    %v11919 = vpack.c.b16 %v10775, %v10764
    %v11920 = vpack.c.b16 %v10776, %v10765
    %v11921 = vpack.c.b16 %v10777, %v10766
    %v11922 = vpack.c.b16 %v10778, %v10767
    %v11923 = vpack.c.b16 %v10779, %v10768
    %v11924 = vpack.c.b16 %v10780, %v10769
    %v11925 = vpack.c.b16 %v10781, %v10770
    %v11926 = vpack.c.b16 %v10782, %v10771
    %v11927 = vpack.c.b16 %v10783, %v10772
    %v11928 = vpack.c.b16 %v10784, %v10773
    %v11929 = vpack.c.b16 %v10796, %v10785
    %v11930 = vpack.c.b16 %v10797, %v10786
    %v11931 = vpack.c.b16 %v10798, %v10787
    %v11932 = vpack.c.b16 %v10799, %v10788
    %v11933 = vpack.c.b16 %v10800, %v10789
    %v11934 = vpack.c.b16 %v10801, %v10790
    %v11935 = vpack.c.b16 %v10802, %v10791
    %v11936 = vpack.c.b16 %v10803, %v10792
    %v11937 = vpack.c.b16 %v10804, %v10793
    %v11938 = vpack.c.b16 %v10805, %v10794
    %v11939 = vpack.c.b16 %v10806, %v10795
    %v11940 = vpack.c.b16 %v10818, %v10807
    %v11941 = vpack.c.b16 %v10819, %v10808
    %v11942 = vpack.c.b16 %v10820, %v10809
    %v11943 = vpack.c.b16 %v10821, %v10810
    %v11944 = vpack.c.b16 %v10822, %v10811
    %v11945 = vpack.c.b16 %v10823, %v10812
    %v11946 = vpack.c.b16 %v10824, %v10813
    %v11947 = vpack.c.b16 %v10825, %v10814
    %v11948 = vpack.c.b16 %v10826, %v10815
    %v11949 = vpack.c.b16 %v10827, %v10816
    %v11950 = vpack.c.b16 %v10828, %v10817
    %v11951 = vpack.c.b16 %v10840, %v10829
    %v11952 = vpack.c.b16 %v10841, %v10830
    %v11953 = vpack.c.b16 %v10842, %v10831
    %v11954 = vpack.c.b16 %v10843, %v10832
    %v11955 = vpack.c.b16 %v10844, %v10833
    %v11956 = vpack.c.b16 %v10845, %v10834
    %v11957 = vpack.c.b16 %v10846, %v10835
    %v11958 = vpack.c.b16 %v10847, %v10836
    %v11959 = vpack.c.b16 %v10848, %v10837
    %v11960 = vpack.c.b16 %v10849, %v10838
    %v11961 = vpack.c.b16 %v10850, %v10839
    %v11962 = vpack.c.b16 %v10862, %v10851
    %v11963 = vpack.c.b16 %v10863, %v10852
    %v11964 = vpack.c.b16 %v10864, %v10853
    %v11965 = vpack.c.b16 %v10865, %v10854
    %v11966 = vpack.c.b16 %v10866, %v10855
    %v11967 = vpack.c.b16 %v10867, %v10856
    %v11968 = vpack.c.b16 %v10868, %v10857
    %v11969 = vpack.c.b16 %v10869, %v10858
    %v11970 = vpack.c.b16 %v10870, %v10859
    %v11971 = vpack.c.b16 %v10871, %v10860
    %v11972 = vpack.c.b16 %v10872, %v10861
    %v11973 = vpack.c.b16 %v10884, %v10873
    %v11974 = vpack.c.b16 %v10885, %v10874
    %v11975 = vpack.c.b16 %v10886, %v10875
    %v11976 = vpack.c.b16 %v10887, %v10876
    %v11977 = vpack.c.b16 %v10888, %v10877
    %v11978 = vpack.c.b16 %v10889, %v10878
    %v11979 = vpack.c.b16 %v10890, %v10879
    %v11980 = vpack.c.b16 %v10891, %v10880
    %v11981 = vpack.c.b16 %v10892, %v10881
    %v11982 = vpack.c.b16 %v10893, %v10882
    %v11983 = vpack.c.b16 %v10894, %v10883
    %v11984 = vpack.c.b16 %v10906, %v10895
    %v11985 = vpack.c.b16 %v10907, %v10896
    %v11986 = vpack.c.b16 %v10908, %v10897
    %v11987 = vpack.c.b16 %v10909, %v10898
    %v11988 = vpack.c.b16 %v10910, %v10899
    %v11989 = vpack.c.b16 %v10911, %v10900
    %v11990 = vpack.c.b16 %v10912, %v10901
    %v11991 = vpack.c.b16 %v10913, %v10902
    %v11992 = vpack.c.b16 %v10914, %v10903
    %v11993 = vpack.c.b16 %v10915, %v10904
    %v11994 = vpack.c.b16 %v10916, %v10905
    %v11995 = vpack.c.b16 %v10928, %v10917
    %v11996 = vpack.c.b16 %v10929, %v10918
    %v11997 = vpack.c.b16 %v10930, %v10919
    %v11998 = vpack.c.b16 %v10931, %v10920
    %v11999 = vpack.c.b16 %v10932, %v10921
    %v12000 = vpack.c.b16 %v10933, %v10922
    %v12001 = vpack.c.b16 %v10934, %v10923
    %v12002 = vpack.c.b16 %v10935, %v10924
    %v12003 = vpack.c.b16 %v10936, %v10925
    %v12004 = vpack.c.b16 %v10937, %v10926
    %v12005 = vpack.c.b16 %v10938, %v10927
    %v12006 = vpack.c.b16 %v10950, %v10939
    %v12007 = vpack.c.b16 %v10951, %v10940
    %v12008 = vpack.c.b16 %v10952, %v10941
    %v12009 = vpack.c.b16 %v10953, %v10942
    %v12010 = vpack.c.b16 %v10954, %v10943
    %v12011 = vpack.c.b16 %v10955, %v10944
    %v12012 = vpack.c.b16 %v10956, %v10945
    %v12013 = vpack.c.b16 %v10957, %v10946
    %v12014 = vpack.c.b16 %v10958, %v10947
    %v12015 = vpack.c.b16 %v10959, %v10948
    %v12016 = vpack.c.b16 %v10960, %v10949
    %v12017 = vpack.c.b16 %v10972, %v10961
    %v12018 = vpack.c.b16 %v10973, %v10962
    %v12019 = vpack.c.b16 %v10974, %v10963
    %v12020 = vpack.c.b16 %v10975, %v10964
    %v12021 = vpack.c.b16 %v10976, %v10965
    %v12022 = vpack.c.b16 %v10977, %v10966
    %v12023 = vpack.c.b16 %v10978, %v10967
    %v12024 = vpack.c.b16 %v10979, %v10968
    %v12025 = vpack.c.b16 %v10980, %v10969
    %v12026 = vpack.c.b16 %v10981, %v10970
    %v12027 = vpack.c.b16 %v10982, %v10971
    %v12028 = vpack.c.b16 %v10994, %v10983
    %v12029 = vpack.c.b16 %v10995, %v10984
    %v12030 = vpack.c.b16 %v10996, %v10985
    %v12031 = vpack.c.b16 %v10997, %v10986
    %v12032 = vpack.c.b16 %v10998, %v10987
    %v12033 = vpack.c.b16 %v10999, %v10988
    %v12034 = vpack.c.b16 %v11000, %v10989
    %v12035 = vpack.c.b16 %v11001, %v10990
    %v12036 = vpack.c.b16 %v11002, %v10991
    %v12037 = vpack.c.b16 %v11003, %v10992
    %v12038 = vpack.c.b16 %v11004, %v10993
    %v12039 = vpack.c.b16 %v11016, %v11005
    %v12040 = vpack.c.b16 %v11017, %v11006
    %v12041 = vpack.c.b16 %v11018, %v11007
    %v12042 = vpack.c.b16 %v11019, %v11008
    %v12043 = vpack.c.b16 %v11020, %v11009
    %v12044 = vpack.c.b16 %v11021, %v11010
    %v12045 = vpack.c.b16 %v11022, %v11011
    %v12046 = vpack.c.b16 %v11023, %v11012
    %v12047 = vpack.c.b16 %v11024, %v11013
    %v12048 = vpack.c.b16 %v11025, %v11014
    %v12049 = vpack.c.b16 %v11026, %v11015
    %v12050 = vpack.c.b16 %v11038, %v11027
    %v12051 = vpack.c.b16 %v11039, %v11028
    %v12052 = vpack.c.b16 %v11040, %v11029
    %v12053 = vpack.c.b16 %v11041, %v11030
    %v12054 = vpack.c.b16 %v11042, %v11031
    %v12055 = vpack.c.b16 %v11043, %v11032
    %v12056 = vpack.c.b16 %v11044, %v11033
    %v12057 = vpack.c.b16 %v11045, %v11034
    %v12058 = vpack.c.b16 %v11046, %v11035
    %v12059 = vpack.c.b16 %v11047, %v11036
    %v12060 = vpack.c.b16 %v11048, %v11037
    %v12061 = vpack.c.b16 %v11060, %v11049
    %v12062 = vpack.c.b16 %v11061, %v11050
    %v12063 = vpack.c.b16 %v11062, %v11051
    %v12064 = vpack.c.b16 %v11063, %v11052
    %v12065 = vpack.c.b16 %v11064, %v11053
    %v12066 = vpack.c.b16 %v11065, %v11054
    %v12067 = vpack.c.b16 %v11066, %v11055
    %v12068 = vpack.c.b16 %v11067, %v11056
    %v12069 = vpack.c.b16 %v11068, %v11057
    %v12070 = vpack.c.b16 %v11069, %v11058
    %v12071 = vpack.c.b16 %v11070, %v11059
    %v12072 = vpack.c.b16 %v11082, %v11071
    %v12073 = vpack.c.b16 %v11083, %v11072
    %v12074 = vpack.c.b16 %v11084, %v11073
    %v12075 = vpack.c.b16 %v11085, %v11074
    %v12076 = vpack.c.b16 %v11086, %v11075
    %v12077 = vpack.c.b16 %v11087, %v11076
    %v12078 = vpack.c.b16 %v11088, %v11077
    %v12079 = vpack.c.b16 %v11089, %v11078
    %v12080 = vpack.c.b16 %v11090, %v11079
    %v12081 = vpack.c.b16 %v11091, %v11080
    %v12082 = vpack.c.b16 %v11092, %v11081
    %v12083 = vpack.c.b16 %v11104, %v11093
    %v12084 = vpack.c.b16 %v11105, %v11094
    %v12085 = vpack.c.b16 %v11106, %v11095
    %v12086 = vpack.c.b16 %v11107, %v11096
    %v12087 = vpack.c.b16 %v11108, %v11097
    %v12088 = vpack.c.b16 %v11109, %v11098
    %v12089 = vpack.c.b16 %v11110, %v11099
    %v12090 = vpack.c.b16 %v11111, %v11100
    %v12091 = vpack.c.b16 %v11112, %v11101
    %v12092 = vpack.c.b16 %v11113, %v11102
    %v12093 = vpack.c.b16 %v11114, %v11103
    %v12094 = vpack.c.b16 %v11126, %v11115
    %v12095 = vpack.c.b16 %v11127, %v11116
    %v12096 = vpack.c.b16 %v11128, %v11117
    %v12097 = vpack.c.b16 %v11129, %v11118
    %v12098 = vpack.c.b16 %v11130, %v11119
    %v12099 = vpack.c.b16 %v11131, %v11120
    %v12100 = vpack.c.b16 %v11132, %v11121
    %v12101 = vpack.c.b16 %v11133, %v11122
    %v12102 = vpack.c.b16 %v11134, %v11123
    %v12103 = vpack.c.b16 %v11135, %v11124
    %v12104 = vpack.c.b16 %v11136, %v11125
    %v12105 = vpack.c.b16 %v11148, %v11137
    %v12106 = vpack.c.b16 %v11149, %v11138
    %v12107 = vpack.c.b16 %v11150, %v11139
    %v12108 = vpack.c.b16 %v11151, %v11140
    %v12109 = vpack.c.b16 %v11152, %v11141
    %v12110 = vpack.c.b16 %v11153, %v11142
    %v12111 = vpack.c.b16 %v11154, %v11143
    %v12112 = vpack.c.b16 %v11155, %v11144
    %v12113 = vpack.c.b16 %v11156, %v11145
    %v12114 = vpack.c.b16 %v11157, %v11146
    %v12115 = vpack.c.b16 %v11158, %v11147
    %v12116 = vpack.c.b16 %v11170, %v11159
    %v12117 = vpack.c.b16 %v11171, %v11160
    %v12118 = vpack.c.b16 %v11172, %v11161
    %v12119 = vpack.c.b16 %v11173, %v11162
    %v12120 = vpack.c.b16 %v11174, %v11163
    %v12121 = vpack.c.b16 %v11175, %v11164
    %v12122 = vpack.c.b16 %v11176, %v11165
    %v12123 = vpack.c.b16 %v11177, %v11166
    %v12124 = vpack.c.b16 %v11178, %v11167
    %v12125 = vpack.c.b16 %v11179, %v11168
    %v12126 = vpack.c.b16 %v11180, %v11169
    %v12127 = vpack.c.b16 %v11192, %v11181
    %v12128 = vpack.c.b16 %v11193, %v11182
    %v12129 = vpack.c.b16 %v11194, %v11183
    %v12130 = vpack.c.b16 %v11195, %v11184
    %v12131 = vpack.c.b16 %v11196, %v11185
    %v12132 = vpack.c.b16 %v11197, %v11186
    %v12133 = vpack.c.b16 %v11198, %v11187
    %v12134 = vpack.c.b16 %v11199, %v11188
    %v12135 = vpack.c.b16 %v11200, %v11189
    %v12136 = vpack.c.b16 %v11201, %v11190
    %v12137 = vpack.c.b16 %v11202, %v11191
    %v12138 = vpack.c.b16 %v11214, %v11203
    %v12139 = vpack.c.b16 %v11215, %v11204
    %v12140 = vpack.c.b16 %v11216, %v11205
    %v12141 = vpack.c.b16 %v11217, %v11206
    %v12142 = vpack.c.b16 %v11218, %v11207
    %v12143 = vpack.c.b16 %v11219, %v11208
    %v12144 = vpack.c.b16 %v11220, %v11209
    %v12145 = vpack.c.b16 %v11221, %v11210
    %v12146 = vpack.c.b16 %v11222, %v11211
    %v12147 = vpack.c.b16 %v11223, %v11212
    %v12148 = vpack.c.b16 %v11224, %v11213
    %v13074 = vsel %vm5865, %v7360, 0
    %13076 = vmatprep.subr.bf16.mxu0 %v11303
    %13077 = vmatpush1.bf16.msra.mxu0 %v11302
    %13078 = vmatprep.subr.bf16.mxu0 %v11292
    %13079 = vmatpush1.bf16.msra.mxu0 %v11291
    %13080 = vmatprep.subr.bf16.mxu0 %v11281
    %13081 = vmatpush1.bf16.msra.mxu0 %v11280
    %13082 = vmatprep.subr.bf16.mxu0 %v11270
    %13083 = vmatpush1.bf16.msra.mxu0 %v11269
    %13084 = vmatprep.subr.bf16.mxu0 %v11259
    %13085 = vmatpush1.bf16.msra.mxu0 %v11258
    %13086 = vmatprep.subr.bf16.mxu0 %v11248
    %13087 = vmatpush1.bf16.msra.mxu0 %v11247
    %13088 = vmatprep.subr.bf16.mxu0 %v11237
    %13089 = vmatpush1.bf16.msra.mxu0 %v11236
    %13090 = vmatprep.subr.bf16.mxu0 %v11226
    %13091 = vmatpush1.bf16.msra.mxu0 %v11225
    %13092 = vmatprep.subr.bf16.mxu0 %v11391
    %13093 = vmatpush2.bf16.msra.mxu0 %v11390
    %13094 = vmatprep.subr.bf16.mxu0 %v11380
    %13095 = vmatpush2.bf16.msra.mxu0 %v11379
    %13096 = vmatprep.subr.bf16.mxu0 %v11369
    %13097 = vmatpush2.bf16.msra.mxu0 %v11368
    %13098 = vmatprep.subr.bf16.mxu0 %v11358
    %13099 = vmatpush2.bf16.msra.mxu0 %v11357
    %13100 = vmatprep.subr.bf16.mxu0 %v11347
    %13101 = vmatpush2.bf16.msra.mxu0 %v11346
    %13102 = vmatprep.subr.bf16.mxu0 %v11336
    %13103 = vmatpush2.bf16.msra.mxu0 %v11335
    %13104 = vmatprep.subr.bf16.mxu0 %v11325
    %13105 = vmatpush2.bf16.msra.mxu0 %v11324
    %13106 = vmatprep.subr.bf16.mxu0 %v11314
    %13107 = vmatpush2.bf16.msra.mxu0 %v11313
    %13108 = vmatprep.mubr.bf16.mxu0 %v7351
    %13109 = vmatmul.mubr.bf16.gmra.mxu0 %v7350
    %v13110 = vpop.f32.mrf.mxu0
    %v13111 = vadd.f32 0.0, %v13110
    %v13112 = vpop.f32.mrf.mxu0
    %v13113 = vadd.f32 0.0, %v13112
    %v13114 = vpop.f32.mrf.mxu0
    %v13115 = vpop.f32.mrf.mxu0
    %13116 = vdwg.mxu0
    %13117 = vmatprep.subr.bf16.mxu0 %v11479
    %13118 = vmatpush1.bf16.msra.mxu0 %v11478
    %13119 = vmatprep.subr.bf16.mxu0 %v11468
    %13120 = vmatpush1.bf16.msra.mxu0 %v11467
    %13121 = vmatprep.subr.bf16.mxu0 %v11457
    %13122 = vmatpush1.bf16.msra.mxu0 %v11456
    %13123 = vmatprep.subr.bf16.mxu0 %v11446
    %13124 = vmatpush1.bf16.msra.mxu0 %v11445
    %13125 = vmatprep.subr.bf16.mxu0 %v11435
    %13126 = vmatpush1.bf16.msra.mxu0 %v11434
    %13127 = vmatprep.subr.bf16.mxu0 %v11424
    %13128 = vmatpush1.bf16.msra.mxu0 %v11423
    %13129 = vmatprep.subr.bf16.mxu0 %v11413
    %13130 = vmatpush1.bf16.msra.mxu0 %v11412
    %13131 = vmatprep.subr.bf16.mxu0 %v11402
    %13132 = vmatpush1.bf16.msra.mxu0 %v11401
    %13133 = vmatprep.subr.bf16.mxu0 %v11567
    %13134 = vmatpush2.bf16.msra.mxu0 %v11566
    %13135 = vmatprep.subr.bf16.mxu0 %v11556
    %13136 = vmatpush2.bf16.msra.mxu0 %v11555
    %13137 = vmatprep.subr.bf16.mxu0 %v11545
    %13138 = vmatpush2.bf16.msra.mxu0 %v11544
    %13139 = vmatprep.subr.bf16.mxu0 %v11534
    %13140 = vmatpush2.bf16.msra.mxu0 %v11533
    %13141 = vmatprep.subr.bf16.mxu0 %v11523
    %13142 = vmatpush2.bf16.msra.mxu0 %v11522
    %13143 = vmatprep.subr.bf16.mxu0 %v11512
    %13144 = vmatpush2.bf16.msra.mxu0 %v11511
    %13145 = vmatprep.subr.bf16.mxu0 %v11501
    %13146 = vmatpush2.bf16.msra.mxu0 %v11500
    %13147 = vmatprep.subr.bf16.mxu0 %v11490
    %13148 = vmatpush2.bf16.msra.mxu0 %v11489
    %13149 = vmatprep.mubr.bf16.mxu0 %v7353
    %13150 = vmatmul.mubr.bf16.gmra.mxu0 %v7352
    %v13151 = vpop.f32.mrf.mxu0
    %v13152 = vadd.f32 %v13111, %v13151
    %v13153 = vpop.f32.mrf.mxu0
    %v13154 = vadd.f32 %v13113, %v13153
    %v13155 = vpop.f32.mrf.mxu0
    %v13156 = vpop.f32.mrf.mxu0
    %13157 = vdwg.mxu0
    %13158 = vmatprep.subr.bf16.mxu0 %v11655
    %13159 = vmatpush1.bf16.msra.mxu0 %v11654
    %13160 = vmatprep.subr.bf16.mxu0 %v11644
    %13161 = vmatpush1.bf16.msra.mxu0 %v11643
    %13162 = vmatprep.subr.bf16.mxu0 %v11633
    %13163 = vmatpush1.bf16.msra.mxu0 %v11632
    %13164 = vmatprep.subr.bf16.mxu0 %v11622
    %13165 = vmatpush1.bf16.msra.mxu0 %v11621
    %13166 = vmatprep.subr.bf16.mxu0 %v11611
    %13167 = vmatpush1.bf16.msra.mxu0 %v11610
    %13168 = vmatprep.subr.bf16.mxu0 %v11600
    %13169 = vmatpush1.bf16.msra.mxu0 %v11599
    %13170 = vmatprep.subr.bf16.mxu0 %v11589
    %13171 = vmatpush1.bf16.msra.mxu0 %v11588
    %13172 = vmatprep.subr.bf16.mxu0 %v11578
    %13173 = vmatpush1.bf16.msra.mxu0 %v11577
    %13174 = vmatprep.subr.bf16.mxu0 %v11743
    %13175 = vmatpush2.bf16.msra.mxu0 %v11742
    %13176 = vmatprep.subr.bf16.mxu0 %v11732
    %13177 = vmatpush2.bf16.msra.mxu0 %v11731
    %13178 = vmatprep.subr.bf16.mxu0 %v11721
    %13179 = vmatpush2.bf16.msra.mxu0 %v11720
    %13180 = vmatprep.subr.bf16.mxu0 %v11710
    %13181 = vmatpush2.bf16.msra.mxu0 %v11709
    %13182 = vmatprep.subr.bf16.mxu0 %v11699
    %13183 = vmatpush2.bf16.msra.mxu0 %v11698
    %13184 = vmatprep.subr.bf16.mxu0 %v11688
    %13185 = vmatpush2.bf16.msra.mxu0 %v11687
    %13186 = vmatprep.subr.bf16.mxu0 %v11677
    %13187 = vmatpush2.bf16.msra.mxu0 %v11676
    %13188 = vmatprep.subr.bf16.mxu0 %v11666
    %13189 = vmatpush2.bf16.msra.mxu0 %v11665
    %13190 = vmatprep.mubr.bf16.mxu0 %v7355
    %13191 = vmatmul.mubr.bf16.gmra.mxu0 %v7354
    %v13192 = vpop.f32.mrf.mxu0
    %v13193 = vadd.f32 %v13152, %v13192
    %v13194 = vpop.f32.mrf.mxu0
    %v13195 = vadd.f32 %v13154, %v13194
    %v13196 = vpop.f32.mrf.mxu0
    %v13197 = vpop.f32.mrf.mxu0
    %13198 = vdwg.mxu0
    %13199 = vmatprep.subr.bf16.mxu0 %v11831
    %13200 = vmatpush1.bf16.msra.mxu0 %v11830
    %13201 = vmatprep.subr.bf16.mxu0 %v11820
    %13202 = vmatpush1.bf16.msra.mxu0 %v11819
    %13203 = vmatprep.subr.bf16.mxu0 %v11809
    %13204 = vmatpush1.bf16.msra.mxu0 %v11808
    %13205 = vmatprep.subr.bf16.mxu0 %v11798
    %13206 = vmatpush1.bf16.msra.mxu0 %v11797
    %13207 = vmatprep.subr.bf16.mxu0 %v11787
    %13208 = vmatpush1.bf16.msra.mxu0 %v11786
    %13209 = vmatprep.subr.bf16.mxu0 %v11776
    %13210 = vmatpush1.bf16.msra.mxu0 %v11775
    %13211 = vmatprep.subr.bf16.mxu0 %v11765
    %13212 = vmatpush1.bf16.msra.mxu0 %v11764
    %13213 = vmatprep.subr.bf16.mxu0 %v11754
    %13214 = vmatpush1.bf16.msra.mxu0 %v11753
    %13215 = vmatprep.subr.bf16.mxu0 %v11919
    %13216 = vmatpush2.bf16.msra.mxu0 %v11918
    %13217 = vmatprep.subr.bf16.mxu0 %v11908
    %13218 = vmatpush2.bf16.msra.mxu0 %v11907
    %13219 = vmatprep.subr.bf16.mxu0 %v11897
    %13220 = vmatpush2.bf16.msra.mxu0 %v11896
    %13221 = vmatprep.subr.bf16.mxu0 %v11886
    %13222 = vmatpush2.bf16.msra.mxu0 %v11885
    %13223 = vmatprep.subr.bf16.mxu0 %v11875
    %13224 = vmatpush2.bf16.msra.mxu0 %v11874
    %13225 = vmatprep.subr.bf16.mxu0 %v11864
    %13226 = vmatpush2.bf16.msra.mxu0 %v11863
    %13227 = vmatprep.subr.bf16.mxu0 %v11853
    %13228 = vmatpush2.bf16.msra.mxu0 %v11852
    %13229 = vmatprep.subr.bf16.mxu0 %v11842
    %13230 = vmatpush2.bf16.msra.mxu0 %v11841
    %13231 = vmatprep.mubr.bf16.mxu0 %v7357
    %13232 = vmatmul.mubr.bf16.gmra.mxu0 %v7356
    %v13233 = vpop.f32.mrf.mxu0
    %v13234 = vadd.f32 %v13193, %v13233
    %v13235 = vpop.f32.mrf.mxu0
    %v13236 = vadd.f32 %v13195, %v13235
    %v13237 = vpop.f32.mrf.mxu0
    %v13238 = vpop.f32.mrf.mxu0
    %13239 = vdwg.mxu0
    %13240 = vmatprep.subr.bf16.mxu0 %v12007
    %13241 = vmatpush1.bf16.msra.mxu0 %v12006
    %13242 = vmatprep.subr.bf16.mxu0 %v11996
    %13243 = vmatpush1.bf16.msra.mxu0 %v11995
    %13244 = vmatprep.subr.bf16.mxu0 %v11985
    %13245 = vmatpush1.bf16.msra.mxu0 %v11984
    %13246 = vmatprep.subr.bf16.mxu0 %v11974
    %13247 = vmatpush1.bf16.msra.mxu0 %v11973
    %13248 = vmatprep.subr.bf16.mxu0 %v11963
    %13249 = vmatpush1.bf16.msra.mxu0 %v11962
    %13250 = vmatprep.subr.bf16.mxu0 %v11952
    %13251 = vmatpush1.bf16.msra.mxu0 %v11951
    %13252 = vmatprep.subr.bf16.mxu0 %v11941
    %13253 = vmatpush1.bf16.msra.mxu0 %v11940
    %13254 = vmatprep.subr.bf16.mxu0 %v11930
    %13255 = vmatpush1.bf16.msra.mxu0 %v11929
    %13256 = vmatprep.subr.bf16.mxu0 %v12095
    %13257 = vmatpush2.bf16.msra.mxu0 %v12094
    %13258 = vmatprep.subr.bf16.mxu0 %v12084
    %13259 = vmatpush2.bf16.msra.mxu0 %v12083
    %13260 = vmatprep.subr.bf16.mxu0 %v12073
    %13261 = vmatpush2.bf16.msra.mxu0 %v12072
    %13262 = vmatprep.subr.bf16.mxu0 %v12062
    %13263 = vmatpush2.bf16.msra.mxu0 %v12061
    %13264 = vmatprep.subr.bf16.mxu0 %v12051
    %13265 = vmatpush2.bf16.msra.mxu0 %v12050
    %13266 = vmatprep.subr.bf16.mxu0 %v12040
    %13267 = vmatpush2.bf16.msra.mxu0 %v12039
    %13268 = vmatprep.subr.bf16.mxu0 %v12029
    %13269 = vmatpush2.bf16.msra.mxu0 %v12028
    %13270 = vmatprep.subr.bf16.mxu0 %v12018
    %13271 = vmatpush2.bf16.msra.mxu0 %v12017
    %13272 = vmatprep.mubr.bf16.mxu0 %v7359
    %13273 = vmatmul.mubr.bf16.gmra.mxu0 %v7358
    %v13274 = vpop.f32.mrf.mxu0
    %v13275 = vadd.f32 %v13234, %v13274
    %v13276 = vpop.f32.mrf.mxu0
    %v13277 = vadd.f32 %v13236, %v13276
    %v13278 = vpop.f32.mrf.mxu0
    %v13279 = vpop.f32.mrf.mxu0
    %13280 = vdwg.mxu0
    %13281 = vmatprep.subr.bf16.mxu0 0
    %13282 = vmatpush1.bf16.msra.mxu0 0
    %13283 = vmatprep.subr.bf16.mxu0 0
    %13284 = vmatpush1.bf16.msra.mxu0 0
    %13285 = vmatprep.subr.bf16.mxu0 0
    %13286 = vmatpush1.bf16.msra.mxu0 0
    %13287 = vmatprep.subr.bf16.mxu0 0
    %13288 = vmatpush1.bf16.msra.mxu0 0
    %13289 = vmatprep.subr.bf16.mxu0 %v12139
    %13290 = vmatpush1.bf16.msra.mxu0 %v12138
    %13291 = vmatprep.subr.bf16.mxu0 %v12128
    %13292 = vmatpush1.bf16.msra.mxu0 %v12127
    %13293 = vmatprep.subr.bf16.mxu0 %v12117
    %13294 = vmatpush1.bf16.msra.mxu0 %v12116
    %13295 = vmatprep.subr.bf16.mxu0 %v12106
    %13296 = vmatpush1.bf16.msra.mxu0 %v12105
    %13297 = vmatprep.subr.bf16.mxu0 0
    %13298 = vmatpush2.bf16.msra.mxu0 0
    %13299 = vmatprep.subr.bf16.mxu0 0
    %13300 = vmatpush2.bf16.msra.mxu0 0
    %13301 = vmatprep.subr.bf16.mxu0 0
    %13302 = vmatpush2.bf16.msra.mxu0 0
    %13303 = vmatprep.subr.bf16.mxu0 0
    %13304 = vmatpush2.bf16.msra.mxu0 0
    %13305 = vmatprep.subr.bf16.mxu0 0
    %13306 = vmatpush2.bf16.msra.mxu0 0
    %13307 = vmatprep.subr.bf16.mxu0 0
    %13308 = vmatpush2.bf16.msra.mxu0 0
    %13309 = vmatprep.subr.bf16.mxu0 0
    %13310 = vmatpush2.bf16.msra.mxu0 0
    %13311 = vmatprep.subr.bf16.mxu0 0
    %13312 = vmatpush2.bf16.msra.mxu0 0
    %13313 = vmatprep.mubr.bf16.mxu0 0
    %13314 = vmatmul.mubr.bf16.gmra.mxu0 %v13074
    %v13315 = vpop.f32.mrf.mxu0
    %v13316 = vadd.f32 %v13275, %v13315
    %v13317 = vpop.f32.mrf.mxu0
    %v13318 = vadd.f32 %v13277, %v13317
    %v13319 = vpop.f32.mrf.mxu0
    %v13320 = vpop.f32.mrf.mxu0
    %13321 = vdwg.mxu0
    %13322 = vmatprep.subr.bf16.mxu0 %v11305
    %13323 = vmatpush1.bf16.msra.mxu0 %v11304
    %13324 = vmatprep.subr.bf16.mxu0 %v11294
    %13325 = vmatpush1.bf16.msra.mxu0 %v11293
    %13326 = vmatprep.subr.bf16.mxu0 %v11283
    %13327 = vmatpush1.bf16.msra.mxu0 %v11282
    %13328 = vmatprep.subr.bf16.mxu0 %v11272
    %13329 = vmatpush1.bf16.msra.mxu0 %v11271
    %13330 = vmatprep.subr.bf16.mxu0 %v11261
    %13331 = vmatpush1.bf16.msra.mxu0 %v11260
    %13332 = vmatprep.subr.bf16.mxu0 %v11250
    %13333 = vmatpush1.bf16.msra.mxu0 %v11249
    %13334 = vmatprep.subr.bf16.mxu0 %v11239
    %13335 = vmatpush1.bf16.msra.mxu0 %v11238
    %13336 = vmatprep.subr.bf16.mxu0 %v11228
    %13337 = vmatpush1.bf16.msra.mxu0 %v11227
    %13338 = vmatprep.subr.bf16.mxu0 %v11393
    %13339 = vmatpush2.bf16.msra.mxu0 %v11392
    %13340 = vmatprep.subr.bf16.mxu0 %v11382
    %13341 = vmatpush2.bf16.msra.mxu0 %v11381
    %13342 = vmatprep.subr.bf16.mxu0 %v11371
    %13343 = vmatpush2.bf16.msra.mxu0 %v11370
    %13344 = vmatprep.subr.bf16.mxu0 %v11360
    %13345 = vmatpush2.bf16.msra.mxu0 %v11359
    %13346 = vmatprep.subr.bf16.mxu0 %v11349
    %13347 = vmatpush2.bf16.msra.mxu0 %v11348
    %13348 = vmatprep.subr.bf16.mxu0 %v11338
    %13349 = vmatpush2.bf16.msra.mxu0 %v11337
    %13350 = vmatprep.subr.bf16.mxu0 %v11327
    %13351 = vmatpush2.bf16.msra.mxu0 %v11326
    %13352 = vmatprep.subr.bf16.mxu0 %v11316
    %13353 = vmatpush2.bf16.msra.mxu0 %v11315
    %13354 = vmatprep.mubr.bf16.mxu0 %v7351
    %13355 = vmatmul.mubr.bf16.gmra.mxu0 %v7350
    %v13356 = vpop.f32.mrf.mxu0
    %v13357 = vadd.f32 0.0, %v13356
    %v13358 = vpop.f32.mrf.mxu0
    %v13359 = vadd.f32 0.0, %v13358
    %v13360 = vpop.f32.mrf.mxu0
    %v13361 = vpop.f32.mrf.mxu0
    %13362 = vdwg.mxu0
    %13363 = vmatprep.subr.bf16.mxu0 %v11481
    %13364 = vmatpush1.bf16.msra.mxu0 %v11480
    %13365 = vmatprep.subr.bf16.mxu0 %v11470
    %13366 = vmatpush1.bf16.msra.mxu0 %v11469
    %13367 = vmatprep.subr.bf16.mxu0 %v11459
    %13368 = vmatpush1.bf16.msra.mxu0 %v11458
    %13369 = vmatprep.subr.bf16.mxu0 %v11448
    %13370 = vmatpush1.bf16.msra.mxu0 %v11447
    %13371 = vmatprep.subr.bf16.mxu0 %v11437
    %13372 = vmatpush1.bf16.msra.mxu0 %v11436
    %13373 = vmatprep.subr.bf16.mxu0 %v11426
    %13374 = vmatpush1.bf16.msra.mxu0 %v11425
    %13375 = vmatprep.subr.bf16.mxu0 %v11415
    %13376 = vmatpush1.bf16.msra.mxu0 %v11414
    %13377 = vmatprep.subr.bf16.mxu0 %v11404
    %13378 = vmatpush1.bf16.msra.mxu0 %v11403
    %13379 = vmatprep.subr.bf16.mxu0 %v11569
    %13380 = vmatpush2.bf16.msra.mxu0 %v11568
    %13381 = vmatprep.subr.bf16.mxu0 %v11558
    %13382 = vmatpush2.bf16.msra.mxu0 %v11557
    %13383 = vmatprep.subr.bf16.mxu0 %v11547
    %13384 = vmatpush2.bf16.msra.mxu0 %v11546
    %13385 = vmatprep.subr.bf16.mxu0 %v11536
    %13386 = vmatpush2.bf16.msra.mxu0 %v11535
    %13387 = vmatprep.subr.bf16.mxu0 %v11525
    %13388 = vmatpush2.bf16.msra.mxu0 %v11524
    %13389 = vmatprep.subr.bf16.mxu0 %v11514
    %13390 = vmatpush2.bf16.msra.mxu0 %v11513
    %13391 = vmatprep.subr.bf16.mxu0 %v11503
    %13392 = vmatpush2.bf16.msra.mxu0 %v11502
    %13393 = vmatprep.subr.bf16.mxu0 %v11492
    %13394 = vmatpush2.bf16.msra.mxu0 %v11491
    %13395 = vmatprep.mubr.bf16.mxu0 %v7353
    %13396 = vmatmul.mubr.bf16.gmra.mxu0 %v7352
    %v13397 = vpop.f32.mrf.mxu0
    %v13398 = vadd.f32 %v13357, %v13397
    %v13399 = vpop.f32.mrf.mxu0
    %v13400 = vadd.f32 %v13359, %v13399
    %v13401 = vpop.f32.mrf.mxu0
    %v13402 = vpop.f32.mrf.mxu0
    %13403 = vdwg.mxu0
    %13404 = vmatprep.subr.bf16.mxu0 %v11657
    %13405 = vmatpush1.bf16.msra.mxu0 %v11656
    %13406 = vmatprep.subr.bf16.mxu0 %v11646
    %13407 = vmatpush1.bf16.msra.mxu0 %v11645
    %13408 = vmatprep.subr.bf16.mxu0 %v11635
    %13409 = vmatpush1.bf16.msra.mxu0 %v11634
    %13410 = vmatprep.subr.bf16.mxu0 %v11624
    %13411 = vmatpush1.bf16.msra.mxu0 %v11623
    %13412 = vmatprep.subr.bf16.mxu0 %v11613
    %13413 = vmatpush1.bf16.msra.mxu0 %v11612
    %13414 = vmatprep.subr.bf16.mxu0 %v11602
    %13415 = vmatpush1.bf16.msra.mxu0 %v11601
    %13416 = vmatprep.subr.bf16.mxu0 %v11591
    %13417 = vmatpush1.bf16.msra.mxu0 %v11590
    %13418 = vmatprep.subr.bf16.mxu0 %v11580
    %13419 = vmatpush1.bf16.msra.mxu0 %v11579
    %13420 = vmatprep.subr.bf16.mxu0 %v11745
    %13421 = vmatpush2.bf16.msra.mxu0 %v11744
    %13422 = vmatprep.subr.bf16.mxu0 %v11734
    %13423 = vmatpush2.bf16.msra.mxu0 %v11733
    %13424 = vmatprep.subr.bf16.mxu0 %v11723
    %13425 = vmatpush2.bf16.msra.mxu0 %v11722
    %13426 = vmatprep.subr.bf16.mxu0 %v11712
    %13427 = vmatpush2.bf16.msra.mxu0 %v11711
    %13428 = vmatprep.subr.bf16.mxu0 %v11701
    %13429 = vmatpush2.bf16.msra.mxu0 %v11700
    %13430 = vmatprep.subr.bf16.mxu0 %v11690
    %13431 = vmatpush2.bf16.msra.mxu0 %v11689
    %13432 = vmatprep.subr.bf16.mxu0 %v11679
    %13433 = vmatpush2.bf16.msra.mxu0 %v11678
    %13434 = vmatprep.subr.bf16.mxu0 %v11668
    %13435 = vmatpush2.bf16.msra.mxu0 %v11667
    %13436 = vmatprep.mubr.bf16.mxu0 %v7355
    %13437 = vmatmul.mubr.bf16.gmra.mxu0 %v7354
    %v13438 = vpop.f32.mrf.mxu0
    %v13439 = vadd.f32 %v13398, %v13438
    %v13440 = vpop.f32.mrf.mxu0
    %v13441 = vadd.f32 %v13400, %v13440
    %v13442 = vpop.f32.mrf.mxu0
    %v13443 = vpop.f32.mrf.mxu0
    %13444 = vdwg.mxu0
    %13445 = vmatprep.subr.bf16.mxu0 %v11833
    %13446 = vmatpush1.bf16.msra.mxu0 %v11832
    %13447 = vmatprep.subr.bf16.mxu0 %v11822
    %13448 = vmatpush1.bf16.msra.mxu0 %v11821
    %13449 = vmatprep.subr.bf16.mxu0 %v11811
    %13450 = vmatpush1.bf16.msra.mxu0 %v11810
    %13451 = vmatprep.subr.bf16.mxu0 %v11800
    %13452 = vmatpush1.bf16.msra.mxu0 %v11799
    %13453 = vmatprep.subr.bf16.mxu0 %v11789
    %13454 = vmatpush1.bf16.msra.mxu0 %v11788
    %13455 = vmatprep.subr.bf16.mxu0 %v11778
    %13456 = vmatpush1.bf16.msra.mxu0 %v11777
    %13457 = vmatprep.subr.bf16.mxu0 %v11767
    %13458 = vmatpush1.bf16.msra.mxu0 %v11766
    %13459 = vmatprep.subr.bf16.mxu0 %v11756
    %13460 = vmatpush1.bf16.msra.mxu0 %v11755
    %13461 = vmatprep.subr.bf16.mxu0 %v11921
    %13462 = vmatpush2.bf16.msra.mxu0 %v11920
    %13463 = vmatprep.subr.bf16.mxu0 %v11910
    %13464 = vmatpush2.bf16.msra.mxu0 %v11909
    %13465 = vmatprep.subr.bf16.mxu0 %v11899
    %13466 = vmatpush2.bf16.msra.mxu0 %v11898
    %13467 = vmatprep.subr.bf16.mxu0 %v11888
    %13468 = vmatpush2.bf16.msra.mxu0 %v11887
    %13469 = vmatprep.subr.bf16.mxu0 %v11877
    %13470 = vmatpush2.bf16.msra.mxu0 %v11876
    %13471 = vmatprep.subr.bf16.mxu0 %v11866
    %13472 = vmatpush2.bf16.msra.mxu0 %v11865
    %13473 = vmatprep.subr.bf16.mxu0 %v11855
    %13474 = vmatpush2.bf16.msra.mxu0 %v11854
    %13475 = vmatprep.subr.bf16.mxu0 %v11844
    %13476 = vmatpush2.bf16.msra.mxu0 %v11843
    %13477 = vmatprep.mubr.bf16.mxu0 %v7357
    %13478 = vmatmul.mubr.bf16.gmra.mxu0 %v7356
    %v13479 = vpop.f32.mrf.mxu0
    %v13480 = vadd.f32 %v13439, %v13479
    %v13481 = vpop.f32.mrf.mxu0
    %v13482 = vadd.f32 %v13441, %v13481
    %v13483 = vpop.f32.mrf.mxu0
    %v13484 = vpop.f32.mrf.mxu0
    %13485 = vdwg.mxu0
    %13486 = vmatprep.subr.bf16.mxu0 %v12009
    %13487 = vmatpush1.bf16.msra.mxu0 %v12008
    %13488 = vmatprep.subr.bf16.mxu0 %v11998
    %13489 = vmatpush1.bf16.msra.mxu0 %v11997
    %13490 = vmatprep.subr.bf16.mxu0 %v11987
    %13491 = vmatpush1.bf16.msra.mxu0 %v11986
    %13492 = vmatprep.subr.bf16.mxu0 %v11976
    %13493 = vmatpush1.bf16.msra.mxu0 %v11975
    %13494 = vmatprep.subr.bf16.mxu0 %v11965
    %13495 = vmatpush1.bf16.msra.mxu0 %v11964
    %13496 = vmatprep.subr.bf16.mxu0 %v11954
    %13497 = vmatpush1.bf16.msra.mxu0 %v11953
    %13498 = vmatprep.subr.bf16.mxu0 %v11943
    %13499 = vmatpush1.bf16.msra.mxu0 %v11942
    %13500 = vmatprep.subr.bf16.mxu0 %v11932
    %13501 = vmatpush1.bf16.msra.mxu0 %v11931
    %13502 = vmatprep.subr.bf16.mxu0 %v12097
    %13503 = vmatpush2.bf16.msra.mxu0 %v12096
    %13504 = vmatprep.subr.bf16.mxu0 %v12086
    %13505 = vmatpush2.bf16.msra.mxu0 %v12085
    %13506 = vmatprep.subr.bf16.mxu0 %v12075
    %13507 = vmatpush2.bf16.msra.mxu0 %v12074
    %13508 = vmatprep.subr.bf16.mxu0 %v12064
    %13509 = vmatpush2.bf16.msra.mxu0 %v12063
    %13510 = vmatprep.subr.bf16.mxu0 %v12053
    %13511 = vmatpush2.bf16.msra.mxu0 %v12052
    %13512 = vmatprep.subr.bf16.mxu0 %v12042
    %13513 = vmatpush2.bf16.msra.mxu0 %v12041
    %13514 = vmatprep.subr.bf16.mxu0 %v12031
    %13515 = vmatpush2.bf16.msra.mxu0 %v12030
    %13516 = vmatprep.subr.bf16.mxu0 %v12020
    %13517 = vmatpush2.bf16.msra.mxu0 %v12019
    %13518 = vmatprep.mubr.bf16.mxu0 %v7359
    %13519 = vmatmul.mubr.bf16.gmra.mxu0 %v7358
    %v13520 = vpop.f32.mrf.mxu0
    %v13521 = vadd.f32 %v13480, %v13520
    %v13522 = vpop.f32.mrf.mxu0
    %v13523 = vadd.f32 %v13482, %v13522
    %v13524 = vpop.f32.mrf.mxu0
    %v13525 = vpop.f32.mrf.mxu0
    %13526 = vdwg.mxu0
    %13527 = vmatprep.subr.bf16.mxu0 0
    %13528 = vmatpush1.bf16.msra.mxu0 0
    %13529 = vmatprep.subr.bf16.mxu0 0
    %13530 = vmatpush1.bf16.msra.mxu0 0
    %13531 = vmatprep.subr.bf16.mxu0 0
    %13532 = vmatpush1.bf16.msra.mxu0 0
    %13533 = vmatprep.subr.bf16.mxu0 0
    %13534 = vmatpush1.bf16.msra.mxu0 0
    %13535 = vmatprep.subr.bf16.mxu0 %v12141
    %13536 = vmatpush1.bf16.msra.mxu0 %v12140
    %13537 = vmatprep.subr.bf16.mxu0 %v12130
    %13538 = vmatpush1.bf16.msra.mxu0 %v12129
    %13539 = vmatprep.subr.bf16.mxu0 %v12119
    %13540 = vmatpush1.bf16.msra.mxu0 %v12118
    %13541 = vmatprep.subr.bf16.mxu0 %v12108
    %13542 = vmatpush1.bf16.msra.mxu0 %v12107
    %13543 = vmatprep.subr.bf16.mxu0 0
    %13544 = vmatpush2.bf16.msra.mxu0 0
    %13545 = vmatprep.subr.bf16.mxu0 0
    %13546 = vmatpush2.bf16.msra.mxu0 0
    %13547 = vmatprep.subr.bf16.mxu0 0
    %13548 = vmatpush2.bf16.msra.mxu0 0
    %13549 = vmatprep.subr.bf16.mxu0 0
    %13550 = vmatpush2.bf16.msra.mxu0 0
    %13551 = vmatprep.subr.bf16.mxu0 0
    %13552 = vmatpush2.bf16.msra.mxu0 0
    %13553 = vmatprep.subr.bf16.mxu0 0
    %13554 = vmatpush2.bf16.msra.mxu0 0
    %13555 = vmatprep.subr.bf16.mxu0 0
    %13556 = vmatpush2.bf16.msra.mxu0 0
    %13557 = vmatprep.subr.bf16.mxu0 0
    %13558 = vmatpush2.bf16.msra.mxu0 0
    %13559 = vmatprep.mubr.bf16.mxu0 0
    %13560 = vmatmul.mubr.bf16.gmra.mxu0 %v13074
    %v13561 = vpop.f32.mrf.mxu0
    %v13562 = vadd.f32 %v13521, %v13561
    %v13563 = vpop.f32.mrf.mxu0
    %v13564 = vadd.f32 %v13523, %v13563
    %v13565 = vpop.f32.mrf.mxu0
    %v13566 = vpop.f32.mrf.mxu0
    %13567 = vdwg.mxu0
    %13568 = vmatprep.subr.bf16.mxu0 %v11307
    %13569 = vmatpush1.bf16.msra.mxu0 %v11306
    %13570 = vmatprep.subr.bf16.mxu0 %v11296
    %13571 = vmatpush1.bf16.msra.mxu0 %v11295
    %13572 = vmatprep.subr.bf16.mxu0 %v11285
    %13573 = vmatpush1.bf16.msra.mxu0 %v11284
    %13574 = vmatprep.subr.bf16.mxu0 %v11274
    %13575 = vmatpush1.bf16.msra.mxu0 %v11273
    %13576 = vmatprep.subr.bf16.mxu0 %v11263
    %13577 = vmatpush1.bf16.msra.mxu0 %v11262
    %13578 = vmatprep.subr.bf16.mxu0 %v11252
    %13579 = vmatpush1.bf16.msra.mxu0 %v11251
    %13580 = vmatprep.subr.bf16.mxu0 %v11241
    %13581 = vmatpush1.bf16.msra.mxu0 %v11240
    %13582 = vmatprep.subr.bf16.mxu0 %v11230
    %13583 = vmatpush1.bf16.msra.mxu0 %v11229
    %13584 = vmatprep.subr.bf16.mxu0 %v11395
    %13585 = vmatpush2.bf16.msra.mxu0 %v11394
    %13586 = vmatprep.subr.bf16.mxu0 %v11384
    %13587 = vmatpush2.bf16.msra.mxu0 %v11383
    %13588 = vmatprep.subr.bf16.mxu0 %v11373
    %13589 = vmatpush2.bf16.msra.mxu0 %v11372
    %13590 = vmatprep.subr.bf16.mxu0 %v11362
    %13591 = vmatpush2.bf16.msra.mxu0 %v11361
    %13592 = vmatprep.subr.bf16.mxu0 %v11351
    %13593 = vmatpush2.bf16.msra.mxu0 %v11350
    %13594 = vmatprep.subr.bf16.mxu0 %v11340
    %13595 = vmatpush2.bf16.msra.mxu0 %v11339
    %13596 = vmatprep.subr.bf16.mxu0 %v11329
    %13597 = vmatpush2.bf16.msra.mxu0 %v11328
    %13598 = vmatprep.subr.bf16.mxu0 %v11318
    %13599 = vmatpush2.bf16.msra.mxu0 %v11317
    %13600 = vmatprep.mubr.bf16.mxu0 %v7351
    %13601 = vmatmul.mubr.bf16.gmra.mxu0 %v7350
    %v13602 = vpop.f32.mrf.mxu0
    %v13603 = vadd.f32 0.0, %v13602
    %v13604 = vpop.f32.mrf.mxu0
    %v13605 = vadd.f32 0.0, %v13604
    %v13606 = vpop.f32.mrf.mxu0
    %v13607 = vpop.f32.mrf.mxu0
    %13608 = vdwg.mxu0
    %13609 = vmatprep.subr.bf16.mxu0 %v11483
    %13610 = vmatpush1.bf16.msra.mxu0 %v11482
    %13611 = vmatprep.subr.bf16.mxu0 %v11472
    %13612 = vmatpush1.bf16.msra.mxu0 %v11471
    %13613 = vmatprep.subr.bf16.mxu0 %v11461
    %13614 = vmatpush1.bf16.msra.mxu0 %v11460
    %13615 = vmatprep.subr.bf16.mxu0 %v11450
    %13616 = vmatpush1.bf16.msra.mxu0 %v11449
    %13617 = vmatprep.subr.bf16.mxu0 %v11439
    %13618 = vmatpush1.bf16.msra.mxu0 %v11438
    %13619 = vmatprep.subr.bf16.mxu0 %v11428
    %13620 = vmatpush1.bf16.msra.mxu0 %v11427
    %13621 = vmatprep.subr.bf16.mxu0 %v11417
    %13622 = vmatpush1.bf16.msra.mxu0 %v11416
    %13623 = vmatprep.subr.bf16.mxu0 %v11406
    %13624 = vmatpush1.bf16.msra.mxu0 %v11405
    %13625 = vmatprep.subr.bf16.mxu0 %v11571
    %13626 = vmatpush2.bf16.msra.mxu0 %v11570
    %13627 = vmatprep.subr.bf16.mxu0 %v11560
    %13628 = vmatpush2.bf16.msra.mxu0 %v11559
    %13629 = vmatprep.subr.bf16.mxu0 %v11549
    %13630 = vmatpush2.bf16.msra.mxu0 %v11548
    %13631 = vmatprep.subr.bf16.mxu0 %v11538
    %13632 = vmatpush2.bf16.msra.mxu0 %v11537
    %13633 = vmatprep.subr.bf16.mxu0 %v11527
    %13634 = vmatpush2.bf16.msra.mxu0 %v11526
    %13635 = vmatprep.subr.bf16.mxu0 %v11516
    %13636 = vmatpush2.bf16.msra.mxu0 %v11515
    %13637 = vmatprep.subr.bf16.mxu0 %v11505
    %13638 = vmatpush2.bf16.msra.mxu0 %v11504
    %13639 = vmatprep.subr.bf16.mxu0 %v11494
    %13640 = vmatpush2.bf16.msra.mxu0 %v11493
    %13641 = vmatprep.mubr.bf16.mxu0 %v7353
    %13642 = vmatmul.mubr.bf16.gmra.mxu0 %v7352
    %v13643 = vpop.f32.mrf.mxu0
    %v13644 = vadd.f32 %v13603, %v13643
    %v13645 = vpop.f32.mrf.mxu0
    %v13646 = vadd.f32 %v13605, %v13645
    %v13647 = vpop.f32.mrf.mxu0
    %v13648 = vpop.f32.mrf.mxu0
    %13649 = vdwg.mxu0
    %13650 = vmatprep.subr.bf16.mxu0 %v11659
    %13651 = vmatpush1.bf16.msra.mxu0 %v11658
    %13652 = vmatprep.subr.bf16.mxu0 %v11648
    %13653 = vmatpush1.bf16.msra.mxu0 %v11647
    %13654 = vmatprep.subr.bf16.mxu0 %v11637
    %13655 = vmatpush1.bf16.msra.mxu0 %v11636
    %13656 = vmatprep.subr.bf16.mxu0 %v11626
    %13657 = vmatpush1.bf16.msra.mxu0 %v11625
    %13658 = vmatprep.subr.bf16.mxu0 %v11615
    %13659 = vmatpush1.bf16.msra.mxu0 %v11614
    %13660 = vmatprep.subr.bf16.mxu0 %v11604
    %13661 = vmatpush1.bf16.msra.mxu0 %v11603
    %13662 = vmatprep.subr.bf16.mxu0 %v11593
    %13663 = vmatpush1.bf16.msra.mxu0 %v11592
    %13664 = vmatprep.subr.bf16.mxu0 %v11582
    %13665 = vmatpush1.bf16.msra.mxu0 %v11581
    %13666 = vmatprep.subr.bf16.mxu0 %v11747
    %13667 = vmatpush2.bf16.msra.mxu0 %v11746
    %13668 = vmatprep.subr.bf16.mxu0 %v11736
    %13669 = vmatpush2.bf16.msra.mxu0 %v11735
    %13670 = vmatprep.subr.bf16.mxu0 %v11725
    %13671 = vmatpush2.bf16.msra.mxu0 %v11724
    %13672 = vmatprep.subr.bf16.mxu0 %v11714
    %13673 = vmatpush2.bf16.msra.mxu0 %v11713
    %13674 = vmatprep.subr.bf16.mxu0 %v11703
    %13675 = vmatpush2.bf16.msra.mxu0 %v11702
    %13676 = vmatprep.subr.bf16.mxu0 %v11692
    %13677 = vmatpush2.bf16.msra.mxu0 %v11691
    %13678 = vmatprep.subr.bf16.mxu0 %v11681
    %13679 = vmatpush2.bf16.msra.mxu0 %v11680
    %13680 = vmatprep.subr.bf16.mxu0 %v11670
    %13681 = vmatpush2.bf16.msra.mxu0 %v11669
    %13682 = vmatprep.mubr.bf16.mxu0 %v7355
    %13683 = vmatmul.mubr.bf16.gmra.mxu0 %v7354
    %v13684 = vpop.f32.mrf.mxu0
    %v13685 = vadd.f32 %v13644, %v13684
    %v13686 = vpop.f32.mrf.mxu0
    %v13687 = vadd.f32 %v13646, %v13686
    %v13688 = vpop.f32.mrf.mxu0
    %v13689 = vpop.f32.mrf.mxu0
    %13690 = vdwg.mxu0
    %13691 = vmatprep.subr.bf16.mxu0 %v11835
    %13692 = vmatpush1.bf16.msra.mxu0 %v11834
    %13693 = vmatprep.subr.bf16.mxu0 %v11824
    %13694 = vmatpush1.bf16.msra.mxu0 %v11823
    %13695 = vmatprep.subr.bf16.mxu0 %v11813
    %13696 = vmatpush1.bf16.msra.mxu0 %v11812
    %13697 = vmatprep.subr.bf16.mxu0 %v11802
    %13698 = vmatpush1.bf16.msra.mxu0 %v11801
    %13699 = vmatprep.subr.bf16.mxu0 %v11791
    %13700 = vmatpush1.bf16.msra.mxu0 %v11790
    %13701 = vmatprep.subr.bf16.mxu0 %v11780
    %13702 = vmatpush1.bf16.msra.mxu0 %v11779
    %13703 = vmatprep.subr.bf16.mxu0 %v11769
    %13704 = vmatpush1.bf16.msra.mxu0 %v11768
    %13705 = vmatprep.subr.bf16.mxu0 %v11758
    %13706 = vmatpush1.bf16.msra.mxu0 %v11757
    %13707 = vmatprep.subr.bf16.mxu0 %v11923
    %13708 = vmatpush2.bf16.msra.mxu0 %v11922
    %13709 = vmatprep.subr.bf16.mxu0 %v11912
    %13710 = vmatpush2.bf16.msra.mxu0 %v11911
    %13711 = vmatprep.subr.bf16.mxu0 %v11901
    %13712 = vmatpush2.bf16.msra.mxu0 %v11900
    %13713 = vmatprep.subr.bf16.mxu0 %v11890
    %13714 = vmatpush2.bf16.msra.mxu0 %v11889
    %13715 = vmatprep.subr.bf16.mxu0 %v11879
    %13716 = vmatpush2.bf16.msra.mxu0 %v11878
    %13717 = vmatprep.subr.bf16.mxu0 %v11868
    %13718 = vmatpush2.bf16.msra.mxu0 %v11867
    %13719 = vmatprep.subr.bf16.mxu0 %v11857
    %13720 = vmatpush2.bf16.msra.mxu0 %v11856
    %13721 = vmatprep.subr.bf16.mxu0 %v11846
    %13722 = vmatpush2.bf16.msra.mxu0 %v11845
    %13723 = vmatprep.mubr.bf16.mxu0 %v7357
    %13724 = vmatmul.mubr.bf16.gmra.mxu0 %v7356
    %v13725 = vpop.f32.mrf.mxu0
    %v13726 = vadd.f32 %v13685, %v13725
    %v13727 = vpop.f32.mrf.mxu0
    %v13728 = vadd.f32 %v13687, %v13727
    %v13729 = vpop.f32.mrf.mxu0
    %v13730 = vpop.f32.mrf.mxu0
    %13731 = vdwg.mxu0
    %13732 = vmatprep.subr.bf16.mxu0 %v12011
    %13733 = vmatpush1.bf16.msra.mxu0 %v12010
    %13734 = vmatprep.subr.bf16.mxu0 %v12000
    %13735 = vmatpush1.bf16.msra.mxu0 %v11999
    %13736 = vmatprep.subr.bf16.mxu0 %v11989
    %13737 = vmatpush1.bf16.msra.mxu0 %v11988
    %13738 = vmatprep.subr.bf16.mxu0 %v11978
    %13739 = vmatpush1.bf16.msra.mxu0 %v11977
    %13740 = vmatprep.subr.bf16.mxu0 %v11967
    %13741 = vmatpush1.bf16.msra.mxu0 %v11966
    %13742 = vmatprep.subr.bf16.mxu0 %v11956
    %13743 = vmatpush1.bf16.msra.mxu0 %v11955
    %13744 = vmatprep.subr.bf16.mxu0 %v11945
    %13745 = vmatpush1.bf16.msra.mxu0 %v11944
    %13746 = vmatprep.subr.bf16.mxu0 %v11934
    %13747 = vmatpush1.bf16.msra.mxu0 %v11933
    %13748 = vmatprep.subr.bf16.mxu0 %v12099
    %13749 = vmatpush2.bf16.msra.mxu0 %v12098
    %13750 = vmatprep.subr.bf16.mxu0 %v12088
    %13751 = vmatpush2.bf16.msra.mxu0 %v12087
    %13752 = vmatprep.subr.bf16.mxu0 %v12077
    %13753 = vmatpush2.bf16.msra.mxu0 %v12076
    %13754 = vmatprep.subr.bf16.mxu0 %v12066
    %13755 = vmatpush2.bf16.msra.mxu0 %v12065
    %13756 = vmatprep.subr.bf16.mxu0 %v12055
    %13757 = vmatpush2.bf16.msra.mxu0 %v12054
    %13758 = vmatprep.subr.bf16.mxu0 %v12044
    %13759 = vmatpush2.bf16.msra.mxu0 %v12043
    %13760 = vmatprep.subr.bf16.mxu0 %v12033
    %13761 = vmatpush2.bf16.msra.mxu0 %v12032
    %13762 = vmatprep.subr.bf16.mxu0 %v12022
    %13763 = vmatpush2.bf16.msra.mxu0 %v12021
    %13764 = vmatprep.mubr.bf16.mxu0 %v7359
    %13765 = vmatmul.mubr.bf16.gmra.mxu0 %v7358
    %v13766 = vpop.f32.mrf.mxu0
    %v13767 = vadd.f32 %v13726, %v13766
    %v13768 = vpop.f32.mrf.mxu0
    %v13769 = vadd.f32 %v13728, %v13768
    %v13770 = vpop.f32.mrf.mxu0
    %v13771 = vpop.f32.mrf.mxu0
    %13772 = vdwg.mxu0
    %13773 = vmatprep.subr.bf16.mxu0 0
    %13774 = vmatpush1.bf16.msra.mxu0 0
    %13775 = vmatprep.subr.bf16.mxu0 0
    %13776 = vmatpush1.bf16.msra.mxu0 0
    %13777 = vmatprep.subr.bf16.mxu0 0
    %13778 = vmatpush1.bf16.msra.mxu0 0
    %13779 = vmatprep.subr.bf16.mxu0 0
    %13780 = vmatpush1.bf16.msra.mxu0 0
    %13781 = vmatprep.subr.bf16.mxu0 %v12143
    %13782 = vmatpush1.bf16.msra.mxu0 %v12142
    %13783 = vmatprep.subr.bf16.mxu0 %v12132
    %13784 = vmatpush1.bf16.msra.mxu0 %v12131
    %13785 = vmatprep.subr.bf16.mxu0 %v12121
    %13786 = vmatpush1.bf16.msra.mxu0 %v12120
    %13787 = vmatprep.subr.bf16.mxu0 %v12110
    %13788 = vmatpush1.bf16.msra.mxu0 %v12109
    %13789 = vmatprep.subr.bf16.mxu0 0
    %13790 = vmatpush2.bf16.msra.mxu0 0
    %13791 = vmatprep.subr.bf16.mxu0 0
    %13792 = vmatpush2.bf16.msra.mxu0 0
    %13793 = vmatprep.subr.bf16.mxu0 0
    %13794 = vmatpush2.bf16.msra.mxu0 0
    %13795 = vmatprep.subr.bf16.mxu0 0
    %13796 = vmatpush2.bf16.msra.mxu0 0
    %13797 = vmatprep.subr.bf16.mxu0 0
    %13798 = vmatpush2.bf16.msra.mxu0 0
    %13799 = vmatprep.subr.bf16.mxu0 0
    %13800 = vmatpush2.bf16.msra.mxu0 0
    %13801 = vmatprep.subr.bf16.mxu0 0
    %13802 = vmatpush2.bf16.msra.mxu0 0
    %13803 = vmatprep.subr.bf16.mxu0 0
    %13804 = vmatpush2.bf16.msra.mxu0 0
    %13805 = vmatprep.mubr.bf16.mxu0 0
    %13806 = vmatmul.mubr.bf16.gmra.mxu0 %v13074
    %v13807 = vpop.f32.mrf.mxu0
    %v13808 = vadd.f32 %v13767, %v13807
    %v13809 = vpop.f32.mrf.mxu0
    %v13810 = vadd.f32 %v13769, %v13809
    %v13811 = vpop.f32.mrf.mxu0
    %v13812 = vpop.f32.mrf.mxu0
    %13813 = vdwg.mxu0
    %13814 = vmatprep.subr.bf16.mxu0 %v11309
    %13815 = vmatpush1.bf16.msra.mxu0 %v11308
    %13816 = vmatprep.subr.bf16.mxu0 %v11298
    %13817 = vmatpush1.bf16.msra.mxu0 %v11297
    %13818 = vmatprep.subr.bf16.mxu0 %v11287
    %13819 = vmatpush1.bf16.msra.mxu0 %v11286
    %13820 = vmatprep.subr.bf16.mxu0 %v11276
    %13821 = vmatpush1.bf16.msra.mxu0 %v11275
    %13822 = vmatprep.subr.bf16.mxu0 %v11265
    %13823 = vmatpush1.bf16.msra.mxu0 %v11264
    %13824 = vmatprep.subr.bf16.mxu0 %v11254
    %13825 = vmatpush1.bf16.msra.mxu0 %v11253
    %13826 = vmatprep.subr.bf16.mxu0 %v11243
    %13827 = vmatpush1.bf16.msra.mxu0 %v11242
    %13828 = vmatprep.subr.bf16.mxu0 %v11232
    %13829 = vmatpush1.bf16.msra.mxu0 %v11231
    %13830 = vmatprep.subr.bf16.mxu0 %v11397
    %13831 = vmatpush2.bf16.msra.mxu0 %v11396
    %13832 = vmatprep.subr.bf16.mxu0 %v11386
    %13833 = vmatpush2.bf16.msra.mxu0 %v11385
    %13834 = vmatprep.subr.bf16.mxu0 %v11375
    %13835 = vmatpush2.bf16.msra.mxu0 %v11374
    %13836 = vmatprep.subr.bf16.mxu0 %v11364
    %13837 = vmatpush2.bf16.msra.mxu0 %v11363
    %13838 = vmatprep.subr.bf16.mxu0 %v11353
    %13839 = vmatpush2.bf16.msra.mxu0 %v11352
    %13840 = vmatprep.subr.bf16.mxu0 %v11342
    %13841 = vmatpush2.bf16.msra.mxu0 %v11341
    %13842 = vmatprep.subr.bf16.mxu0 %v11331
    %13843 = vmatpush2.bf16.msra.mxu0 %v11330
    %13844 = vmatprep.subr.bf16.mxu0 %v11320
    %13845 = vmatpush2.bf16.msra.mxu0 %v11319
    %13846 = vmatprep.mubr.bf16.mxu0 %v7351
    %13847 = vmatmul.mubr.bf16.gmra.mxu0 %v7350
    %v13848 = vpop.f32.mrf.mxu0
    %v13849 = vadd.f32 0.0, %v13848
    %v13850 = vpop.f32.mrf.mxu0
    %v13851 = vadd.f32 0.0, %v13850
    %v13852 = vpop.f32.mrf.mxu0
    %v13853 = vpop.f32.mrf.mxu0
    %13854 = vdwg.mxu0
    %13855 = vmatprep.subr.bf16.mxu0 %v11485
    %13856 = vmatpush1.bf16.msra.mxu0 %v11484
    %13857 = vmatprep.subr.bf16.mxu0 %v11474
    %13858 = vmatpush1.bf16.msra.mxu0 %v11473
    %13859 = vmatprep.subr.bf16.mxu0 %v11463
    %13860 = vmatpush1.bf16.msra.mxu0 %v11462
    %13861 = vmatprep.subr.bf16.mxu0 %v11452
    %13862 = vmatpush1.bf16.msra.mxu0 %v11451
    %13863 = vmatprep.subr.bf16.mxu0 %v11441
    %13864 = vmatpush1.bf16.msra.mxu0 %v11440
    %13865 = vmatprep.subr.bf16.mxu0 %v11430
    %13866 = vmatpush1.bf16.msra.mxu0 %v11429
    %13867 = vmatprep.subr.bf16.mxu0 %v11419
    %13868 = vmatpush1.bf16.msra.mxu0 %v11418
    %13869 = vmatprep.subr.bf16.mxu0 %v11408
    %13870 = vmatpush1.bf16.msra.mxu0 %v11407
    %13871 = vmatprep.subr.bf16.mxu0 %v11573
    %13872 = vmatpush2.bf16.msra.mxu0 %v11572
    %13873 = vmatprep.subr.bf16.mxu0 %v11562
    %13874 = vmatpush2.bf16.msra.mxu0 %v11561
    %13875 = vmatprep.subr.bf16.mxu0 %v11551
    %13876 = vmatpush2.bf16.msra.mxu0 %v11550
    %13877 = vmatprep.subr.bf16.mxu0 %v11540
    %13878 = vmatpush2.bf16.msra.mxu0 %v11539
    %13879 = vmatprep.subr.bf16.mxu0 %v11529
    %13880 = vmatpush2.bf16.msra.mxu0 %v11528
    %13881 = vmatprep.subr.bf16.mxu0 %v11518
    %13882 = vmatpush2.bf16.msra.mxu0 %v11517
    %13883 = vmatprep.subr.bf16.mxu0 %v11507
    %13884 = vmatpush2.bf16.msra.mxu0 %v11506
    %13885 = vmatprep.subr.bf16.mxu0 %v11496
    %13886 = vmatpush2.bf16.msra.mxu0 %v11495
    %13887 = vmatprep.mubr.bf16.mxu0 %v7353
    %13888 = vmatmul.mubr.bf16.gmra.mxu0 %v7352
    %v13889 = vpop.f32.mrf.mxu0
    %v13890 = vadd.f32 %v13849, %v13889
    %v13891 = vpop.f32.mrf.mxu0
    %v13892 = vadd.f32 %v13851, %v13891
    %v13893 = vpop.f32.mrf.mxu0
    %v13894 = vpop.f32.mrf.mxu0
    %13895 = vdwg.mxu0
    %13896 = vmatprep.subr.bf16.mxu0 %v11661
    %13897 = vmatpush1.bf16.msra.mxu0 %v11660
    %13898 = vmatprep.subr.bf16.mxu0 %v11650
    %13899 = vmatpush1.bf16.msra.mxu0 %v11649
    %13900 = vmatprep.subr.bf16.mxu0 %v11639
    %13901 = vmatpush1.bf16.msra.mxu0 %v11638
    %13902 = vmatprep.subr.bf16.mxu0 %v11628
    %13903 = vmatpush1.bf16.msra.mxu0 %v11627
    %13904 = vmatprep.subr.bf16.mxu0 %v11617
    %13905 = vmatpush1.bf16.msra.mxu0 %v11616
    %13906 = vmatprep.subr.bf16.mxu0 %v11606
    %13907 = vmatpush1.bf16.msra.mxu0 %v11605
    %13908 = vmatprep.subr.bf16.mxu0 %v11595
    %13909 = vmatpush1.bf16.msra.mxu0 %v11594
    %13910 = vmatprep.subr.bf16.mxu0 %v11584
    %13911 = vmatpush1.bf16.msra.mxu0 %v11583
    %13912 = vmatprep.subr.bf16.mxu0 %v11749
    %13913 = vmatpush2.bf16.msra.mxu0 %v11748
    %13914 = vmatprep.subr.bf16.mxu0 %v11738
    %13915 = vmatpush2.bf16.msra.mxu0 %v11737
    %13916 = vmatprep.subr.bf16.mxu0 %v11727
    %13917 = vmatpush2.bf16.msra.mxu0 %v11726
    %13918 = vmatprep.subr.bf16.mxu0 %v11716
    %13919 = vmatpush2.bf16.msra.mxu0 %v11715
    %13920 = vmatprep.subr.bf16.mxu0 %v11705
    %13921 = vmatpush2.bf16.msra.mxu0 %v11704
    %13922 = vmatprep.subr.bf16.mxu0 %v11694
    %13923 = vmatpush2.bf16.msra.mxu0 %v11693
    %13924 = vmatprep.subr.bf16.mxu0 %v11683
    %13925 = vmatpush2.bf16.msra.mxu0 %v11682
    %13926 = vmatprep.subr.bf16.mxu0 %v11672
    %13927 = vmatpush2.bf16.msra.mxu0 %v11671
    %13928 = vmatprep.mubr.bf16.mxu0 %v7355
    %13929 = vmatmul.mubr.bf16.gmra.mxu0 %v7354
    %v13930 = vpop.f32.mrf.mxu0
    %v13931 = vadd.f32 %v13890, %v13930
    %v13932 = vpop.f32.mrf.mxu0
    %v13933 = vadd.f32 %v13892, %v13932
    %v13934 = vpop.f32.mrf.mxu0
    %v13935 = vpop.f32.mrf.mxu0
    %13936 = vdwg.mxu0
    %13937 = vmatprep.subr.bf16.mxu0 %v11837
    %13938 = vmatpush1.bf16.msra.mxu0 %v11836
    %13939 = vmatprep.subr.bf16.mxu0 %v11826
    %13940 = vmatpush1.bf16.msra.mxu0 %v11825
    %13941 = vmatprep.subr.bf16.mxu0 %v11815
    %13942 = vmatpush1.bf16.msra.mxu0 %v11814
    %13943 = vmatprep.subr.bf16.mxu0 %v11804
    %13944 = vmatpush1.bf16.msra.mxu0 %v11803
    %13945 = vmatprep.subr.bf16.mxu0 %v11793
    %13946 = vmatpush1.bf16.msra.mxu0 %v11792
    %13947 = vmatprep.subr.bf16.mxu0 %v11782
    %13948 = vmatpush1.bf16.msra.mxu0 %v11781
    %13949 = vmatprep.subr.bf16.mxu0 %v11771
    %13950 = vmatpush1.bf16.msra.mxu0 %v11770
    %13951 = vmatprep.subr.bf16.mxu0 %v11760
    %13952 = vmatpush1.bf16.msra.mxu0 %v11759
    %13953 = vmatprep.subr.bf16.mxu0 %v11925
    %13954 = vmatpush2.bf16.msra.mxu0 %v11924
    %13955 = vmatprep.subr.bf16.mxu0 %v11914
    %13956 = vmatpush2.bf16.msra.mxu0 %v11913
    %13957 = vmatprep.subr.bf16.mxu0 %v11903
    %13958 = vmatpush2.bf16.msra.mxu0 %v11902
    %13959 = vmatprep.subr.bf16.mxu0 %v11892
    %13960 = vmatpush2.bf16.msra.mxu0 %v11891
    %13961 = vmatprep.subr.bf16.mxu0 %v11881
    %13962 = vmatpush2.bf16.msra.mxu0 %v11880
    %13963 = vmatprep.subr.bf16.mxu0 %v11870
    %13964 = vmatpush2.bf16.msra.mxu0 %v11869
    %13965 = vmatprep.subr.bf16.mxu0 %v11859
    %13966 = vmatpush2.bf16.msra.mxu0 %v11858
    %13967 = vmatprep.subr.bf16.mxu0 %v11848
    %13968 = vmatpush2.bf16.msra.mxu0 %v11847
    %13969 = vmatprep.mubr.bf16.mxu0 %v7357
    %13970 = vmatmul.mubr.bf16.gmra.mxu0 %v7356
    %v13971 = vpop.f32.mrf.mxu0
    %v13972 = vadd.f32 %v13931, %v13971
    %v13973 = vpop.f32.mrf.mxu0
    %v13974 = vadd.f32 %v13933, %v13973
    %v13975 = vpop.f32.mrf.mxu0
    %v13976 = vpop.f32.mrf.mxu0
    %13977 = vdwg.mxu0
    %13978 = vmatprep.subr.bf16.mxu0 %v12013
    %13979 = vmatpush1.bf16.msra.mxu0 %v12012
    %13980 = vmatprep.subr.bf16.mxu0 %v12002
    %13981 = vmatpush1.bf16.msra.mxu0 %v12001
    %13982 = vmatprep.subr.bf16.mxu0 %v11991
    %13983 = vmatpush1.bf16.msra.mxu0 %v11990
    %13984 = vmatprep.subr.bf16.mxu0 %v11980
    %13985 = vmatpush1.bf16.msra.mxu0 %v11979
    %13986 = vmatprep.subr.bf16.mxu0 %v11969
    %13987 = vmatpush1.bf16.msra.mxu0 %v11968
    %13988 = vmatprep.subr.bf16.mxu0 %v11958
    %13989 = vmatpush1.bf16.msra.mxu0 %v11957
    %13990 = vmatprep.subr.bf16.mxu0 %v11947
    %13991 = vmatpush1.bf16.msra.mxu0 %v11946
    %13992 = vmatprep.subr.bf16.mxu0 %v11936
    %13993 = vmatpush1.bf16.msra.mxu0 %v11935
    %13994 = vmatprep.subr.bf16.mxu0 %v12101
    %13995 = vmatpush2.bf16.msra.mxu0 %v12100
    %13996 = vmatprep.subr.bf16.mxu0 %v12090
    %13997 = vmatpush2.bf16.msra.mxu0 %v12089
    %13998 = vmatprep.subr.bf16.mxu0 %v12079
    %13999 = vmatpush2.bf16.msra.mxu0 %v12078
    %14000 = vmatprep.subr.bf16.mxu0 %v12068
    %14001 = vmatpush2.bf16.msra.mxu0 %v12067
    %14002 = vmatprep.subr.bf16.mxu0 %v12057
    %14003 = vmatpush2.bf16.msra.mxu0 %v12056
    %14004 = vmatprep.subr.bf16.mxu0 %v12046
    %14005 = vmatpush2.bf16.msra.mxu0 %v12045
    %14006 = vmatprep.subr.bf16.mxu0 %v12035
    %14007 = vmatpush2.bf16.msra.mxu0 %v12034
    %14008 = vmatprep.subr.bf16.mxu0 %v12024
    %14009 = vmatpush2.bf16.msra.mxu0 %v12023
    %14010 = vmatprep.mubr.bf16.mxu0 %v7359
    %14011 = vmatmul.mubr.bf16.gmra.mxu0 %v7358
    %v14012 = vpop.f32.mrf.mxu0
    %v14013 = vadd.f32 %v13972, %v14012
    %v14014 = vpop.f32.mrf.mxu0
    %v14015 = vadd.f32 %v13974, %v14014
    %v14016 = vpop.f32.mrf.mxu0
    %v14017 = vpop.f32.mrf.mxu0
    %14018 = vdwg.mxu0
    %14019 = vmatprep.subr.bf16.mxu0 0
    %14020 = vmatpush1.bf16.msra.mxu0 0
    %14021 = vmatprep.subr.bf16.mxu0 0
    %14022 = vmatpush1.bf16.msra.mxu0 0
    %14023 = vmatprep.subr.bf16.mxu0 0
    %14024 = vmatpush1.bf16.msra.mxu0 0
    %14025 = vmatprep.subr.bf16.mxu0 0
    %14026 = vmatpush1.bf16.msra.mxu0 0
    %14027 = vmatprep.subr.bf16.mxu0 %v12145
    %14028 = vmatpush1.bf16.msra.mxu0 %v12144
    %14029 = vmatprep.subr.bf16.mxu0 %v12134
    %14030 = vmatpush1.bf16.msra.mxu0 %v12133
    %14031 = vmatprep.subr.bf16.mxu0 %v12123
    %14032 = vmatpush1.bf16.msra.mxu0 %v12122
    %14033 = vmatprep.subr.bf16.mxu0 %v12112
    %14034 = vmatpush1.bf16.msra.mxu0 %v12111
    %14035 = vmatprep.subr.bf16.mxu0 0
    %14036 = vmatpush2.bf16.msra.mxu0 0
    %14037 = vmatprep.subr.bf16.mxu0 0
    %14038 = vmatpush2.bf16.msra.mxu0 0
    %14039 = vmatprep.subr.bf16.mxu0 0
    %14040 = vmatpush2.bf16.msra.mxu0 0
    %14041 = vmatprep.subr.bf16.mxu0 0
    %14042 = vmatpush2.bf16.msra.mxu0 0
    %14043 = vmatprep.subr.bf16.mxu0 0
    %14044 = vmatpush2.bf16.msra.mxu0 0
    %14045 = vmatprep.subr.bf16.mxu0 0
    %14046 = vmatpush2.bf16.msra.mxu0 0
    %14047 = vmatprep.subr.bf16.mxu0 0
    %14048 = vmatpush2.bf16.msra.mxu0 0
    %14049 = vmatprep.subr.bf16.mxu0 0
    %14050 = vmatpush2.bf16.msra.mxu0 0
    %14051 = vmatprep.mubr.bf16.mxu0 0
    %14052 = vmatmul.mubr.bf16.gmra.mxu0 %v13074
    %v14053 = vpop.f32.mrf.mxu0
    %v14054 = vadd.f32 %v14013, %v14053
    %v14055 = vpop.f32.mrf.mxu0
    %v14056 = vadd.f32 %v14015, %v14055
    %v14057 = vpop.f32.mrf.mxu0
    %v14058 = vpop.f32.mrf.mxu0
    %14059 = vdwg.mxu0
    %14060 = vmatprep.subr.bf16.mxu0 %v11311
    %14061 = vmatpush1.bf16.msra.mxu0 %v11310
    %14062 = vmatprep.subr.bf16.mxu0 %v11300
    %14063 = vmatpush1.bf16.msra.mxu0 %v11299
    %14064 = vmatprep.subr.bf16.mxu0 %v11289
    %14065 = vmatpush1.bf16.msra.mxu0 %v11288
    %14066 = vmatprep.subr.bf16.mxu0 %v11278
    %14067 = vmatpush1.bf16.msra.mxu0 %v11277
    %14068 = vmatprep.subr.bf16.mxu0 %v11267
    %14069 = vmatpush1.bf16.msra.mxu0 %v11266
    %14070 = vmatprep.subr.bf16.mxu0 %v11256
    %14071 = vmatpush1.bf16.msra.mxu0 %v11255
    %14072 = vmatprep.subr.bf16.mxu0 %v11245
    %14073 = vmatpush1.bf16.msra.mxu0 %v11244
    %14074 = vmatprep.subr.bf16.mxu0 %v11234
    %14075 = vmatpush1.bf16.msra.mxu0 %v11233
    %14076 = vmatprep.subr.bf16.mxu0 %v11399
    %14077 = vmatpush2.bf16.msra.mxu0 %v11398
    %14078 = vmatprep.subr.bf16.mxu0 %v11388
    %14079 = vmatpush2.bf16.msra.mxu0 %v11387
    %14080 = vmatprep.subr.bf16.mxu0 %v11377
    %14081 = vmatpush2.bf16.msra.mxu0 %v11376
    %14082 = vmatprep.subr.bf16.mxu0 %v11366
    %14083 = vmatpush2.bf16.msra.mxu0 %v11365
    %14084 = vmatprep.subr.bf16.mxu0 %v11355
    %14085 = vmatpush2.bf16.msra.mxu0 %v11354
    %14086 = vmatprep.subr.bf16.mxu0 %v11344
    %14087 = vmatpush2.bf16.msra.mxu0 %v11343
    %14088 = vmatprep.subr.bf16.mxu0 %v11333
    %14089 = vmatpush2.bf16.msra.mxu0 %v11332
    %14090 = vmatprep.subr.bf16.mxu0 %v11322
    %14091 = vmatpush2.bf16.msra.mxu0 %v11321
    %14092 = vmatprep.mubr.bf16.mxu0 %v7351
    %14093 = vmatmul.mubr.bf16.gmra.mxu0 %v7350
    %v14094 = vpop.f32.mrf.mxu0
    %v14095 = vadd.f32 0.0, %v14094
    %v14096 = vpop.f32.mrf.mxu0
    %v14097 = vadd.f32 0.0, %v14096
    %v14098 = vpop.f32.mrf.mxu0
    %v14099 = vpop.f32.mrf.mxu0
    %14100 = vdwg.mxu0
    %14101 = vmatprep.subr.bf16.mxu0 %v11487
    %14102 = vmatpush1.bf16.msra.mxu0 %v11486
    %14103 = vmatprep.subr.bf16.mxu0 %v11476
    %14104 = vmatpush1.bf16.msra.mxu0 %v11475
    %14105 = vmatprep.subr.bf16.mxu0 %v11465
    %14106 = vmatpush1.bf16.msra.mxu0 %v11464
    %14107 = vmatprep.subr.bf16.mxu0 %v11454
    %14108 = vmatpush1.bf16.msra.mxu0 %v11453
    %14109 = vmatprep.subr.bf16.mxu0 %v11443
    %14110 = vmatpush1.bf16.msra.mxu0 %v11442
    %14111 = vmatprep.subr.bf16.mxu0 %v11432
    %14112 = vmatpush1.bf16.msra.mxu0 %v11431
    %14113 = vmatprep.subr.bf16.mxu0 %v11421
    %14114 = vmatpush1.bf16.msra.mxu0 %v11420
    %14115 = vmatprep.subr.bf16.mxu0 %v11410
    %14116 = vmatpush1.bf16.msra.mxu0 %v11409
    %14117 = vmatprep.subr.bf16.mxu0 %v11575
    %14118 = vmatpush2.bf16.msra.mxu0 %v11574
    %14119 = vmatprep.subr.bf16.mxu0 %v11564
    %14120 = vmatpush2.bf16.msra.mxu0 %v11563
    %14121 = vmatprep.subr.bf16.mxu0 %v11553
    %14122 = vmatpush2.bf16.msra.mxu0 %v11552
    %14123 = vmatprep.subr.bf16.mxu0 %v11542
    %14124 = vmatpush2.bf16.msra.mxu0 %v11541
    %14125 = vmatprep.subr.bf16.mxu0 %v11531
    %14126 = vmatpush2.bf16.msra.mxu0 %v11530
    %14127 = vmatprep.subr.bf16.mxu0 %v11520
    %14128 = vmatpush2.bf16.msra.mxu0 %v11519
    %14129 = vmatprep.subr.bf16.mxu0 %v11509
    %14130 = vmatpush2.bf16.msra.mxu0 %v11508
    %14131 = vmatprep.subr.bf16.mxu0 %v11498
    %14132 = vmatpush2.bf16.msra.mxu0 %v11497
    %14133 = vmatprep.mubr.bf16.mxu0 %v7353
    %14134 = vmatmul.mubr.bf16.gmra.mxu0 %v7352
    %v14135 = vpop.f32.mrf.mxu0
    %v14136 = vadd.f32 %v14095, %v14135
    %v14137 = vpop.f32.mrf.mxu0
    %v14138 = vadd.f32 %v14097, %v14137
    %v14139 = vpop.f32.mrf.mxu0
    %v14140 = vpop.f32.mrf.mxu0
    %14141 = vdwg.mxu0
    %14142 = vmatprep.subr.bf16.mxu0 %v11663
    %14143 = vmatpush1.bf16.msra.mxu0 %v11662
    %14144 = vmatprep.subr.bf16.mxu0 %v11652
    %14145 = vmatpush1.bf16.msra.mxu0 %v11651
    %14146 = vmatprep.subr.bf16.mxu0 %v11641
    %14147 = vmatpush1.bf16.msra.mxu0 %v11640
    %14148 = vmatprep.subr.bf16.mxu0 %v11630
    %14149 = vmatpush1.bf16.msra.mxu0 %v11629
    %14150 = vmatprep.subr.bf16.mxu0 %v11619
    %14151 = vmatpush1.bf16.msra.mxu0 %v11618
    %14152 = vmatprep.subr.bf16.mxu0 %v11608
    %14153 = vmatpush1.bf16.msra.mxu0 %v11607
    %14154 = vmatprep.subr.bf16.mxu0 %v11597
    %14155 = vmatpush1.bf16.msra.mxu0 %v11596
    %14156 = vmatprep.subr.bf16.mxu0 %v11586
    %14157 = vmatpush1.bf16.msra.mxu0 %v11585
    %14158 = vmatprep.subr.bf16.mxu0 %v11751
    %14159 = vmatpush2.bf16.msra.mxu0 %v11750
    %14160 = vmatprep.subr.bf16.mxu0 %v11740
    %14161 = vmatpush2.bf16.msra.mxu0 %v11739
    %14162 = vmatprep.subr.bf16.mxu0 %v11729
    %14163 = vmatpush2.bf16.msra.mxu0 %v11728
    %14164 = vmatprep.subr.bf16.mxu0 %v11718
    %14165 = vmatpush2.bf16.msra.mxu0 %v11717
    %14166 = vmatprep.subr.bf16.mxu0 %v11707
    %14167 = vmatpush2.bf16.msra.mxu0 %v11706
    %14168 = vmatprep.subr.bf16.mxu0 %v11696
    %14169 = vmatpush2.bf16.msra.mxu0 %v11695
    %14170 = vmatprep.subr.bf16.mxu0 %v11685
    %14171 = vmatpush2.bf16.msra.mxu0 %v11684
    %14172 = vmatprep.subr.bf16.mxu0 %v11674
    %14173 = vmatpush2.bf16.msra.mxu0 %v11673
    %14174 = vmatprep.mubr.bf16.mxu0 %v7355
    %14175 = vmatmul.mubr.bf16.gmra.mxu0 %v7354
    %v14176 = vpop.f32.mrf.mxu0
    %v14177 = vadd.f32 %v14136, %v14176
    %v14178 = vpop.f32.mrf.mxu0
    %v14179 = vadd.f32 %v14138, %v14178
    %v14180 = vpop.f32.mrf.mxu0
    %v14181 = vpop.f32.mrf.mxu0
    %14182 = vdwg.mxu0
    %14183 = vmatprep.subr.bf16.mxu0 %v11839
    %14184 = vmatpush1.bf16.msra.mxu0 %v11838
    %14185 = vmatprep.subr.bf16.mxu0 %v11828
    %14186 = vmatpush1.bf16.msra.mxu0 %v11827
    %14187 = vmatprep.subr.bf16.mxu0 %v11817
    %14188 = vmatpush1.bf16.msra.mxu0 %v11816
    %14189 = vmatprep.subr.bf16.mxu0 %v11806
    %14190 = vmatpush1.bf16.msra.mxu0 %v11805
    %14191 = vmatprep.subr.bf16.mxu0 %v11795
    %14192 = vmatpush1.bf16.msra.mxu0 %v11794
    %14193 = vmatprep.subr.bf16.mxu0 %v11784
    %14194 = vmatpush1.bf16.msra.mxu0 %v11783
    %14195 = vmatprep.subr.bf16.mxu0 %v11773
    %14196 = vmatpush1.bf16.msra.mxu0 %v11772
    %14197 = vmatprep.subr.bf16.mxu0 %v11762
    %14198 = vmatpush1.bf16.msra.mxu0 %v11761
    %14199 = vmatprep.subr.bf16.mxu0 %v11927
    %14200 = vmatpush2.bf16.msra.mxu0 %v11926
    %14201 = vmatprep.subr.bf16.mxu0 %v11916
    %14202 = vmatpush2.bf16.msra.mxu0 %v11915
    %14203 = vmatprep.subr.bf16.mxu0 %v11905
    %14204 = vmatpush2.bf16.msra.mxu0 %v11904
    %14205 = vmatprep.subr.bf16.mxu0 %v11894
    %14206 = vmatpush2.bf16.msra.mxu0 %v11893
    %14207 = vmatprep.subr.bf16.mxu0 %v11883
    %14208 = vmatpush2.bf16.msra.mxu0 %v11882
    %14209 = vmatprep.subr.bf16.mxu0 %v11872
    %14210 = vmatpush2.bf16.msra.mxu0 %v11871
    %14211 = vmatprep.subr.bf16.mxu0 %v11861
    %14212 = vmatpush2.bf16.msra.mxu0 %v11860
    %14213 = vmatprep.subr.bf16.mxu0 %v11850
    %14214 = vmatpush2.bf16.msra.mxu0 %v11849
    %14215 = vmatprep.mubr.bf16.mxu0 %v7357
    %14216 = vmatmul.mubr.bf16.gmra.mxu0 %v7356
    %v14217 = vpop.f32.mrf.mxu0
    %v14218 = vadd.f32 %v14177, %v14217
    %v14219 = vpop.f32.mrf.mxu0
    %v14220 = vadd.f32 %v14179, %v14219
    %v14221 = vpop.f32.mrf.mxu0
    %v14222 = vpop.f32.mrf.mxu0
    %14223 = vdwg.mxu0
    %14224 = vmatprep.subr.bf16.mxu0 %v12015
    %14225 = vmatpush1.bf16.msra.mxu0 %v12014
    %14226 = vmatprep.subr.bf16.mxu0 %v12004
    %14227 = vmatpush1.bf16.msra.mxu0 %v12003
    %14228 = vmatprep.subr.bf16.mxu0 %v11993
    %14229 = vmatpush1.bf16.msra.mxu0 %v11992
    %14230 = vmatprep.subr.bf16.mxu0 %v11982
    %14231 = vmatpush1.bf16.msra.mxu0 %v11981
    %14232 = vmatprep.subr.bf16.mxu0 %v11971
    %14233 = vmatpush1.bf16.msra.mxu0 %v11970
    %14234 = vmatprep.subr.bf16.mxu0 %v11960
    %14235 = vmatpush1.bf16.msra.mxu0 %v11959
    %14236 = vmatprep.subr.bf16.mxu0 %v11949
    %14237 = vmatpush1.bf16.msra.mxu0 %v11948
    %14238 = vmatprep.subr.bf16.mxu0 %v11938
    %14239 = vmatpush1.bf16.msra.mxu0 %v11937
    %14240 = vmatprep.subr.bf16.mxu0 %v12103
    %14241 = vmatpush2.bf16.msra.mxu0 %v12102
    %14242 = vmatprep.subr.bf16.mxu0 %v12092
    %14243 = vmatpush2.bf16.msra.mxu0 %v12091
    %14244 = vmatprep.subr.bf16.mxu0 %v12081
    %14245 = vmatpush2.bf16.msra.mxu0 %v12080
    %14246 = vmatprep.subr.bf16.mxu0 %v12070
    %14247 = vmatpush2.bf16.msra.mxu0 %v12069
    %14248 = vmatprep.subr.bf16.mxu0 %v12059
    %14249 = vmatpush2.bf16.msra.mxu0 %v12058
    %14250 = vmatprep.subr.bf16.mxu0 %v12048
    %14251 = vmatpush2.bf16.msra.mxu0 %v12047
    %14252 = vmatprep.subr.bf16.mxu0 %v12037
    %14253 = vmatpush2.bf16.msra.mxu0 %v12036
    %14254 = vmatprep.subr.bf16.mxu0 %v12026
    %14255 = vmatpush2.bf16.msra.mxu0 %v12025
    %14256 = vmatprep.mubr.bf16.mxu0 %v7359
    %14257 = vmatmul.mubr.bf16.gmra.mxu0 %v7358
    %v14258 = vpop.f32.mrf.mxu0
    %v14259 = vadd.f32 %v14218, %v14258
    %v14260 = vpop.f32.mrf.mxu0
    %v14261 = vadd.f32 %v14220, %v14260
    %v14262 = vpop.f32.mrf.mxu0
    %v14263 = vpop.f32.mrf.mxu0
    %14264 = vdwg.mxu0
    %14265 = vmatprep.subr.bf16.mxu0 0
    %14266 = vmatpush1.bf16.msra.mxu0 0
    %14267 = vmatprep.subr.bf16.mxu0 0
    %14268 = vmatpush1.bf16.msra.mxu0 0
    %14269 = vmatprep.subr.bf16.mxu0 0
    %14270 = vmatpush1.bf16.msra.mxu0 0
    %14271 = vmatprep.subr.bf16.mxu0 0
    %14272 = vmatpush1.bf16.msra.mxu0 0
    %14273 = vmatprep.subr.bf16.mxu0 %v12147
    %14274 = vmatpush1.bf16.msra.mxu0 %v12146
    %14275 = vmatprep.subr.bf16.mxu0 %v12136
    %14276 = vmatpush1.bf16.msra.mxu0 %v12135
    %14277 = vmatprep.subr.bf16.mxu0 %v12125
    %14278 = vmatpush1.bf16.msra.mxu0 %v12124
    %14279 = vmatprep.subr.bf16.mxu0 %v12114
    %14280 = vmatpush1.bf16.msra.mxu0 %v12113
    %14281 = vmatprep.subr.bf16.mxu0 0
    %14282 = vmatpush2.bf16.msra.mxu0 0
    %14283 = vmatprep.subr.bf16.mxu0 0
    %14284 = vmatpush2.bf16.msra.mxu0 0
    %14285 = vmatprep.subr.bf16.mxu0 0
    %14286 = vmatpush2.bf16.msra.mxu0 0
    %14287 = vmatprep.subr.bf16.mxu0 0
    %14288 = vmatpush2.bf16.msra.mxu0 0
    %14289 = vmatprep.subr.bf16.mxu0 0
    %14290 = vmatpush2.bf16.msra.mxu0 0
    %14291 = vmatprep.subr.bf16.mxu0 0
    %14292 = vmatpush2.bf16.msra.mxu0 0
    %14293 = vmatprep.subr.bf16.mxu0 0
    %14294 = vmatpush2.bf16.msra.mxu0 0
    %14295 = vmatprep.subr.bf16.mxu0 0
    %14296 = vmatpush2.bf16.msra.mxu0 0
    %14297 = vmatprep.mubr.bf16.mxu0 0
    %14298 = vmatmul.mubr.bf16.gmra.mxu0 %v13074
    %v14299 = vpop.f32.mrf.mxu0
    %v14300 = vadd.f32 %v14259, %v14299
    %v14301 = vpop.f32.mrf.mxu0
    %v14302 = vadd.f32 %v14261, %v14301
    %v14303 = vpop.f32.mrf.mxu0
    %v14304 = vpop.f32.mrf.mxu0
    %14305 = vdwg.mxu0
    %14306 = vmatprep.subr.bf16.mxu0 0
    %14307 = vmatpush1.bf16.msra.mxu0 %v11312
    %14308 = vmatprep.subr.bf16.mxu0 0
    %14309 = vmatpush1.bf16.msra.mxu0 %v11301
    %14310 = vmatprep.subr.bf16.mxu0 0
    %14311 = vmatpush1.bf16.msra.mxu0 %v11290
    %14312 = vmatprep.subr.bf16.mxu0 0
    %14313 = vmatpush1.bf16.msra.mxu0 %v11279
    %14314 = vmatprep.subr.bf16.mxu0 0
    %14315 = vmatpush1.bf16.msra.mxu0 %v11268
    %14316 = vmatprep.subr.bf16.mxu0 0
    %14317 = vmatpush1.bf16.msra.mxu0 %v11257
    %14318 = vmatprep.subr.bf16.mxu0 0
    %14319 = vmatpush1.bf16.msra.mxu0 %v11246
    %14320 = vmatprep.subr.bf16.mxu0 0
    %14321 = vmatpush1.bf16.msra.mxu0 %v11235
    %14322 = vmatprep.subr.bf16.mxu0 0
    %14323 = vmatpush2.bf16.msra.mxu0 %v11400
    %14324 = vmatprep.subr.bf16.mxu0 0
    %14325 = vmatpush2.bf16.msra.mxu0 %v11389
    %14326 = vmatprep.subr.bf16.mxu0 0
    %14327 = vmatpush2.bf16.msra.mxu0 %v11378
    %14328 = vmatprep.subr.bf16.mxu0 0
    %14329 = vmatpush2.bf16.msra.mxu0 %v11367
    %14330 = vmatprep.subr.bf16.mxu0 0
    %14331 = vmatpush2.bf16.msra.mxu0 %v11356
    %14332 = vmatprep.subr.bf16.mxu0 0
    %14333 = vmatpush2.bf16.msra.mxu0 %v11345
    %14334 = vmatprep.subr.bf16.mxu0 0
    %14335 = vmatpush2.bf16.msra.mxu0 %v11334
    %14336 = vmatprep.subr.bf16.mxu0 0
    %14337 = vmatpush2.bf16.msra.mxu0 %v11323
    %14338 = vmatprep.mubr.bf16.mxu0 %v7351
    %14339 = vmatmul.mubr.bf16.gmra.mxu0 %v7350
    %v14340 = vpop.f32.mrf.mxu0
    %v14341 = vadd.f32 0.0, %v14340
    %v14342 = vpop.f32.mrf.mxu0
    %v14343 = vpop.f32.mrf.mxu0
    %v14344 = vpop.f32.mrf.mxu0
    %14345 = vdwg.mxu0
    %14346 = vmatprep.subr.bf16.mxu0 0
    %14347 = vmatpush1.bf16.msra.mxu0 %v11488
    %14348 = vmatprep.subr.bf16.mxu0 0
    %14349 = vmatpush1.bf16.msra.mxu0 %v11477
    %14350 = vmatprep.subr.bf16.mxu0 0
    %14351 = vmatpush1.bf16.msra.mxu0 %v11466
    %14352 = vmatprep.subr.bf16.mxu0 0
    %14353 = vmatpush1.bf16.msra.mxu0 %v11455
    %14354 = vmatprep.subr.bf16.mxu0 0
    %14355 = vmatpush1.bf16.msra.mxu0 %v11444
    %14356 = vmatprep.subr.bf16.mxu0 0
    %14357 = vmatpush1.bf16.msra.mxu0 %v11433
    %14358 = vmatprep.subr.bf16.mxu0 0
    %14359 = vmatpush1.bf16.msra.mxu0 %v11422
    %14360 = vmatprep.subr.bf16.mxu0 0
    %14361 = vmatpush1.bf16.msra.mxu0 %v11411
    %14362 = vmatprep.subr.bf16.mxu0 0
    %14363 = vmatpush2.bf16.msra.mxu0 %v11576
    %14364 = vmatprep.subr.bf16.mxu0 0
    %14365 = vmatpush2.bf16.msra.mxu0 %v11565
    %14366 = vmatprep.subr.bf16.mxu0 0
    %14367 = vmatpush2.bf16.msra.mxu0 %v11554
    %14368 = vmatprep.subr.bf16.mxu0 0
    %14369 = vmatpush2.bf16.msra.mxu0 %v11543
    %14370 = vmatprep.subr.bf16.mxu0 0
    %14371 = vmatpush2.bf16.msra.mxu0 %v11532
    %14372 = vmatprep.subr.bf16.mxu0 0
    %14373 = vmatpush2.bf16.msra.mxu0 %v11521
    %14374 = vmatprep.subr.bf16.mxu0 0
    %14375 = vmatpush2.bf16.msra.mxu0 %v11510
    %14376 = vmatprep.subr.bf16.mxu0 0
    %14377 = vmatpush2.bf16.msra.mxu0 %v11499
    %14378 = vmatprep.mubr.bf16.mxu0 %v7353
    %14379 = vmatmul.mubr.bf16.gmra.mxu0 %v7352
    %v14380 = vpop.f32.mrf.mxu0
    %v14381 = vadd.f32 %v14341, %v14380
    %v14382 = vpop.f32.mrf.mxu0
    %v14383 = vpop.f32.mrf.mxu0
    %v14384 = vpop.f32.mrf.mxu0
    %14385 = vdwg.mxu0
    %14386 = vmatprep.subr.bf16.mxu0 0
    %14387 = vmatpush1.bf16.msra.mxu0 %v11664
    %14388 = vmatprep.subr.bf16.mxu0 0
    %14389 = vmatpush1.bf16.msra.mxu0 %v11653
    %14390 = vmatprep.subr.bf16.mxu0 0
    %14391 = vmatpush1.bf16.msra.mxu0 %v11642
    %14392 = vmatprep.subr.bf16.mxu0 0
    %14393 = vmatpush1.bf16.msra.mxu0 %v11631
    %14394 = vmatprep.subr.bf16.mxu0 0
    %14395 = vmatpush1.bf16.msra.mxu0 %v11620
    %14396 = vmatprep.subr.bf16.mxu0 0
    %14397 = vmatpush1.bf16.msra.mxu0 %v11609
    %14398 = vmatprep.subr.bf16.mxu0 0
    %14399 = vmatpush1.bf16.msra.mxu0 %v11598
    %14400 = vmatprep.subr.bf16.mxu0 0
    %14401 = vmatpush1.bf16.msra.mxu0 %v11587
    %14402 = vmatprep.subr.bf16.mxu0 0
    %14403 = vmatpush2.bf16.msra.mxu0 %v11752
    %14404 = vmatprep.subr.bf16.mxu0 0
    %14405 = vmatpush2.bf16.msra.mxu0 %v11741
    %14406 = vmatprep.subr.bf16.mxu0 0
    %14407 = vmatpush2.bf16.msra.mxu0 %v11730
    %14408 = vmatprep.subr.bf16.mxu0 0
    %14409 = vmatpush2.bf16.msra.mxu0 %v11719
    %14410 = vmatprep.subr.bf16.mxu0 0
    %14411 = vmatpush2.bf16.msra.mxu0 %v11708
    %14412 = vmatprep.subr.bf16.mxu0 0
    %14413 = vmatpush2.bf16.msra.mxu0 %v11697
    %14414 = vmatprep.subr.bf16.mxu0 0
    %14415 = vmatpush2.bf16.msra.mxu0 %v11686
    %14416 = vmatprep.subr.bf16.mxu0 0
    %14417 = vmatpush2.bf16.msra.mxu0 %v11675
    %14418 = vmatprep.mubr.bf16.mxu0 %v7355
    %14419 = vmatmul.mubr.bf16.gmra.mxu0 %v7354
    %v14420 = vpop.f32.mrf.mxu0
    %v14421 = vadd.f32 %v14381, %v14420
    %v14422 = vpop.f32.mrf.mxu0
    %v14423 = vpop.f32.mrf.mxu0
    %v14424 = vpop.f32.mrf.mxu0
    %14425 = vdwg.mxu0
    %14426 = vmatprep.subr.bf16.mxu0 0
    %14427 = vmatpush1.bf16.msra.mxu0 %v11840
    %14428 = vmatprep.subr.bf16.mxu0 0
    %14429 = vmatpush1.bf16.msra.mxu0 %v11829
    %14430 = vmatprep.subr.bf16.mxu0 0
    %14431 = vmatpush1.bf16.msra.mxu0 %v11818
    %14432 = vmatprep.subr.bf16.mxu0 0
    %14433 = vmatpush1.bf16.msra.mxu0 %v11807
    %14434 = vmatprep.subr.bf16.mxu0 0
    %14435 = vmatpush1.bf16.msra.mxu0 %v11796
    %14436 = vmatprep.subr.bf16.mxu0 0
    %14437 = vmatpush1.bf16.msra.mxu0 %v11785
    %14438 = vmatprep.subr.bf16.mxu0 0
    %14439 = vmatpush1.bf16.msra.mxu0 %v11774
    %14440 = vmatprep.subr.bf16.mxu0 0
    %14441 = vmatpush1.bf16.msra.mxu0 %v11763
    %14442 = vmatprep.subr.bf16.mxu0 0
    %14443 = vmatpush2.bf16.msra.mxu0 %v11928
    %14444 = vmatprep.subr.bf16.mxu0 0
    %14445 = vmatpush2.bf16.msra.mxu0 %v11917
    %14446 = vmatprep.subr.bf16.mxu0 0
    %14447 = vmatpush2.bf16.msra.mxu0 %v11906
    %14448 = vmatprep.subr.bf16.mxu0 0
    %14449 = vmatpush2.bf16.msra.mxu0 %v11895
    %14450 = vmatprep.subr.bf16.mxu0 0
    %14451 = vmatpush2.bf16.msra.mxu0 %v11884
    %14452 = vmatprep.subr.bf16.mxu0 0
    %14453 = vmatpush2.bf16.msra.mxu0 %v11873
    %14454 = vmatprep.subr.bf16.mxu0 0
    %14455 = vmatpush2.bf16.msra.mxu0 %v11862
    %14456 = vmatprep.subr.bf16.mxu0 0
    %14457 = vmatpush2.bf16.msra.mxu0 %v11851
    %14458 = vmatprep.mubr.bf16.mxu0 %v7357
    %14459 = vmatmul.mubr.bf16.gmra.mxu0 %v7356
    %v14460 = vpop.f32.mrf.mxu0
    %v14461 = vadd.f32 %v14421, %v14460
    %v14462 = vpop.f32.mrf.mxu0
    %v14463 = vpop.f32.mrf.mxu0
    %v14464 = vpop.f32.mrf.mxu0
    %14465 = vdwg.mxu0
    %14466 = vmatprep.subr.bf16.mxu0 0
    %14467 = vmatpush1.bf16.msra.mxu0 %v12016
    %14468 = vmatprep.subr.bf16.mxu0 0
    %14469 = vmatpush1.bf16.msra.mxu0 %v12005
    %14470 = vmatprep.subr.bf16.mxu0 0
    %14471 = vmatpush1.bf16.msra.mxu0 %v11994
    %14472 = vmatprep.subr.bf16.mxu0 0
    %14473 = vmatpush1.bf16.msra.mxu0 %v11983
    %14474 = vmatprep.subr.bf16.mxu0 0
    %14475 = vmatpush1.bf16.msra.mxu0 %v11972
    %14476 = vmatprep.subr.bf16.mxu0 0
    %14477 = vmatpush1.bf16.msra.mxu0 %v11961
    %14478 = vmatprep.subr.bf16.mxu0 0
    %14479 = vmatpush1.bf16.msra.mxu0 %v11950
    %14480 = vmatprep.subr.bf16.mxu0 0
    %14481 = vmatpush1.bf16.msra.mxu0 %v11939
    %14482 = vmatprep.subr.bf16.mxu0 0
    %14483 = vmatpush2.bf16.msra.mxu0 %v12104
    %14484 = vmatprep.subr.bf16.mxu0 0
    %14485 = vmatpush2.bf16.msra.mxu0 %v12093
    %14486 = vmatprep.subr.bf16.mxu0 0
    %14487 = vmatpush2.bf16.msra.mxu0 %v12082
    %14488 = vmatprep.subr.bf16.mxu0 0
    %14489 = vmatpush2.bf16.msra.mxu0 %v12071
    %14490 = vmatprep.subr.bf16.mxu0 0
    %14491 = vmatpush2.bf16.msra.mxu0 %v12060
    %14492 = vmatprep.subr.bf16.mxu0 0
    %14493 = vmatpush2.bf16.msra.mxu0 %v12049
    %14494 = vmatprep.subr.bf16.mxu0 0
    %14495 = vmatpush2.bf16.msra.mxu0 %v12038
    %14496 = vmatprep.subr.bf16.mxu0 0
    %14497 = vmatpush2.bf16.msra.mxu0 %v12027
    %14498 = vmatprep.mubr.bf16.mxu0 %v7359
    %14499 = vmatmul.mubr.bf16.gmra.mxu0 %v7358
    %v14500 = vpop.f32.mrf.mxu0
    %v14501 = vadd.f32 %v14461, %v14500
    %v14502 = vpop.f32.mrf.mxu0
    %v14503 = vpop.f32.mrf.mxu0
    %v14504 = vpop.f32.mrf.mxu0
    %14505 = vdwg.mxu0
    %14506 = vmatprep.subr.bf16.mxu0 0
    %14507 = vmatpush1.bf16.msra.mxu0 0
    %14508 = vmatprep.subr.bf16.mxu0 0
    %14509 = vmatpush1.bf16.msra.mxu0 0
    %14510 = vmatprep.subr.bf16.mxu0 0
    %14511 = vmatpush1.bf16.msra.mxu0 0
    %14512 = vmatprep.subr.bf16.mxu0 0
    %14513 = vmatpush1.bf16.msra.mxu0 0
    %14514 = vmatprep.subr.bf16.mxu0 0
    %14515 = vmatpush1.bf16.msra.mxu0 %v12148
    %14516 = vmatprep.subr.bf16.mxu0 0
    %14517 = vmatpush1.bf16.msra.mxu0 %v12137
    %14518 = vmatprep.subr.bf16.mxu0 0
    %14519 = vmatpush1.bf16.msra.mxu0 %v12126
    %14520 = vmatprep.subr.bf16.mxu0 0
    %14521 = vmatpush1.bf16.msra.mxu0 %v12115
    %14522 = vmatprep.subr.bf16.mxu0 0
    %14523 = vmatpush2.bf16.msra.mxu0 0
    %14524 = vmatprep.subr.bf16.mxu0 0
    %14525 = vmatpush2.bf16.msra.mxu0 0
    %14526 = vmatprep.subr.bf16.mxu0 0
    %14527 = vmatpush2.bf16.msra.mxu0 0
    %14528 = vmatprep.subr.bf16.mxu0 0
    %14529 = vmatpush2.bf16.msra.mxu0 0
    %14530 = vmatprep.subr.bf16.mxu0 0
    %14531 = vmatpush2.bf16.msra.mxu0 0
    %14532 = vmatprep.subr.bf16.mxu0 0
    %14533 = vmatpush2.bf16.msra.mxu0 0
    %14534 = vmatprep.subr.bf16.mxu0 0
    %14535 = vmatpush2.bf16.msra.mxu0 0
    %14536 = vmatprep.subr.bf16.mxu0 0
    %14537 = vmatpush2.bf16.msra.mxu0 0
    %14538 = vmatprep.mubr.bf16.mxu0 0
    %14539 = vmatmul.mubr.bf16.gmra.mxu0 %v13074
    %v14540 = vpop.f32.mrf.mxu0
    %v14541 = vadd.f32 %v14501, %v14540
    %v14542 = vpop.f32.mrf.mxu0
    %v14543 = vpop.f32.mrf.mxu0
    %v14544 = vpop.f32.mrf.mxu0
    %14545 = vdwg.mxu0
    %v14546 = vadd.f32 %v72, %v13316
    %v14547 = vadd.f32 %v73, %v13318
    %v14548 = vadd.f32 %v74, %v13562
    %v14549 = vadd.f32 %v75, %v13564
    %v14550 = vadd.f32 %v76, %v13808
    %v14551 = vadd.f32 %v77, %v13810
    %v14552 = vadd.f32 %v78, %v14054
    %v14553 = vadd.f32 %v79, %v14056
    %v14554 = vadd.f32 %v80, %v14300
    %v14555 = vadd.f32 %v81, %v14302
    %v14556 = vadd.f32 %v82, %v14541
    %v14557 = vld [vmem:[#allocation7] sm:$0xff]
    %v14558 = vld [vmem:[#allocation7 + $0x8] sm:$0x7]
    %v14561 = vlaneseq
    %v14562 = vshrl.u32 %v14561, 7
    %v14563 = vsub.s32 0, %v14562
    %v14564 = vrot.slane %v14557, %v14563
    %v14565 = vlaneseq
    %v14566 = vshrl.u32 %v14565, 7
    %v14567 = vsub.s32 1, %v14566
    %v14568 = vrot.slane %v14557, %v14567
    %v14569 = vlaneseq
    %v14570 = vshrl.u32 %v14569, 7
    %v14571 = vsub.s32 2, %v14570
    %v14572 = vrot.slane %v14557, %v14571
    %v14573 = vlaneseq
    %v14574 = vshrl.u32 %v14573, 7
    %v14575 = vsub.s32 3, %v14574
    %v14576 = vrot.slane %v14557, %v14575
    %v14577 = vlaneseq
    %v14578 = vshrl.u32 %v14577, 7
    %v14579 = vsub.s32 4, %v14578
    %v14580 = vrot.slane %v14557, %v14579
    %v14581 = vlaneseq
    %v14582 = vshrl.u32 %v14581, 7
    %v14583 = vsub.s32 5, %v14582
    %v14584 = vrot.slane %v14557, %v14583
    %v14585 = vlaneseq
    %v14586 = vshrl.u32 %v14585, 7
    %v14587 = vsub.s32 6, %v14586
    %v14588 = vrot.slane %v14557, %v14587
    %v14589 = vlaneseq
    %v14590 = vshrl.u32 %v14589, 7
    %v14591 = vsub.s32 7, %v14590
    %v14592 = vrot.slane %v14557, %v14591
    %v14593 = vlaneseq
    %v14594 = vshrl.u32 %v14593, 7
    %v14595 = vsub.s32 0, %v14594
    %v14596 = vrot.slane %v14558, %v14595
    %v14597 = vlaneseq
    %v14598 = vshrl.u32 %v14597, 7
    %v14599 = vsub.s32 1, %v14598
    %v14600 = vrot.slane %v14558, %v14599
    %v14601 = vlaneseq
    %v14602 = vshrl.u32 %v14601, 7
    %v14603 = vsub.s32 2, %v14602
    %v14604 = vrot.slane %v14558, %v14603
    %v14616 = vadd.f32 %v14546, %v14564
    %v14617 = vadd.f32 %v14547, %v14568
    %v14618 = vadd.f32 %v14548, %v14572
    %v14619 = vadd.f32 %v14549, %v14576
    %v14620 = vadd.f32 %v14550, %v14580
    %v14621 = vadd.f32 %v14551, %v14584
    %v14622 = vadd.f32 %v14552, %v14588
    %v14623 = vadd.f32 %v14553, %v14592
    %v14624 = vadd.f32 %v14554, %v14596
    %v14625 = vadd.f32 %v14555, %v14600
    %v14626 = vadd.f32 %v14556, %v14604
    %v14627 = vmax.f32 %v14616, 0.0
    %v14628 = vmax.f32 %v14617, 0.0
    %v14629 = vmax.f32 %v14618, 0.0
    %v14630 = vmax.f32 %v14619, 0.0
    %v14631 = vmax.f32 %v14620, 0.0
    %v14632 = vmax.f32 %v14621, 0.0
    %v14633 = vmax.f32 %v14622, 0.0
    %v14634 = vmax.f32 %v14623, 0.0
    %v14635 = vmax.f32 %v14624, 0.0
    %v14636 = vmax.f32 %v14625, 0.0
    %v14637 = vmax.f32 %v14626, 0.0
    %14638 = vst [vmem:[%s5] sm:$0xff] %v14627
    %14639 = vst [vmem:[%s5 + $0x8] sm:$0xff] %v14628
    %14640 = vst [vmem:[%s5 + $0x10] sm:$0xff] %v14629
    %14641 = vst [vmem:[%s5 + $0x18] sm:$0xff] %v14630
    %14642 = vst [vmem:[%s5 + $0x20] sm:$0xff] %v14631
    %14643 = vst [vmem:[%s5 + $0x28] sm:$0xff] %v14632
    %14644 = vst [vmem:[%s5 + $0x30] sm:$0xff] %v14633
    %14645 = vst [vmem:[%s5 + $0x38] sm:$0xff] %v14634
    %14646 = vst [vmem:[%s5 + $0x40] sm:$0xff] %v14635
    %14647 = vst [vmem:[%s5 + $0x48] sm:$0xff] %v14636
    %14648 = vst.msk [vmem:[%s5 + $0x50] sm:$0xff] %vm5865, %v14637
    // Predicated region
    $region38: #{resblock_forward.1} parent=1 // pred_check
      _
    $region39: #{resblock_forward.1} parent=1 // pred_check_branch
      %14650 = sbr.rel (0) target = $region41
    $region40: #{resblock_forward.1} parent=1 // pred_region
      _
    $region41: #{resblock_forward.1} parent=1 // pred_fallthru
      _
    // Predicated region
    $region42: #{resblock_forward.1} parent=1 // pred_check
      _
    $region43: #{resblock_forward.1} parent=1 // pred_check_branch
      %14652 = sbr.rel (0) target = $region45
    $region44: #{resblock_forward.1} parent=1 // pred_region
      _
    $region45: #{resblock_forward.1} parent=1 // pred_fallthru
      _
    %14653 = vsyncpa [#allocation3], 1
    %14654 = vsyncpa [#allocation5], 1
    %14655 = vsyncpa [#allocation8], 1

</llo_original>
